<compile_context>
chip_gen: v6e
topology: v6e:2x2x1
jax: 0.10.0
libtpu: 0.0.40
codegen_flags: <defaults>
</compile_context>

<pallas_src>
import jax
import jax.numpy as jnp
from jax import lax
from jax.experimental import pallas as pl
from jax.experimental.pallas import tpu as pltpu


def _make_residual_kernel(has_proj, block_n, Pp, Wr, c0, OFF, H, W, mid):
    """Build the fused Residual-block kernel for a static geometry.

    Each batch element lives on a zero-padded grid of (H+2) rows whose row
    stride is padded to Wr (multiple of 8); the interior starts at column c0
    (multiple of 8).  Flattened pixel count per element is Pp = (H+2)*Wr, and
    block_n elements are stacked along the pixel/sublane axis into one M-row
    slab so every conv is a single (or 9x accumulated) MXU matmul.
    """
    M = block_n * Pp

    def kernel(x_ref, s0_ref, t0_ref, w1_ref, b1_ref, w2_ref, b2_ref,
               w3_ref, b3_ref, *rest):
        if has_proj:
            w4_ref, b4_ref, out_ref, h1buf_ref = rest
        else:
            out_ref, h1buf_ref = rest

        x = x_ref[...]                                          # (M, Cin) f32

        # Leading BatchNorm (eval running stats) + ReLU, f32 on the VPU.
        pre = jnp.maximum(x * s0_ref[...] + t0_ref[...], 0.0)

        # conv1 (1x1, bn1 folded) + ReLU.  bf16 MXU operands, f32 accumulation.
        h1 = jnp.dot(pre.astype(jnp.bfloat16), w1_ref[...],
                     preferred_element_type=jnp.float32) + b1_ref[...]
        h1 = jnp.maximum(h1, 0.0)                               # (M, mid) f32

        # Stage h1 on the sublane-aligned padded pixel grid.  Zero only the
        # halo rows and the pad-ring runs (all runs start at multiples of 8
        # with multiple-of-8 lengths when W % 8 == 0); interior slabs keep the
        # staged values, so conv2 sees exact zero padding with no mask input.
        zeros_halo = jnp.zeros((OFF, mid), jnp.float32)
        h1buf_ref[0:OFF, :] = zeros_halo
        h1buf_ref[OFF + M:OFF + M + OFF, :] = zeros_halo
        h1buf_ref[OFF:OFF + M, :] = h1
        pad_runs = [(0, Wr + c0)]
        pad_runs += [((h + 1) * Wr + c0 + W, Wr - W) for h in range(H - 1)]
        pad_runs += [(H * Wr + c0 + W, Pp - (H * Wr + c0 + W))]
        for e in range(block_n):
            base = OFF + e * Pp
            for start, length in pad_runs:
                h1buf_ref[base + start:base + start + length, :] = (
                    jnp.zeros((length, mid), jnp.float32))

        # conv2 (3x3, pad 1, bn2 folded): nine statically-unrolled accumulated
        # MXU matmuls; each LHS is a sublane-shifted slice of the staged grid
        # (no materialized im2col buffer / extra VMEM round trip).
        acc = None
        for t in range(9):
            dy, dx = t // 3, t % 3
            s = OFF + (dy - 1) * Wr + (dx - 1)
            lhs = h1buf_ref[s:s + M, :].astype(jnp.bfloat16)
            part = jnp.dot(lhs, w2_ref[t], preferred_element_type=jnp.float32)
            acc = part if acc is None else acc + part
        h2 = jnp.maximum(acc + b2_ref[...], 0.0)                # (M, mid) f32

        # conv3 (1x1) + residual branch (projected conv4 or identity).
        y = jnp.dot(h2.astype(jnp.bfloat16), w3_ref[...],
                    preferred_element_type=jnp.float32) + b3_ref[...]
        if has_proj:
            y = y + (jnp.dot(x.astype(jnp.bfloat16), w4_ref[...],
                             preferred_element_type=jnp.float32) + b4_ref[...])
        else:
            y = y + x        # numIn == numOut: identity residual, no matmul

        # Extract interior pixels: each store is a lane-dense, sublane-aligned
        # (W, numOut) row slab.
        for e in range(block_n):
            for h in range(H):
                r = e * Pp + (h + 1) * Wr + c0
                out_ref[e, h, :, :] = y[r:r + W, :]

    return kernel


def residual_forward(x_nchw, params, eps=1e-5, block_n=None):
    """x_nchw: (N, numIn, H, W) f32.  Returns (N, numOut, H, W), matching PyTorch.

    block_n = batch elements folded into one grid step (must divide N).  The
    default keeps >= 2 parallel grid steps when N is even (v7x has two
    TensorCores); on single-TC v5e/v6e pass block_n=N for one big slab.
    """
    N, Cin, H, W = x_nchw.shape
    w1, b1 = params["conv1_w"], params["conv1_b"]   # (mid, Cin, 1, 1), (mid,)
    w2, b2 = params["conv2_w"], params["conv2_b"]   # (mid, mid, 3, 3), (mid,)
    w3, b3 = params["conv3_w"], params["conv3_b"]   # (K, mid, 1, 1),   (K,)
    mid, K = w1.shape[0], w3.shape[0]
    has_proj = "conv4_w" in params

    if block_n is None:
        block_n = N // 2 if (N >= 2 and N % 2 == 0) else 1
    assert N % block_n == 0, "block_n must divide the batch size"
    steps = N // block_n

    # Sublane-aligned padded pixel-flat geometry.
    c0 = 8                                   # interior column start (multiple of 8)
    Wr = ((c0 + W + 7) // 8) * 8             # padded row stride   (multiple of 8)
    Hr = H + 2                               # top + bottom zero pad rows
    Pp = Hr * Wr                             # flattened pixels per element
    OFF = ((Wr + 1 + 7) // 8) * 8            # halo >= Wr+1 rows, multiple of 8
    M = block_n * Pp
    BUF = M + 2 * OFF

    def bn_fold(prefix):
        s = params[prefix + "_g"] / jnp.sqrt(params[prefix + "_v"] + eps)
        return s, params[prefix + "_b"] - params[prefix + "_m"] * s

    s0, t0 = bn_fold("bn")
    s1, t1 = bn_fold("bn1")
    s2, t2 = bn_fold("bn2")

    # Fold bn1 -> conv1 and bn2 -> conv2; pre-cast matmul weights to bf16
    # (MXU peak is bf16); biases and the leading bn scale/shift stay f32.
    w1f = (w1[:, :, 0, 0].T * s1[None, :]).astype(jnp.bfloat16)           # (Cin, mid)
    b1f = (b1 * s1 + t1).reshape(1, mid)
    w2f = (jnp.transpose(w2, (2, 3, 1, 0)).reshape(9, mid, mid)
           * s2[None, None, :]).astype(jnp.bfloat16)                      # (9, mid, mid)
    b2f = (b2 * s2 + t2).reshape(1, mid)
    w3f = w3[:, :, 0, 0].T.astype(jnp.bfloat16)                           # (mid, K)
    b3f = b3.reshape(1, K)

    # Place inputs on the padded, stride-aligned grid and flatten pixels.
    x_nhwc = jnp.transpose(x_nchw, (0, 2, 3, 1)).astype(jnp.float32)
    x_grid = jnp.zeros((N, Hr, Wr, Cin), jnp.float32)
    x_grid = x_grid.at[:, 1:H + 1, c0:c0 + W, :].set(x_nhwc)
    x_flat = x_grid.reshape(N * Pp, Cin)

    in_specs = [
        pl.BlockSpec((M, Cin), lambda i: (i, 0)),          # x slab (block_n elems)
        pl.BlockSpec((1, Cin), lambda i: (0, 0)),          # bn scale
        pl.BlockSpec((1, Cin), lambda i: (0, 0)),          # bn shift
        pl.BlockSpec((Cin, mid), lambda i: (0, 0)),        # conv1 (bn1 folded)
        pl.BlockSpec((1, mid), lambda i: (0, 0)),
        pl.BlockSpec((9, mid, mid), lambda i: (0, 0, 0)),  # conv2 taps (bn2 folded)
        pl.BlockSpec((1, mid), lambda i: (0, 0)),
        pl.BlockSpec((mid, K), lambda i: (0, 0)),          # conv3
        pl.BlockSpec((1, K), lambda i: (0, 0)),
    ]
    args = [x_flat, s0.reshape(1, Cin), t0.reshape(1, Cin),
            w1f, b1f, w2f, b2f, w3f, b3f]
    if has_proj:                                           # numIn != numOut
        w4f = params["conv4_w"][:, :, 0, 0].T.astype(jnp.bfloat16)        # (Cin, K)
        b4f = params["conv4_b"].reshape(1, K)
        in_specs += [pl.BlockSpec((Cin, K), lambda i: (0, 0)),
                     pl.BlockSpec((1, K), lambda i: (0, 0))]
        args += [w4f, b4f]

    kernel = _make_residual_kernel(has_proj, block_n, Pp, Wr, c0, OFF, H, W, mid)

    out_nhwc = pl.pallas_call(
        kernel,
        out_shape=jax.ShapeDtypeStruct((N, H, W, K), jnp.float32),
        grid_spec=pltpu.PrefetchScalarGridSpec(
            num_scalar_prefetch=0,
            grid=(steps,),
            in_specs=in_specs,
            out_specs=pl.BlockSpec((block_n, H, W, K), lambda i: (i, 0, 0, 0)),
            scratch_shapes=[pltpu.VMEM((BUF, mid), jnp.float32)],  # staged h1 grid
        ),
        compiler_params=pltpu.CompilerParams(
            dimension_semantics=("parallel",)),
    )(*args)

    # NHWC -> NCHW to match PyTorch.
    return jnp.transpose(out_nhwc, (0, 3, 1, 2))


def _reference_forward(x, params, eps=1e-5):
    """Pure-JAX NCHW reference mirroring the PyTorch Residual forward (eval BN)."""
    def bn(y, prefix):
        s = params[prefix + "_g"] / jnp.sqrt(params[prefix + "_v"] + eps)
        t = params[prefix + "_b"] - params[prefix + "_m"] * s
        return y * s[None, :, None, None] + t[None, :, None, None]

    def conv(y, w, b, pad):
        dn = lax.conv_dimension_numbers(y.shape, w.shape, ("NCHW", "OIHW", "NCHW"))
        o = lax.conv_general_dilated(y, w, (1, 1), ((pad, pad), (pad, pad)),
                                     dimension_numbers=dn,
                                     precision=lax.Precision.HIGHEST)
        return o + b[None, :, None, None]

    out = jnp.maximum(bn(x, "bn"), 0.0)
    out = conv(out, params["conv1_w"], params["conv1_b"], 0)
    out = jnp.maximum(bn(out, "bn1"), 0.0)
    out = conv(out, params["conv2_w"], params["conv2_b"], 1)
    out = jnp.maximum(bn(out, "bn2"), 0.0)
    out = conv(out, params["conv3_w"], params["conv3_b"], 0)
    if "conv4_w" in params:
        res = conv(x, params["conv4_w"], params["conv4_b"], 0)
    else:
        res = x
    return out + res


def _make_params(key, num_in, num_out):
    mid = num_out // 2
    ks = jax.random.split(key, 24)

    def nrm(k, shape, std):
        return std * jax.random.normal(k, shape, jnp.float32)

    p = {
        "bn_g": 1.0 + nrm(ks[0], (num_in,), 0.1),
        "bn_b": nrm(ks[1], (num_in,), 0.1),
        "bn_m": nrm(ks[2], (num_in,), 0.1),
        "bn_v": jax.random.uniform(ks[3], (num_in,), jnp.float32, 0.5, 1.5),
        "conv1_w": nrm(ks[4], (mid, num_in, 1, 1), 0.05),
        "conv1_b": nrm(ks[5], (mid,), 0.05),
        "bn1_g": 1.0 + nrm(ks[6], (mid,), 0.1),
        "bn1_b": nrm(ks[7], (mid,), 0.1),
        "bn1_m": nrm(ks[8], (mid,), 0.1),
        "bn1_v": jax.random.uniform(ks[9], (mid,), jnp.float32, 0.5, 1.5),
        "conv2_w": nrm(ks[10], (mid, mid, 3, 3), 0.05),
        "conv2_b": nrm(ks[11], (mid,), 0.05),
        "bn2_g": 1.0 + nrm(ks[12], (mid,), 0.1),
        "bn2_b": nrm(ks[13], (mid,), 0.1),
        "bn2_m": nrm(ks[14], (mid,), 0.1),
        "bn2_v": jax.random.uniform(ks[15], (mid,), jnp.float32, 0.5, 1.5),
        "conv3_w": nrm(ks[16], (num_out, mid, 1, 1), 0.05),
        "conv3_b": nrm(ks[17], (num_out,), 0.05),
    }
    if num_in != num_out:
        p["conv4_w"] = nrm(ks[18], (num_out, num_in, 1, 1), 0.05)
        p["conv4_b"] = nrm(ks[19], (num_out,), 0.05)
    return p


if __name__ == "__main__":
    key = jax.random.PRNGKey(0)
    k_proj, k_id, kx1, kx2 = jax.random.split(key, 4)
    N, H, W = 2, 16, 16
    fwd = jax.jit(residual_forward)

    # Case 1: numIn != numOut -> projected residual (conv4 matmul exercised).
    params_p = _make_params(k_proj, 64, 128)
    x1 = jax.random.normal(kx1, (N, 64, H, W), jnp.float32)
    out1 = jax.block_until_ready(fwd(x1, params_p))
    ref1 = _reference_forward(x1, params_p)
    assert out1.shape == (N, 128, H, W)
    assert jnp.allclose(out1, ref1, atol=3e-2, rtol=3e-2), float(
        jnp.max(jnp.abs(out1 - ref1)))

    # Case 2: numIn == numOut -> identity residual (conv4 matmul skipped).
    params_i = _make_params(k_id, 128, 128)
    x2 = jax.random.normal(kx2, (N, 128, H, W), jnp.float32)
    out2 = jax.block_until_ready(fwd(x2, params_i))
    ref2 = _reference_forward(x2, params_i)
    assert out2.shape == (N, 128, H, W)
    assert jnp.allclose(out2, ref2, atol=3e-2, rtol=3e-2), float(
        jnp.max(jnp.abs(out2 - ref2)))

    print("KERNEL_OK")
</pallas_src>

<mosaic_0001>
module attributes {stable_mosaic.version = 11 : i64} {
  func.func @kernel(%arg0: i32, %arg1: memref<432x64xf32, #tpu.memory_space<vmem>>, %arg2: memref<1x64xf32, #tpu.memory_space<vmem>>, %arg3: memref<1x64xf32, #tpu.memory_space<vmem>>, %arg4: memref<64x64xbf16, #tpu.memory_space<vmem>>, %arg5: memref<1x64xf32, #tpu.memory_space<vmem>>, %arg6: memref<9x64x64xbf16, #tpu.memory_space<vmem>>, %arg7: memref<1x64xf32, #tpu.memory_space<vmem>>, %arg8: memref<64x128xbf16, #tpu.memory_space<vmem>>, %arg9: memref<1x128xf32, #tpu.memory_space<vmem>>, %arg10: memref<64x128xbf16, #tpu.memory_space<vmem>>, %arg11: memref<1x128xf32, #tpu.memory_space<vmem>>, %arg12: memref<1x16x16x128xf32, #tpu.memory_space<vmem>>, %arg13: memref<496x64xf32, #tpu.memory_space<vmem>>) attributes {dimension_semantics = [#tpu.dimension_semantics<parallel>], iteration_bounds = array<i64: 2>, scalar_prefetch = 0 : i64, scratch_operands = 1 : i64, tpu.core_type = #tpu.core_type<tc>, window_params = [{transform_indices = @transform_0, window_bounds = array<i64: 432, 64>}, {pipeline_mode = #tpu.pipeline_mode<synchronous>, transform_indices = @transform_1, window_bounds = array<i64: 1, 64>}, {pipeline_mode = #tpu.pipeline_mode<synchronous>, transform_indices = @transform_2, window_bounds = array<i64: 1, 64>}, {pipeline_mode = #tpu.pipeline_mode<synchronous>, transform_indices = @transform_3, window_bounds = array<i64: 64, 64>}, {pipeline_mode = #tpu.pipeline_mode<synchronous>, transform_indices = @transform_4, window_bounds = array<i64: 1, 64>}, {pipeline_mode = #tpu.pipeline_mode<synchronous>, transform_indices = @transform_5, window_bounds = array<i64: 9, 64, 64>}, {pipeline_mode = #tpu.pipeline_mode<synchronous>, transform_indices = @transform_6, window_bounds = array<i64: 1, 64>}, {pipeline_mode = #tpu.pipeline_mode<synchronous>, transform_indices = @transform_7, window_bounds = array<i64: 64, 128>}, {pipeline_mode = #tpu.pipeline_mode<synchronous>, transform_indices = @transform_8, window_bounds = array<i64: 1, 128>}, {pipeline_mode = #tpu.pipeline_mode<synchronous>, transform_indices = @transform_9, window_bounds = array<i64: 64, 128>}, {pipeline_mode = #tpu.pipeline_mode<synchronous>, transform_indices = @transform_10, window_bounds = array<i64: 1, 128>}, {transform_indices = @transform_11, window_bounds = array<i64: 1, 16, 16, 128>}]} {
    %c0 = arith.constant 0 : index
    %c0_0 = arith.constant 0 : index
    %0 = vector.load %arg1[%c0, %c0_0] : memref<432x64xf32, #tpu.memory_space<vmem>>, vector<432x64xf32>
    %c0_1 = arith.constant 0 : index
    %c0_2 = arith.constant 0 : index
    %1 = vector.load %arg2[%c0_1, %c0_2] : memref<1x64xf32, #tpu.memory_space<vmem>>, vector<1x64xf32>
    %2 = vector.broadcast %1 : vector<1x64xf32> to vector<432x64xf32>
    %3 = arith.mulf %0, %2 : vector<432x64xf32>
    %c0_3 = arith.constant 0 : index
    %c0_4 = arith.constant 0 : index
    %4 = vector.load %arg3[%c0_3, %c0_4] : memref<1x64xf32, #tpu.memory_space<vmem>>, vector<1x64xf32>
    %5 = vector.broadcast %4 : vector<1x64xf32> to vector<432x64xf32>
    %6 = arith.addf %3, %5 : vector<432x64xf32>
    %cst = arith.constant 0.000000e+00 : f32
    %7 = vector.broadcast %cst : f32 to vector<432x64xf32>
    %8 = arith.maximumf %6, %7 : vector<432x64xf32>
    %9 = arith.truncf %8 : vector<432x64xf32> to vector<432x64xbf16>
    %c0_5 = arith.constant 0 : index
    %c0_6 = arith.constant 0 : index
    %10 = vector.load %arg4[%c0_5, %c0_6] : memref<64x64xbf16, #tpu.memory_space<vmem>>, vector<64x64xbf16>
    %cst_7 = arith.constant dense<0.000000e+00> : vector<432x64xf32>
    %11 = tpu.matmul %9, %10, %cst_7 {dimension_numbers = #tpu.dot_dimension_numbers<[1], [0], [0], [1], [0, 0, 1, 1], [], []>} : vector<432x64xbf16>, vector<64x64xbf16>, vector<432x64xf32> -> vector<432x64xf32>
    %c0_8 = arith.constant 0 : index
    %c0_9 = arith.constant 0 : index
    %12 = vector.load %arg5[%c0_8, %c0_9] : memref<1x64xf32, #tpu.memory_space<vmem>>, vector<1x64xf32>
    %13 = vector.broadcast %12 : vector<1x64xf32> to vector<432x64xf32>
    %14 = arith.addf %11, %13 : vector<432x64xf32>
    %cst_10 = arith.constant 0.000000e+00 : f32
    %15 = vector.broadcast %cst_10 : f32 to vector<432x64xf32>
    %16 = arith.maximumf %14, %15 : vector<432x64xf32>
    %cst_11 = arith.constant 0.000000e+00 : f32
    %17 = vector.broadcast %cst_11 : f32 to vector<32x64xf32>
    %c0_12 = arith.constant 0 : index
    %c0_13 = arith.constant 0 : index
    %18 = vector.load %arg13[%c0_12, %c0_13] : memref<496x64xf32, #tpu.memory_space<vmem>>, vector<32x64xf32>
    tpu.vector_store %arg13[%c0_12, %c0_13], %17 {strides = array<i32>} : memref<496x64xf32, #tpu.memory_space<vmem>>, vector<32x64xf32>,
    %c464 = arith.constant 464 : index
    %c0_14 = arith.constant 0 : index
    %19 = vector.load %arg13[%c464, %c0_14] : memref<496x64xf32, #tpu.memory_space<vmem>>, vector<32x64xf32>
    tpu.vector_store %arg13[%c464, %c0_14], %17 {strides = array<i32>} : memref<496x64xf32, #tpu.memory_space<vmem>>, vector<32x64xf32>,
    %c32 = arith.constant 32 : index
    %c0_15 = arith.constant 0 : index
    %20 = vector.load %arg13[%c32, %c0_15] : memref<496x64xf32, #tpu.memory_space<vmem>>, vector<432x64xf32>
    tpu.vector_store %arg13[%c32, %c0_15], %16 {strides = array<i32>} : memref<496x64xf32, #tpu.memory_space<vmem>>, vector<432x64xf32>,
    %cst_16 = arith.constant 0.000000e+00 : f32
    %21 = vector.broadcast %cst_16 : f32 to vector<32x64xf32>
    %c32_17 = arith.constant 32 : index
    %c0_18 = arith.constant 0 : index
    %22 = vector.load %arg13[%c32_17, %c0_18] : memref<496x64xf32, #tpu.memory_space<vmem>>, vector<32x64xf32>
    tpu.vector_store %arg13[%c32_17, %c0_18], %21 {strides = array<i32>} : memref<496x64xf32, #tpu.memory_space<vmem>>, vector<32x64xf32>,
    %cst_19 = arith.constant 0.000000e+00 : f32
    %23 = vector.broadcast %cst_19 : f32 to vector<8x64xf32>
    %c80 = arith.constant 80 : index
    %c0_20 = arith.constant 0 : index
    %24 = vector.load %arg13[%c80, %c0_20] : memref<496x64xf32, #tpu.memory_space<vmem>>, vector<8x64xf32>
    tpu.vector_store %arg13[%c80, %c0_20], %23 {strides = array<i32>} : memref<496x64xf32, #tpu.memory_space<vmem>>, vector<8x64xf32>,
    %cst_21 = arith.constant 0.000000e+00 : f32
    %25 = vector.broadcast %cst_21 : f32 to vector<8x64xf32>
    %c104 = arith.constant 104 : index
    %c0_22 = arith.constant 0 : index
    %26 = vector.load %arg13[%c104, %c0_22] : memref<496x64xf32, #tpu.memory_space<vmem>>, vector<8x64xf32>
    tpu.vector_store %arg13[%c104, %c0_22], %25 {strides = array<i32>} : memref<496x64xf32, #tpu.memory_space<vmem>>, vector<8x64xf32>,
    %cst_23 = arith.constant 0.000000e+00 : f32
    %27 = vector.broadcast %cst_23 : f32 to vector<8x64xf32>
    %c128 = arith.constant 128 : index
    %c0_24 = arith.constant 0 : index
    %28 = vector.load %arg13[%c128, %c0_24] : memref<496x64xf32, #tpu.memory_space<vmem>>, vector<8x64xf32>
    tpu.vector_store %arg13[%c128, %c0_24], %27 {strides = array<i32>} : memref<496x64xf32, #tpu.memory_space<vmem>>, vector<8x64xf32>,
    %cst_25 = arith.constant 0.000000e+00 : f32
    %29 = vector.broadcast %cst_25 : f32 to vector<8x64xf32>
    %c152 = arith.constant 152 : index
    %c0_26 = arith.constant 0 : index
    %30 = vector.load %arg13[%c152, %c0_26] : memref<496x64xf32, #tpu.memory_space<vmem>>, vector<8x64xf32>
    tpu.vector_store %arg13[%c152, %c0_26], %29 {strides = array<i32>} : memref<496x64xf32, #tpu.memory_space<vmem>>, vector<8x64xf32>,
    %cst_27 = arith.constant 0.000000e+00 : f32
    %31 = vector.broadcast %cst_27 : f32 to vector<8x64xf32>
    %c176 = arith.constant 176 : index
    %c0_28 = arith.constant 0 : index
    %32 = vector.load %arg13[%c176, %c0_28] : memref<496x64xf32, #tpu.memory_space<vmem>>, vector<8x64xf32>
    tpu.vector_store %arg13[%c176, %c0_28], %31 {strides = array<i32>} : memref<496x64xf32, #tpu.memory_space<vmem>>, vector<8x64xf32>,
    %cst_29 = arith.constant 0.000000e+00 : f32
    %33 = vector.broadcast %cst_29 : f32 to vector<8x64xf32>
    %c200 = arith.constant 200 : index
    %c0_30 = arith.constant 0 : index
    %34 = vector.load %arg13[%c200, %c0_30] : memref<496x64xf32, #tpu.memory_space<vmem>>, vector<8x64xf32>
    tpu.vector_store %arg13[%c200, %c0_30], %33 {strides = array<i32>} : memref<496x64xf32, #tpu.memory_space<vmem>>, vector<8x64xf32>,
    %cst_31 = arith.constant 0.000000e+00 : f32
    %35 = vector.broadcast %cst_31 : f32 to vector<8x64xf32>
    %c224 = arith.constant 224 : index
    %c0_32 = arith.constant 0 : index
    %36 = vector.load %arg13[%c224, %c0_32] : memref<496x64xf32, #tpu.memory_space<vmem>>, vector<8x64xf32>
    tpu.vector_store %arg13[%c224, %c0_32], %35 {strides = array<i32>} : memref<496x64xf32, #tpu.memory_space<vmem>>, vector<8x64xf32>,
    %cst_33 = arith.constant 0.000000e+00 : f32
    %37 = vector.broadcast %cst_33 : f32 to vector<8x64xf32>
    %c248 = arith.constant 248 : index
    %c0_34 = arith.constant 0 : index
    %38 = vector.load %arg13[%c248, %c0_34] : memref<496x64xf32, #tpu.memory_space<vmem>>, vector<8x64xf32>
    tpu.vector_store %arg13[%c248, %c0_34], %37 {strides = array<i32>} : memref<496x64xf32, #tpu.memory_space<vmem>>, vector<8x64xf32>,
    %cst_35 = arith.constant 0.000000e+00 : f32
    %39 = vector.broadcast %cst_35 : f32 to vector<8x64xf32>
    %c272 = arith.constant 272 : index
    %c0_36 = arith.constant 0 : index
    %40 = vector.load %arg13[%c272, %c0_36] : memref<496x64xf32, #tpu.memory_space<vmem>>, vector<8x64xf32>
    tpu.vector_store %arg13[%c272, %c0_36], %39 {strides = array<i32>} : memref<496x64xf32, #tpu.memory_space<vmem>>, vector<8x64xf32>,
    %cst_37 = arith.constant 0.000000e+00 : f32
    %41 = vector.broadcast %cst_37 : f32 to vector<8x64xf32>
    %c296 = arith.constant 296 : index
    %c0_38 = arith.constant 0 : index
    %42 = vector.load %arg13[%c296, %c0_38] : memref<496x64xf32, #tpu.memory_space<vmem>>, vector<8x64xf32>
    tpu.vector_store %arg13[%c296, %c0_38], %41 {strides = array<i32>} : memref<496x64xf32, #tpu.memory_space<vmem>>, vector<8x64xf32>,
    %cst_39 = arith.constant 0.000000e+00 : f32
    %43 = vector.broadcast %cst_39 : f32 to vector<8x64xf32>
    %c320 = arith.constant 320 : index
    %c0_40 = arith.constant 0 : index
    %44 = vector.load %arg13[%c320, %c0_40] : memref<496x64xf32, #tpu.memory_space<vmem>>, vector<8x64xf32>
    tpu.vector_store %arg13[%c320, %c0_40], %43 {strides = array<i32>} : memref<496x64xf32, #tpu.memory_space<vmem>>, vector<8x64xf32>,
    %cst_41 = arith.constant 0.000000e+00 : f32
    %45 = vector.broadcast %cst_41 : f32 to vector<8x64xf32>
    %c344 = arith.constant 344 : index
    %c0_42 = arith.constant 0 : index
    %46 = vector.load %arg13[%c344, %c0_42] : memref<496x64xf32, #tpu.memory_space<vmem>>, vector<8x64xf32>
    tpu.vector_store %arg13[%c344, %c0_42], %45 {strides = array<i32>} : memref<496x64xf32, #tpu.memory_space<vmem>>, vector<8x64xf32>,
    %cst_43 = arith.constant 0.000000e+00 : f32
    %47 = vector.broadcast %cst_43 : f32 to vector<8x64xf32>
    %c368 = arith.constant 368 : index
    %c0_44 = arith.constant 0 : index
    %48 = vector.load %arg13[%c368, %c0_44] : memref<496x64xf32, #tpu.memory_space<vmem>>, vector<8x64xf32>
    tpu.vector_store %arg13[%c368, %c0_44], %47 {strides = array<i32>} : memref<496x64xf32, #tpu.memory_space<vmem>>, vector<8x64xf32>,
    %cst_45 = arith.constant 0.000000e+00 : f32
    %49 = vector.broadcast %cst_45 : f32 to vector<8x64xf32>
    %c392 = arith.constant 392 : index
    %c0_46 = arith.constant 0 : index
    %50 = vector.load %arg13[%c392, %c0_46] : memref<496x64xf32, #tpu.memory_space<vmem>>, vector<8x64xf32>
    tpu.vector_store %arg13[%c392, %c0_46], %49 {strides = array<i32>} : memref<496x64xf32, #tpu.memory_space<vmem>>, vector<8x64xf32>,
    %cst_47 = arith.constant 0.000000e+00 : f32
    %51 = vector.broadcast %cst_47 : f32 to vector<8x64xf32>
    %c416 = arith.constant 416 : index
    %c0_48 = arith.constant 0 : index
    %52 = vector.load %arg13[%c416, %c0_48] : memref<496x64xf32, #tpu.memory_space<vmem>>, vector<8x64xf32>
    tpu.vector_store %arg13[%c416, %c0_48], %51 {strides = array<i32>} : memref<496x64xf32, #tpu.memory_space<vmem>>, vector<8x64xf32>,
    %cst_49 = arith.constant 0.000000e+00 : f32
    %53 = vector.broadcast %cst_49 : f32 to vector<24x64xf32>
    %c440 = arith.constant 440 : index
    %c0_50 = arith.constant 0 : index
    %54 = vector.load %arg13[%c440, %c0_50] : memref<496x64xf32, #tpu.memory_space<vmem>>, vector<24x64xf32>
    tpu.vector_store %arg13[%c440, %c0_50], %53 {strides = array<i32>} : memref<496x64xf32, #tpu.memory_space<vmem>>, vector<24x64xf32>,
    %c7 = arith.constant 7 : index
    %c0_51 = arith.constant 0 : index
    %55 = vector.load %arg13[%c7, %c0_51] : memref<496x64xf32, #tpu.memory_space<vmem>>, vector<432x64xf32>
    %56 = arith.truncf %55 : vector<432x64xf32> to vector<432x64xbf16>
    %c0_52 = arith.constant 0 : index
    %c0_53 = arith.constant 0 : index
    %c0_54 = arith.constant 0 : index
    %57 = vector.load %arg6[%c0_52, %c0_53, %c0_54] : memref<9x64x64xbf16, #tpu.memory_space<vmem>>, vector<1x64x64xbf16>
    %58 = vector.shape_cast %57 : vector<1x64x64xbf16> to vector<64x64xbf16>
    %cst_55 = arith.constant dense<0.000000e+00> : vector<432x64xf32>
    %59 = tpu.matmul %56, %58, %cst_55 {dimension_numbers = #tpu.dot_dimension_numbers<[1], [0], [0], [1], [0, 0, 1, 1], [], []>} : vector<432x64xbf16>, vector<64x64xbf16>, vector<432x64xf32> -> vector<432x64xf32>
    %c8 = arith.constant 8 : index
    %c0_56 = arith.constant 0 : index
    %60 = vector.load %arg13[%c8, %c0_56] : memref<496x64xf32, #tpu.memory_space<vmem>>, vector<432x64xf32>
    %61 = arith.truncf %60 : vector<432x64xf32> to vector<432x64xbf16>
    %c1 = arith.constant 1 : index
    %c0_57 = arith.constant 0 : index
    %c0_58 = arith.constant 0 : index
    %62 = vector.load %arg6[%c1, %c0_57, %c0_58] : memref<9x64x64xbf16, #tpu.memory_space<vmem>>, vector<1x64x64xbf16>
    %63 = vector.shape_cast %62 : vector<1x64x64xbf16> to vector<64x64xbf16>
    %cst_59 = arith.constant dense<0.000000e+00> : vector<432x64xf32>
    %64 = tpu.matmul %61, %63, %cst_59 {dimension_numbers = #tpu.dot_dimension_numbers<[1], [0], [0], [1], [0, 0, 1, 1], [], []>} : vector<432x64xbf16>, vector<64x64xbf16>, vector<432x64xf32> -> vector<432x64xf32>
    %65 = arith.addf %59, %64 : vector<432x64xf32>
    %c9 = arith.constant 9 : index
    %c0_60 = arith.constant 0 : index
    %66 = vector.load %arg13[%c9, %c0_60] : memref<496x64xf32, #tpu.memory_space<vmem>>, vector<432x64xf32>
    %67 = arith.truncf %66 : vector<432x64xf32> to vector<432x64xbf16>
    %c2 = arith.constant 2 : index
    %c0_61 = arith.constant 0 : index
    %c0_62 = arith.constant 0 : index
    %68 = vector.load %arg6[%c2, %c0_61, %c0_62] : memref<9x64x64xbf16, #tpu.memory_space<vmem>>, vector<1x64x64xbf16>
    %69 = vector.shape_cast %68 : vector<1x64x64xbf16> to vector<64x64xbf16>
    %cst_63 = arith.constant dense<0.000000e+00> : vector<432x64xf32>
    %70 = tpu.matmul %67, %69, %cst_63 {dimension_numbers = #tpu.dot_dimension_numbers<[1], [0], [0], [1], [0, 0, 1, 1], [], []>} : vector<432x64xbf16>, vector<64x64xbf16>, vector<432x64xf32> -> vector<432x64xf32>
    %71 = arith.addf %65, %70 : vector<432x64xf32>
    %c31 = arith.constant 31 : index
    %c0_64 = arith.constant 0 : index
    %72 = vector.load %arg13[%c31, %c0_64] : memref<496x64xf32, #tpu.memory_space<vmem>>, vector<432x64xf32>
    %73 = arith.truncf %72 : vector<432x64xf32> to vector<432x64xbf16>
    %c3 = arith.constant 3 : index
    %c0_65 = arith.constant 0 : index
    %c0_66 = arith.constant 0 : index
    %74 = vector.load %arg6[%c3, %c0_65, %c0_66] : memref<9x64x64xbf16, #tpu.memory_space<vmem>>, vector<1x64x64xbf16>
    %75 = vector.shape_cast %74 : vector<1x64x64xbf16> to vector<64x64xbf16>
    %cst_67 = arith.constant dense<0.000000e+00> : vector<432x64xf32>
    %76 = tpu.matmul %73, %75, %cst_67 {dimension_numbers = #tpu.dot_dimension_numbers<[1], [0], [0], [1], [0, 0, 1, 1], [], []>} : vector<432x64xbf16>, vector<64x64xbf16>, vector<432x64xf32> -> vector<432x64xf32>
    %77 = arith.addf %71, %76 : vector<432x64xf32>
    %c32_68 = arith.constant 32 : index
    %c0_69 = arith.constant 0 : index
    %78 = vector.load %arg13[%c32_68, %c0_69] : memref<496x64xf32, #tpu.memory_space<vmem>>, vector<432x64xf32>
    %79 = arith.truncf %78 : vector<432x64xf32> to vector<432x64xbf16>
    %c4 = arith.constant 4 : index
    %c0_70 = arith.constant 0 : index
    %c0_71 = arith.constant 0 : index
    %80 = vector.load %arg6[%c4, %c0_70, %c0_71] : memref<9x64x64xbf16, #tpu.memory_space<vmem>>, vector<1x64x64xbf16>
    %81 = vector.shape_cast %80 : vector<1x64x64xbf16> to vector<64x64xbf16>
    %cst_72 = arith.constant dense<0.000000e+00> : vector<432x64xf32>
    %82 = tpu.matmul %79, %81, %cst_72 {dimension_numbers = #tpu.dot_dimension_numbers<[1], [0], [0], [1], [0, 0, 1, 1], [], []>} : vector<432x64xbf16>, vector<64x64xbf16>, vector<432x64xf32> -> vector<432x64xf32>
    %83 = arith.addf %77, %82 : vector<432x64xf32>
    %c33 = arith.constant 33 : index
    %c0_73 = arith.constant 0 : index
    %84 = vector.load %arg13[%c33, %c0_73] : memref<496x64xf32, #tpu.memory_space<vmem>>, vector<432x64xf32>
    %85 = arith.truncf %84 : vector<432x64xf32> to vector<432x64xbf16>
    %c5 = arith.constant 5 : index
    %c0_74 = arith.constant 0 : index
    %c0_75 = arith.constant 0 : index
    %86 = vector.load %arg6[%c5, %c0_74, %c0_75] : memref<9x64x64xbf16, #tpu.memory_space<vmem>>, vector<1x64x64xbf16>
    %87 = vector.shape_cast %86 : vector<1x64x64xbf16> to vector<64x64xbf16>
    %cst_76 = arith.constant dense<0.000000e+00> : vector<432x64xf32>
    %88 = tpu.matmul %85, %87, %cst_76 {dimension_numbers = #tpu.dot_dimension_numbers<[1], [0], [0], [1], [0, 0, 1, 1], [], []>} : vector<432x64xbf16>, vector<64x64xbf16>, vector<432x64xf32> -> vector<432x64xf32>
    %89 = arith.addf %83, %88 : vector<432x64xf32>
    %c55 = arith.constant 55 : index
    %c0_77 = arith.constant 0 : index
    %90 = vector.load %arg13[%c55, %c0_77] : memref<496x64xf32, #tpu.memory_space<vmem>>, vector<432x64xf32>
    %91 = arith.truncf %90 : vector<432x64xf32> to vector<432x64xbf16>
    %c6 = arith.constant 6 : index
    %c0_78 = arith.constant 0 : index
    %c0_79 = arith.constant 0 : index
    %92 = vector.load %arg6[%c6, %c0_78, %c0_79] : memref<9x64x64xbf16, #tpu.memory_space<vmem>>, vector<1x64x64xbf16>
    %93 = vector.shape_cast %92 : vector<1x64x64xbf16> to vector<64x64xbf16>
    %cst_80 = arith.constant dense<0.000000e+00> : vector<432x64xf32>
    %94 = tpu.matmul %91, %93, %cst_80 {dimension_numbers = #tpu.dot_dimension_numbers<[1], [0], [0], [1], [0, 0, 1, 1], [], []>} : vector<432x64xbf16>, vector<64x64xbf16>, vector<432x64xf32> -> vector<432x64xf32>
    %95 = arith.addf %89, %94 : vector<432x64xf32>
    %c56 = arith.constant 56 : index
    %c0_81 = arith.constant 0 : index
    %96 = vector.load %arg13[%c56, %c0_81] : memref<496x64xf32, #tpu.memory_space<vmem>>, vector<432x64xf32>
    %97 = arith.truncf %96 : vector<432x64xf32> to vector<432x64xbf16>
    %c7_82 = arith.constant 7 : index
    %c0_83 = arith.constant 0 : index
    %c0_84 = arith.constant 0 : index
    %98 = vector.load %arg6[%c7_82, %c0_83, %c0_84] : memref<9x64x64xbf16, #tpu.memory_space<vmem>>, vector<1x64x64xbf16>
    %99 = vector.shape_cast %98 : vector<1x64x64xbf16> to vector<64x64xbf16>
    %cst_85 = arith.constant dense<0.000000e+00> : vector<432x64xf32>
    %100 = tpu.matmul %97, %99, %cst_85 {dimension_numbers = #tpu.dot_dimension_numbers<[1], [0], [0], [1], [0, 0, 1, 1], [], []>} : vector<432x64xbf16>, vector<64x64xbf16>, vector<432x64xf32> -> vector<432x64xf32>
    %101 = arith.addf %95, %100 : vector<432x64xf32>
    %c57 = arith.constant 57 : index
    %c0_86 = arith.constant 0 : index
    %102 = vector.load %arg13[%c57, %c0_86] : memref<496x64xf32, #tpu.memory_space<vmem>>, vector<432x64xf32>
    %103 = arith.truncf %102 : vector<432x64xf32> to vector<432x64xbf16>
    %c8_87 = arith.constant 8 : index
    %c0_88 = arith.constant 0 : index
    %c0_89 = arith.constant 0 : index
    %104 = vector.load %arg6[%c8_87, %c0_88, %c0_89] : memref<9x64x64xbf16, #tpu.memory_space<vmem>>, vector<1x64x64xbf16>
    %105 = vector.shape_cast %104 : vector<1x64x64xbf16> to vector<64x64xbf16>
    %cst_90 = arith.constant dense<0.000000e+00> : vector<432x64xf32>
    %106 = tpu.matmul %103, %105, %cst_90 {dimension_numbers = #tpu.dot_dimension_numbers<[1], [0], [0], [1], [0, 0, 1, 1], [], []>} : vector<432x64xbf16>, vector<64x64xbf16>, vector<432x64xf32> -> vector<432x64xf32>
    %107 = arith.addf %101, %106 : vector<432x64xf32>
    %c0_91 = arith.constant 0 : index
    %c0_92 = arith.constant 0 : index
    %108 = vector.load %arg7[%c0_91, %c0_92] : memref<1x64xf32, #tpu.memory_space<vmem>>, vector<1x64xf32>
    %109 = vector.broadcast %108 : vector<1x64xf32> to vector<432x64xf32>
    %110 = arith.addf %107, %109 : vector<432x64xf32>
    %cst_93 = arith.constant 0.000000e+00 : f32
    %111 = vector.broadcast %cst_93 : f32 to vector<432x64xf32>
    %112 = arith.maximumf %110, %111 : vector<432x64xf32>
    %113 = arith.truncf %112 : vector<432x64xf32> to vector<432x64xbf16>
    %c0_94 = arith.constant 0 : index
    %c0_95 = arith.constant 0 : index
    %114 = vector.load %arg8[%c0_94, %c0_95] : memref<64x128xbf16, #tpu.memory_space<vmem>>, vector<64x128xbf16>
    %cst_96 = arith.constant dense<0.000000e+00> : vector<432x128xf32>
    %115 = tpu.matmul %113, %114, %cst_96 {dimension_numbers = #tpu.dot_dimension_numbers<[1], [0], [0], [1], [0, 0, 1, 1], [], []>} : vector<432x64xbf16>, vector<64x128xbf16>, vector<432x128xf32> -> vector<432x128xf32>
    %c0_97 = arith.constant 0 : index
    %c0_98 = arith.constant 0 : index
    %116 = vector.load %arg9[%c0_97, %c0_98] : memref<1x128xf32, #tpu.memory_space<vmem>>, vector<1x128xf32>
    %117 = vector.broadcast %116 : vector<1x128xf32> to vector<432x128xf32>
    %118 = arith.addf %115, %117 : vector<432x128xf32>
    %119 = arith.truncf %0 : vector<432x64xf32> to vector<432x64xbf16>
    %c0_99 = arith.constant 0 : index
    %c0_100 = arith.constant 0 : index
    %120 = vector.load %arg10[%c0_99, %c0_100] : memref<64x128xbf16, #tpu.memory_space<vmem>>, vector<64x128xbf16>
    %cst_101 = arith.constant dense<0.000000e+00> : vector<432x128xf32>
    %121 = tpu.matmul %119, %120, %cst_101 {dimension_numbers = #tpu.dot_dimension_numbers<[1], [0], [0], [1], [0, 0, 1, 1], [], []>} : vector<432x64xbf16>, vector<64x128xbf16>, vector<432x128xf32> -> vector<432x128xf32>
    %c0_102 = arith.constant 0 : index
    %c0_103 = arith.constant 0 : index
    %122 = vector.load %arg11[%c0_102, %c0_103] : memref<1x128xf32, #tpu.memory_space<vmem>>, vector<1x128xf32>
    %123 = vector.broadcast %122 : vector<1x128xf32> to vector<432x128xf32>
    %124 = arith.addf %121, %123 : vector<432x128xf32>
    %125 = arith.addf %118, %124 : vector<432x128xf32>
    %126 = vector.extract_strided_slice %125 {offsets = [32, 0], sizes = [16, 128], strides = [1, 1]} : vector<432x128xf32> to vector<16x128xf32>
    %c0_104 = arith.constant 0 : index
    %c0_105 = arith.constant 0 : index
    %c0_106 = arith.constant 0 : index
    %c0_107 = arith.constant 0 : index
    %127 = vector.load %arg12[%c0_104, %c0_105, %c0_106, %c0_107] : memref<1x16x16x128xf32, #tpu.memory_space<vmem>>, vector<1x1x16x128xf32>
    %128 = vector.shape_cast %127 : vector<1x1x16x128xf32> to vector<16x128xf32>
    %129 = vector.shape_cast %126 : vector<16x128xf32> to vector<1x1x16x128xf32>
    tpu.vector_store %arg12[%c0_104, %c0_105, %c0_106, %c0_107], %129 {strides = array<i32>} : memref<1x16x16x128xf32, #tpu.memory_space<vmem>>, vector<1x1x16x128xf32>,
    %130 = vector.extract_strided_slice %125 {offsets = [56, 0], sizes = [16, 128], strides = [1, 1]} : vector<432x128xf32> to vector<16x128xf32>
    %c0_108 = arith.constant 0 : index
    %c1_109 = arith.constant 1 : index
    %c0_110 = arith.constant 0 : index
    %c0_111 = arith.constant 0 : index
    %131 = vector.load %arg12[%c0_108, %c1_109, %c0_110, %c0_111] : memref<1x16x16x128xf32, #tpu.memory_space<vmem>>, vector<1x1x16x128xf32>
    %132 = vector.shape_cast %131 : vector<1x1x16x128xf32> to vector<16x128xf32>
    %133 = vector.shape_cast %130 : vector<16x128xf32> to vector<1x1x16x128xf32>
    tpu.vector_store %arg12[%c0_108, %c1_109, %c0_110, %c0_111], %133 {strides = array<i32>} : memref<1x16x16x128xf32, #tpu.memory_space<vmem>>, vector<1x1x16x128xf32>,
    %134 = vector.extract_strided_slice %125 {offsets = [80, 0], sizes = [16, 128], strides = [1, 1]} : vector<432x128xf32> to vector<16x128xf32>
    %c0_112 = arith.constant 0 : index
    %c2_113 = arith.constant 2 : index
    %c0_114 = arith.constant 0 : index
    %c0_115 = arith.constant 0 : index
    %135 = vector.load %arg12[%c0_112, %c2_113, %c0_114, %c0_115] : memref<1x16x16x128xf32, #tpu.memory_space<vmem>>, vector<1x1x16x128xf32>
    %136 = vector.shape_cast %135 : vector<1x1x16x128xf32> to vector<16x128xf32>
    %137 = vector.shape_cast %134 : vector<16x128xf32> to vector<1x1x16x128xf32>
    tpu.vector_store %arg12[%c0_112, %c2_113, %c0_114, %c0_115], %137 {strides = array<i32>} : memref<1x16x16x128xf32, #tpu.memory_space<vmem>>, vector<1x1x16x128xf32>,
    %138 = vector.extract_strided_slice %125 {offsets = [104, 0], sizes = [16, 128], strides = [1, 1]} : vector<432x128xf32> to vector<16x128xf32>
    %c0_116 = arith.constant 0 : index
    %c3_117 = arith.constant 3 : index
    %c0_118 = arith.constant 0 : index
    %c0_119 = arith.constant 0 : index
    %139 = vector.load %arg12[%c0_116, %c3_117, %c0_118, %c0_119] : memref<1x16x16x128xf32, #tpu.memory_space<vmem>>, vector<1x1x16x128xf32>
    %140 = vector.shape_cast %139 : vector<1x1x16x128xf32> to vector<16x128xf32>
    %141 = vector.shape_cast %138 : vector<16x128xf32> to vector<1x1x16x128xf32>
    tpu.vector_store %arg12[%c0_116, %c3_117, %c0_118, %c0_119], %141 {strides = array<i32>} : memref<1x16x16x128xf32, #tpu.memory_space<vmem>>, vector<1x1x16x128xf32>,
    %142 = vector.extract_strided_slice %125 {offsets = [128, 0], sizes = [16, 128], strides = [1, 1]} : vector<432x128xf32> to vector<16x128xf32>
    %c0_120 = arith.constant 0 : index
    %c4_121 = arith.constant 4 : index
    %c0_122 = arith.constant 0 : index
    %c0_123 = arith.constant 0 : index
    %143 = vector.load %arg12[%c0_120, %c4_121, %c0_122, %c0_123] : memref<1x16x16x128xf32, #tpu.memory_space<vmem>>, vector<1x1x16x128xf32>
    %144 = vector.shape_cast %143 : vector<1x1x16x128xf32> to vector<16x128xf32>
    %145 = vector.shape_cast %142 : vector<16x128xf32> to vector<1x1x16x128xf32>
    tpu.vector_store %arg12[%c0_120, %c4_121, %c0_122, %c0_123], %145 {strides = array<i32>} : memref<1x16x16x128xf32, #tpu.memory_space<vmem>>, vector<1x1x16x128xf32>,
    %146 = vector.extract_strided_slice %125 {offsets = [152, 0], sizes = [16, 128], strides = [1, 1]} : vector<432x128xf32> to vector<16x128xf32>
    %c0_124 = arith.constant 0 : index
    %c5_125 = arith.constant 5 : index
    %c0_126 = arith.constant 0 : index
    %c0_127 = arith.constant 0 : index
    %147 = vector.load %arg12[%c0_124, %c5_125, %c0_126, %c0_127] : memref<1x16x16x128xf32, #tpu.memory_space<vmem>>, vector<1x1x16x128xf32>
    %148 = vector.shape_cast %147 : vector<1x1x16x128xf32> to vector<16x128xf32>
    %149 = vector.shape_cast %146 : vector<16x128xf32> to vector<1x1x16x128xf32>
    tpu.vector_store %arg12[%c0_124, %c5_125, %c0_126, %c0_127], %149 {strides = array<i32>} : memref<1x16x16x128xf32, #tpu.memory_space<vmem>>, vector<1x1x16x128xf32>,
    %150 = vector.extract_strided_slice %125 {offsets = [176, 0], sizes = [16, 128], strides = [1, 1]} : vector<432x128xf32> to vector<16x128xf32>
    %c0_128 = arith.constant 0 : index
    %c6_129 = arith.constant 6 : index
    %c0_130 = arith.constant 0 : index
    %c0_131 = arith.constant 0 : index
    %151 = vector.load %arg12[%c0_128, %c6_129, %c0_130, %c0_131] : memref<1x16x16x128xf32, #tpu.memory_space<vmem>>, vector<1x1x16x128xf32>
    %152 = vector.shape_cast %151 : vector<1x1x16x128xf32> to vector<16x128xf32>
    %153 = vector.shape_cast %150 : vector<16x128xf32> to vector<1x1x16x128xf32>
    tpu.vector_store %arg12[%c0_128, %c6_129, %c0_130, %c0_131], %153 {strides = array<i32>} : memref<1x16x16x128xf32, #tpu.memory_space<vmem>>, vector<1x1x16x128xf32>,
    %154 = vector.extract_strided_slice %125 {offsets = [200, 0], sizes = [16, 128], strides = [1, 1]} : vector<432x128xf32> to vector<16x128xf32>
    %c0_132 = arith.constant 0 : index
    %c7_133 = arith.constant 7 : index
    %c0_134 = arith.constant 0 : index
    %c0_135 = arith.constant 0 : index
    %155 = vector.load %arg12[%c0_132, %c7_133, %c0_134, %c0_135] : memref<1x16x16x128xf32, #tpu.memory_space<vmem>>, vector<1x1x16x128xf32>
    %156 = vector.shape_cast %155 : vector<1x1x16x128xf32> to vector<16x128xf32>
    %157 = vector.shape_cast %154 : vector<16x128xf32> to vector<1x1x16x128xf32>
    tpu.vector_store %arg12[%c0_132, %c7_133, %c0_134, %c0_135], %157 {strides = array<i32>} : memref<1x16x16x128xf32, #tpu.memory_space<vmem>>, vector<1x1x16x128xf32>,
    %158 = vector.extract_strided_slice %125 {offsets = [224, 0], sizes = [16, 128], strides = [1, 1]} : vector<432x128xf32> to vector<16x128xf32>
    %c0_136 = arith.constant 0 : index
    %c8_137 = arith.constant 8 : index
    %c0_138 = arith.constant 0 : index
    %c0_139 = arith.constant 0 : index
    %159 = vector.load %arg12[%c0_136, %c8_137, %c0_138, %c0_139] : memref<1x16x16x128xf32, #tpu.memory_space<vmem>>, vector<1x1x16x128xf32>
    %160 = vector.shape_cast %159 : vector<1x1x16x128xf32> to vector<16x128xf32>
    %161 = vector.shape_cast %158 : vector<16x128xf32> to vector<1x1x16x128xf32>
    tpu.vector_store %arg12[%c0_136, %c8_137, %c0_138, %c0_139], %161 {strides = array<i32>} : memref<1x16x16x128xf32, #tpu.memory_space<vmem>>, vector<1x1x16x128xf32>,
    %162 = vector.extract_strided_slice %125 {offsets = [248, 0], sizes = [16, 128], strides = [1, 1]} : vector<432x128xf32> to vector<16x128xf32>
    %c0_140 = arith.constant 0 : index
    %c9_141 = arith.constant 9 : index
    %c0_142 = arith.constant 0 : index
    %c0_143 = arith.constant 0 : index
    %163 = vector.load %arg12[%c0_140, %c9_141, %c0_142, %c0_143] : memref<1x16x16x128xf32, #tpu.memory_space<vmem>>, vector<1x1x16x128xf32>
    %164 = vector.shape_cast %163 : vector<1x1x16x128xf32> to vector<16x128xf32>
    %165 = vector.shape_cast %162 : vector<16x128xf32> to vector<1x1x16x128xf32>
    tpu.vector_store %arg12[%c0_140, %c9_141, %c0_142, %c0_143], %165 {strides = array<i32>} : memref<1x16x16x128xf32, #tpu.memory_space<vmem>>, vector<1x1x16x128xf32>,
    %166 = vector.extract_strided_slice %125 {offsets = [272, 0], sizes = [16, 128], strides = [1, 1]} : vector<432x128xf32> to vector<16x128xf32>
    %c0_144 = arith.constant 0 : index
    %c10 = arith.constant 10 : index
    %c0_145 = arith.constant 0 : index
    %c0_146 = arith.constant 0 : index
    %167 = vector.load %arg12[%c0_144, %c10, %c0_145, %c0_146] : memref<1x16x16x128xf32, #tpu.memory_space<vmem>>, vector<1x1x16x128xf32>
    %168 = vector.shape_cast %167 : vector<1x1x16x128xf32> to vector<16x128xf32>
    %169 = vector.shape_cast %166 : vector<16x128xf32> to vector<1x1x16x128xf32>
    tpu.vector_store %arg12[%c0_144, %c10, %c0_145, %c0_146], %169 {strides = array<i32>} : memref<1x16x16x128xf32, #tpu.memory_space<vmem>>, vector<1x1x16x128xf32>,
    %170 = vector.extract_strided_slice %125 {offsets = [296, 0], sizes = [16, 128], strides = [1, 1]} : vector<432x128xf32> to vector<16x128xf32>
    %c0_147 = arith.constant 0 : index
    %c11 = arith.constant 11 : index
    %c0_148 = arith.constant 0 : index
    %c0_149 = arith.constant 0 : index
    %171 = vector.load %arg12[%c0_147, %c11, %c0_148, %c0_149] : memref<1x16x16x128xf32, #tpu.memory_space<vmem>>, vector<1x1x16x128xf32>
    %172 = vector.shape_cast %171 : vector<1x1x16x128xf32> to vector<16x128xf32>
    %173 = vector.shape_cast %170 : vector<16x128xf32> to vector<1x1x16x128xf32>
    tpu.vector_store %arg12[%c0_147, %c11, %c0_148, %c0_149], %173 {strides = array<i32>} : memref<1x16x16x128xf32, #tpu.memory_space<vmem>>, vector<1x1x16x128xf32>,
    %174 = vector.extract_strided_slice %125 {offsets = [320, 0], sizes = [16, 128], strides = [1, 1]} : vector<432x128xf32> to vector<16x128xf32>
    %c0_150 = arith.constant 0 : index
    %c12 = arith.constant 12 : index
    %c0_151 = arith.constant 0 : index
    %c0_152 = arith.constant 0 : index
    %175 = vector.load %arg12[%c0_150, %c12, %c0_151, %c0_152] : memref<1x16x16x128xf32, #tpu.memory_space<vmem>>, vector<1x1x16x128xf32>
    %176 = vector.shape_cast %175 : vector<1x1x16x128xf32> to vector<16x128xf32>
    %177 = vector.shape_cast %174 : vector<16x128xf32> to vector<1x1x16x128xf32>
    tpu.vector_store %arg12[%c0_150, %c12, %c0_151, %c0_152], %177 {strides = array<i32>} : memref<1x16x16x128xf32, #tpu.memory_space<vmem>>, vector<1x1x16x128xf32>,
    %178 = vector.extract_strided_slice %125 {offsets = [344, 0], sizes = [16, 128], strides = [1, 1]} : vector<432x128xf32> to vector<16x128xf32>
    %c0_153 = arith.constant 0 : index
    %c13 = arith.constant 13 : index
    %c0_154 = arith.constant 0 : index
    %c0_155 = arith.constant 0 : index
    %179 = vector.load %arg12[%c0_153, %c13, %c0_154, %c0_155] : memref<1x16x16x128xf32, #tpu.memory_space<vmem>>, vector<1x1x16x128xf32>
    %180 = vector.shape_cast %179 : vector<1x1x16x128xf32> to vector<16x128xf32>
    %181 = vector.shape_cast %178 : vector<16x128xf32> to vector<1x1x16x128xf32>
    tpu.vector_store %arg12[%c0_153, %c13, %c0_154, %c0_155], %181 {strides = array<i32>} : memref<1x16x16x128xf32, #tpu.memory_space<vmem>>, vector<1x1x16x128xf32>,
    %182 = vector.extract_strided_slice %125 {offsets = [368, 0], sizes = [16, 128], strides = [1, 1]} : vector<432x128xf32> to vector<16x128xf32>
    %c0_156 = arith.constant 0 : index
    %c14 = arith.constant 14 : index
    %c0_157 = arith.constant 0 : index
    %c0_158 = arith.constant 0 : index
    %183 = vector.load %arg12[%c0_156, %c14, %c0_157, %c0_158] : memref<1x16x16x128xf32, #tpu.memory_space<vmem>>, vector<1x1x16x128xf32>
    %184 = vector.shape_cast %183 : vector<1x1x16x128xf32> to vector<16x128xf32>
    %185 = vector.shape_cast %182 : vector<16x128xf32> to vector<1x1x16x128xf32>
    tpu.vector_store %arg12[%c0_156, %c14, %c0_157, %c0_158], %185 {strides = array<i32>} : memref<1x16x16x128xf32, #tpu.memory_space<vmem>>, vector<1x1x16x128xf32>,
    %186 = vector.extract_strided_slice %125 {offsets = [392, 0], sizes = [16, 128], strides = [1, 1]} : vector<432x128xf32> to vector<16x128xf32>
    %c0_159 = arith.constant 0 : index
    %c15 = arith.constant 15 : index
    %c0_160 = arith.constant 0 : index
    %c0_161 = arith.constant 0 : index
    %187 = vector.load %arg12[%c0_159, %c15, %c0_160, %c0_161] : memref<1x16x16x128xf32, #tpu.memory_space<vmem>>, vector<1x1x16x128xf32>
    %188 = vector.shape_cast %187 : vector<1x1x16x128xf32> to vector<16x128xf32>
    %189 = vector.shape_cast %186 : vector<16x128xf32> to vector<1x1x16x128xf32>
    tpu.vector_store %arg12[%c0_159, %c15, %c0_160, %c0_161], %189 {strides = array<i32>} : memref<1x16x16x128xf32, #tpu.memory_space<vmem>>, vector<1x1x16x128xf32>,
    return
  }
  func.func @transform_0(%arg0: i32) -> (i32, i32) {
    %c0_i32 = arith.constant 0 : i32
    %c0_i32_0 = arith.constant 0 : i32
    return %arg0, %c0_i32 : i32, i32
  }
  func.func @transform_1(%arg0: i32) -> (i32, i32) {
    %c0_i32 = arith.constant 0 : i32
    %c0_i32_0 = arith.constant 0 : i32
    %c0_i32_1 = arith.constant 0 : i32
    return %c0_i32, %c0_i32_0 : i32, i32
  }
  func.func @transform_2(%arg0: i32) -> (i32, i32) {
    %c0_i32 = arith.constant 0 : i32
    %c0_i32_0 = arith.constant 0 : i32
    %c0_i32_1 = arith.constant 0 : i32
    return %c0_i32, %c0_i32_0 : i32, i32
  }
  func.func @transform_3(%arg0: i32) -> (i32, i32) {
    %c0_i32 = arith.constant 0 : i32
    %c0_i32_0 = arith.constant 0 : i32
    %c0_i32_1 = arith.constant 0 : i32
    return %c0_i32, %c0_i32_0 : i32, i32
  }
  func.func @transform_4(%arg0: i32) -> (i32, i32) {
    %c0_i32 = arith.constant 0 : i32
    %c0_i32_0 = arith.constant 0 : i32
    %c0_i32_1 = arith.constant 0 : i32
    return %c0_i32, %c0_i32_0 : i32, i32
  }
  func.func @transform_5(%arg0: i32) -> (i32, i32, i32) {
    %c0_i32 = arith.constant 0 : i32
    %c0_i32_0 = arith.constant 0 : i32
    %c0_i32_1 = arith.constant 0 : i32
    %c0_i32_2 = arith.constant 0 : i32
    return %c0_i32, %c0_i32_0, %c0_i32_1 : i32, i32, i32
  }
  func.func @transform_6(%arg0: i32) -> (i32, i32) {
    %c0_i32 = arith.constant 0 : i32
    %c0_i32_0 = arith.constant 0 : i32
    %c0_i32_1 = arith.constant 0 : i32
    return %c0_i32, %c0_i32_0 : i32, i32
  }
  func.func @transform_7(%arg0: i32) -> (i32, i32) {
    %c0_i32 = arith.constant 0 : i32
    %c0_i32_0 = arith.constant 0 : i32
    %c0_i32_1 = arith.constant 0 : i32
    return %c0_i32, %c0_i32_0 : i32, i32
  }
  func.func @transform_8(%arg0: i32) -> (i32, i32) {
    %c0_i32 = arith.constant 0 : i32
    %c0_i32_0 = arith.constant 0 : i32
    %c0_i32_1 = arith.constant 0 : i32
    return %c0_i32, %c0_i32_0 : i32, i32
  }
  func.func @transform_9(%arg0: i32) -> (i32, i32) {
    %c0_i32 = arith.constant 0 : i32
    %c0_i32_0 = arith.constant 0 : i32
    %c0_i32_1 = arith.constant 0 : i32
    return %c0_i32, %c0_i32_0 : i32, i32
  }
  func.func @transform_10(%arg0: i32) -> (i32, i32) {
    %c0_i32 = arith.constant 0 : i32
    %c0_i32_0 = arith.constant 0 : i32
    %c0_i32_1 = arith.constant 0 : i32
    return %c0_i32, %c0_i32_0 : i32, i32
  }
  func.func @transform_11(%arg0: i32) -> (i32, i32, i32, i32) {
    %c0_i32 = arith.constant 0 : i32
    %c0_i32_0 = arith.constant 0 : i32
    %c0_i32_1 = arith.constant 0 : i32
    %c0_i32_2 = arith.constant 0 : i32
    return %arg0, %c0_i32, %c0_i32_0, %c0_i32_1 : i32, i32, i32, i32
  }
}

</mosaic_0001>

<llo_original>
// kernel: residual_forward.1
$region0: #{residual_forward.1}
  #allocation0 [shape = 'u32[]', space=smem, size = 0x4, offset = 0x4, fixed_abs, tag = 'smem constant byte address 0x4 - core index']
  #allocation1 [shape = 'u32[144,128]{1,0:T(1,128)}', space=vmem, size = 0x12000, scoped, tag = 'internal scratch']
  #allocation2 [shape = 'f32[496,64]{1,0:T(8,128)}', space=vmem, size = 0x3e000, scoped, tag = 'scratch operand']
  %s0 = inlined_call_operand.vmem [shape: f32[864,64], index: 0, kind: input, shape index: {}]
  %s1 = inlined_call_operand.vmem [shape: f32[1,64], index: 1, kind: input, shape index: {}]
  %s2 = inlined_call_operand.vmem [shape: f32[1,64], index: 2, kind: input, shape index: {}]
  %s3 = inlined_call_operand.vmem [shape: bf16[64,64], index: 3, kind: input, shape index: {}]
  %s4 = inlined_call_operand.vmem [shape: f32[1,64], index: 4, kind: input, shape index: {}]
  %s5 = inlined_call_operand.vmem [shape: bf16[9,64,64], index: 5, kind: input, shape index: {}]
  %s6 = inlined_call_operand.vmem [shape: f32[1,64], index: 6, kind: input, shape index: {}]
  %s7 = inlined_call_operand.vmem [shape: bf16[64,128], index: 7, kind: input, shape index: {}]
  %s8 = inlined_call_operand.vmem [shape: f32[1,128], index: 8, kind: input, shape index: {}]
  %s9 = inlined_call_operand.vmem [shape: bf16[64,128], index: 9, kind: input, shape index: {}]
  %s10 = inlined_call_operand.vmem [shape: f32[1,128], index: 10, kind: input, shape index: {}]
  %s11 = inlined_call_operand.hbm [shape: f32[2,16,16,128], index: 11, kind: output, shape index: {}]
  %s12 = sld [smem:[#allocation0]]
  $region77: #{residual_forward.1} parent=0
    _
  %s14 = ssub.s32 1, %s12
  %s15 = scalar_select 0, %s14, %s12
  $region1: #{residual_forward.1} parent=0
    #allocation3 [shape = 'u8[262144]{0}', space=vmem, size = 0x40000, scoped, tag = 'output window, operand 0']
    #allocation4 [shape = 's32[2]{0}', space=sflag, size = 0x8, scoped, tag = 'scoped memory for residual_forward.1']
    %16 = vsyncpa [#allocation4], 0
    %s17 = scalar_lea.sflag [#allocation4], 1
    %18 = vsyncpa %s17, 0
    loop: start=0, step=1, limit=4
    $region2: #{residual_forward.1} parent=1 // loop_pre_header
      _
    $region3: #{residual_forward.1} parent=1 // loop_header
      %s20 = sphi 0, %s24
      %p21 = scmp.ge.s32.totalorder %s20, 4
      %s30 = sphi 0, %s32
      %s33 = sphi 0, %s30
      %s34 = sphi 0, %s33
      %s50 = sphi 0, %s34
      %s54 = sphi 0, %s54
      %s56 = sphi 0, %s54
      %s57 = sphi 0, %s56
      %s71 = sphi 0, %s57
      %s75 = sphi 0, %s75
      %s77 = sphi 0, %s75
      %s78 = sphi 0, %s77
      %s92 = sphi 0, %s78
      %s96 = sphi 0, %s96
      %s98 = sphi 0, %s96
      %s99 = sphi 0, %s98
      %s113 = sphi 0, %s99
      %s117 = sphi 0, %s117
      %s119 = sphi 0, %s117
      %s120 = sphi 0, %s119
      %s134 = sphi 0, %s120
      %s138 = sphi 0, %s138
      %s140 = sphi 0, %s138
      %s141 = sphi 0, %s140
      %s155 = sphi 0, %s141
      %s159 = sphi 0, %s159
      %s161 = sphi 0, %s159
      %s162 = sphi 0, %s161
      %s176 = sphi 0, %s162
      %s180 = sphi 0, %s180
      %s182 = sphi 0, %s180
      %s183 = sphi 0, %s182
      %s197 = sphi 0, %s183
      %s201 = sphi 0, %s201
      %s203 = sphi 0, %s201
      %s204 = sphi 0, %s203
      %s218 = sphi 0, %s204
      %s222 = sphi 0, %s222
      %s224 = sphi 0, %s222
      %s225 = sphi 0, %s224
      %s239 = sphi 0, %s225
      %s243 = sphi 0, %s243
      %s245 = sphi 0, %s243
      %s246 = sphi 0, %s245
      %s260 = sphi 0, %s246
      %s266 = sphi 0, %s268
      %s269 = sphi 0, %s266
      %s270 = sphi 0, %s269
      %s286 = sphi 0, %s270
    $region4: #{residual_forward.1} parent=1 // loop_header_branch
      %23 = sbr.rel (%p21) target = $region8
    $region5: #{residual_forward.1} parent=1 // loop_body
      %s25 = ssub.s32 %s20, 1
      %s26 = ssub.s32 %s20, 2
      %s27 = sadd.s32 %s20, 1
      %s28 = ssub.s32 %s20, %s27
      %p29 = scmp.eq.s32.totalorder %s28, 0
      %s31 = sadd.s32 %s30, 1
      %s32 = scalar_select %p29, %s30, %s31
      %p35 = pneg %p29
      %p36 = scmp.eq.s32.totalorder %s20, 1
      %p37 = por %p35, %p36
      %p38 = scmp.ne.s32.totalorder %s30, %s33
      %p39 = scmp.eq.s32.totalorder %s20, 0
      %p40 = por %p38, %p39
      %p41 = scmp.ne.s32.totalorder %s30, %s33
      %p42 = scmp.eq.s32.totalorder %s25, 1
      %p43 = por %p41, %p42
      %p44 = scmp.ne.s32.totalorder %s33, %s34
      %p45 = scmp.eq.s32.totalorder %s25, 0
      %p46 = por %p44, %p45
      %p47 = scmp.ne.s32.totalorder %s33, %s34
      %p48 = scmp.eq.s32.totalorder %s26, 1
      %p49 = por %p47, %p48
      %p51 = scmp.ne.s32.totalorder %s34, %s50
      %p52 = scmp.eq.s32.totalorder %s26, 0
      %p53 = por %p51, %p52
      %s55 = sadd.s32 %s54, 1
      %p58 = scmp.eq.s32.totalorder %s20, 1
      %p59 = scmp.ne.s32.totalorder %s54, %s56
      %p60 = scmp.eq.s32.totalorder %s20, 0
      %p61 = por %p59, %p60
      %p62 = scmp.ne.s32.totalorder %s54, %s56
      %p63 = scmp.eq.s32.totalorder %s25, 1
      %p64 = por %p62, %p63
      %p65 = scmp.ne.s32.totalorder %s56, %s57
      %p66 = scmp.eq.s32.totalorder %s25, 0
      %p67 = por %p65, %p66
      %p68 = scmp.ne.s32.totalorder %s56, %s57
      %p69 = scmp.eq.s32.totalorder %s26, 1
      %p70 = por %p68, %p69
      %p72 = scmp.ne.s32.totalorder %s57, %s71
      %p73 = scmp.eq.s32.totalorder %s26, 0
      %p74 = por %p72, %p73
      %s76 = sadd.s32 %s75, 1
      %p79 = scmp.eq.s32.totalorder %s20, 1
      %p80 = scmp.ne.s32.totalorder %s75, %s77
      %p81 = scmp.eq.s32.totalorder %s20, 0
      %p82 = por %p80, %p81
      %p83 = scmp.ne.s32.totalorder %s75, %s77
      %p84 = scmp.eq.s32.totalorder %s25, 1
      %p85 = por %p83, %p84
      %p86 = scmp.ne.s32.totalorder %s77, %s78
      %p87 = scmp.eq.s32.totalorder %s25, 0
      %p88 = por %p86, %p87
      %p89 = scmp.ne.s32.totalorder %s77, %s78
      %p90 = scmp.eq.s32.totalorder %s26, 1
      %p91 = por %p89, %p90
      %p93 = scmp.ne.s32.totalorder %s78, %s92
      %p94 = scmp.eq.s32.totalorder %s26, 0
      %p95 = por %p93, %p94
      %s97 = sadd.s32 %s96, 1
      %p100 = scmp.eq.s32.totalorder %s20, 1
      %p101 = scmp.ne.s32.totalorder %s96, %s98
      %p102 = scmp.eq.s32.totalorder %s20, 0
      %p103 = por %p101, %p102
      %p104 = scmp.ne.s32.totalorder %s96, %s98
      %p105 = scmp.eq.s32.totalorder %s25, 1
      %p106 = por %p104, %p105
      %p107 = scmp.ne.s32.totalorder %s98, %s99
      %p108 = scmp.eq.s32.totalorder %s25, 0
      %p109 = por %p107, %p108
      %p110 = scmp.ne.s32.totalorder %s98, %s99
      %p111 = scmp.eq.s32.totalorder %s26, 1
      %p112 = por %p110, %p111
      %p114 = scmp.ne.s32.totalorder %s99, %s113
      %p115 = scmp.eq.s32.totalorder %s26, 0
      %p116 = por %p114, %p115
      %s118 = sadd.s32 %s117, 1
      %p121 = scmp.eq.s32.totalorder %s20, 1
      %p122 = scmp.ne.s32.totalorder %s117, %s119
      %p123 = scmp.eq.s32.totalorder %s20, 0
      %p124 = por %p122, %p123
      %p125 = scmp.ne.s32.totalorder %s117, %s119
      %p126 = scmp.eq.s32.totalorder %s25, 1
      %p127 = por %p125, %p126
      %p128 = scmp.ne.s32.totalorder %s119, %s120
      %p129 = scmp.eq.s32.totalorder %s25, 0
      %p130 = por %p128, %p129
      %p131 = scmp.ne.s32.totalorder %s119, %s120
      %p132 = scmp.eq.s32.totalorder %s26, 1
      %p133 = por %p131, %p132
      %p135 = scmp.ne.s32.totalorder %s120, %s134
      %p136 = scmp.eq.s32.totalorder %s26, 0
      %p137 = por %p135, %p136
      %s139 = sadd.s32 %s138, 1
      %p142 = scmp.eq.s32.totalorder %s20, 1
      %p143 = scmp.ne.s32.totalorder %s138, %s140
      %p144 = scmp.eq.s32.totalorder %s20, 0
      %p145 = por %p143, %p144
      %p146 = scmp.ne.s32.totalorder %s138, %s140
      %p147 = scmp.eq.s32.totalorder %s25, 1
      %p148 = por %p146, %p147
      %p149 = scmp.ne.s32.totalorder %s140, %s141
      %p150 = scmp.eq.s32.totalorder %s25, 0
      %p151 = por %p149, %p150
      %p152 = scmp.ne.s32.totalorder %s140, %s141
      %p153 = scmp.eq.s32.totalorder %s26, 1
      %p154 = por %p152, %p153
      %p156 = scmp.ne.s32.totalorder %s141, %s155
      %p157 = scmp.eq.s32.totalorder %s26, 0
      %p158 = por %p156, %p157
      %s160 = sadd.s32 %s159, 1
      %p163 = scmp.eq.s32.totalorder %s20, 1
      %p164 = scmp.ne.s32.totalorder %s159, %s161
      %p165 = scmp.eq.s32.totalorder %s20, 0
      %p166 = por %p164, %p165
      %p167 = scmp.ne.s32.totalorder %s159, %s161
      %p168 = scmp.eq.s32.totalorder %s25, 1
      %p169 = por %p167, %p168
      %p170 = scmp.ne.s32.totalorder %s161, %s162
      %p171 = scmp.eq.s32.totalorder %s25, 0
      %p172 = por %p170, %p171
      %p173 = scmp.ne.s32.totalorder %s161, %s162
      %p174 = scmp.eq.s32.totalorder %s26, 1
      %p175 = por %p173, %p174
      %p177 = scmp.ne.s32.totalorder %s162, %s176
      %p178 = scmp.eq.s32.totalorder %s26, 0
      %p179 = por %p177, %p178
      %s181 = sadd.s32 %s180, 1
      %p184 = scmp.eq.s32.totalorder %s20, 1
      %p185 = scmp.ne.s32.totalorder %s180, %s182
      %p186 = scmp.eq.s32.totalorder %s20, 0
      %p187 = por %p185, %p186
      %p188 = scmp.ne.s32.totalorder %s180, %s182
      %p189 = scmp.eq.s32.totalorder %s25, 1
      %p190 = por %p188, %p189
      %p191 = scmp.ne.s32.totalorder %s182, %s183
      %p192 = scmp.eq.s32.totalorder %s25, 0
      %p193 = por %p191, %p192
      %p194 = scmp.ne.s32.totalorder %s182, %s183
      %p195 = scmp.eq.s32.totalorder %s26, 1
      %p196 = por %p194, %p195
      %p198 = scmp.ne.s32.totalorder %s183, %s197
      %p199 = scmp.eq.s32.totalorder %s26, 0
      %p200 = por %p198, %p199
      %s202 = sadd.s32 %s201, 1
      %p205 = scmp.eq.s32.totalorder %s20, 1
      %p206 = scmp.ne.s32.totalorder %s201, %s203
      %p207 = scmp.eq.s32.totalorder %s20, 0
      %p208 = por %p206, %p207
      %p209 = scmp.ne.s32.totalorder %s201, %s203
      %p210 = scmp.eq.s32.totalorder %s25, 1
      %p211 = por %p209, %p210
      %p212 = scmp.ne.s32.totalorder %s203, %s204
      %p213 = scmp.eq.s32.totalorder %s25, 0
      %p214 = por %p212, %p213
      %p215 = scmp.ne.s32.totalorder %s203, %s204
      %p216 = scmp.eq.s32.totalorder %s26, 1
      %p217 = por %p215, %p216
      %p219 = scmp.ne.s32.totalorder %s204, %s218
      %p220 = scmp.eq.s32.totalorder %s26, 0
      %p221 = por %p219, %p220
      %s223 = sadd.s32 %s222, 1
      %p226 = scmp.eq.s32.totalorder %s20, 1
      %p227 = scmp.ne.s32.totalorder %s222, %s224
      %p228 = scmp.eq.s32.totalorder %s20, 0
      %p229 = por %p227, %p228
      %p230 = scmp.ne.s32.totalorder %s222, %s224
      %p231 = scmp.eq.s32.totalorder %s25, 1
      %p232 = por %p230, %p231
      %p233 = scmp.ne.s32.totalorder %s224, %s225
      %p234 = scmp.eq.s32.totalorder %s25, 0
      %p235 = por %p233, %p234
      %p236 = scmp.ne.s32.totalorder %s224, %s225
      %p237 = scmp.eq.s32.totalorder %s26, 1
      %p238 = por %p236, %p237
      %p240 = scmp.ne.s32.totalorder %s225, %s239
      %p241 = scmp.eq.s32.totalorder %s26, 0
      %p242 = por %p240, %p241
      %s244 = sadd.s32 %s243, 1
      %p247 = scmp.eq.s32.totalorder %s20, 1
      %p248 = scmp.ne.s32.totalorder %s243, %s245
      %p249 = scmp.eq.s32.totalorder %s20, 0
      %p250 = por %p248, %p249
      %p251 = scmp.ne.s32.totalorder %s243, %s245
      %p252 = scmp.eq.s32.totalorder %s25, 1
      %p253 = por %p251, %p252
      %p254 = scmp.ne.s32.totalorder %s245, %s246
      %p255 = scmp.eq.s32.totalorder %s25, 0
      %p256 = por %p254, %p255
      %p257 = scmp.ne.s32.totalorder %s245, %s246
      %p258 = scmp.eq.s32.totalorder %s26, 1
      %p259 = por %p257, %p258
      %p261 = scmp.ne.s32.totalorder %s246, %s260
      %p262 = scmp.eq.s32.totalorder %s26, 0
      %p263 = por %p261, %p262
      %s264 = ssub.s32 %s20, %s27
      %p265 = scmp.eq.s32.totalorder %s264, 0
      %s267 = sadd.s32 %s266, 1
      %s268 = scalar_select %p265, %s266, %s267
      %p271 = pneg %p265
      %p272 = scmp.eq.s32.totalorder %s20, 1
      %p273 = por %p271, %p272
      %p274 = scmp.ne.s32.totalorder %s266, %s269
      %p275 = scmp.eq.s32.totalorder %s20, 0
      %p276 = por %p274, %p275
      %p277 = scmp.ne.s32.totalorder %s266, %s269
      %p278 = scmp.eq.s32.totalorder %s25, 1
      %p279 = por %p277, %p278
      %p280 = scmp.ne.s32.totalorder %s269, %s270
      %p281 = scmp.eq.s32.totalorder %s25, 0
      %p282 = por %p280, %p281
      %p283 = scmp.ne.s32.totalorder %s269, %s270
      %p284 = scmp.eq.s32.totalorder %s26, 1
      %p285 = por %p283, %p284
      %p287 = scmp.ne.s32.totalorder %s270, %s286
      %p288 = scmp.eq.s32.totalorder %s26, 0
      %p289 = por %p287, %p288
      %p290 = scmp.le.s32.totalorder 1, %s20
      %p291 = scmp.lt.s32.totalorder %s20, 3
      %p292 = pnand %p290, %p291
      %p293 = pneg %p292
      // Predicated region
      $region9: #{residual_forward.1} parent=5 // pred_check
        _
      $region10: #{residual_forward.1} parent=5 // pred_check_branch
        %295 = sbr.rel (%p292) target = $region12
      $region11: #{residual_forward.1} parent=5 // pred_region
        %s296 = ssub.s32 %s20, 1
        // Predicated region
        $region13: #{residual_forward.1} parent=11 // pred_check
          %p297 = pneg %p67
        $region14: #{residual_forward.1} parent=11 // pred_check_branch
          %299 = sbr.rel (%p297) target = $region16
        $region15: #{residual_forward.1} parent=11 // pred_region
          _
        $region16: #{residual_forward.1} parent=11 // pred_fallthru
          _
        // Predicated region
        $region17: #{residual_forward.1} parent=11 // pred_check
          %p300 = pneg %p88
        $region18: #{residual_forward.1} parent=11 // pred_check_branch
          %302 = sbr.rel (%p300) target = $region20
        $region19: #{residual_forward.1} parent=11 // pred_region
          _
        $region20: #{residual_forward.1} parent=11 // pred_fallthru
          _
        // Predicated region
        $region21: #{residual_forward.1} parent=11 // pred_check
          %p303 = pneg %p109
        $region22: #{residual_forward.1} parent=11 // pred_check_branch
          %305 = sbr.rel (%p303) target = $region24
        $region23: #{residual_forward.1} parent=11 // pred_region
          _
        $region24: #{residual_forward.1} parent=11 // pred_fallthru
          _
        // Predicated region
        $region25: #{residual_forward.1} parent=11 // pred_check
          %p306 = pneg %p130
        $region26: #{residual_forward.1} parent=11 // pred_check_branch
          %308 = sbr.rel (%p306) target = $region28
        $region27: #{residual_forward.1} parent=11 // pred_region
          _
        $region28: #{residual_forward.1} parent=11 // pred_fallthru
          _
        // Predicated region
        $region29: #{residual_forward.1} parent=11 // pred_check
          %p309 = pneg %p151
        $region30: #{residual_forward.1} parent=11 // pred_check_branch
          %311 = sbr.rel (%p309) target = $region32
        $region31: #{residual_forward.1} parent=11 // pred_region
          _
        $region32: #{residual_forward.1} parent=11 // pred_fallthru
          _
        // Predicated region
        $region33: #{residual_forward.1} parent=11 // pred_check
          %p312 = pneg %p172
        $region34: #{residual_forward.1} parent=11 // pred_check_branch
          %314 = sbr.rel (%p312) target = $region36
        $region35: #{residual_forward.1} parent=11 // pred_region
          _
        $region36: #{residual_forward.1} parent=11 // pred_fallthru
          _
        // Predicated region
        $region37: #{residual_forward.1} parent=11 // pred_check
          %p315 = pneg %p193
        $region38: #{residual_forward.1} parent=11 // pred_check_branch
          %317 = sbr.rel (%p315) target = $region40
        $region39: #{residual_forward.1} parent=11 // pred_region
          _
        $region40: #{residual_forward.1} parent=11 // pred_fallthru
          _
        // Predicated region
        $region41: #{residual_forward.1} parent=11 // pred_check
          %p318 = pneg %p214
        $region42: #{residual_forward.1} parent=11 // pred_check_branch
          %320 = sbr.rel (%p318) target = $region44
        $region43: #{residual_forward.1} parent=11 // pred_region
          _
        $region44: #{residual_forward.1} parent=11 // pred_fallthru
          _
        // Predicated region
        $region45: #{residual_forward.1} parent=11 // pred_check
          %p321 = pneg %p235
        $region46: #{residual_forward.1} parent=11 // pred_check_branch
          %323 = sbr.rel (%p321) target = $region48
        $region47: #{residual_forward.1} parent=11 // pred_region
          _
        $region48: #{residual_forward.1} parent=11 // pred_fallthru
          _
        // Predicated region
        $region49: #{residual_forward.1} parent=11 // pred_check
          %p324 = pneg %p256
        $region50: #{residual_forward.1} parent=11 // pred_check_branch
          %326 = sbr.rel (%p324) target = $region52
        $region51: #{residual_forward.1} parent=11 // pred_region
          _
        $region52: #{residual_forward.1} parent=11 // pred_fallthru
          _
      $region12: #{residual_forward.1} parent=5 // pred_fallthru
        _
      %p327 = scmp.lt.s32.totalorder %s20, 2
      // Predicated region
      $region53: #{residual_forward.1} parent=5 // pred_check
        %p328 = pneg %p327
      $region54: #{residual_forward.1} parent=5 // pred_check_branch
        %330 = sbr.rel (%p328) target = $region56
      $region55: #{residual_forward.1} parent=5 // pred_region
        // Predicated region
        $region57: #{residual_forward.1} parent=55 // pred_check
          %p331 = pneg %p40
        $region58: #{residual_forward.1} parent=55 // pred_check_branch
          %333 = sbr.rel (%p331) target = $region60
        $region59: #{residual_forward.1} parent=55 // pred_region
          %s334 = smul.u32 54, %s20
          %p335 = scmp.lt.s32.totalorder %s334, 107
          %s336 = scalar_select %p335, %s334, 107
          %s337 = smul.addr %s336, 8
          %s338 = scalar_lea.vmem %s0, %s337
          %s339 = smul.u32 54, %s20
        $region60: #{residual_forward.1} parent=55 // pred_fallthru
          _
      $region56: #{residual_forward.1} parent=5 // pred_fallthru
        _
      %p340 = scmp.le.s32.totalorder 1, %s20
      %p341 = scmp.lt.s32.totalorder %s20, 3
      %p342 = pnand %p340, %p341
      %p343 = pneg %p342
      // Predicated region
      $region61: #{residual_forward.1} parent=5 // pred_check
        _
      $region62: #{residual_forward.1} parent=5 // pred_check_branch
        %345 = sbr.rel (%p342) target = $region64
      $region63: #{residual_forward.1} parent=5 // pred_region
        %s346 = ssub.s32 %s20, 1
        %s347 = smul.u32 54, %s25
        %p348 = scmp.lt.s32.totalorder %s347, 107
        %s349 = scalar_select %p348, %s347, 107
        %s350 = smul.addr %s349, 8
        %s351 = scalar_lea.vmem %s0, %s350
        %p352 = pneg %p46
        %p353 = pneg %p43
        %p354 = pneg %p67
        %p355 = pneg %p64
        %p356 = pneg %p88
        %p357 = pneg %p85
        %p358 = pneg %p109
        %p359 = pneg %p106
        %p360 = pneg %p130
        %p361 = pneg %p127
        %p362 = pneg %p151
        %p363 = pneg %p148
        %p364 = pneg %p172
        %p365 = pneg %p169
        %p366 = pneg %p193
        %p367 = pneg %p190
        %p368 = pneg %p214
        %p369 = pneg %p211
        %p370 = pneg %p235
        %p371 = pneg %p232
        %p372 = pneg %p256
        %p373 = pneg %p253
        %p374 = pneg %p282
        %p375 = pneg %p279
        %s376 = sand.u32 %s269, 1
        %s377 = scalar_lea.sflag [#allocation4], %s376
        %s378 = sand.u32 %s269, 1
        %s379 = smul.addr %s378, 256
        %s380 = scalar_lea.vmem [#allocation3], %s379
        %s381 = smul.u32 54, %s25
        %p382 = scmp.lt.s32.totalorder %s381, 107
        %s383 = scalar_select %p382, %s381, 107
        %s384 = smul.addr %s383, 8
        %s385 = scalar_lea.vmem %s0, %s384
        %s386 = smul.u32 54, %s25
        %v388 = vld [vmem:[%s385] sm:$0xff]
        %v389 = vld [vmem:[%s385 + $0x8] sm:$0xff]
        %v390 = vld [vmem:[%s385 + $0x10] sm:$0xff]
        %v391 = vld [vmem:[%s385 + $0x18] sm:$0xff]
        %v392 = vld [vmem:[%s385 + $0x20] sm:$0xff]
        %v393 = vld [vmem:[%s385 + $0x28] sm:$0xff]
        %v394 = vld [vmem:[%s385 + $0x30] sm:$0xff]
        %v395 = vld [vmem:[%s385 + $0x38] sm:$0xff]
        %v396 = vld [vmem:[%s385 + $0x40] sm:$0xff]
        %v397 = vld [vmem:[%s385 + $0x48] sm:$0xff]
        %v398 = vld [vmem:[%s385 + $0x50] sm:$0xff]
        %v399 = vld [vmem:[%s385 + $0x58] sm:$0xff]
        %v400 = vld [vmem:[%s385 + $0x60] sm:$0xff]
        %v401 = vld [vmem:[%s385 + $0x68] sm:$0xff]
        %v402 = vld [vmem:[%s385 + $0x70] sm:$0xff]
        %v403 = vld [vmem:[%s385 + $0x78] sm:$0xff]
        %v404 = vld [vmem:[%s385 + $0x80] sm:$0xff]
        %v405 = vld [vmem:[%s385 + $0x88] sm:$0xff]
        %v406 = vld [vmem:[%s385 + $0x90] sm:$0xff]
        %v407 = vld [vmem:[%s385 + $0x98] sm:$0xff]
        %v408 = vld [vmem:[%s385 + $0xa0] sm:$0xff]
        %v409 = vld [vmem:[%s385 + $0xa8] sm:$0xff]
        %v410 = vld [vmem:[%s385 + $0xb0] sm:$0xff]
        %v411 = vld [vmem:[%s385 + $0xb8] sm:$0xff]
        %v412 = vld [vmem:[%s385 + $0xc0] sm:$0xff]
        %v413 = vld [vmem:[%s385 + $0xc8] sm:$0xff]
        %v414 = vld [vmem:[%s385 + $0xd0] sm:$0xff]
        %v415 = vld [vmem:[%s385 + $0xd8] sm:$0xff]
        %v416 = vld [vmem:[%s385 + $0xe0] sm:$0xff]
        %v417 = vld [vmem:[%s385 + $0xe8] sm:$0xff]
        %v418 = vld [vmem:[%s385 + $0xf0] sm:$0xff]
        %v419 = vld [vmem:[%s385 + $0xf8] sm:$0xff]
        %v420 = vld [vmem:[%s385 + $0x100] sm:$0xff]
        %v421 = vld [vmem:[%s385 + $0x108] sm:$0xff]
        %v422 = vld [vmem:[%s385 + $0x110] sm:$0xff]
        %v423 = vld [vmem:[%s385 + $0x118] sm:$0xff]
        %v424 = vld [vmem:[%s385 + $0x120] sm:$0xff]
        %v425 = vld [vmem:[%s385 + $0x128] sm:$0xff]
        %v426 = vld [vmem:[%s385 + $0x130] sm:$0xff]
        %v427 = vld [vmem:[%s385 + $0x138] sm:$0xff]
        %v428 = vld [vmem:[%s385 + $0x140] sm:$0xff]
        %v429 = vld [vmem:[%s385 + $0x148] sm:$0xff]
        %v430 = vld [vmem:[%s385 + $0x150] sm:$0xff]
        %v431 = vld [vmem:[%s385 + $0x158] sm:$0xff]
        %v432 = vld [vmem:[%s385 + $0x160] sm:$0xff]
        %v433 = vld [vmem:[%s385 + $0x168] sm:$0xff]
        %v434 = vld [vmem:[%s385 + $0x170] sm:$0xff]
        %v435 = vld [vmem:[%s385 + $0x178] sm:$0xff]
        %v436 = vld [vmem:[%s385 + $0x180] sm:$0xff]
        %v437 = vld [vmem:[%s385 + $0x188] sm:$0xff]
        %v438 = vld [vmem:[%s385 + $0x190] sm:$0xff]
        %v439 = vld [vmem:[%s385 + $0x198] sm:$0xff]
        %v440 = vld [vmem:[%s385 + $0x1a0] sm:$0xff]
        %v441 = vld [vmem:[%s385 + $0x1a8] sm:$0xff]
        %v442 = vld [vmem:[%s1] sm:$0x1]
        %v444 = vlaneseq
        %v445 = vshrl.u32 %v444, 7
        %v446 = vsub.s32 0, %v445
        %v447 = vrot.slane %v442, %v446
        %v449 = vmul.f32 %v388, %v447
        %v450 = vmul.f32 %v389, %v447
        %v451 = vmul.f32 %v390, %v447
        %v452 = vmul.f32 %v391, %v447
        %v453 = vmul.f32 %v392, %v447
        %v454 = vmul.f32 %v393, %v447
        %v455 = vmul.f32 %v394, %v447
        %v456 = vmul.f32 %v395, %v447
        %v457 = vmul.f32 %v396, %v447
        %v458 = vmul.f32 %v397, %v447
        %v459 = vmul.f32 %v398, %v447
        %v460 = vmul.f32 %v399, %v447
        %v461 = vmul.f32 %v400, %v447
        %v462 = vmul.f32 %v401, %v447
        %v463 = vmul.f32 %v402, %v447
        %v464 = vmul.f32 %v403, %v447
        %v465 = vmul.f32 %v404, %v447
        %v466 = vmul.f32 %v405, %v447
        %v467 = vmul.f32 %v406, %v447
        %v468 = vmul.f32 %v407, %v447
        %v469 = vmul.f32 %v408, %v447
        %v470 = vmul.f32 %v409, %v447
        %v471 = vmul.f32 %v410, %v447
        %v472 = vmul.f32 %v411, %v447
        %v473 = vmul.f32 %v412, %v447
        %v474 = vmul.f32 %v413, %v447
        %v475 = vmul.f32 %v414, %v447
        %v476 = vmul.f32 %v415, %v447
        %v477 = vmul.f32 %v416, %v447
        %v478 = vmul.f32 %v417, %v447
        %v479 = vmul.f32 %v418, %v447
        %v480 = vmul.f32 %v419, %v447
        %v481 = vmul.f32 %v420, %v447
        %v482 = vmul.f32 %v421, %v447
        %v483 = vmul.f32 %v422, %v447
        %v484 = vmul.f32 %v423, %v447
        %v485 = vmul.f32 %v424, %v447
        %v486 = vmul.f32 %v425, %v447
        %v487 = vmul.f32 %v426, %v447
        %v488 = vmul.f32 %v427, %v447
        %v489 = vmul.f32 %v428, %v447
        %v490 = vmul.f32 %v429, %v447
        %v491 = vmul.f32 %v430, %v447
        %v492 = vmul.f32 %v431, %v447
        %v493 = vmul.f32 %v432, %v447
        %v494 = vmul.f32 %v433, %v447
        %v495 = vmul.f32 %v434, %v447
        %v496 = vmul.f32 %v435, %v447
        %v497 = vmul.f32 %v436, %v447
        %v498 = vmul.f32 %v437, %v447
        %v499 = vmul.f32 %v438, %v447
        %v500 = vmul.f32 %v439, %v447
        %v501 = vmul.f32 %v440, %v447
        %v502 = vmul.f32 %v441, %v447
        %v503 = vld [vmem:[%s2] sm:$0x1]
        %v505 = vlaneseq
        %v506 = vshrl.u32 %v505, 7
        %v507 = vsub.s32 0, %v506
        %v508 = vrot.slane %v503, %v507
        %v510 = vadd.f32 %v449, %v508
        %v511 = vadd.f32 %v450, %v508
        %v512 = vadd.f32 %v451, %v508
        %v513 = vadd.f32 %v452, %v508
        %v514 = vadd.f32 %v453, %v508
        %v515 = vadd.f32 %v454, %v508
        %v516 = vadd.f32 %v455, %v508
        %v517 = vadd.f32 %v456, %v508
        %v518 = vadd.f32 %v457, %v508
        %v519 = vadd.f32 %v458, %v508
        %v520 = vadd.f32 %v459, %v508
        %v521 = vadd.f32 %v460, %v508
        %v522 = vadd.f32 %v461, %v508
        %v523 = vadd.f32 %v462, %v508
        %v524 = vadd.f32 %v463, %v508
        %v525 = vadd.f32 %v464, %v508
        %v526 = vadd.f32 %v465, %v508
        %v527 = vadd.f32 %v466, %v508
        %v528 = vadd.f32 %v467, %v508
        %v529 = vadd.f32 %v468, %v508
        %v530 = vadd.f32 %v469, %v508
        %v531 = vadd.f32 %v470, %v508
        %v532 = vadd.f32 %v471, %v508
        %v533 = vadd.f32 %v472, %v508
        %v534 = vadd.f32 %v473, %v508
        %v535 = vadd.f32 %v474, %v508
        %v536 = vadd.f32 %v475, %v508
        %v537 = vadd.f32 %v476, %v508
        %v538 = vadd.f32 %v477, %v508
        %v539 = vadd.f32 %v478, %v508
        %v540 = vadd.f32 %v479, %v508
        %v541 = vadd.f32 %v480, %v508
        %v542 = vadd.f32 %v481, %v508
        %v543 = vadd.f32 %v482, %v508
        %v544 = vadd.f32 %v483, %v508
        %v545 = vadd.f32 %v484, %v508
        %v546 = vadd.f32 %v485, %v508
        %v547 = vadd.f32 %v486, %v508
        %v548 = vadd.f32 %v487, %v508
        %v549 = vadd.f32 %v488, %v508
        %v550 = vadd.f32 %v489, %v508
        %v551 = vadd.f32 %v490, %v508
        %v552 = vadd.f32 %v491, %v508
        %v553 = vadd.f32 %v492, %v508
        %v554 = vadd.f32 %v493, %v508
        %v555 = vadd.f32 %v494, %v508
        %v556 = vadd.f32 %v495, %v508
        %v557 = vadd.f32 %v496, %v508
        %v558 = vadd.f32 %v497, %v508
        %v559 = vadd.f32 %v498, %v508
        %v560 = vadd.f32 %v499, %v508
        %v561 = vadd.f32 %v500, %v508
        %v562 = vadd.f32 %v501, %v508
        %v563 = vadd.f32 %v502, %v508
        %v564 = vmax.f32 %v510, 0.0
        %v565 = vmax.f32 %v511, 0.0
        %v566 = vmax.f32 %v512, 0.0
        %v567 = vmax.f32 %v513, 0.0
        %v568 = vmax.f32 %v514, 0.0
        %v569 = vmax.f32 %v515, 0.0
        %v570 = vmax.f32 %v516, 0.0
        %v571 = vmax.f32 %v517, 0.0
        %v572 = vmax.f32 %v518, 0.0
        %v573 = vmax.f32 %v519, 0.0
        %v574 = vmax.f32 %v520, 0.0
        %v575 = vmax.f32 %v521, 0.0
        %v576 = vmax.f32 %v522, 0.0
        %v577 = vmax.f32 %v523, 0.0
        %v578 = vmax.f32 %v524, 0.0
        %v579 = vmax.f32 %v525, 0.0
        %v580 = vmax.f32 %v526, 0.0
        %v581 = vmax.f32 %v527, 0.0
        %v582 = vmax.f32 %v528, 0.0
        %v583 = vmax.f32 %v529, 0.0
        %v584 = vmax.f32 %v530, 0.0
        %v585 = vmax.f32 %v531, 0.0
        %v586 = vmax.f32 %v532, 0.0
        %v587 = vmax.f32 %v533, 0.0
        %v588 = vmax.f32 %v534, 0.0
        %v589 = vmax.f32 %v535, 0.0
        %v590 = vmax.f32 %v536, 0.0
        %v591 = vmax.f32 %v537, 0.0
        %v592 = vmax.f32 %v538, 0.0
        %v593 = vmax.f32 %v539, 0.0
        %v594 = vmax.f32 %v540, 0.0
        %v595 = vmax.f32 %v541, 0.0
        %v596 = vmax.f32 %v542, 0.0
        %v597 = vmax.f32 %v543, 0.0
        %v598 = vmax.f32 %v544, 0.0
        %v599 = vmax.f32 %v545, 0.0
        %v600 = vmax.f32 %v546, 0.0
        %v601 = vmax.f32 %v547, 0.0
        %v602 = vmax.f32 %v548, 0.0
        %v603 = vmax.f32 %v549, 0.0
        %v604 = vmax.f32 %v550, 0.0
        %v605 = vmax.f32 %v551, 0.0
        %v606 = vmax.f32 %v552, 0.0
        %v607 = vmax.f32 %v553, 0.0
        %v608 = vmax.f32 %v554, 0.0
        %v609 = vmax.f32 %v555, 0.0
        %v610 = vmax.f32 %v556, 0.0
        %v611 = vmax.f32 %v557, 0.0
        %v612 = vmax.f32 %v558, 0.0
        %v613 = vmax.f32 %v559, 0.0
        %v614 = vmax.f32 %v560, 0.0
        %v615 = vmax.f32 %v561, 0.0
        %v616 = vmax.f32 %v562, 0.0
        %v617 = vmax.f32 %v563, 0.0
        %v618 = vpack.c.bf16 %v565, %v564
        %v619 = vpack.c.bf16 %v567, %v566
        %v620 = vpack.c.bf16 %v569, %v568
        %v621 = vpack.c.bf16 %v571, %v570
        %v622 = vpack.c.bf16 %v573, %v572
        %v623 = vpack.c.bf16 %v575, %v574
        %v624 = vpack.c.bf16 %v577, %v576
        %v625 = vpack.c.bf16 %v579, %v578
        %v626 = vpack.c.bf16 %v581, %v580
        %v627 = vpack.c.bf16 %v583, %v582
        %v628 = vpack.c.bf16 %v585, %v584
        %v629 = vpack.c.bf16 %v587, %v586
        %v630 = vpack.c.bf16 %v589, %v588
        %v631 = vpack.c.bf16 %v591, %v590
        %v632 = vpack.c.bf16 %v593, %v592
        %v633 = vpack.c.bf16 %v595, %v594
        %v634 = vpack.c.bf16 %v597, %v596
        %v635 = vpack.c.bf16 %v599, %v598
        %v636 = vpack.c.bf16 %v601, %v600
        %v637 = vpack.c.bf16 %v603, %v602
        %v638 = vpack.c.bf16 %v605, %v604
        %v639 = vpack.c.bf16 %v607, %v606
        %v640 = vpack.c.bf16 %v609, %v608
        %v641 = vpack.c.bf16 %v611, %v610
        %v642 = vpack.c.bf16 %v613, %v612
        %v643 = vpack.c.bf16 %v615, %v614
        %v644 = vpack.c.bf16 %v617, %v616
        %v645 = vld [vmem:[%s3] sm:$0xf]
        %v646 = vld [vmem:[%s3 + $0x4] sm:$0xf]
        %v647 = vld [vmem:[%s3 + $0x8] sm:$0xf]
        %v648 = vld [vmem:[%s3 + $0xc] sm:$0xf]
        %v649 = vld [vmem:[%s3 + $0x10] sm:$0xf]
        %v650 = vld [vmem:[%s3 + $0x14] sm:$0xf]
        %v651 = vld [vmem:[%s3 + $0x18] sm:$0xf]
        %v652 = vld [vmem:[%s3 + $0x1c] sm:$0xf]
        %v653 = vld [vmem:[%s4] sm:$0x1]
        %v655 = vlaneseq
        %v656 = vshrl.u32 %v655, 7
        %v657 = vsub.s32 0, %v656
        %v658 = vrot.slane %v653, %v657
        %v668 = vunpack.c.l.b16 %v645
        %v669 = vunpack.c.l.b16 %v646
        %v670 = vunpack.c.l.b16 %v647
        %v671 = vunpack.c.l.b16 %v648
        %v672 = vunpack.c.l.b16 %v649
        %v673 = vunpack.c.l.b16 %v650
        %v674 = vunpack.c.l.b16 %v651
        %v675 = vunpack.c.l.b16 %v652
        %v676 = vpack.c.b16 %v669, %v668
        %v677 = vpack.c.b16 %v671, %v670
        %v678 = vpack.c.b16 %v673, %v672
        %v679 = vpack.c.b16 %v675, %v674
        %vm684 = vcmask 523264
        %v686 = vsel %vm684, %v618, 0
        %v689 = vsel %vm684, %v619, 0
        %v692 = vsel %vm684, %v620, 0
        %v695 = vsel %vm684, %v621, 0
        %v698 = vsel %vm684, %v622, 0
        %v701 = vsel %vm684, %v623, 0
        %v704 = vsel %vm684, %v624, 0
        %v707 = vsel %vm684, %v625, 0
        %v710 = vsel %vm684, %v626, 0
        %v713 = vsel %vm684, %v627, 0
        %v716 = vsel %vm684, %v628, 0
        %v719 = vsel %vm684, %v629, 0
        %v722 = vsel %vm684, %v630, 0
        %v725 = vsel %vm684, %v631, 0
        %v728 = vsel %vm684, %v632, 0
        %v731 = vsel %vm684, %v633, 0
        %v734 = vsel %vm684, %v634, 0
        %v737 = vsel %vm684, %v635, 0
        %v740 = vsel %vm684, %v636, 0
        %v743 = vsel %vm684, %v637, 0
        %v746 = vsel %vm684, %v638, 0
        %v749 = vsel %vm684, %v639, 0
        %v752 = vsel %vm684, %v640, 0
        %v755 = vsel %vm684, %v641, 0
        %v758 = vsel %vm684, %v642, 0
        %v761 = vsel %vm684, %v643, 0
        %v764 = vsel %vm684, %v644, 0
        %766 = vmatprep.subr.bf16.mxu0 0
        %767 = vmatpush1.bf16.msra.mxu0 0
        %768 = vmatprep.subr.bf16.mxu0 0
        %769 = vmatpush1.bf16.msra.mxu0 0
        %770 = vmatprep.subr.bf16.mxu0 0
        %771 = vmatpush1.bf16.msra.mxu0 0
        %772 = vmatprep.subr.bf16.mxu0 0
        %773 = vmatpush1.bf16.msra.mxu0 0
        %774 = vmatprep.subr.bf16.mxu0 0
        %775 = vmatpush1.bf16.msra.mxu0 %v679
        %776 = vmatprep.subr.bf16.mxu0 0
        %777 = vmatpush1.bf16.msra.mxu0 %v678
        %778 = vmatprep.subr.bf16.mxu0 0
        %779 = vmatpush1.bf16.msra.mxu0 %v677
        %780 = vmatprep.subr.bf16.mxu0 0
        %781 = vmatpush1.bf16.msra.mxu0 %v676
        %782 = vmatprep.subr.bf16.mxu0 0
        %783 = vmatpush2.bf16.msra.mxu0 0
        %784 = vmatprep.subr.bf16.mxu0 0
        %785 = vmatpush2.bf16.msra.mxu0 0
        %786 = vmatprep.subr.bf16.mxu0 0
        %787 = vmatpush2.bf16.msra.mxu0 0
        %788 = vmatprep.subr.bf16.mxu0 0
        %789 = vmatpush2.bf16.msra.mxu0 0
        %790 = vmatprep.subr.bf16.mxu0 0
        %791 = vmatpush2.bf16.msra.mxu0 0
        %792 = vmatprep.subr.bf16.mxu0 0
        %793 = vmatpush2.bf16.msra.mxu0 0
        %794 = vmatprep.subr.bf16.mxu0 0
        %795 = vmatpush2.bf16.msra.mxu0 0
        %796 = vmatprep.subr.bf16.mxu0 0
        %797 = vmatpush2.bf16.msra.mxu0 0
        %798 = vmatprep.mubr.bf16.mxu0 0
        %799 = vmatmul.mubr.bf16.gmra.mxu0 %v686
        %v800 = vpop.f32.mrf.mxu0
        %v801 = vadd.f32 %v658, %v800
        %v802 = vpop.f32.mrf.mxu0
        %v803 = vpop.f32.mrf.mxu0
        %v804 = vadd.f32 %v658, %v803
        %v805 = vpop.f32.mrf.mxu0
        %806 = vmatprep.mubr.bf16.mxu0 0
        %807 = vmatmul.mubr.bf16.gmra.mxu0 %v689
        %v808 = vpop.f32.mrf.mxu0
        %v809 = vadd.f32 %v658, %v808
        %v810 = vpop.f32.mrf.mxu0
        %v811 = vpop.f32.mrf.mxu0
        %v812 = vadd.f32 %v658, %v811
        %v813 = vpop.f32.mrf.mxu0
        %814 = vmatprep.mubr.bf16.mxu0 0
        %815 = vmatmul.mubr.bf16.gmra.mxu0 %v692
        %v816 = vpop.f32.mrf.mxu0
        %v817 = vadd.f32 %v658, %v816
        %v818 = vpop.f32.mrf.mxu0
        %v819 = vpop.f32.mrf.mxu0
        %v820 = vadd.f32 %v658, %v819
        %v821 = vpop.f32.mrf.mxu0
        %822 = vmatprep.mubr.bf16.mxu0 0
        %823 = vmatmul.mubr.bf16.gmra.mxu0 %v695
        %v824 = vpop.f32.mrf.mxu0
        %v825 = vadd.f32 %v658, %v824
        %v826 = vpop.f32.mrf.mxu0
        %v827 = vpop.f32.mrf.mxu0
        %v828 = vadd.f32 %v658, %v827
        %v829 = vpop.f32.mrf.mxu0
        %830 = vmatprep.mubr.bf16.mxu0 0
        %831 = vmatmul.mubr.bf16.gmra.mxu0 %v698
        %v832 = vpop.f32.mrf.mxu0
        %v833 = vadd.f32 %v658, %v832
        %v834 = vpop.f32.mrf.mxu0
        %v835 = vpop.f32.mrf.mxu0
        %v836 = vadd.f32 %v658, %v835
        %v837 = vpop.f32.mrf.mxu0
        %838 = vmatprep.mubr.bf16.mxu0 0
        %839 = vmatmul.mubr.bf16.gmra.mxu0 %v701
        %v840 = vpop.f32.mrf.mxu0
        %v841 = vadd.f32 %v658, %v840
        %v842 = vpop.f32.mrf.mxu0
        %v843 = vpop.f32.mrf.mxu0
        %v844 = vadd.f32 %v658, %v843
        %v845 = vpop.f32.mrf.mxu0
        %846 = vmatprep.mubr.bf16.mxu0 0
        %847 = vmatmul.mubr.bf16.gmra.mxu0 %v704
        %v848 = vpop.f32.mrf.mxu0
        %v849 = vadd.f32 %v658, %v848
        %v850 = vpop.f32.mrf.mxu0
        %v851 = vpop.f32.mrf.mxu0
        %v852 = vadd.f32 %v658, %v851
        %v853 = vpop.f32.mrf.mxu0
        %854 = vmatprep.mubr.bf16.mxu0 0
        %855 = vmatmul.mubr.bf16.gmra.mxu0 %v707
        %v856 = vpop.f32.mrf.mxu0
        %v857 = vadd.f32 %v658, %v856
        %v858 = vpop.f32.mrf.mxu0
        %v859 = vpop.f32.mrf.mxu0
        %v860 = vadd.f32 %v658, %v859
        %v861 = vpop.f32.mrf.mxu0
        %862 = vmatprep.mubr.bf16.mxu0 0
        %863 = vmatmul.mubr.bf16.gmra.mxu0 %v710
        %v864 = vpop.f32.mrf.mxu0
        %v865 = vadd.f32 %v658, %v864
        %v866 = vpop.f32.mrf.mxu0
        %v867 = vpop.f32.mrf.mxu0
        %v868 = vadd.f32 %v658, %v867
        %v869 = vpop.f32.mrf.mxu0
        %870 = vmatprep.mubr.bf16.mxu0 0
        %871 = vmatmul.mubr.bf16.gmra.mxu0 %v713
        %v872 = vpop.f32.mrf.mxu0
        %v873 = vadd.f32 %v658, %v872
        %v874 = vpop.f32.mrf.mxu0
        %v875 = vpop.f32.mrf.mxu0
        %v876 = vadd.f32 %v658, %v875
        %v877 = vpop.f32.mrf.mxu0
        %878 = vmatprep.mubr.bf16.mxu0 0
        %879 = vmatmul.mubr.bf16.gmra.mxu0 %v716
        %v880 = vpop.f32.mrf.mxu0
        %v881 = vadd.f32 %v658, %v880
        %v882 = vpop.f32.mrf.mxu0
        %v883 = vpop.f32.mrf.mxu0
        %v884 = vadd.f32 %v658, %v883
        %v885 = vpop.f32.mrf.mxu0
        %886 = vmatprep.mubr.bf16.mxu0 0
        %887 = vmatmul.mubr.bf16.gmra.mxu0 %v719
        %v888 = vpop.f32.mrf.mxu0
        %v889 = vadd.f32 %v658, %v888
        %v890 = vpop.f32.mrf.mxu0
        %v891 = vpop.f32.mrf.mxu0
        %v892 = vadd.f32 %v658, %v891
        %v893 = vpop.f32.mrf.mxu0
        %894 = vmatprep.mubr.bf16.mxu0 0
        %895 = vmatmul.mubr.bf16.gmra.mxu0 %v722
        %v896 = vpop.f32.mrf.mxu0
        %v897 = vadd.f32 %v658, %v896
        %v898 = vpop.f32.mrf.mxu0
        %v899 = vpop.f32.mrf.mxu0
        %v900 = vadd.f32 %v658, %v899
        %v901 = vpop.f32.mrf.mxu0
        %902 = vmatprep.mubr.bf16.mxu0 0
        %903 = vmatmul.mubr.bf16.gmra.mxu0 %v725
        %v904 = vpop.f32.mrf.mxu0
        %v905 = vadd.f32 %v658, %v904
        %v906 = vpop.f32.mrf.mxu0
        %v907 = vpop.f32.mrf.mxu0
        %v908 = vadd.f32 %v658, %v907
        %v909 = vpop.f32.mrf.mxu0
        %910 = vmatprep.mubr.bf16.mxu0 0
        %911 = vmatmul.mubr.bf16.gmra.mxu0 %v728
        %v912 = vpop.f32.mrf.mxu0
        %v913 = vadd.f32 %v658, %v912
        %v914 = vpop.f32.mrf.mxu0
        %v915 = vpop.f32.mrf.mxu0
        %v916 = vadd.f32 %v658, %v915
        %v917 = vpop.f32.mrf.mxu0
        %918 = vmatprep.mubr.bf16.mxu0 0
        %919 = vmatmul.mubr.bf16.gmra.mxu0 %v731
        %v920 = vpop.f32.mrf.mxu0
        %v921 = vadd.f32 %v658, %v920
        %v922 = vpop.f32.mrf.mxu0
        %v923 = vpop.f32.mrf.mxu0
        %v924 = vadd.f32 %v658, %v923
        %v925 = vpop.f32.mrf.mxu0
        %926 = vmatprep.mubr.bf16.mxu0 0
        %927 = vmatmul.mubr.bf16.gmra.mxu0 %v734
        %v928 = vpop.f32.mrf.mxu0
        %v929 = vadd.f32 %v658, %v928
        %v930 = vpop.f32.mrf.mxu0
        %v931 = vpop.f32.mrf.mxu0
        %v932 = vadd.f32 %v658, %v931
        %v933 = vpop.f32.mrf.mxu0
        %934 = vmatprep.mubr.bf16.mxu0 0
        %935 = vmatmul.mubr.bf16.gmra.mxu0 %v737
        %v936 = vpop.f32.mrf.mxu0
        %v937 = vadd.f32 %v658, %v936
        %v938 = vpop.f32.mrf.mxu0
        %v939 = vpop.f32.mrf.mxu0
        %v940 = vadd.f32 %v658, %v939
        %v941 = vpop.f32.mrf.mxu0
        %942 = vmatprep.mubr.bf16.mxu0 0
        %943 = vmatmul.mubr.bf16.gmra.mxu0 %v740
        %v944 = vpop.f32.mrf.mxu0
        %v945 = vadd.f32 %v658, %v944
        %v946 = vpop.f32.mrf.mxu0
        %v947 = vpop.f32.mrf.mxu0
        %v948 = vadd.f32 %v658, %v947
        %v949 = vpop.f32.mrf.mxu0
        %950 = vmatprep.mubr.bf16.mxu0 0
        %951 = vmatmul.mubr.bf16.gmra.mxu0 %v743
        %v952 = vpop.f32.mrf.mxu0
        %v953 = vadd.f32 %v658, %v952
        %v954 = vpop.f32.mrf.mxu0
        %v955 = vpop.f32.mrf.mxu0
        %v956 = vadd.f32 %v658, %v955
        %v957 = vpop.f32.mrf.mxu0
        %958 = vmatprep.mubr.bf16.mxu0 0
        %959 = vmatmul.mubr.bf16.gmra.mxu0 %v746
        %v960 = vpop.f32.mrf.mxu0
        %v961 = vadd.f32 %v658, %v960
        %v962 = vpop.f32.mrf.mxu0
        %v963 = vpop.f32.mrf.mxu0
        %v964 = vadd.f32 %v658, %v963
        %v965 = vpop.f32.mrf.mxu0
        %966 = vmatprep.mubr.bf16.mxu0 0
        %967 = vmatmul.mubr.bf16.gmra.mxu0 %v749
        %v968 = vpop.f32.mrf.mxu0
        %v969 = vadd.f32 %v658, %v968
        %v970 = vpop.f32.mrf.mxu0
        %v971 = vpop.f32.mrf.mxu0
        %v972 = vadd.f32 %v658, %v971
        %v973 = vpop.f32.mrf.mxu0
        %974 = vmatprep.mubr.bf16.mxu0 0
        %975 = vmatmul.mubr.bf16.gmra.mxu0 %v752
        %v976 = vpop.f32.mrf.mxu0
        %v977 = vadd.f32 %v658, %v976
        %v978 = vpop.f32.mrf.mxu0
        %v979 = vpop.f32.mrf.mxu0
        %v980 = vadd.f32 %v658, %v979
        %v981 = vpop.f32.mrf.mxu0
        %982 = vmatprep.mubr.bf16.mxu0 0
        %983 = vmatmul.mubr.bf16.gmra.mxu0 %v755
        %v984 = vpop.f32.mrf.mxu0
        %v985 = vadd.f32 %v658, %v984
        %v986 = vpop.f32.mrf.mxu0
        %v987 = vpop.f32.mrf.mxu0
        %v988 = vadd.f32 %v658, %v987
        %v989 = vpop.f32.mrf.mxu0
        %990 = vmatprep.mubr.bf16.mxu0 0
        %991 = vmatmul.mubr.bf16.gmra.mxu0 %v758
        %v992 = vpop.f32.mrf.mxu0
        %v993 = vadd.f32 %v658, %v992
        %v994 = vpop.f32.mrf.mxu0
        %v995 = vpop.f32.mrf.mxu0
        %v996 = vadd.f32 %v658, %v995
        %v997 = vpop.f32.mrf.mxu0
        %998 = vmatprep.mubr.bf16.mxu0 0
        %999 = vmatmul.mubr.bf16.gmra.mxu0 %v761
        %v1000 = vpop.f32.mrf.mxu0
        %v1001 = vadd.f32 %v658, %v1000
        %v1002 = vpop.f32.mrf.mxu0
        %v1003 = vpop.f32.mrf.mxu0
        %v1004 = vadd.f32 %v658, %v1003
        %v1005 = vpop.f32.mrf.mxu0
        %1006 = vmatprep.mubr.bf16.mxu0 0
        %1007 = vmatmul.mubr.bf16.gmra.mxu0 %v764
        %v1008 = vpop.f32.mrf.mxu0
        %v1009 = vadd.f32 %v658, %v1008
        %v1010 = vpop.f32.mrf.mxu0
        %v1011 = vpop.f32.mrf.mxu0
        %v1012 = vadd.f32 %v658, %v1011
        %v1013 = vpop.f32.mrf.mxu0
        %1014 = vdwg.mxu0
        %v1015 = vmax.f32 %v801, 0.0
        %v1016 = vmax.f32 %v804, 0.0
        %v1017 = vmax.f32 %v809, 0.0
        %v1018 = vmax.f32 %v812, 0.0
        %v1019 = vmax.f32 %v817, 0.0
        %v1020 = vmax.f32 %v820, 0.0
        %v1021 = vmax.f32 %v825, 0.0
        %v1022 = vmax.f32 %v828, 0.0
        %v1023 = vmax.f32 %v833, 0.0
        %v1024 = vmax.f32 %v836, 0.0
        %v1025 = vmax.f32 %v841, 0.0
        %v1026 = vmax.f32 %v844, 0.0
        %v1027 = vmax.f32 %v849, 0.0
        %v1028 = vmax.f32 %v852, 0.0
        %v1029 = vmax.f32 %v857, 0.0
        %v1030 = vmax.f32 %v860, 0.0
        %v1031 = vmax.f32 %v865, 0.0
        %v1032 = vmax.f32 %v868, 0.0
        %v1033 = vmax.f32 %v873, 0.0
        %v1034 = vmax.f32 %v876, 0.0
        %v1035 = vmax.f32 %v881, 0.0
        %v1036 = vmax.f32 %v884, 0.0
        %v1037 = vmax.f32 %v889, 0.0
        %v1038 = vmax.f32 %v892, 0.0
        %v1039 = vmax.f32 %v897, 0.0
        %v1040 = vmax.f32 %v900, 0.0
        %v1041 = vmax.f32 %v905, 0.0
        %v1042 = vmax.f32 %v908, 0.0
        %v1043 = vmax.f32 %v913, 0.0
        %v1044 = vmax.f32 %v916, 0.0
        %v1045 = vmax.f32 %v921, 0.0
        %v1046 = vmax.f32 %v924, 0.0
        %v1047 = vmax.f32 %v929, 0.0
        %v1048 = vmax.f32 %v932, 0.0
        %v1049 = vmax.f32 %v937, 0.0
        %v1050 = vmax.f32 %v940, 0.0
        %v1051 = vmax.f32 %v945, 0.0
        %v1052 = vmax.f32 %v948, 0.0
        %v1053 = vmax.f32 %v953, 0.0
        %v1054 = vmax.f32 %v956, 0.0
        %v1055 = vmax.f32 %v961, 0.0
        %v1056 = vmax.f32 %v964, 0.0
        %v1057 = vmax.f32 %v969, 0.0
        %v1058 = vmax.f32 %v972, 0.0
        %v1059 = vmax.f32 %v977, 0.0
        %v1060 = vmax.f32 %v980, 0.0
        %v1061 = vmax.f32 %v985, 0.0
        %v1062 = vmax.f32 %v988, 0.0
        %v1063 = vmax.f32 %v993, 0.0
        %v1064 = vmax.f32 %v996, 0.0
        %v1065 = vmax.f32 %v1001, 0.0
        %v1066 = vmax.f32 %v1004, 0.0
        %v1067 = vmax.f32 %v1009, 0.0
        %v1068 = vmax.f32 %v1012, 0.0
        %1069 = vst.msk [vmem:[#allocation2] sm:$0xff] %vm684, 0.0
        %1070 = vst.msk [vmem:[#allocation2 + $0x8] sm:$0xff] %vm684, 0.0
        %1071 = vst.msk [vmem:[#allocation2 + $0x10] sm:$0xff] %vm684, 0.0
        %1072 = vst.msk [vmem:[#allocation2 + $0x18] sm:$0xff] %vm684, 0.0
        %1073 = vst.msk [vmem:[#allocation2 + $0x1d0] sm:$0xff] %vm684, 0.0
        %1074 = vst.msk [vmem:[#allocation2 + $0x1d8] sm:$0xff] %vm684, 0.0
        %1075 = vst.msk [vmem:[#allocation2 + $0x1e0] sm:$0xff] %vm684, 0.0
        %1076 = vst.msk [vmem:[#allocation2 + $0x1e8] sm:$0xff] %vm684, 0.0
        %1077 = vst.msk [vmem:[#allocation2 + $0x20] sm:$0xff] %vm684, %v1015
        %1078 = vst.msk [vmem:[#allocation2 + $0x28] sm:$0xff] %vm684, %v1016
        %1079 = vst.msk [vmem:[#allocation2 + $0x30] sm:$0xff] %vm684, %v1017
        %1080 = vst.msk [vmem:[#allocation2 + $0x38] sm:$0xff] %vm684, %v1018
        %1081 = vst.msk [vmem:[#allocation2 + $0x40] sm:$0xff] %vm684, %v1019
        %1082 = vst.msk [vmem:[#allocation2 + $0x48] sm:$0xff] %vm684, %v1020
        %1083 = vst.msk [vmem:[#allocation2 + $0x50] sm:$0xff] %vm684, %v1021
        %1084 = vst.msk [vmem:[#allocation2 + $0x58] sm:$0xff] %vm684, %v1022
        %1085 = vst.msk [vmem:[#allocation2 + $0x60] sm:$0xff] %vm684, %v1023
        %1086 = vst.msk [vmem:[#allocation2 + $0x68] sm:$0xff] %vm684, %v1024
        %1087 = vst.msk [vmem:[#allocation2 + $0x70] sm:$0xff] %vm684, %v1025
        %1088 = vst.msk [vmem:[#allocation2 + $0x78] sm:$0xff] %vm684, %v1026
        %1089 = vst.msk [vmem:[#allocation2 + $0x80] sm:$0xff] %vm684, %v1027
        %1090 = vst.msk [vmem:[#allocation2 + $0x88] sm:$0xff] %vm684, %v1028
        %1091 = vst.msk [vmem:[#allocation2 + $0x90] sm:$0xff] %vm684, %v1029
        %1092 = vst.msk [vmem:[#allocation2 + $0x98] sm:$0xff] %vm684, %v1030
        %1093 = vst.msk [vmem:[#allocation2 + $0xa0] sm:$0xff] %vm684, %v1031
        %1094 = vst.msk [vmem:[#allocation2 + $0xa8] sm:$0xff] %vm684, %v1032
        %1095 = vst.msk [vmem:[#allocation2 + $0xb0] sm:$0xff] %vm684, %v1033
        %1096 = vst.msk [vmem:[#allocation2 + $0xb8] sm:$0xff] %vm684, %v1034
        %1097 = vst.msk [vmem:[#allocation2 + $0xc0] sm:$0xff] %vm684, %v1035
        %1098 = vst.msk [vmem:[#allocation2 + $0xc8] sm:$0xff] %vm684, %v1036
        %1099 = vst.msk [vmem:[#allocation2 + $0xd0] sm:$0xff] %vm684, %v1037
        %1100 = vst.msk [vmem:[#allocation2 + $0xd8] sm:$0xff] %vm684, %v1038
        %1101 = vst.msk [vmem:[#allocation2 + $0xe0] sm:$0xff] %vm684, %v1039
        %1102 = vst.msk [vmem:[#allocation2 + $0xe8] sm:$0xff] %vm684, %v1040
        %1103 = vst.msk [vmem:[#allocation2 + $0xf0] sm:$0xff] %vm684, %v1041
        %1104 = vst.msk [vmem:[#allocation2 + $0xf8] sm:$0xff] %vm684, %v1042
        %1105 = vst.msk [vmem:[#allocation2 + $0x100] sm:$0xff] %vm684, %v1043
        %1106 = vst.msk [vmem:[#allocation2 + $0x108] sm:$0xff] %vm684, %v1044
        %1107 = vst.msk [vmem:[#allocation2 + $0x110] sm:$0xff] %vm684, %v1045
        %1108 = vst.msk [vmem:[#allocation2 + $0x118] sm:$0xff] %vm684, %v1046
        %1109 = vst.msk [vmem:[#allocation2 + $0x120] sm:$0xff] %vm684, %v1047
        %1110 = vst.msk [vmem:[#allocation2 + $0x128] sm:$0xff] %vm684, %v1048
        %1111 = vst.msk [vmem:[#allocation2 + $0x130] sm:$0xff] %vm684, %v1049
        %1112 = vst.msk [vmem:[#allocation2 + $0x138] sm:$0xff] %vm684, %v1050
        %1113 = vst.msk [vmem:[#allocation2 + $0x140] sm:$0xff] %vm684, %v1051
        %1114 = vst.msk [vmem:[#allocation2 + $0x148] sm:$0xff] %vm684, %v1052
        %1115 = vst.msk [vmem:[#allocation2 + $0x150] sm:$0xff] %vm684, %v1053
        %1116 = vst.msk [vmem:[#allocation2 + $0x158] sm:$0xff] %vm684, %v1054
        %1117 = vst.msk [vmem:[#allocation2 + $0x160] sm:$0xff] %vm684, %v1055
        %1118 = vst.msk [vmem:[#allocation2 + $0x168] sm:$0xff] %vm684, %v1056
        %1119 = vst.msk [vmem:[#allocation2 + $0x170] sm:$0xff] %vm684, %v1057
        %1120 = vst.msk [vmem:[#allocation2 + $0x178] sm:$0xff] %vm684, %v1058
        %1121 = vst.msk [vmem:[#allocation2 + $0x180] sm:$0xff] %vm684, %v1059
        %1122 = vst.msk [vmem:[#allocation2 + $0x188] sm:$0xff] %vm684, %v1060
        %1123 = vst.msk [vmem:[#allocation2 + $0x190] sm:$0xff] %vm684, %v1061
        %1124 = vst.msk [vmem:[#allocation2 + $0x198] sm:$0xff] %vm684, %v1062
        %1125 = vst.msk [vmem:[#allocation2 + $0x1a0] sm:$0xff] %vm684, %v1063
        %1126 = vst.msk [vmem:[#allocation2 + $0x1a8] sm:$0xff] %vm684, %v1064
        %1127 = vst.msk [vmem:[#allocation2 + $0x1b0] sm:$0xff] %vm684, %v1065
        %1128 = vst.msk [vmem:[#allocation2 + $0x1b8] sm:$0xff] %vm684, %v1066
        %1129 = vst.msk [vmem:[#allocation2 + $0x1c0] sm:$0xff] %vm684, %v1067
        %1130 = vst.msk [vmem:[#allocation2 + $0x1c8] sm:$0xff] %vm684, %v1068
        %1131 = vst.msk [vmem:[#allocation2 + $0x20] sm:$0xff] %vm684, 0.0
        %1132 = vst.msk [vmem:[#allocation2 + $0x28] sm:$0xff] %vm684, 0.0
        %1133 = vst.msk [vmem:[#allocation2 + $0x30] sm:$0xff] %vm684, 0.0
        %1134 = vst.msk [vmem:[#allocation2 + $0x38] sm:$0xff] %vm684, 0.0
        %1135 = vst.msk [vmem:[#allocation2 + $0x50] sm:$0xff] %vm684, 0.0
        %1136 = vst.msk [vmem:[#allocation2 + $0x68] sm:$0xff] %vm684, 0.0
        %1137 = vst.msk [vmem:[#allocation2 + $0x80] sm:$0xff] %vm684, 0.0
        %1138 = vst.msk [vmem:[#allocation2 + $0x98] sm:$0xff] %vm684, 0.0
        %1139 = vst.msk [vmem:[#allocation2 + $0xb0] sm:$0xff] %vm684, 0.0
        %1140 = vst.msk [vmem:[#allocation2 + $0xc8] sm:$0xff] %vm684, 0.0
        %1141 = vst.msk [vmem:[#allocation2 + $0xe0] sm:$0xff] %vm684, 0.0
        %1142 = vst.msk [vmem:[#allocation2 + $0xf8] sm:$0xff] %vm684, 0.0
        %1143 = vst.msk [vmem:[#allocation2 + $0x110] sm:$0xff] %vm684, 0.0
        %1144 = vst.msk [vmem:[#allocation2 + $0x128] sm:$0xff] %vm684, 0.0
        %1145 = vst.msk [vmem:[#allocation2 + $0x140] sm:$0xff] %vm684, 0.0
        %1146 = vst.msk [vmem:[#allocation2 + $0x158] sm:$0xff] %vm684, 0.0
        %1147 = vst.msk [vmem:[#allocation2 + $0x170] sm:$0xff] %vm684, 0.0
        %1148 = vst.msk [vmem:[#allocation2 + $0x188] sm:$0xff] %vm684, 0.0
        %1149 = vst.msk [vmem:[#allocation2 + $0x1a0] sm:$0xff] %vm684, 0.0
        %1150 = vst.msk [vmem:[#allocation2 + $0x1b8] sm:$0xff] %vm684, 0.0
        %1151 = vst.msk [vmem:[#allocation2 + $0x1c0] sm:$0xff] %vm684, 0.0
        %1152 = vst.msk [vmem:[#allocation2 + $0x1c8] sm:$0xff] %vm684, 0.0
        %v1153 = vld [vmem:[#allocation2 + $0x7] sm:$0xff]
        %v1154 = vld [vmem:[#allocation2 + $0xf] sm:$0xff]
        %v1155 = vld [vmem:[#allocation2 + $0x17] sm:$0xff]
        %v1156 = vld [vmem:[#allocation2 + $0x1f] sm:$0xff]
        %v1157 = vld [vmem:[#allocation2 + $0x27] sm:$0xff]
        %v1158 = vld [vmem:[#allocation2 + $0x2f] sm:$0xff]
        %v1159 = vld [vmem:[#allocation2 + $0x37] sm:$0xff]
        %v1160 = vld [vmem:[#allocation2 + $0x3f] sm:$0xff]
        %v1161 = vld [vmem:[#allocation2 + $0x47] sm:$0xff]
        %v1162 = vld [vmem:[#allocation2 + $0x4f] sm:$0xff]
        %v1163 = vld [vmem:[#allocation2 + $0x57] sm:$0xff]
        %v1164 = vld [vmem:[#allocation2 + $0x5f] sm:$0xff]
        %v1165 = vld [vmem:[#allocation2 + $0x67] sm:$0xff]
        %v1166 = vld [vmem:[#allocation2 + $0x6f] sm:$0xff]
        %v1167 = vld [vmem:[#allocation2 + $0x77] sm:$0xff]
        %v1168 = vld [vmem:[#allocation2 + $0x7f] sm:$0xff]
        %v1169 = vld [vmem:[#allocation2 + $0x87] sm:$0xff]
        %v1170 = vld [vmem:[#allocation2 + $0x8f] sm:$0xff]
        %v1171 = vld [vmem:[#allocation2 + $0x97] sm:$0xff]
        %v1172 = vld [vmem:[#allocation2 + $0x9f] sm:$0xff]
        %v1173 = vld [vmem:[#allocation2 + $0xa7] sm:$0xff]
        %v1174 = vld [vmem:[#allocation2 + $0xaf] sm:$0xff]
        %v1175 = vld [vmem:[#allocation2 + $0xb7] sm:$0xff]
        %v1176 = vld [vmem:[#allocation2 + $0xbf] sm:$0xff]
        %v1177 = vld [vmem:[#allocation2 + $0xc7] sm:$0xff]
        %v1178 = vld [vmem:[#allocation2 + $0xcf] sm:$0xff]
        %v1179 = vld [vmem:[#allocation2 + $0xd7] sm:$0xff]
        %v1180 = vld [vmem:[#allocation2 + $0xdf] sm:$0xff]
        %v1181 = vld [vmem:[#allocation2 + $0xe7] sm:$0xff]
        %v1182 = vld [vmem:[#allocation2 + $0xef] sm:$0xff]
        %v1183 = vld [vmem:[#allocation2 + $0xf7] sm:$0xff]
        %v1184 = vld [vmem:[#allocation2 + $0xff] sm:$0xff]
        %v1185 = vld [vmem:[#allocation2 + $0x107] sm:$0xff]
        %v1186 = vld [vmem:[#allocation2 + $0x10f] sm:$0xff]
        %v1187 = vld [vmem:[#allocation2 + $0x117] sm:$0xff]
        %v1188 = vld [vmem:[#allocation2 + $0x11f] sm:$0xff]
        %v1189 = vld [vmem:[#allocation2 + $0x127] sm:$0xff]
        %v1190 = vld [vmem:[#allocation2 + $0x12f] sm:$0xff]
        %v1191 = vld [vmem:[#allocation2 + $0x137] sm:$0xff]
        %v1192 = vld [vmem:[#allocation2 + $0x13f] sm:$0xff]
        %v1193 = vld [vmem:[#allocation2 + $0x147] sm:$0xff]
        %v1194 = vld [vmem:[#allocation2 + $0x14f] sm:$0xff]
        %v1195 = vld [vmem:[#allocation2 + $0x157] sm:$0xff]
        %v1196 = vld [vmem:[#allocation2 + $0x15f] sm:$0xff]
        %v1197 = vld [vmem:[#allocation2 + $0x167] sm:$0xff]
        %v1198 = vld [vmem:[#allocation2 + $0x16f] sm:$0xff]
        %v1199 = vld [vmem:[#allocation2 + $0x177] sm:$0xff]
        %v1200 = vld [vmem:[#allocation2 + $0x17f] sm:$0xff]
        %v1201 = vld [vmem:[#allocation2 + $0x187] sm:$0xff]
        %v1202 = vld [vmem:[#allocation2 + $0x18f] sm:$0xff]
        %v1203 = vld [vmem:[#allocation2 + $0x197] sm:$0xff]
        %v1204 = vld [vmem:[#allocation2 + $0x19f] sm:$0xff]
        %v1205 = vld [vmem:[#allocation2 + $0x1a7] sm:$0xff]
        %v1206 = vld [vmem:[#allocation2 + $0x1af] sm:$0xff]
        %v1207 = vpack.c.bf16 %v1154, %v1153
        %v1208 = vpack.c.bf16 %v1156, %v1155
        %v1209 = vpack.c.bf16 %v1158, %v1157
        %v1210 = vpack.c.bf16 %v1160, %v1159
        %v1211 = vpack.c.bf16 %v1162, %v1161
        %v1212 = vpack.c.bf16 %v1164, %v1163
        %v1213 = vpack.c.bf16 %v1166, %v1165
        %v1214 = vpack.c.bf16 %v1168, %v1167
        %v1215 = vpack.c.bf16 %v1170, %v1169
        %v1216 = vpack.c.bf16 %v1172, %v1171
        %v1217 = vpack.c.bf16 %v1174, %v1173
        %v1218 = vpack.c.bf16 %v1176, %v1175
        %v1219 = vpack.c.bf16 %v1178, %v1177
        %v1220 = vpack.c.bf16 %v1180, %v1179
        %v1221 = vpack.c.bf16 %v1182, %v1181
        %v1222 = vpack.c.bf16 %v1184, %v1183
        %v1223 = vpack.c.bf16 %v1186, %v1185
        %v1224 = vpack.c.bf16 %v1188, %v1187
        %v1225 = vpack.c.bf16 %v1190, %v1189
        %v1226 = vpack.c.bf16 %v1192, %v1191
        %v1227 = vpack.c.bf16 %v1194, %v1193
        %v1228 = vpack.c.bf16 %v1196, %v1195
        %v1229 = vpack.c.bf16 %v1198, %v1197
        %v1230 = vpack.c.bf16 %v1200, %v1199
        %v1231 = vpack.c.bf16 %v1202, %v1201
        %v1232 = vpack.c.bf16 %v1204, %v1203
        %v1233 = vpack.c.bf16 %v1206, %v1205
        %v1234 = vld [vmem:[%s5] sm:$0xf]
        %v1235 = vld [vmem:[%s5 + $0x4] sm:$0xf]
        %v1236 = vld [vmem:[%s5 + $0x8] sm:$0xf]
        %v1237 = vld [vmem:[%s5 + $0xc] sm:$0xf]
        %v1238 = vld [vmem:[%s5 + $0x10] sm:$0xf]
        %v1239 = vld [vmem:[%s5 + $0x14] sm:$0xf]
        %v1240 = vld [vmem:[%s5 + $0x18] sm:$0xf]
        %v1241 = vld [vmem:[%s5 + $0x1c] sm:$0xf]
        %v1242 = vld [vmem:[#allocation2 + $0x8] sm:$0xff]
        %v1243 = vld [vmem:[#allocation2 + $0x10] sm:$0xff]
        %v1244 = vld [vmem:[#allocation2 + $0x18] sm:$0xff]
        %v1245 = vld [vmem:[#allocation2 + $0x20] sm:$0xff]
        %v1246 = vld [vmem:[#allocation2 + $0x28] sm:$0xff]
        %v1247 = vld [vmem:[#allocation2 + $0x30] sm:$0xff]
        %v1248 = vld [vmem:[#allocation2 + $0x38] sm:$0xff]
        %v1249 = vld [vmem:[#allocation2 + $0x40] sm:$0xff]
        %v1250 = vld [vmem:[#allocation2 + $0x48] sm:$0xff]
        %v1251 = vld [vmem:[#allocation2 + $0x50] sm:$0xff]
        %v1252 = vld [vmem:[#allocation2 + $0x58] sm:$0xff]
        %v1253 = vld [vmem:[#allocation2 + $0x60] sm:$0xff]
        %v1254 = vld [vmem:[#allocation2 + $0x68] sm:$0xff]
        %v1255 = vld [vmem:[#allocation2 + $0x70] sm:$0xff]
        %v1256 = vld [vmem:[#allocation2 + $0x78] sm:$0xff]
        %v1257 = vld [vmem:[#allocation2 + $0x80] sm:$0xff]
        %v1258 = vld [vmem:[#allocation2 + $0x88] sm:$0xff]
        %v1259 = vld [vmem:[#allocation2 + $0x90] sm:$0xff]
        %v1260 = vld [vmem:[#allocation2 + $0x98] sm:$0xff]
        %v1261 = vld [vmem:[#allocation2 + $0xa0] sm:$0xff]
        %v1262 = vld [vmem:[#allocation2 + $0xa8] sm:$0xff]
        %v1263 = vld [vmem:[#allocation2 + $0xb0] sm:$0xff]
        %v1264 = vld [vmem:[#allocation2 + $0xb8] sm:$0xff]
        %v1265 = vld [vmem:[#allocation2 + $0xc0] sm:$0xff]
        %v1266 = vld [vmem:[#allocation2 + $0xc8] sm:$0xff]
        %v1267 = vld [vmem:[#allocation2 + $0xd0] sm:$0xff]
        %v1268 = vld [vmem:[#allocation2 + $0xd8] sm:$0xff]
        %v1269 = vld [vmem:[#allocation2 + $0xe0] sm:$0xff]
        %v1270 = vld [vmem:[#allocation2 + $0xe8] sm:$0xff]
        %v1271 = vld [vmem:[#allocation2 + $0xf0] sm:$0xff]
        %v1272 = vld [vmem:[#allocation2 + $0xf8] sm:$0xff]
        %v1273 = vld [vmem:[#allocation2 + $0x100] sm:$0xff]
        %v1274 = vld [vmem:[#allocation2 + $0x108] sm:$0xff]
        %v1275 = vld [vmem:[#allocation2 + $0x110] sm:$0xff]
        %v1276 = vld [vmem:[#allocation2 + $0x118] sm:$0xff]
        %v1277 = vld [vmem:[#allocation2 + $0x120] sm:$0xff]
        %v1278 = vld [vmem:[#allocation2 + $0x128] sm:$0xff]
        %v1279 = vld [vmem:[#allocation2 + $0x130] sm:$0xff]
        %v1280 = vld [vmem:[#allocation2 + $0x138] sm:$0xff]
        %v1281 = vld [vmem:[#allocation2 + $0x140] sm:$0xff]
        %v1282 = vld [vmem:[#allocation2 + $0x148] sm:$0xff]
        %v1283 = vld [vmem:[#allocation2 + $0x150] sm:$0xff]
        %v1284 = vld [vmem:[#allocation2 + $0x158] sm:$0xff]
        %v1285 = vld [vmem:[#allocation2 + $0x160] sm:$0xff]
        %v1286 = vld [vmem:[#allocation2 + $0x168] sm:$0xff]
        %v1287 = vld [vmem:[#allocation2 + $0x170] sm:$0xff]
        %v1288 = vld [vmem:[#allocation2 + $0x178] sm:$0xff]
        %v1289 = vld [vmem:[#allocation2 + $0x180] sm:$0xff]
        %v1290 = vld [vmem:[#allocation2 + $0x188] sm:$0xff]
        %v1291 = vld [vmem:[#allocation2 + $0x190] sm:$0xff]
        %v1292 = vld [vmem:[#allocation2 + $0x198] sm:$0xff]
        %v1293 = vld [vmem:[#allocation2 + $0x1a0] sm:$0xff]
        %v1294 = vld [vmem:[#allocation2 + $0x1a8] sm:$0xff]
        %v1295 = vld [vmem:[#allocation2 + $0x1b0] sm:$0xff]
        %v1296 = vpack.c.bf16 %v1243, %v1242
        %v1297 = vpack.c.bf16 %v1245, %v1244
        %v1298 = vpack.c.bf16 %v1247, %v1246
        %v1299 = vpack.c.bf16 %v1249, %v1248
        %v1300 = vpack.c.bf16 %v1251, %v1250
        %v1301 = vpack.c.bf16 %v1253, %v1252
        %v1302 = vpack.c.bf16 %v1255, %v1254
        %v1303 = vpack.c.bf16 %v1257, %v1256
        %v1304 = vpack.c.bf16 %v1259, %v1258
        %v1305 = vpack.c.bf16 %v1261, %v1260
        %v1306 = vpack.c.bf16 %v1263, %v1262
        %v1307 = vpack.c.bf16 %v1265, %v1264
        %v1308 = vpack.c.bf16 %v1267, %v1266
        %v1309 = vpack.c.bf16 %v1269, %v1268
        %v1310 = vpack.c.bf16 %v1271, %v1270
        %v1311 = vpack.c.bf16 %v1273, %v1272
        %v1312 = vpack.c.bf16 %v1275, %v1274
        %v1313 = vpack.c.bf16 %v1277, %v1276
        %v1314 = vpack.c.bf16 %v1279, %v1278
        %v1315 = vpack.c.bf16 %v1281, %v1280
        %v1316 = vpack.c.bf16 %v1283, %v1282
        %v1317 = vpack.c.bf16 %v1285, %v1284
        %v1318 = vpack.c.bf16 %v1287, %v1286
        %v1319 = vpack.c.bf16 %v1289, %v1288
        %v1320 = vpack.c.bf16 %v1291, %v1290
        %v1321 = vpack.c.bf16 %v1293, %v1292
        %v1322 = vpack.c.bf16 %v1295, %v1294
        %s1323 = scalar_lea.vmem %s5, 32
        %v1324 = vld [vmem:[%s1323] sm:$0xf]
        %v1325 = vld [vmem:[%s1323 + $0x4] sm:$0xf]
        %v1326 = vld [vmem:[%s1323 + $0x8] sm:$0xf]
        %v1327 = vld [vmem:[%s1323 + $0xc] sm:$0xf]
        %v1328 = vld [vmem:[%s1323 + $0x10] sm:$0xf]
        %v1329 = vld [vmem:[%s1323 + $0x14] sm:$0xf]
        %v1330 = vld [vmem:[%s1323 + $0x18] sm:$0xf]
        %v1331 = vld [vmem:[%s1323 + $0x1c] sm:$0xf]
        %v1340 = vunpack.c.l.b16 %v1324
        %v1341 = vunpack.c.l.b16 %v1325
        %v1342 = vunpack.c.l.b16 %v1326
        %v1343 = vunpack.c.l.b16 %v1327
        %v1344 = vunpack.c.l.b16 %v1328
        %v1345 = vunpack.c.l.b16 %v1329
        %v1346 = vunpack.c.l.b16 %v1330
        %v1347 = vunpack.c.l.b16 %v1331
        %v1348 = vpack.c.b16 %v1341, %v1340
        %v1349 = vpack.c.b16 %v1343, %v1342
        %v1350 = vpack.c.b16 %v1345, %v1344
        %v1351 = vpack.c.b16 %v1347, %v1346
        %v1357 = vsel %vm684, %v1296, 0
        %v1360 = vsel %vm684, %v1297, 0
        %v1363 = vsel %vm684, %v1298, 0
        %v1366 = vsel %vm684, %v1299, 0
        %v1369 = vsel %vm684, %v1300, 0
        %v1372 = vsel %vm684, %v1301, 0
        %v1375 = vsel %vm684, %v1302, 0
        %v1378 = vsel %vm684, %v1303, 0
        %v1381 = vsel %vm684, %v1304, 0
        %v1384 = vsel %vm684, %v1305, 0
        %v1387 = vsel %vm684, %v1306, 0
        %v1390 = vsel %vm684, %v1307, 0
        %v1393 = vsel %vm684, %v1308, 0
        %v1396 = vsel %vm684, %v1309, 0
        %v1399 = vsel %vm684, %v1310, 0
        %v1402 = vsel %vm684, %v1311, 0
        %v1405 = vsel %vm684, %v1312, 0
        %v1408 = vsel %vm684, %v1313, 0
        %v1411 = vsel %vm684, %v1314, 0
        %v1414 = vsel %vm684, %v1315, 0
        %v1417 = vsel %vm684, %v1316, 0
        %v1420 = vsel %vm684, %v1317, 0
        %v1423 = vsel %vm684, %v1318, 0
        %v1426 = vsel %vm684, %v1319, 0
        %v1429 = vsel %vm684, %v1320, 0
        %v1432 = vsel %vm684, %v1321, 0
        %v1435 = vsel %vm684, %v1322, 0
        %1437 = vmatprep.subr.bf16.mxu0 0
        %1438 = vmatpush1.bf16.msra.mxu0 0
        %1439 = vmatprep.subr.bf16.mxu0 0
        %1440 = vmatpush1.bf16.msra.mxu0 0
        %1441 = vmatprep.subr.bf16.mxu0 0
        %1442 = vmatpush1.bf16.msra.mxu0 0
        %1443 = vmatprep.subr.bf16.mxu0 0
        %1444 = vmatpush1.bf16.msra.mxu0 0
        %1445 = vmatprep.subr.bf16.mxu0 0
        %1446 = vmatpush1.bf16.msra.mxu0 %v1351
        %1447 = vmatprep.subr.bf16.mxu0 0
        %1448 = vmatpush1.bf16.msra.mxu0 %v1350
        %1449 = vmatprep.subr.bf16.mxu0 0
        %1450 = vmatpush1.bf16.msra.mxu0 %v1349
        %1451 = vmatprep.subr.bf16.mxu0 0
        %1452 = vmatpush1.bf16.msra.mxu0 %v1348
        %1453 = vmatprep.subr.bf16.mxu0 0
        %1454 = vmatpush2.bf16.msra.mxu0 0
        %1455 = vmatprep.subr.bf16.mxu0 0
        %1456 = vmatpush2.bf16.msra.mxu0 0
        %1457 = vmatprep.subr.bf16.mxu0 0
        %1458 = vmatpush2.bf16.msra.mxu0 0
        %1459 = vmatprep.subr.bf16.mxu0 0
        %1460 = vmatpush2.bf16.msra.mxu0 0
        %1461 = vmatprep.subr.bf16.mxu0 0
        %1462 = vmatpush2.bf16.msra.mxu0 0
        %1463 = vmatprep.subr.bf16.mxu0 0
        %1464 = vmatpush2.bf16.msra.mxu0 0
        %1465 = vmatprep.subr.bf16.mxu0 0
        %1466 = vmatpush2.bf16.msra.mxu0 0
        %1467 = vmatprep.subr.bf16.mxu0 0
        %1468 = vmatpush2.bf16.msra.mxu0 0
        %1469 = vmatprep.mubr.bf16.mxu0 0
        %1470 = vmatmul.mubr.bf16.gmra.mxu0 %v1357
        %v1471 = vpop.f32.mrf.mxu0
        %v1472 = vadd.f32 0.0, %v1471
        %v1473 = vpop.f32.mrf.mxu0
        %v1474 = vpop.f32.mrf.mxu0
        %v1475 = vadd.f32 0.0, %v1474
        %v1476 = vpop.f32.mrf.mxu0
        %1477 = vmatprep.mubr.bf16.mxu0 0
        %1478 = vmatmul.mubr.bf16.gmra.mxu0 %v1360
        %v1479 = vpop.f32.mrf.mxu0
        %v1480 = vadd.f32 0.0, %v1479
        %v1481 = vpop.f32.mrf.mxu0
        %v1482 = vpop.f32.mrf.mxu0
        %v1483 = vadd.f32 0.0, %v1482
        %v1484 = vpop.f32.mrf.mxu0
        %1485 = vmatprep.mubr.bf16.mxu0 0
        %1486 = vmatmul.mubr.bf16.gmra.mxu0 %v1363
        %v1487 = vpop.f32.mrf.mxu0
        %v1488 = vadd.f32 0.0, %v1487
        %v1489 = vpop.f32.mrf.mxu0
        %v1490 = vpop.f32.mrf.mxu0
        %v1491 = vadd.f32 0.0, %v1490
        %v1492 = vpop.f32.mrf.mxu0
        %1493 = vmatprep.mubr.bf16.mxu0 0
        %1494 = vmatmul.mubr.bf16.gmra.mxu0 %v1366
        %v1495 = vpop.f32.mrf.mxu0
        %v1496 = vadd.f32 0.0, %v1495
        %v1497 = vpop.f32.mrf.mxu0
        %v1498 = vpop.f32.mrf.mxu0
        %v1499 = vadd.f32 0.0, %v1498
        %v1500 = vpop.f32.mrf.mxu0
        %1501 = vmatprep.mubr.bf16.mxu0 0
        %1502 = vmatmul.mubr.bf16.gmra.mxu0 %v1369
        %v1503 = vpop.f32.mrf.mxu0
        %v1504 = vadd.f32 0.0, %v1503
        %v1505 = vpop.f32.mrf.mxu0
        %v1506 = vpop.f32.mrf.mxu0
        %v1507 = vadd.f32 0.0, %v1506
        %v1508 = vpop.f32.mrf.mxu0
        %1509 = vmatprep.mubr.bf16.mxu0 0
        %1510 = vmatmul.mubr.bf16.gmra.mxu0 %v1372
        %v1511 = vpop.f32.mrf.mxu0
        %v1512 = vadd.f32 0.0, %v1511
        %v1513 = vpop.f32.mrf.mxu0
        %v1514 = vpop.f32.mrf.mxu0
        %v1515 = vadd.f32 0.0, %v1514
        %v1516 = vpop.f32.mrf.mxu0
        %1517 = vmatprep.mubr.bf16.mxu0 0
        %1518 = vmatmul.mubr.bf16.gmra.mxu0 %v1375
        %v1519 = vpop.f32.mrf.mxu0
        %v1520 = vadd.f32 0.0, %v1519
        %v1521 = vpop.f32.mrf.mxu0
        %v1522 = vpop.f32.mrf.mxu0
        %v1523 = vadd.f32 0.0, %v1522
        %v1524 = vpop.f32.mrf.mxu0
        %1525 = vmatprep.mubr.bf16.mxu0 0
        %1526 = vmatmul.mubr.bf16.gmra.mxu0 %v1378
        %v1527 = vpop.f32.mrf.mxu0
        %v1528 = vadd.f32 0.0, %v1527
        %v1529 = vpop.f32.mrf.mxu0
        %v1530 = vpop.f32.mrf.mxu0
        %v1531 = vadd.f32 0.0, %v1530
        %v1532 = vpop.f32.mrf.mxu0
        %1533 = vmatprep.mubr.bf16.mxu0 0
        %1534 = vmatmul.mubr.bf16.gmra.mxu0 %v1381
        %v1535 = vpop.f32.mrf.mxu0
        %v1536 = vadd.f32 0.0, %v1535
        %v1537 = vpop.f32.mrf.mxu0
        %v1538 = vpop.f32.mrf.mxu0
        %v1539 = vadd.f32 0.0, %v1538
        %v1540 = vpop.f32.mrf.mxu0
        %1541 = vmatprep.mubr.bf16.mxu0 0
        %1542 = vmatmul.mubr.bf16.gmra.mxu0 %v1384
        %v1543 = vpop.f32.mrf.mxu0
        %v1544 = vadd.f32 0.0, %v1543
        %v1545 = vpop.f32.mrf.mxu0
        %v1546 = vpop.f32.mrf.mxu0
        %v1547 = vadd.f32 0.0, %v1546
        %v1548 = vpop.f32.mrf.mxu0
        %1549 = vmatprep.mubr.bf16.mxu0 0
        %1550 = vmatmul.mubr.bf16.gmra.mxu0 %v1387
        %v1551 = vpop.f32.mrf.mxu0
        %v1552 = vadd.f32 0.0, %v1551
        %v1553 = vpop.f32.mrf.mxu0
        %v1554 = vpop.f32.mrf.mxu0
        %v1555 = vadd.f32 0.0, %v1554
        %v1556 = vpop.f32.mrf.mxu0
        %1557 = vmatprep.mubr.bf16.mxu0 0
        %1558 = vmatmul.mubr.bf16.gmra.mxu0 %v1390
        %v1559 = vpop.f32.mrf.mxu0
        %v1560 = vadd.f32 0.0, %v1559
        %v1561 = vpop.f32.mrf.mxu0
        %v1562 = vpop.f32.mrf.mxu0
        %v1563 = vadd.f32 0.0, %v1562
        %v1564 = vpop.f32.mrf.mxu0
        %1565 = vmatprep.mubr.bf16.mxu0 0
        %1566 = vmatmul.mubr.bf16.gmra.mxu0 %v1393
        %v1567 = vpop.f32.mrf.mxu0
        %v1568 = vadd.f32 0.0, %v1567
        %v1569 = vpop.f32.mrf.mxu0
        %v1570 = vpop.f32.mrf.mxu0
        %v1571 = vadd.f32 0.0, %v1570
        %v1572 = vpop.f32.mrf.mxu0
        %1573 = vmatprep.mubr.bf16.mxu0 0
        %1574 = vmatmul.mubr.bf16.gmra.mxu0 %v1396
        %v1575 = vpop.f32.mrf.mxu0
        %v1576 = vadd.f32 0.0, %v1575
        %v1577 = vpop.f32.mrf.mxu0
        %v1578 = vpop.f32.mrf.mxu0
        %v1579 = vadd.f32 0.0, %v1578
        %v1580 = vpop.f32.mrf.mxu0
        %1581 = vmatprep.mubr.bf16.mxu0 0
        %1582 = vmatmul.mubr.bf16.gmra.mxu0 %v1399
        %v1583 = vpop.f32.mrf.mxu0
        %v1584 = vadd.f32 0.0, %v1583
        %v1585 = vpop.f32.mrf.mxu0
        %v1586 = vpop.f32.mrf.mxu0
        %v1587 = vadd.f32 0.0, %v1586
        %v1588 = vpop.f32.mrf.mxu0
        %1589 = vmatprep.mubr.bf16.mxu0 0
        %1590 = vmatmul.mubr.bf16.gmra.mxu0 %v1402
        %v1591 = vpop.f32.mrf.mxu0
        %v1592 = vadd.f32 0.0, %v1591
        %v1593 = vpop.f32.mrf.mxu0
        %v1594 = vpop.f32.mrf.mxu0
        %v1595 = vadd.f32 0.0, %v1594
        %v1596 = vpop.f32.mrf.mxu0
        %1597 = vmatprep.mubr.bf16.mxu0 0
        %1598 = vmatmul.mubr.bf16.gmra.mxu0 %v1405
        %v1599 = vpop.f32.mrf.mxu0
        %v1600 = vadd.f32 0.0, %v1599
        %v1601 = vpop.f32.mrf.mxu0
        %v1602 = vpop.f32.mrf.mxu0
        %v1603 = vadd.f32 0.0, %v1602
        %v1604 = vpop.f32.mrf.mxu0
        %1605 = vmatprep.mubr.bf16.mxu0 0
        %1606 = vmatmul.mubr.bf16.gmra.mxu0 %v1408
        %v1607 = vpop.f32.mrf.mxu0
        %v1608 = vadd.f32 0.0, %v1607
        %v1609 = vpop.f32.mrf.mxu0
        %v1610 = vpop.f32.mrf.mxu0
        %v1611 = vadd.f32 0.0, %v1610
        %v1612 = vpop.f32.mrf.mxu0
        %1613 = vmatprep.mubr.bf16.mxu0 0
        %1614 = vmatmul.mubr.bf16.gmra.mxu0 %v1411
        %v1615 = vpop.f32.mrf.mxu0
        %v1616 = vadd.f32 0.0, %v1615
        %v1617 = vpop.f32.mrf.mxu0
        %v1618 = vpop.f32.mrf.mxu0
        %v1619 = vadd.f32 0.0, %v1618
        %v1620 = vpop.f32.mrf.mxu0
        %1621 = vmatprep.mubr.bf16.mxu0 0
        %1622 = vmatmul.mubr.bf16.gmra.mxu0 %v1414
        %v1623 = vpop.f32.mrf.mxu0
        %v1624 = vadd.f32 0.0, %v1623
        %v1625 = vpop.f32.mrf.mxu0
        %v1626 = vpop.f32.mrf.mxu0
        %v1627 = vadd.f32 0.0, %v1626
        %v1628 = vpop.f32.mrf.mxu0
        %1629 = vmatprep.mubr.bf16.mxu0 0
        %1630 = vmatmul.mubr.bf16.gmra.mxu0 %v1417
        %v1631 = vpop.f32.mrf.mxu0
        %v1632 = vadd.f32 0.0, %v1631
        %v1633 = vpop.f32.mrf.mxu0
        %v1634 = vpop.f32.mrf.mxu0
        %v1635 = vadd.f32 0.0, %v1634
        %v1636 = vpop.f32.mrf.mxu0
        %1637 = vmatprep.mubr.bf16.mxu0 0
        %1638 = vmatmul.mubr.bf16.gmra.mxu0 %v1420
        %v1639 = vpop.f32.mrf.mxu0
        %v1640 = vadd.f32 0.0, %v1639
        %v1641 = vpop.f32.mrf.mxu0
        %v1642 = vpop.f32.mrf.mxu0
        %v1643 = vadd.f32 0.0, %v1642
        %v1644 = vpop.f32.mrf.mxu0
        %1645 = vmatprep.mubr.bf16.mxu0 0
        %1646 = vmatmul.mubr.bf16.gmra.mxu0 %v1423
        %v1647 = vpop.f32.mrf.mxu0
        %v1648 = vadd.f32 0.0, %v1647
        %v1649 = vpop.f32.mrf.mxu0
        %v1650 = vpop.f32.mrf.mxu0
        %v1651 = vadd.f32 0.0, %v1650
        %v1652 = vpop.f32.mrf.mxu0
        %1653 = vmatprep.mubr.bf16.mxu0 0
        %1654 = vmatmul.mubr.bf16.gmra.mxu0 %v1426
        %v1655 = vpop.f32.mrf.mxu0
        %v1656 = vadd.f32 0.0, %v1655
        %v1657 = vpop.f32.mrf.mxu0
        %v1658 = vpop.f32.mrf.mxu0
        %v1659 = vadd.f32 0.0, %v1658
        %v1660 = vpop.f32.mrf.mxu0
        %1661 = vmatprep.mubr.bf16.mxu0 0
        %1662 = vmatmul.mubr.bf16.gmra.mxu0 %v1429
        %v1663 = vpop.f32.mrf.mxu0
        %v1664 = vadd.f32 0.0, %v1663
        %v1665 = vpop.f32.mrf.mxu0
        %v1666 = vpop.f32.mrf.mxu0
        %v1667 = vadd.f32 0.0, %v1666
        %v1668 = vpop.f32.mrf.mxu0
        %1669 = vmatprep.mubr.bf16.mxu0 0
        %1670 = vmatmul.mubr.bf16.gmra.mxu0 %v1432
        %v1671 = vpop.f32.mrf.mxu0
        %v1672 = vadd.f32 0.0, %v1671
        %v1673 = vpop.f32.mrf.mxu0
        %v1674 = vpop.f32.mrf.mxu0
        %v1675 = vadd.f32 0.0, %v1674
        %v1676 = vpop.f32.mrf.mxu0
        %1677 = vmatprep.mubr.bf16.mxu0 0
        %1678 = vmatmul.mubr.bf16.gmra.mxu0 %v1435
        %v1679 = vpop.f32.mrf.mxu0
        %v1680 = vadd.f32 0.0, %v1679
        %v1681 = vpop.f32.mrf.mxu0
        %v1682 = vpop.f32.mrf.mxu0
        %v1683 = vadd.f32 0.0, %v1682
        %v1684 = vpop.f32.mrf.mxu0
        %1685 = vdwg.mxu0
        %v1694 = vunpack.c.l.b16 %v1234
        %v1695 = vunpack.c.l.b16 %v1235
        %v1696 = vunpack.c.l.b16 %v1236
        %v1697 = vunpack.c.l.b16 %v1237
        %v1698 = vunpack.c.l.b16 %v1238
        %v1699 = vunpack.c.l.b16 %v1239
        %v1700 = vunpack.c.l.b16 %v1240
        %v1701 = vunpack.c.l.b16 %v1241
        %v1702 = vpack.c.b16 %v1695, %v1694
        %v1703 = vpack.c.b16 %v1697, %v1696
        %v1704 = vpack.c.b16 %v1699, %v1698
        %v1705 = vpack.c.b16 %v1701, %v1700
        %v1711 = vsel %vm684, %v1207, 0
        %v1714 = vsel %vm684, %v1208, 0
        %v1717 = vsel %vm684, %v1209, 0
        %v1720 = vsel %vm684, %v1210, 0
        %v1723 = vsel %vm684, %v1211, 0
        %v1726 = vsel %vm684, %v1212, 0
        %v1729 = vsel %vm684, %v1213, 0
        %v1732 = vsel %vm684, %v1214, 0
        %v1735 = vsel %vm684, %v1215, 0
        %v1738 = vsel %vm684, %v1216, 0
        %v1741 = vsel %vm684, %v1217, 0
        %v1744 = vsel %vm684, %v1218, 0
        %v1747 = vsel %vm684, %v1219, 0
        %v1750 = vsel %vm684, %v1220, 0
        %v1753 = vsel %vm684, %v1221, 0
        %v1756 = vsel %vm684, %v1222, 0
        %v1759 = vsel %vm684, %v1223, 0
        %v1762 = vsel %vm684, %v1224, 0
        %v1765 = vsel %vm684, %v1225, 0
        %v1768 = vsel %vm684, %v1226, 0
        %v1771 = vsel %vm684, %v1227, 0
        %v1774 = vsel %vm684, %v1228, 0
        %v1777 = vsel %vm684, %v1229, 0
        %v1780 = vsel %vm684, %v1230, 0
        %v1783 = vsel %vm684, %v1231, 0
        %v1786 = vsel %vm684, %v1232, 0
        %v1789 = vsel %vm684, %v1233, 0
        %1791 = vmatprep.subr.bf16.mxu0 0
        %1792 = vmatpush1.bf16.msra.mxu0 0
        %1793 = vmatprep.subr.bf16.mxu0 0
        %1794 = vmatpush1.bf16.msra.mxu0 0
        %1795 = vmatprep.subr.bf16.mxu0 0
        %1796 = vmatpush1.bf16.msra.mxu0 0
        %1797 = vmatprep.subr.bf16.mxu0 0
        %1798 = vmatpush1.bf16.msra.mxu0 0
        %1799 = vmatprep.subr.bf16.mxu0 0
        %1800 = vmatpush1.bf16.msra.mxu0 %v1705
        %1801 = vmatprep.subr.bf16.mxu0 0
        %1802 = vmatpush1.bf16.msra.mxu0 %v1704
        %1803 = vmatprep.subr.bf16.mxu0 0
        %1804 = vmatpush1.bf16.msra.mxu0 %v1703
        %1805 = vmatprep.subr.bf16.mxu0 0
        %1806 = vmatpush1.bf16.msra.mxu0 %v1702
        %1807 = vmatprep.subr.bf16.mxu0 0
        %1808 = vmatpush2.bf16.msra.mxu0 0
        %1809 = vmatprep.subr.bf16.mxu0 0
        %1810 = vmatpush2.bf16.msra.mxu0 0
        %1811 = vmatprep.subr.bf16.mxu0 0
        %1812 = vmatpush2.bf16.msra.mxu0 0
        %1813 = vmatprep.subr.bf16.mxu0 0
        %1814 = vmatpush2.bf16.msra.mxu0 0
        %1815 = vmatprep.subr.bf16.mxu0 0
        %1816 = vmatpush2.bf16.msra.mxu0 0
        %1817 = vmatprep.subr.bf16.mxu0 0
        %1818 = vmatpush2.bf16.msra.mxu0 0
        %1819 = vmatprep.subr.bf16.mxu0 0
        %1820 = vmatpush2.bf16.msra.mxu0 0
        %1821 = vmatprep.subr.bf16.mxu0 0
        %1822 = vmatpush2.bf16.msra.mxu0 0
        %1823 = vmatprep.mubr.bf16.mxu0 0
        %1824 = vmatmul.mubr.bf16.gmra.mxu0 %v1711
        %v1825 = vpop.f32.mrf.mxu0
        %v1826 = vadd.f32 %v1472, %v1825
        %v1827 = vpop.f32.mrf.mxu0
        %v1828 = vpop.f32.mrf.mxu0
        %v1829 = vadd.f32 %v1475, %v1828
        %v1830 = vpop.f32.mrf.mxu0
        %1831 = vmatprep.mubr.bf16.mxu0 0
        %1832 = vmatmul.mubr.bf16.gmra.mxu0 %v1714
        %v1833 = vpop.f32.mrf.mxu0
        %v1834 = vadd.f32 %v1480, %v1833
        %v1835 = vpop.f32.mrf.mxu0
        %v1836 = vpop.f32.mrf.mxu0
        %v1837 = vadd.f32 %v1483, %v1836
        %v1838 = vpop.f32.mrf.mxu0
        %1839 = vmatprep.mubr.bf16.mxu0 0
        %1840 = vmatmul.mubr.bf16.gmra.mxu0 %v1717
        %v1841 = vpop.f32.mrf.mxu0
        %v1842 = vadd.f32 %v1488, %v1841
        %v1843 = vpop.f32.mrf.mxu0
        %v1844 = vpop.f32.mrf.mxu0
        %v1845 = vadd.f32 %v1491, %v1844
        %v1846 = vpop.f32.mrf.mxu0
        %1847 = vmatprep.mubr.bf16.mxu0 0
        %1848 = vmatmul.mubr.bf16.gmra.mxu0 %v1720
        %v1849 = vpop.f32.mrf.mxu0
        %v1850 = vadd.f32 %v1496, %v1849
        %v1851 = vpop.f32.mrf.mxu0
        %v1852 = vpop.f32.mrf.mxu0
        %v1853 = vadd.f32 %v1499, %v1852
        %v1854 = vpop.f32.mrf.mxu0
        %1855 = vmatprep.mubr.bf16.mxu0 0
        %1856 = vmatmul.mubr.bf16.gmra.mxu0 %v1723
        %v1857 = vpop.f32.mrf.mxu0
        %v1858 = vadd.f32 %v1504, %v1857
        %v1859 = vpop.f32.mrf.mxu0
        %v1860 = vpop.f32.mrf.mxu0
        %v1861 = vadd.f32 %v1507, %v1860
        %v1862 = vpop.f32.mrf.mxu0
        %1863 = vmatprep.mubr.bf16.mxu0 0
        %1864 = vmatmul.mubr.bf16.gmra.mxu0 %v1726
        %v1865 = vpop.f32.mrf.mxu0
        %v1866 = vadd.f32 %v1512, %v1865
        %v1867 = vpop.f32.mrf.mxu0
        %v1868 = vpop.f32.mrf.mxu0
        %v1869 = vadd.f32 %v1515, %v1868
        %v1870 = vpop.f32.mrf.mxu0
        %1871 = vmatprep.mubr.bf16.mxu0 0
        %1872 = vmatmul.mubr.bf16.gmra.mxu0 %v1729
        %v1873 = vpop.f32.mrf.mxu0
        %v1874 = vadd.f32 %v1520, %v1873
        %v1875 = vpop.f32.mrf.mxu0
        %v1876 = vpop.f32.mrf.mxu0
        %v1877 = vadd.f32 %v1523, %v1876
        %v1878 = vpop.f32.mrf.mxu0
        %1879 = vmatprep.mubr.bf16.mxu0 0
        %1880 = vmatmul.mubr.bf16.gmra.mxu0 %v1732
        %v1881 = vpop.f32.mrf.mxu0
        %v1882 = vadd.f32 %v1528, %v1881
        %v1883 = vpop.f32.mrf.mxu0
        %v1884 = vpop.f32.mrf.mxu0
        %v1885 = vadd.f32 %v1531, %v1884
        %v1886 = vpop.f32.mrf.mxu0
        %1887 = vmatprep.mubr.bf16.mxu0 0
        %1888 = vmatmul.mubr.bf16.gmra.mxu0 %v1735
        %v1889 = vpop.f32.mrf.mxu0
        %v1890 = vadd.f32 %v1536, %v1889
        %v1891 = vpop.f32.mrf.mxu0
        %v1892 = vpop.f32.mrf.mxu0
        %v1893 = vadd.f32 %v1539, %v1892
        %v1894 = vpop.f32.mrf.mxu0
        %1895 = vmatprep.mubr.bf16.mxu0 0
        %1896 = vmatmul.mubr.bf16.gmra.mxu0 %v1738
        %v1897 = vpop.f32.mrf.mxu0
        %v1898 = vadd.f32 %v1544, %v1897
        %v1899 = vpop.f32.mrf.mxu0
        %v1900 = vpop.f32.mrf.mxu0
        %v1901 = vadd.f32 %v1547, %v1900
        %v1902 = vpop.f32.mrf.mxu0
        %1903 = vmatprep.mubr.bf16.mxu0 0
        %1904 = vmatmul.mubr.bf16.gmra.mxu0 %v1741
        %v1905 = vpop.f32.mrf.mxu0
        %v1906 = vadd.f32 %v1552, %v1905
        %v1907 = vpop.f32.mrf.mxu0
        %v1908 = vpop.f32.mrf.mxu0
        %v1909 = vadd.f32 %v1555, %v1908
        %v1910 = vpop.f32.mrf.mxu0
        %1911 = vmatprep.mubr.bf16.mxu0 0
        %1912 = vmatmul.mubr.bf16.gmra.mxu0 %v1744
        %v1913 = vpop.f32.mrf.mxu0
        %v1914 = vadd.f32 %v1560, %v1913
        %v1915 = vpop.f32.mrf.mxu0
        %v1916 = vpop.f32.mrf.mxu0
        %v1917 = vadd.f32 %v1563, %v1916
        %v1918 = vpop.f32.mrf.mxu0
        %1919 = vmatprep.mubr.bf16.mxu0 0
        %1920 = vmatmul.mubr.bf16.gmra.mxu0 %v1747
        %v1921 = vpop.f32.mrf.mxu0
        %v1922 = vadd.f32 %v1568, %v1921
        %v1923 = vpop.f32.mrf.mxu0
        %v1924 = vpop.f32.mrf.mxu0
        %v1925 = vadd.f32 %v1571, %v1924
        %v1926 = vpop.f32.mrf.mxu0
        %1927 = vmatprep.mubr.bf16.mxu0 0
        %1928 = vmatmul.mubr.bf16.gmra.mxu0 %v1750
        %v1929 = vpop.f32.mrf.mxu0
        %v1930 = vadd.f32 %v1576, %v1929
        %v1931 = vpop.f32.mrf.mxu0
        %v1932 = vpop.f32.mrf.mxu0
        %v1933 = vadd.f32 %v1579, %v1932
        %v1934 = vpop.f32.mrf.mxu0
        %1935 = vmatprep.mubr.bf16.mxu0 0
        %1936 = vmatmul.mubr.bf16.gmra.mxu0 %v1753
        %v1937 = vpop.f32.mrf.mxu0
        %v1938 = vadd.f32 %v1584, %v1937
        %v1939 = vpop.f32.mrf.mxu0
        %v1940 = vpop.f32.mrf.mxu0
        %v1941 = vadd.f32 %v1587, %v1940
        %v1942 = vpop.f32.mrf.mxu0
        %1943 = vmatprep.mubr.bf16.mxu0 0
        %1944 = vmatmul.mubr.bf16.gmra.mxu0 %v1756
        %v1945 = vpop.f32.mrf.mxu0
        %v1946 = vadd.f32 %v1592, %v1945
        %v1947 = vpop.f32.mrf.mxu0
        %v1948 = vpop.f32.mrf.mxu0
        %v1949 = vadd.f32 %v1595, %v1948
        %v1950 = vpop.f32.mrf.mxu0
        %1951 = vmatprep.mubr.bf16.mxu0 0
        %1952 = vmatmul.mubr.bf16.gmra.mxu0 %v1759
        %v1953 = vpop.f32.mrf.mxu0
        %v1954 = vadd.f32 %v1600, %v1953
        %v1955 = vpop.f32.mrf.mxu0
        %v1956 = vpop.f32.mrf.mxu0
        %v1957 = vadd.f32 %v1603, %v1956
        %v1958 = vpop.f32.mrf.mxu0
        %1959 = vmatprep.mubr.bf16.mxu0 0
        %1960 = vmatmul.mubr.bf16.gmra.mxu0 %v1762
        %v1961 = vpop.f32.mrf.mxu0
        %v1962 = vadd.f32 %v1608, %v1961
        %v1963 = vpop.f32.mrf.mxu0
        %v1964 = vpop.f32.mrf.mxu0
        %v1965 = vadd.f32 %v1611, %v1964
        %v1966 = vpop.f32.mrf.mxu0
        %1967 = vmatprep.mubr.bf16.mxu0 0
        %1968 = vmatmul.mubr.bf16.gmra.mxu0 %v1765
        %v1969 = vpop.f32.mrf.mxu0
        %v1970 = vadd.f32 %v1616, %v1969
        %v1971 = vpop.f32.mrf.mxu0
        %v1972 = vpop.f32.mrf.mxu0
        %v1973 = vadd.f32 %v1619, %v1972
        %v1974 = vpop.f32.mrf.mxu0
        %1975 = vmatprep.mubr.bf16.mxu0 0
        %1976 = vmatmul.mubr.bf16.gmra.mxu0 %v1768
        %v1977 = vpop.f32.mrf.mxu0
        %v1978 = vadd.f32 %v1624, %v1977
        %v1979 = vpop.f32.mrf.mxu0
        %v1980 = vpop.f32.mrf.mxu0
        %v1981 = vadd.f32 %v1627, %v1980
        %v1982 = vpop.f32.mrf.mxu0
        %1983 = vmatprep.mubr.bf16.mxu0 0
        %1984 = vmatmul.mubr.bf16.gmra.mxu0 %v1771
        %v1985 = vpop.f32.mrf.mxu0
        %v1986 = vadd.f32 %v1632, %v1985
        %v1987 = vpop.f32.mrf.mxu0
        %v1988 = vpop.f32.mrf.mxu0
        %v1989 = vadd.f32 %v1635, %v1988
        %v1990 = vpop.f32.mrf.mxu0
        %1991 = vmatprep.mubr.bf16.mxu0 0
        %1992 = vmatmul.mubr.bf16.gmra.mxu0 %v1774
        %v1993 = vpop.f32.mrf.mxu0
        %v1994 = vadd.f32 %v1640, %v1993
        %v1995 = vpop.f32.mrf.mxu0
        %v1996 = vpop.f32.mrf.mxu0
        %v1997 = vadd.f32 %v1643, %v1996
        %v1998 = vpop.f32.mrf.mxu0
        %1999 = vmatprep.mubr.bf16.mxu0 0
        %2000 = vmatmul.mubr.bf16.gmra.mxu0 %v1777
        %v2001 = vpop.f32.mrf.mxu0
        %v2002 = vadd.f32 %v1648, %v2001
        %v2003 = vpop.f32.mrf.mxu0
        %v2004 = vpop.f32.mrf.mxu0
        %v2005 = vadd.f32 %v1651, %v2004
        %v2006 = vpop.f32.mrf.mxu0
        %2007 = vmatprep.mubr.bf16.mxu0 0
        %2008 = vmatmul.mubr.bf16.gmra.mxu0 %v1780
        %v2009 = vpop.f32.mrf.mxu0
        %v2010 = vadd.f32 %v1656, %v2009
        %v2011 = vpop.f32.mrf.mxu0
        %v2012 = vpop.f32.mrf.mxu0
        %v2013 = vadd.f32 %v1659, %v2012
        %v2014 = vpop.f32.mrf.mxu0
        %2015 = vmatprep.mubr.bf16.mxu0 0
        %2016 = vmatmul.mubr.bf16.gmra.mxu0 %v1783
        %v2017 = vpop.f32.mrf.mxu0
        %v2018 = vadd.f32 %v1664, %v2017
        %v2019 = vpop.f32.mrf.mxu0
        %v2020 = vpop.f32.mrf.mxu0
        %v2021 = vadd.f32 %v1667, %v2020
        %v2022 = vpop.f32.mrf.mxu0
        %2023 = vmatprep.mubr.bf16.mxu0 0
        %2024 = vmatmul.mubr.bf16.gmra.mxu0 %v1786
        %v2025 = vpop.f32.mrf.mxu0
        %v2026 = vadd.f32 %v1672, %v2025
        %v2027 = vpop.f32.mrf.mxu0
        %v2028 = vpop.f32.mrf.mxu0
        %v2029 = vadd.f32 %v1675, %v2028
        %v2030 = vpop.f32.mrf.mxu0
        %2031 = vmatprep.mubr.bf16.mxu0 0
        %2032 = vmatmul.mubr.bf16.gmra.mxu0 %v1789
        %v2033 = vpop.f32.mrf.mxu0
        %v2034 = vadd.f32 %v1680, %v2033
        %v2035 = vpop.f32.mrf.mxu0
        %v2036 = vpop.f32.mrf.mxu0
        %v2037 = vadd.f32 %v1683, %v2036
        %v2038 = vpop.f32.mrf.mxu0
        %2039 = vdwg.mxu0
        %v2040 = vld [vmem:[#allocation2 + $0x9] sm:$0xff]
        %v2041 = vld [vmem:[#allocation2 + $0x11] sm:$0xff]
        %v2042 = vld [vmem:[#allocation2 + $0x19] sm:$0xff]
        %v2043 = vld [vmem:[#allocation2 + $0x21] sm:$0xff]
        %v2044 = vld [vmem:[#allocation2 + $0x29] sm:$0xff]
        %v2045 = vld [vmem:[#allocation2 + $0x31] sm:$0xff]
        %v2046 = vld [vmem:[#allocation2 + $0x39] sm:$0xff]
        %v2047 = vld [vmem:[#allocation2 + $0x41] sm:$0xff]
        %v2048 = vld [vmem:[#allocation2 + $0x49] sm:$0xff]
        %v2049 = vld [vmem:[#allocation2 + $0x51] sm:$0xff]
        %v2050 = vld [vmem:[#allocation2 + $0x59] sm:$0xff]
        %v2051 = vld [vmem:[#allocation2 + $0x61] sm:$0xff]
        %v2052 = vld [vmem:[#allocation2 + $0x69] sm:$0xff]
        %v2053 = vld [vmem:[#allocation2 + $0x71] sm:$0xff]
        %v2054 = vld [vmem:[#allocation2 + $0x79] sm:$0xff]
        %v2055 = vld [vmem:[#allocation2 + $0x81] sm:$0xff]
        %v2056 = vld [vmem:[#allocation2 + $0x89] sm:$0xff]
        %v2057 = vld [vmem:[#allocation2 + $0x91] sm:$0xff]
        %v2058 = vld [vmem:[#allocation2 + $0x99] sm:$0xff]
        %v2059 = vld [vmem:[#allocation2 + $0xa1] sm:$0xff]
        %v2060 = vld [vmem:[#allocation2 + $0xa9] sm:$0xff]
        %v2061 = vld [vmem:[#allocation2 + $0xb1] sm:$0xff]
        %v2062 = vld [vmem:[#allocation2 + $0xb9] sm:$0xff]
        %v2063 = vld [vmem:[#allocation2 + $0xc1] sm:$0xff]
        %v2064 = vld [vmem:[#allocation2 + $0xc9] sm:$0xff]
        %v2065 = vld [vmem:[#allocation2 + $0xd1] sm:$0xff]
        %v2066 = vld [vmem:[#allocation2 + $0xd9] sm:$0xff]
        %v2067 = vld [vmem:[#allocation2 + $0xe1] sm:$0xff]
        %v2068 = vld [vmem:[#allocation2 + $0xe9] sm:$0xff]
        %v2069 = vld [vmem:[#allocation2 + $0xf1] sm:$0xff]
        %v2070 = vld [vmem:[#allocation2 + $0xf9] sm:$0xff]
        %v2071 = vld [vmem:[#allocation2 + $0x101] sm:$0xff]
        %v2072 = vld [vmem:[#allocation2 + $0x109] sm:$0xff]
        %v2073 = vld [vmem:[#allocation2 + $0x111] sm:$0xff]
        %v2074 = vld [vmem:[#allocation2 + $0x119] sm:$0xff]
        %v2075 = vld [vmem:[#allocation2 + $0x121] sm:$0xff]
        %v2076 = vld [vmem:[#allocation2 + $0x129] sm:$0xff]
        %v2077 = vld [vmem:[#allocation2 + $0x131] sm:$0xff]
        %v2078 = vld [vmem:[#allocation2 + $0x139] sm:$0xff]
        %v2079 = vld [vmem:[#allocation2 + $0x141] sm:$0xff]
        %v2080 = vld [vmem:[#allocation2 + $0x149] sm:$0xff]
        %v2081 = vld [vmem:[#allocation2 + $0x151] sm:$0xff]
        %v2082 = vld [vmem:[#allocation2 + $0x159] sm:$0xff]
        %v2083 = vld [vmem:[#allocation2 + $0x161] sm:$0xff]
        %v2084 = vld [vmem:[#allocation2 + $0x169] sm:$0xff]
        %v2085 = vld [vmem:[#allocation2 + $0x171] sm:$0xff]
        %v2086 = vld [vmem:[#allocation2 + $0x179] sm:$0xff]
        %v2087 = vld [vmem:[#allocation2 + $0x181] sm:$0xff]
        %v2088 = vld [vmem:[#allocation2 + $0x189] sm:$0xff]
        %v2089 = vld [vmem:[#allocation2 + $0x191] sm:$0xff]
        %v2090 = vld [vmem:[#allocation2 + $0x199] sm:$0xff]
        %v2091 = vld [vmem:[#allocation2 + $0x1a1] sm:$0xff]
        %v2092 = vld [vmem:[#allocation2 + $0x1a9] sm:$0xff]
        %v2093 = vld [vmem:[#allocation2 + $0x1b1] sm:$0xff]
        %v2094 = vpack.c.bf16 %v2041, %v2040
        %v2095 = vpack.c.bf16 %v2043, %v2042
        %v2096 = vpack.c.bf16 %v2045, %v2044
        %v2097 = vpack.c.bf16 %v2047, %v2046
        %v2098 = vpack.c.bf16 %v2049, %v2048
        %v2099 = vpack.c.bf16 %v2051, %v2050
        %v2100 = vpack.c.bf16 %v2053, %v2052
        %v2101 = vpack.c.bf16 %v2055, %v2054
        %v2102 = vpack.c.bf16 %v2057, %v2056
        %v2103 = vpack.c.bf16 %v2059, %v2058
        %v2104 = vpack.c.bf16 %v2061, %v2060
        %v2105 = vpack.c.bf16 %v2063, %v2062
        %v2106 = vpack.c.bf16 %v2065, %v2064
        %v2107 = vpack.c.bf16 %v2067, %v2066
        %v2108 = vpack.c.bf16 %v2069, %v2068
        %v2109 = vpack.c.bf16 %v2071, %v2070
        %v2110 = vpack.c.bf16 %v2073, %v2072
        %v2111 = vpack.c.bf16 %v2075, %v2074
        %v2112 = vpack.c.bf16 %v2077, %v2076
        %v2113 = vpack.c.bf16 %v2079, %v2078
        %v2114 = vpack.c.bf16 %v2081, %v2080
        %v2115 = vpack.c.bf16 %v2083, %v2082
        %v2116 = vpack.c.bf16 %v2085, %v2084
        %v2117 = vpack.c.bf16 %v2087, %v2086
        %v2118 = vpack.c.bf16 %v2089, %v2088
        %v2119 = vpack.c.bf16 %v2091, %v2090
        %v2120 = vpack.c.bf16 %v2093, %v2092
        %s2121 = scalar_lea.vmem %s5, 64
        %v2122 = vld [vmem:[%s2121] sm:$0xf]
        %v2123 = vld [vmem:[%s2121 + $0x4] sm:$0xf]
        %v2124 = vld [vmem:[%s2121 + $0x8] sm:$0xf]
        %v2125 = vld [vmem:[%s2121 + $0xc] sm:$0xf]
        %v2126 = vld [vmem:[%s2121 + $0x10] sm:$0xf]
        %v2127 = vld [vmem:[%s2121 + $0x14] sm:$0xf]
        %v2128 = vld [vmem:[%s2121 + $0x18] sm:$0xf]
        %v2129 = vld [vmem:[%s2121 + $0x1c] sm:$0xf]
        %v2138 = vunpack.c.l.b16 %v2122
        %v2139 = vunpack.c.l.b16 %v2123
        %v2140 = vunpack.c.l.b16 %v2124
        %v2141 = vunpack.c.l.b16 %v2125
        %v2142 = vunpack.c.l.b16 %v2126
        %v2143 = vunpack.c.l.b16 %v2127
        %v2144 = vunpack.c.l.b16 %v2128
        %v2145 = vunpack.c.l.b16 %v2129
        %v2146 = vpack.c.b16 %v2139, %v2138
        %v2147 = vpack.c.b16 %v2141, %v2140
        %v2148 = vpack.c.b16 %v2143, %v2142
        %v2149 = vpack.c.b16 %v2145, %v2144
        %v2155 = vsel %vm684, %v2094, 0
        %v2158 = vsel %vm684, %v2095, 0
        %v2161 = vsel %vm684, %v2096, 0
        %v2164 = vsel %vm684, %v2097, 0
        %v2167 = vsel %vm684, %v2098, 0
        %v2170 = vsel %vm684, %v2099, 0
        %v2173 = vsel %vm684, %v2100, 0
        %v2176 = vsel %vm684, %v2101, 0
        %v2179 = vsel %vm684, %v2102, 0
        %v2182 = vsel %vm684, %v2103, 0
        %v2185 = vsel %vm684, %v2104, 0
        %v2188 = vsel %vm684, %v2105, 0
        %v2191 = vsel %vm684, %v2106, 0
        %v2194 = vsel %vm684, %v2107, 0
        %v2197 = vsel %vm684, %v2108, 0
        %v2200 = vsel %vm684, %v2109, 0
        %v2203 = vsel %vm684, %v2110, 0
        %v2206 = vsel %vm684, %v2111, 0
        %v2209 = vsel %vm684, %v2112, 0
        %v2212 = vsel %vm684, %v2113, 0
        %v2215 = vsel %vm684, %v2114, 0
        %v2218 = vsel %vm684, %v2115, 0
        %v2221 = vsel %vm684, %v2116, 0
        %v2224 = vsel %vm684, %v2117, 0
        %v2227 = vsel %vm684, %v2118, 0
        %v2230 = vsel %vm684, %v2119, 0
        %v2233 = vsel %vm684, %v2120, 0
        %2235 = vmatprep.subr.bf16.mxu0 0
        %2236 = vmatpush1.bf16.msra.mxu0 0
        %2237 = vmatprep.subr.bf16.mxu0 0
        %2238 = vmatpush1.bf16.msra.mxu0 0
        %2239 = vmatprep.subr.bf16.mxu0 0
        %2240 = vmatpush1.bf16.msra.mxu0 0
        %2241 = vmatprep.subr.bf16.mxu0 0
        %2242 = vmatpush1.bf16.msra.mxu0 0
        %2243 = vmatprep.subr.bf16.mxu0 0
        %2244 = vmatpush1.bf16.msra.mxu0 %v2149
        %2245 = vmatprep.subr.bf16.mxu0 0
        %2246 = vmatpush1.bf16.msra.mxu0 %v2148
        %2247 = vmatprep.subr.bf16.mxu0 0
        %2248 = vmatpush1.bf16.msra.mxu0 %v2147
        %2249 = vmatprep.subr.bf16.mxu0 0
        %2250 = vmatpush1.bf16.msra.mxu0 %v2146
        %2251 = vmatprep.subr.bf16.mxu0 0
        %2252 = vmatpush2.bf16.msra.mxu0 0
        %2253 = vmatprep.subr.bf16.mxu0 0
        %2254 = vmatpush2.bf16.msra.mxu0 0
        %2255 = vmatprep.subr.bf16.mxu0 0
        %2256 = vmatpush2.bf16.msra.mxu0 0
        %2257 = vmatprep.subr.bf16.mxu0 0
        %2258 = vmatpush2.bf16.msra.mxu0 0
        %2259 = vmatprep.subr.bf16.mxu0 0
        %2260 = vmatpush2.bf16.msra.mxu0 0
        %2261 = vmatprep.subr.bf16.mxu0 0
        %2262 = vmatpush2.bf16.msra.mxu0 0
        %2263 = vmatprep.subr.bf16.mxu0 0
        %2264 = vmatpush2.bf16.msra.mxu0 0
        %2265 = vmatprep.subr.bf16.mxu0 0
        %2266 = vmatpush2.bf16.msra.mxu0 0
        %2267 = vmatprep.mubr.bf16.mxu0 0
        %2268 = vmatmul.mubr.bf16.gmra.mxu0 %v2155
        %v2269 = vpop.f32.mrf.mxu0
        %v2270 = vadd.f32 0.0, %v2269
        %v2271 = vpop.f32.mrf.mxu0
        %v2272 = vpop.f32.mrf.mxu0
        %v2273 = vadd.f32 0.0, %v2272
        %v2274 = vpop.f32.mrf.mxu0
        %2275 = vmatprep.mubr.bf16.mxu0 0
        %2276 = vmatmul.mubr.bf16.gmra.mxu0 %v2158
        %v2277 = vpop.f32.mrf.mxu0
        %v2278 = vadd.f32 0.0, %v2277
        %v2279 = vpop.f32.mrf.mxu0
        %v2280 = vpop.f32.mrf.mxu0
        %v2281 = vadd.f32 0.0, %v2280
        %v2282 = vpop.f32.mrf.mxu0
        %2283 = vmatprep.mubr.bf16.mxu0 0
        %2284 = vmatmul.mubr.bf16.gmra.mxu0 %v2161
        %v2285 = vpop.f32.mrf.mxu0
        %v2286 = vadd.f32 0.0, %v2285
        %v2287 = vpop.f32.mrf.mxu0
        %v2288 = vpop.f32.mrf.mxu0
        %v2289 = vadd.f32 0.0, %v2288
        %v2290 = vpop.f32.mrf.mxu0
        %2291 = vmatprep.mubr.bf16.mxu0 0
        %2292 = vmatmul.mubr.bf16.gmra.mxu0 %v2164
        %v2293 = vpop.f32.mrf.mxu0
        %v2294 = vadd.f32 0.0, %v2293
        %v2295 = vpop.f32.mrf.mxu0
        %v2296 = vpop.f32.mrf.mxu0
        %v2297 = vadd.f32 0.0, %v2296
        %v2298 = vpop.f32.mrf.mxu0
        %2299 = vmatprep.mubr.bf16.mxu0 0
        %2300 = vmatmul.mubr.bf16.gmra.mxu0 %v2167
        %v2301 = vpop.f32.mrf.mxu0
        %v2302 = vadd.f32 0.0, %v2301
        %v2303 = vpop.f32.mrf.mxu0
        %v2304 = vpop.f32.mrf.mxu0
        %v2305 = vadd.f32 0.0, %v2304
        %v2306 = vpop.f32.mrf.mxu0
        %2307 = vmatprep.mubr.bf16.mxu0 0
        %2308 = vmatmul.mubr.bf16.gmra.mxu0 %v2170
        %v2309 = vpop.f32.mrf.mxu0
        %v2310 = vadd.f32 0.0, %v2309
        %v2311 = vpop.f32.mrf.mxu0
        %v2312 = vpop.f32.mrf.mxu0
        %v2313 = vadd.f32 0.0, %v2312
        %v2314 = vpop.f32.mrf.mxu0
        %2315 = vmatprep.mubr.bf16.mxu0 0
        %2316 = vmatmul.mubr.bf16.gmra.mxu0 %v2173
        %v2317 = vpop.f32.mrf.mxu0
        %v2318 = vadd.f32 0.0, %v2317
        %v2319 = vpop.f32.mrf.mxu0
        %v2320 = vpop.f32.mrf.mxu0
        %v2321 = vadd.f32 0.0, %v2320
        %v2322 = vpop.f32.mrf.mxu0
        %2323 = vmatprep.mubr.bf16.mxu0 0
        %2324 = vmatmul.mubr.bf16.gmra.mxu0 %v2176
        %v2325 = vpop.f32.mrf.mxu0
        %v2326 = vadd.f32 0.0, %v2325
        %v2327 = vpop.f32.mrf.mxu0
        %v2328 = vpop.f32.mrf.mxu0
        %v2329 = vadd.f32 0.0, %v2328
        %v2330 = vpop.f32.mrf.mxu0
        %2331 = vmatprep.mubr.bf16.mxu0 0
        %2332 = vmatmul.mubr.bf16.gmra.mxu0 %v2179
        %v2333 = vpop.f32.mrf.mxu0
        %v2334 = vadd.f32 0.0, %v2333
        %v2335 = vpop.f32.mrf.mxu0
        %v2336 = vpop.f32.mrf.mxu0
        %v2337 = vadd.f32 0.0, %v2336
        %v2338 = vpop.f32.mrf.mxu0
        %2339 = vmatprep.mubr.bf16.mxu0 0
        %2340 = vmatmul.mubr.bf16.gmra.mxu0 %v2182
        %v2341 = vpop.f32.mrf.mxu0
        %v2342 = vadd.f32 0.0, %v2341
        %v2343 = vpop.f32.mrf.mxu0
        %v2344 = vpop.f32.mrf.mxu0
        %v2345 = vadd.f32 0.0, %v2344
        %v2346 = vpop.f32.mrf.mxu0
        %2347 = vmatprep.mubr.bf16.mxu0 0
        %2348 = vmatmul.mubr.bf16.gmra.mxu0 %v2185
        %v2349 = vpop.f32.mrf.mxu0
        %v2350 = vadd.f32 0.0, %v2349
        %v2351 = vpop.f32.mrf.mxu0
        %v2352 = vpop.f32.mrf.mxu0
        %v2353 = vadd.f32 0.0, %v2352
        %v2354 = vpop.f32.mrf.mxu0
        %2355 = vmatprep.mubr.bf16.mxu0 0
        %2356 = vmatmul.mubr.bf16.gmra.mxu0 %v2188
        %v2357 = vpop.f32.mrf.mxu0
        %v2358 = vadd.f32 0.0, %v2357
        %v2359 = vpop.f32.mrf.mxu0
        %v2360 = vpop.f32.mrf.mxu0
        %v2361 = vadd.f32 0.0, %v2360
        %v2362 = vpop.f32.mrf.mxu0
        %2363 = vmatprep.mubr.bf16.mxu0 0
        %2364 = vmatmul.mubr.bf16.gmra.mxu0 %v2191
        %v2365 = vpop.f32.mrf.mxu0
        %v2366 = vadd.f32 0.0, %v2365
        %v2367 = vpop.f32.mrf.mxu0
        %v2368 = vpop.f32.mrf.mxu0
        %v2369 = vadd.f32 0.0, %v2368
        %v2370 = vpop.f32.mrf.mxu0
        %2371 = vmatprep.mubr.bf16.mxu0 0
        %2372 = vmatmul.mubr.bf16.gmra.mxu0 %v2194
        %v2373 = vpop.f32.mrf.mxu0
        %v2374 = vadd.f32 0.0, %v2373
        %v2375 = vpop.f32.mrf.mxu0
        %v2376 = vpop.f32.mrf.mxu0
        %v2377 = vadd.f32 0.0, %v2376
        %v2378 = vpop.f32.mrf.mxu0
        %2379 = vmatprep.mubr.bf16.mxu0 0
        %2380 = vmatmul.mubr.bf16.gmra.mxu0 %v2197
        %v2381 = vpop.f32.mrf.mxu0
        %v2382 = vadd.f32 0.0, %v2381
        %v2383 = vpop.f32.mrf.mxu0
        %v2384 = vpop.f32.mrf.mxu0
        %v2385 = vadd.f32 0.0, %v2384
        %v2386 = vpop.f32.mrf.mxu0
        %2387 = vmatprep.mubr.bf16.mxu0 0
        %2388 = vmatmul.mubr.bf16.gmra.mxu0 %v2200
        %v2389 = vpop.f32.mrf.mxu0
        %v2390 = vadd.f32 0.0, %v2389
        %v2391 = vpop.f32.mrf.mxu0
        %v2392 = vpop.f32.mrf.mxu0
        %v2393 = vadd.f32 0.0, %v2392
        %v2394 = vpop.f32.mrf.mxu0
        %2395 = vmatprep.mubr.bf16.mxu0 0
        %2396 = vmatmul.mubr.bf16.gmra.mxu0 %v2203
        %v2397 = vpop.f32.mrf.mxu0
        %v2398 = vadd.f32 0.0, %v2397
        %v2399 = vpop.f32.mrf.mxu0
        %v2400 = vpop.f32.mrf.mxu0
        %v2401 = vadd.f32 0.0, %v2400
        %v2402 = vpop.f32.mrf.mxu0
        %2403 = vmatprep.mubr.bf16.mxu0 0
        %2404 = vmatmul.mubr.bf16.gmra.mxu0 %v2206
        %v2405 = vpop.f32.mrf.mxu0
        %v2406 = vadd.f32 0.0, %v2405
        %v2407 = vpop.f32.mrf.mxu0
        %v2408 = vpop.f32.mrf.mxu0
        %v2409 = vadd.f32 0.0, %v2408
        %v2410 = vpop.f32.mrf.mxu0
        %2411 = vmatprep.mubr.bf16.mxu0 0
        %2412 = vmatmul.mubr.bf16.gmra.mxu0 %v2209
        %v2413 = vpop.f32.mrf.mxu0
        %v2414 = vadd.f32 0.0, %v2413
        %v2415 = vpop.f32.mrf.mxu0
        %v2416 = vpop.f32.mrf.mxu0
        %v2417 = vadd.f32 0.0, %v2416
        %v2418 = vpop.f32.mrf.mxu0
        %2419 = vmatprep.mubr.bf16.mxu0 0
        %2420 = vmatmul.mubr.bf16.gmra.mxu0 %v2212
        %v2421 = vpop.f32.mrf.mxu0
        %v2422 = vadd.f32 0.0, %v2421
        %v2423 = vpop.f32.mrf.mxu0
        %v2424 = vpop.f32.mrf.mxu0
        %v2425 = vadd.f32 0.0, %v2424
        %v2426 = vpop.f32.mrf.mxu0
        %2427 = vmatprep.mubr.bf16.mxu0 0
        %2428 = vmatmul.mubr.bf16.gmra.mxu0 %v2215
        %v2429 = vpop.f32.mrf.mxu0
        %v2430 = vadd.f32 0.0, %v2429
        %v2431 = vpop.f32.mrf.mxu0
        %v2432 = vpop.f32.mrf.mxu0
        %v2433 = vadd.f32 0.0, %v2432
        %v2434 = vpop.f32.mrf.mxu0
        %2435 = vmatprep.mubr.bf16.mxu0 0
        %2436 = vmatmul.mubr.bf16.gmra.mxu0 %v2218
        %v2437 = vpop.f32.mrf.mxu0
        %v2438 = vadd.f32 0.0, %v2437
        %v2439 = vpop.f32.mrf.mxu0
        %v2440 = vpop.f32.mrf.mxu0
        %v2441 = vadd.f32 0.0, %v2440
        %v2442 = vpop.f32.mrf.mxu0
        %2443 = vmatprep.mubr.bf16.mxu0 0
        %2444 = vmatmul.mubr.bf16.gmra.mxu0 %v2221
        %v2445 = vpop.f32.mrf.mxu0
        %v2446 = vadd.f32 0.0, %v2445
        %v2447 = vpop.f32.mrf.mxu0
        %v2448 = vpop.f32.mrf.mxu0
        %v2449 = vadd.f32 0.0, %v2448
        %v2450 = vpop.f32.mrf.mxu0
        %2451 = vmatprep.mubr.bf16.mxu0 0
        %2452 = vmatmul.mubr.bf16.gmra.mxu0 %v2224
        %v2453 = vpop.f32.mrf.mxu0
        %v2454 = vadd.f32 0.0, %v2453
        %v2455 = vpop.f32.mrf.mxu0
        %v2456 = vpop.f32.mrf.mxu0
        %v2457 = vadd.f32 0.0, %v2456
        %v2458 = vpop.f32.mrf.mxu0
        %2459 = vmatprep.mubr.bf16.mxu0 0
        %2460 = vmatmul.mubr.bf16.gmra.mxu0 %v2227
        %v2461 = vpop.f32.mrf.mxu0
        %v2462 = vadd.f32 0.0, %v2461
        %v2463 = vpop.f32.mrf.mxu0
        %v2464 = vpop.f32.mrf.mxu0
        %v2465 = vadd.f32 0.0, %v2464
        %v2466 = vpop.f32.mrf.mxu0
        %2467 = vmatprep.mubr.bf16.mxu0 0
        %2468 = vmatmul.mubr.bf16.gmra.mxu0 %v2230
        %v2469 = vpop.f32.mrf.mxu0
        %v2470 = vadd.f32 0.0, %v2469
        %v2471 = vpop.f32.mrf.mxu0
        %v2472 = vpop.f32.mrf.mxu0
        %v2473 = vadd.f32 0.0, %v2472
        %v2474 = vpop.f32.mrf.mxu0
        %2475 = vmatprep.mubr.bf16.mxu0 0
        %2476 = vmatmul.mubr.bf16.gmra.mxu0 %v2233
        %v2477 = vpop.f32.mrf.mxu0
        %v2478 = vadd.f32 0.0, %v2477
        %v2479 = vpop.f32.mrf.mxu0
        %v2480 = vpop.f32.mrf.mxu0
        %v2481 = vadd.f32 0.0, %v2480
        %v2482 = vpop.f32.mrf.mxu0
        %2483 = vdwg.mxu0
        %v2484 = vadd.f32 %v1826, %v2270
        %v2485 = vadd.f32 %v1829, %v2273
        %v2486 = vadd.f32 %v1834, %v2278
        %v2487 = vadd.f32 %v1837, %v2281
        %v2488 = vadd.f32 %v1842, %v2286
        %v2489 = vadd.f32 %v1845, %v2289
        %v2490 = vadd.f32 %v1850, %v2294
        %v2491 = vadd.f32 %v1853, %v2297
        %v2492 = vadd.f32 %v1858, %v2302
        %v2493 = vadd.f32 %v1861, %v2305
        %v2494 = vadd.f32 %v1866, %v2310
        %v2495 = vadd.f32 %v1869, %v2313
        %v2496 = vadd.f32 %v1874, %v2318
        %v2497 = vadd.f32 %v1877, %v2321
        %v2498 = vadd.f32 %v1882, %v2326
        %v2499 = vadd.f32 %v1885, %v2329
        %v2500 = vadd.f32 %v1890, %v2334
        %v2501 = vadd.f32 %v1893, %v2337
        %v2502 = vadd.f32 %v1898, %v2342
        %v2503 = vadd.f32 %v1901, %v2345
        %v2504 = vadd.f32 %v1906, %v2350
        %v2505 = vadd.f32 %v1909, %v2353
        %v2506 = vadd.f32 %v1914, %v2358
        %v2507 = vadd.f32 %v1917, %v2361
        %v2508 = vadd.f32 %v1922, %v2366
        %v2509 = vadd.f32 %v1925, %v2369
        %v2510 = vadd.f32 %v1930, %v2374
        %v2511 = vadd.f32 %v1933, %v2377
        %v2512 = vadd.f32 %v1938, %v2382
        %v2513 = vadd.f32 %v1941, %v2385
        %v2514 = vadd.f32 %v1946, %v2390
        %v2515 = vadd.f32 %v1949, %v2393
        %v2516 = vadd.f32 %v1954, %v2398
        %v2517 = vadd.f32 %v1957, %v2401
        %v2518 = vadd.f32 %v1962, %v2406
        %v2519 = vadd.f32 %v1965, %v2409
        %v2520 = vadd.f32 %v1970, %v2414
        %v2521 = vadd.f32 %v1973, %v2417
        %v2522 = vadd.f32 %v1978, %v2422
        %v2523 = vadd.f32 %v1981, %v2425
        %v2524 = vadd.f32 %v1986, %v2430
        %v2525 = vadd.f32 %v1989, %v2433
        %v2526 = vadd.f32 %v1994, %v2438
        %v2527 = vadd.f32 %v1997, %v2441
        %v2528 = vadd.f32 %v2002, %v2446
        %v2529 = vadd.f32 %v2005, %v2449
        %v2530 = vadd.f32 %v2010, %v2454
        %v2531 = vadd.f32 %v2013, %v2457
        %v2532 = vadd.f32 %v2018, %v2462
        %v2533 = vadd.f32 %v2021, %v2465
        %v2534 = vadd.f32 %v2026, %v2470
        %v2535 = vadd.f32 %v2029, %v2473
        %v2536 = vadd.f32 %v2034, %v2478
        %v2537 = vadd.f32 %v2037, %v2481
        %v2538 = vld [vmem:[#allocation2 + $0x1f] sm:$0xff]
        %v2539 = vld [vmem:[#allocation2 + $0x27] sm:$0xff]
        %v2540 = vld [vmem:[#allocation2 + $0x2f] sm:$0xff]
        %v2541 = vld [vmem:[#allocation2 + $0x37] sm:$0xff]
        %v2542 = vld [vmem:[#allocation2 + $0x3f] sm:$0xff]
        %v2543 = vld [vmem:[#allocation2 + $0x47] sm:$0xff]
        %v2544 = vld [vmem:[#allocation2 + $0x4f] sm:$0xff]
        %v2545 = vld [vmem:[#allocation2 + $0x57] sm:$0xff]
        %v2546 = vld [vmem:[#allocation2 + $0x5f] sm:$0xff]
        %v2547 = vld [vmem:[#allocation2 + $0x67] sm:$0xff]
        %v2548 = vld [vmem:[#allocation2 + $0x6f] sm:$0xff]
        %v2549 = vld [vmem:[#allocation2 + $0x77] sm:$0xff]
        %v2550 = vld [vmem:[#allocation2 + $0x7f] sm:$0xff]
        %v2551 = vld [vmem:[#allocation2 + $0x87] sm:$0xff]
        %v2552 = vld [vmem:[#allocation2 + $0x8f] sm:$0xff]
        %v2553 = vld [vmem:[#allocation2 + $0x97] sm:$0xff]
        %v2554 = vld [vmem:[#allocation2 + $0x9f] sm:$0xff]
        %v2555 = vld [vmem:[#allocation2 + $0xa7] sm:$0xff]
        %v2556 = vld [vmem:[#allocation2 + $0xaf] sm:$0xff]
        %v2557 = vld [vmem:[#allocation2 + $0xb7] sm:$0xff]
        %v2558 = vld [vmem:[#allocation2 + $0xbf] sm:$0xff]
        %v2559 = vld [vmem:[#allocation2 + $0xc7] sm:$0xff]
        %v2560 = vld [vmem:[#allocation2 + $0xcf] sm:$0xff]
        %v2561 = vld [vmem:[#allocation2 + $0xd7] sm:$0xff]
        %v2562 = vld [vmem:[#allocation2 + $0xdf] sm:$0xff]
        %v2563 = vld [vmem:[#allocation2 + $0xe7] sm:$0xff]
        %v2564 = vld [vmem:[#allocation2 + $0xef] sm:$0xff]
        %v2565 = vld [vmem:[#allocation2 + $0xf7] sm:$0xff]
        %v2566 = vld [vmem:[#allocation2 + $0xff] sm:$0xff]
        %v2567 = vld [vmem:[#allocation2 + $0x107] sm:$0xff]
        %v2568 = vld [vmem:[#allocation2 + $0x10f] sm:$0xff]
        %v2569 = vld [vmem:[#allocation2 + $0x117] sm:$0xff]
        %v2570 = vld [vmem:[#allocation2 + $0x11f] sm:$0xff]
        %v2571 = vld [vmem:[#allocation2 + $0x127] sm:$0xff]
        %v2572 = vld [vmem:[#allocation2 + $0x12f] sm:$0xff]
        %v2573 = vld [vmem:[#allocation2 + $0x137] sm:$0xff]
        %v2574 = vld [vmem:[#allocation2 + $0x13f] sm:$0xff]
        %v2575 = vld [vmem:[#allocation2 + $0x147] sm:$0xff]
        %v2576 = vld [vmem:[#allocation2 + $0x14f] sm:$0xff]
        %v2577 = vld [vmem:[#allocation2 + $0x157] sm:$0xff]
        %v2578 = vld [vmem:[#allocation2 + $0x15f] sm:$0xff]
        %v2579 = vld [vmem:[#allocation2 + $0x167] sm:$0xff]
        %v2580 = vld [vmem:[#allocation2 + $0x16f] sm:$0xff]
        %v2581 = vld [vmem:[#allocation2 + $0x177] sm:$0xff]
        %v2582 = vld [vmem:[#allocation2 + $0x17f] sm:$0xff]
        %v2583 = vld [vmem:[#allocation2 + $0x187] sm:$0xff]
        %v2584 = vld [vmem:[#allocation2 + $0x18f] sm:$0xff]
        %v2585 = vld [vmem:[#allocation2 + $0x197] sm:$0xff]
        %v2586 = vld [vmem:[#allocation2 + $0x19f] sm:$0xff]
        %v2587 = vld [vmem:[#allocation2 + $0x1a7] sm:$0xff]
        %v2588 = vld [vmem:[#allocation2 + $0x1af] sm:$0xff]
        %v2589 = vld [vmem:[#allocation2 + $0x1b7] sm:$0xff]
        %v2590 = vld [vmem:[#allocation2 + $0x1bf] sm:$0xff]
        %v2591 = vld [vmem:[#allocation2 + $0x1c7] sm:$0xff]
        %v2592 = vpack.c.bf16 %v2539, %v2538
        %v2593 = vpack.c.bf16 %v2541, %v2540
        %v2594 = vpack.c.bf16 %v2543, %v2542
        %v2595 = vpack.c.bf16 %v2545, %v2544
        %v2596 = vpack.c.bf16 %v2547, %v2546
        %v2597 = vpack.c.bf16 %v2549, %v2548
        %v2598 = vpack.c.bf16 %v2551, %v2550
        %v2599 = vpack.c.bf16 %v2553, %v2552
        %v2600 = vpack.c.bf16 %v2555, %v2554
        %v2601 = vpack.c.bf16 %v2557, %v2556
        %v2602 = vpack.c.bf16 %v2559, %v2558
        %v2603 = vpack.c.bf16 %v2561, %v2560
        %v2604 = vpack.c.bf16 %v2563, %v2562
        %v2605 = vpack.c.bf16 %v2565, %v2564
        %v2606 = vpack.c.bf16 %v2567, %v2566
        %v2607 = vpack.c.bf16 %v2569, %v2568
        %v2608 = vpack.c.bf16 %v2571, %v2570
        %v2609 = vpack.c.bf16 %v2573, %v2572
        %v2610 = vpack.c.bf16 %v2575, %v2574
        %v2611 = vpack.c.bf16 %v2577, %v2576
        %v2612 = vpack.c.bf16 %v2579, %v2578
        %v2613 = vpack.c.bf16 %v2581, %v2580
        %v2614 = vpack.c.bf16 %v2583, %v2582
        %v2615 = vpack.c.bf16 %v2585, %v2584
        %v2616 = vpack.c.bf16 %v2587, %v2586
        %v2617 = vpack.c.bf16 %v2589, %v2588
        %v2618 = vpack.c.bf16 %v2591, %v2590
        %s2619 = scalar_lea.vmem %s5, 96
        %v2620 = vld [vmem:[%s2619] sm:$0xf]
        %v2621 = vld [vmem:[%s2619 + $0x4] sm:$0xf]
        %v2622 = vld [vmem:[%s2619 + $0x8] sm:$0xf]
        %v2623 = vld [vmem:[%s2619 + $0xc] sm:$0xf]
        %v2624 = vld [vmem:[%s2619 + $0x10] sm:$0xf]
        %v2625 = vld [vmem:[%s2619 + $0x14] sm:$0xf]
        %v2626 = vld [vmem:[%s2619 + $0x18] sm:$0xf]
        %v2627 = vld [vmem:[%s2619 + $0x1c] sm:$0xf]
        %v2636 = vunpack.c.l.b16 %v2620
        %v2637 = vunpack.c.l.b16 %v2621
        %v2638 = vunpack.c.l.b16 %v2622
        %v2639 = vunpack.c.l.b16 %v2623
        %v2640 = vunpack.c.l.b16 %v2624
        %v2641 = vunpack.c.l.b16 %v2625
        %v2642 = vunpack.c.l.b16 %v2626
        %v2643 = vunpack.c.l.b16 %v2627
        %v2644 = vpack.c.b16 %v2637, %v2636
        %v2645 = vpack.c.b16 %v2639, %v2638
        %v2646 = vpack.c.b16 %v2641, %v2640
        %v2647 = vpack.c.b16 %v2643, %v2642
        %v2653 = vsel %vm684, %v2592, 0
        %v2656 = vsel %vm684, %v2593, 0
        %v2659 = vsel %vm684, %v2594, 0
        %v2662 = vsel %vm684, %v2595, 0
        %v2665 = vsel %vm684, %v2596, 0
        %v2668 = vsel %vm684, %v2597, 0
        %v2671 = vsel %vm684, %v2598, 0
        %v2674 = vsel %vm684, %v2599, 0
        %v2677 = vsel %vm684, %v2600, 0
        %v2680 = vsel %vm684, %v2601, 0
        %v2683 = vsel %vm684, %v2602, 0
        %v2686 = vsel %vm684, %v2603, 0
        %v2689 = vsel %vm684, %v2604, 0
        %v2692 = vsel %vm684, %v2605, 0
        %v2695 = vsel %vm684, %v2606, 0
        %v2698 = vsel %vm684, %v2607, 0
        %v2701 = vsel %vm684, %v2608, 0
        %v2704 = vsel %vm684, %v2609, 0
        %v2707 = vsel %vm684, %v2610, 0
        %v2710 = vsel %vm684, %v2611, 0
        %v2713 = vsel %vm684, %v2612, 0
        %v2716 = vsel %vm684, %v2613, 0
        %v2719 = vsel %vm684, %v2614, 0
        %v2722 = vsel %vm684, %v2615, 0
        %v2725 = vsel %vm684, %v2616, 0
        %v2728 = vsel %vm684, %v2617, 0
        %v2731 = vsel %vm684, %v2618, 0
        %2733 = vmatprep.subr.bf16.mxu0 0
        %2734 = vmatpush1.bf16.msra.mxu0 0
        %2735 = vmatprep.subr.bf16.mxu0 0
        %2736 = vmatpush1.bf16.msra.mxu0 0
        %2737 = vmatprep.subr.bf16.mxu0 0
        %2738 = vmatpush1.bf16.msra.mxu0 0
        %2739 = vmatprep.subr.bf16.mxu0 0
        %2740 = vmatpush1.bf16.msra.mxu0 0
        %2741 = vmatprep.subr.bf16.mxu0 0
        %2742 = vmatpush1.bf16.msra.mxu0 %v2647
        %2743 = vmatprep.subr.bf16.mxu0 0
        %2744 = vmatpush1.bf16.msra.mxu0 %v2646
        %2745 = vmatprep.subr.bf16.mxu0 0
        %2746 = vmatpush1.bf16.msra.mxu0 %v2645
        %2747 = vmatprep.subr.bf16.mxu0 0
        %2748 = vmatpush1.bf16.msra.mxu0 %v2644
        %2749 = vmatprep.subr.bf16.mxu0 0
        %2750 = vmatpush2.bf16.msra.mxu0 0
        %2751 = vmatprep.subr.bf16.mxu0 0
        %2752 = vmatpush2.bf16.msra.mxu0 0
        %2753 = vmatprep.subr.bf16.mxu0 0
        %2754 = vmatpush2.bf16.msra.mxu0 0
        %2755 = vmatprep.subr.bf16.mxu0 0
        %2756 = vmatpush2.bf16.msra.mxu0 0
        %2757 = vmatprep.subr.bf16.mxu0 0
        %2758 = vmatpush2.bf16.msra.mxu0 0
        %2759 = vmatprep.subr.bf16.mxu0 0
        %2760 = vmatpush2.bf16.msra.mxu0 0
        %2761 = vmatprep.subr.bf16.mxu0 0
        %2762 = vmatpush2.bf16.msra.mxu0 0
        %2763 = vmatprep.subr.bf16.mxu0 0
        %2764 = vmatpush2.bf16.msra.mxu0 0
        %2765 = vmatprep.mubr.bf16.mxu0 0
        %2766 = vmatmul.mubr.bf16.gmra.mxu0 %v2653
        %v2767 = vpop.f32.mrf.mxu0
        %v2768 = vadd.f32 0.0, %v2767
        %v2769 = vpop.f32.mrf.mxu0
        %v2770 = vpop.f32.mrf.mxu0
        %v2771 = vadd.f32 0.0, %v2770
        %v2772 = vpop.f32.mrf.mxu0
        %2773 = vmatprep.mubr.bf16.mxu0 0
        %2774 = vmatmul.mubr.bf16.gmra.mxu0 %v2656
        %v2775 = vpop.f32.mrf.mxu0
        %v2776 = vadd.f32 0.0, %v2775
        %v2777 = vpop.f32.mrf.mxu0
        %v2778 = vpop.f32.mrf.mxu0
        %v2779 = vadd.f32 0.0, %v2778
        %v2780 = vpop.f32.mrf.mxu0
        %2781 = vmatprep.mubr.bf16.mxu0 0
        %2782 = vmatmul.mubr.bf16.gmra.mxu0 %v2659
        %v2783 = vpop.f32.mrf.mxu0
        %v2784 = vadd.f32 0.0, %v2783
        %v2785 = vpop.f32.mrf.mxu0
        %v2786 = vpop.f32.mrf.mxu0
        %v2787 = vadd.f32 0.0, %v2786
        %v2788 = vpop.f32.mrf.mxu0
        %2789 = vmatprep.mubr.bf16.mxu0 0
        %2790 = vmatmul.mubr.bf16.gmra.mxu0 %v2662
        %v2791 = vpop.f32.mrf.mxu0
        %v2792 = vadd.f32 0.0, %v2791
        %v2793 = vpop.f32.mrf.mxu0
        %v2794 = vpop.f32.mrf.mxu0
        %v2795 = vadd.f32 0.0, %v2794
        %v2796 = vpop.f32.mrf.mxu0
        %2797 = vmatprep.mubr.bf16.mxu0 0
        %2798 = vmatmul.mubr.bf16.gmra.mxu0 %v2665
        %v2799 = vpop.f32.mrf.mxu0
        %v2800 = vadd.f32 0.0, %v2799
        %v2801 = vpop.f32.mrf.mxu0
        %v2802 = vpop.f32.mrf.mxu0
        %v2803 = vadd.f32 0.0, %v2802
        %v2804 = vpop.f32.mrf.mxu0
        %2805 = vmatprep.mubr.bf16.mxu0 0
        %2806 = vmatmul.mubr.bf16.gmra.mxu0 %v2668
        %v2807 = vpop.f32.mrf.mxu0
        %v2808 = vadd.f32 0.0, %v2807
        %v2809 = vpop.f32.mrf.mxu0
        %v2810 = vpop.f32.mrf.mxu0
        %v2811 = vadd.f32 0.0, %v2810
        %v2812 = vpop.f32.mrf.mxu0
        %2813 = vmatprep.mubr.bf16.mxu0 0
        %2814 = vmatmul.mubr.bf16.gmra.mxu0 %v2671
        %v2815 = vpop.f32.mrf.mxu0
        %v2816 = vadd.f32 0.0, %v2815
        %v2817 = vpop.f32.mrf.mxu0
        %v2818 = vpop.f32.mrf.mxu0
        %v2819 = vadd.f32 0.0, %v2818
        %v2820 = vpop.f32.mrf.mxu0
        %2821 = vmatprep.mubr.bf16.mxu0 0
        %2822 = vmatmul.mubr.bf16.gmra.mxu0 %v2674
        %v2823 = vpop.f32.mrf.mxu0
        %v2824 = vadd.f32 0.0, %v2823
        %v2825 = vpop.f32.mrf.mxu0
        %v2826 = vpop.f32.mrf.mxu0
        %v2827 = vadd.f32 0.0, %v2826
        %v2828 = vpop.f32.mrf.mxu0
        %2829 = vmatprep.mubr.bf16.mxu0 0
        %2830 = vmatmul.mubr.bf16.gmra.mxu0 %v2677
        %v2831 = vpop.f32.mrf.mxu0
        %v2832 = vadd.f32 0.0, %v2831
        %v2833 = vpop.f32.mrf.mxu0
        %v2834 = vpop.f32.mrf.mxu0
        %v2835 = vadd.f32 0.0, %v2834
        %v2836 = vpop.f32.mrf.mxu0
        %2837 = vmatprep.mubr.bf16.mxu0 0
        %2838 = vmatmul.mubr.bf16.gmra.mxu0 %v2680
        %v2839 = vpop.f32.mrf.mxu0
        %v2840 = vadd.f32 0.0, %v2839
        %v2841 = vpop.f32.mrf.mxu0
        %v2842 = vpop.f32.mrf.mxu0
        %v2843 = vadd.f32 0.0, %v2842
        %v2844 = vpop.f32.mrf.mxu0
        %2845 = vmatprep.mubr.bf16.mxu0 0
        %2846 = vmatmul.mubr.bf16.gmra.mxu0 %v2683
        %v2847 = vpop.f32.mrf.mxu0
        %v2848 = vadd.f32 0.0, %v2847
        %v2849 = vpop.f32.mrf.mxu0
        %v2850 = vpop.f32.mrf.mxu0
        %v2851 = vadd.f32 0.0, %v2850
        %v2852 = vpop.f32.mrf.mxu0
        %2853 = vmatprep.mubr.bf16.mxu0 0
        %2854 = vmatmul.mubr.bf16.gmra.mxu0 %v2686
        %v2855 = vpop.f32.mrf.mxu0
        %v2856 = vadd.f32 0.0, %v2855
        %v2857 = vpop.f32.mrf.mxu0
        %v2858 = vpop.f32.mrf.mxu0
        %v2859 = vadd.f32 0.0, %v2858
        %v2860 = vpop.f32.mrf.mxu0
        %2861 = vmatprep.mubr.bf16.mxu0 0
        %2862 = vmatmul.mubr.bf16.gmra.mxu0 %v2689
        %v2863 = vpop.f32.mrf.mxu0
        %v2864 = vadd.f32 0.0, %v2863
        %v2865 = vpop.f32.mrf.mxu0
        %v2866 = vpop.f32.mrf.mxu0
        %v2867 = vadd.f32 0.0, %v2866
        %v2868 = vpop.f32.mrf.mxu0
        %2869 = vmatprep.mubr.bf16.mxu0 0
        %2870 = vmatmul.mubr.bf16.gmra.mxu0 %v2692
        %v2871 = vpop.f32.mrf.mxu0
        %v2872 = vadd.f32 0.0, %v2871
        %v2873 = vpop.f32.mrf.mxu0
        %v2874 = vpop.f32.mrf.mxu0
        %v2875 = vadd.f32 0.0, %v2874
        %v2876 = vpop.f32.mrf.mxu0
        %2877 = vmatprep.mubr.bf16.mxu0 0
        %2878 = vmatmul.mubr.bf16.gmra.mxu0 %v2695
        %v2879 = vpop.f32.mrf.mxu0
        %v2880 = vadd.f32 0.0, %v2879
        %v2881 = vpop.f32.mrf.mxu0
        %v2882 = vpop.f32.mrf.mxu0
        %v2883 = vadd.f32 0.0, %v2882
        %v2884 = vpop.f32.mrf.mxu0
        %2885 = vmatprep.mubr.bf16.mxu0 0
        %2886 = vmatmul.mubr.bf16.gmra.mxu0 %v2698
        %v2887 = vpop.f32.mrf.mxu0
        %v2888 = vadd.f32 0.0, %v2887
        %v2889 = vpop.f32.mrf.mxu0
        %v2890 = vpop.f32.mrf.mxu0
        %v2891 = vadd.f32 0.0, %v2890
        %v2892 = vpop.f32.mrf.mxu0
        %2893 = vmatprep.mubr.bf16.mxu0 0
        %2894 = vmatmul.mubr.bf16.gmra.mxu0 %v2701
        %v2895 = vpop.f32.mrf.mxu0
        %v2896 = vadd.f32 0.0, %v2895
        %v2897 = vpop.f32.mrf.mxu0
        %v2898 = vpop.f32.mrf.mxu0
        %v2899 = vadd.f32 0.0, %v2898
        %v2900 = vpop.f32.mrf.mxu0
        %2901 = vmatprep.mubr.bf16.mxu0 0
        %2902 = vmatmul.mubr.bf16.gmra.mxu0 %v2704
        %v2903 = vpop.f32.mrf.mxu0
        %v2904 = vadd.f32 0.0, %v2903
        %v2905 = vpop.f32.mrf.mxu0
        %v2906 = vpop.f32.mrf.mxu0
        %v2907 = vadd.f32 0.0, %v2906
        %v2908 = vpop.f32.mrf.mxu0
        %2909 = vmatprep.mubr.bf16.mxu0 0
        %2910 = vmatmul.mubr.bf16.gmra.mxu0 %v2707
        %v2911 = vpop.f32.mrf.mxu0
        %v2912 = vadd.f32 0.0, %v2911
        %v2913 = vpop.f32.mrf.mxu0
        %v2914 = vpop.f32.mrf.mxu0
        %v2915 = vadd.f32 0.0, %v2914
        %v2916 = vpop.f32.mrf.mxu0
        %2917 = vmatprep.mubr.bf16.mxu0 0
        %2918 = vmatmul.mubr.bf16.gmra.mxu0 %v2710
        %v2919 = vpop.f32.mrf.mxu0
        %v2920 = vadd.f32 0.0, %v2919
        %v2921 = vpop.f32.mrf.mxu0
        %v2922 = vpop.f32.mrf.mxu0
        %v2923 = vadd.f32 0.0, %v2922
        %v2924 = vpop.f32.mrf.mxu0
        %2925 = vmatprep.mubr.bf16.mxu0 0
        %2926 = vmatmul.mubr.bf16.gmra.mxu0 %v2713
        %v2927 = vpop.f32.mrf.mxu0
        %v2928 = vadd.f32 0.0, %v2927
        %v2929 = vpop.f32.mrf.mxu0
        %v2930 = vpop.f32.mrf.mxu0
        %v2931 = vadd.f32 0.0, %v2930
        %v2932 = vpop.f32.mrf.mxu0
        %2933 = vmatprep.mubr.bf16.mxu0 0
        %2934 = vmatmul.mubr.bf16.gmra.mxu0 %v2716
        %v2935 = vpop.f32.mrf.mxu0
        %v2936 = vadd.f32 0.0, %v2935
        %v2937 = vpop.f32.mrf.mxu0
        %v2938 = vpop.f32.mrf.mxu0
        %v2939 = vadd.f32 0.0, %v2938
        %v2940 = vpop.f32.mrf.mxu0
        %2941 = vmatprep.mubr.bf16.mxu0 0
        %2942 = vmatmul.mubr.bf16.gmra.mxu0 %v2719
        %v2943 = vpop.f32.mrf.mxu0
        %v2944 = vadd.f32 0.0, %v2943
        %v2945 = vpop.f32.mrf.mxu0
        %v2946 = vpop.f32.mrf.mxu0
        %v2947 = vadd.f32 0.0, %v2946
        %v2948 = vpop.f32.mrf.mxu0
        %2949 = vmatprep.mubr.bf16.mxu0 0
        %2950 = vmatmul.mubr.bf16.gmra.mxu0 %v2722
        %v2951 = vpop.f32.mrf.mxu0
        %v2952 = vadd.f32 0.0, %v2951
        %v2953 = vpop.f32.mrf.mxu0
        %v2954 = vpop.f32.mrf.mxu0
        %v2955 = vadd.f32 0.0, %v2954
        %v2956 = vpop.f32.mrf.mxu0
        %2957 = vmatprep.mubr.bf16.mxu0 0
        %2958 = vmatmul.mubr.bf16.gmra.mxu0 %v2725
        %v2959 = vpop.f32.mrf.mxu0
        %v2960 = vadd.f32 0.0, %v2959
        %v2961 = vpop.f32.mrf.mxu0
        %v2962 = vpop.f32.mrf.mxu0
        %v2963 = vadd.f32 0.0, %v2962
        %v2964 = vpop.f32.mrf.mxu0
        %2965 = vmatprep.mubr.bf16.mxu0 0
        %2966 = vmatmul.mubr.bf16.gmra.mxu0 %v2728
        %v2967 = vpop.f32.mrf.mxu0
        %v2968 = vadd.f32 0.0, %v2967
        %v2969 = vpop.f32.mrf.mxu0
        %v2970 = vpop.f32.mrf.mxu0
        %v2971 = vadd.f32 0.0, %v2970
        %v2972 = vpop.f32.mrf.mxu0
        %2973 = vmatprep.mubr.bf16.mxu0 0
        %2974 = vmatmul.mubr.bf16.gmra.mxu0 %v2731
        %v2975 = vpop.f32.mrf.mxu0
        %v2976 = vadd.f32 0.0, %v2975
        %v2977 = vpop.f32.mrf.mxu0
        %v2978 = vpop.f32.mrf.mxu0
        %v2979 = vadd.f32 0.0, %v2978
        %v2980 = vpop.f32.mrf.mxu0
        %2981 = vdwg.mxu0
        %v2982 = vadd.f32 %v2484, %v2768
        %v2983 = vadd.f32 %v2485, %v2771
        %v2984 = vadd.f32 %v2486, %v2776
        %v2985 = vadd.f32 %v2487, %v2779
        %v2986 = vadd.f32 %v2488, %v2784
        %v2987 = vadd.f32 %v2489, %v2787
        %v2988 = vadd.f32 %v2490, %v2792
        %v2989 = vadd.f32 %v2491, %v2795
        %v2990 = vadd.f32 %v2492, %v2800
        %v2991 = vadd.f32 %v2493, %v2803
        %v2992 = vadd.f32 %v2494, %v2808
        %v2993 = vadd.f32 %v2495, %v2811
        %v2994 = vadd.f32 %v2496, %v2816
        %v2995 = vadd.f32 %v2497, %v2819
        %v2996 = vadd.f32 %v2498, %v2824
        %v2997 = vadd.f32 %v2499, %v2827
        %v2998 = vadd.f32 %v2500, %v2832
        %v2999 = vadd.f32 %v2501, %v2835
        %v3000 = vadd.f32 %v2502, %v2840
        %v3001 = vadd.f32 %v2503, %v2843
        %v3002 = vadd.f32 %v2504, %v2848
        %v3003 = vadd.f32 %v2505, %v2851
        %v3004 = vadd.f32 %v2506, %v2856
        %v3005 = vadd.f32 %v2507, %v2859
        %v3006 = vadd.f32 %v2508, %v2864
        %v3007 = vadd.f32 %v2509, %v2867
        %v3008 = vadd.f32 %v2510, %v2872
        %v3009 = vadd.f32 %v2511, %v2875
        %v3010 = vadd.f32 %v2512, %v2880
        %v3011 = vadd.f32 %v2513, %v2883
        %v3012 = vadd.f32 %v2514, %v2888
        %v3013 = vadd.f32 %v2515, %v2891
        %v3014 = vadd.f32 %v2516, %v2896
        %v3015 = vadd.f32 %v2517, %v2899
        %v3016 = vadd.f32 %v2518, %v2904
        %v3017 = vadd.f32 %v2519, %v2907
        %v3018 = vadd.f32 %v2520, %v2912
        %v3019 = vadd.f32 %v2521, %v2915
        %v3020 = vadd.f32 %v2522, %v2920
        %v3021 = vadd.f32 %v2523, %v2923
        %v3022 = vadd.f32 %v2524, %v2928
        %v3023 = vadd.f32 %v2525, %v2931
        %v3024 = vadd.f32 %v2526, %v2936
        %v3025 = vadd.f32 %v2527, %v2939
        %v3026 = vadd.f32 %v2528, %v2944
        %v3027 = vadd.f32 %v2529, %v2947
        %v3028 = vadd.f32 %v2530, %v2952
        %v3029 = vadd.f32 %v2531, %v2955
        %v3030 = vadd.f32 %v2532, %v2960
        %v3031 = vadd.f32 %v2533, %v2963
        %v3032 = vadd.f32 %v2534, %v2968
        %v3033 = vadd.f32 %v2535, %v2971
        %v3034 = vadd.f32 %v2536, %v2976
        %v3035 = vadd.f32 %v2537, %v2979
        %v3036 = vld [vmem:[#allocation2 + $0x20] sm:$0xff]
        %v3037 = vld [vmem:[#allocation2 + $0x28] sm:$0xff]
        %v3038 = vld [vmem:[#allocation2 + $0x30] sm:$0xff]
        %v3039 = vld [vmem:[#allocation2 + $0x38] sm:$0xff]
        %v3040 = vld [vmem:[#allocation2 + $0x40] sm:$0xff]
        %v3041 = vld [vmem:[#allocation2 + $0x48] sm:$0xff]
        %v3042 = vld [vmem:[#allocation2 + $0x50] sm:$0xff]
        %v3043 = vld [vmem:[#allocation2 + $0x58] sm:$0xff]
        %v3044 = vld [vmem:[#allocation2 + $0x60] sm:$0xff]
        %v3045 = vld [vmem:[#allocation2 + $0x68] sm:$0xff]
        %v3046 = vld [vmem:[#allocation2 + $0x70] sm:$0xff]
        %v3047 = vld [vmem:[#allocation2 + $0x78] sm:$0xff]
        %v3048 = vld [vmem:[#allocation2 + $0x80] sm:$0xff]
        %v3049 = vld [vmem:[#allocation2 + $0x88] sm:$0xff]
        %v3050 = vld [vmem:[#allocation2 + $0x90] sm:$0xff]
        %v3051 = vld [vmem:[#allocation2 + $0x98] sm:$0xff]
        %v3052 = vld [vmem:[#allocation2 + $0xa0] sm:$0xff]
        %v3053 = vld [vmem:[#allocation2 + $0xa8] sm:$0xff]
        %v3054 = vld [vmem:[#allocation2 + $0xb0] sm:$0xff]
        %v3055 = vld [vmem:[#allocation2 + $0xb8] sm:$0xff]
        %v3056 = vld [vmem:[#allocation2 + $0xc0] sm:$0xff]
        %v3057 = vld [vmem:[#allocation2 + $0xc8] sm:$0xff]
        %v3058 = vld [vmem:[#allocation2 + $0xd0] sm:$0xff]
        %v3059 = vld [vmem:[#allocation2 + $0xd8] sm:$0xff]
        %v3060 = vld [vmem:[#allocation2 + $0xe0] sm:$0xff]
        %v3061 = vld [vmem:[#allocation2 + $0xe8] sm:$0xff]
        %v3062 = vld [vmem:[#allocation2 + $0xf0] sm:$0xff]
        %v3063 = vld [vmem:[#allocation2 + $0xf8] sm:$0xff]
        %v3064 = vld [vmem:[#allocation2 + $0x100] sm:$0xff]
        %v3065 = vld [vmem:[#allocation2 + $0x108] sm:$0xff]
        %v3066 = vld [vmem:[#allocation2 + $0x110] sm:$0xff]
        %v3067 = vld [vmem:[#allocation2 + $0x118] sm:$0xff]
        %v3068 = vld [vmem:[#allocation2 + $0x120] sm:$0xff]
        %v3069 = vld [vmem:[#allocation2 + $0x128] sm:$0xff]
        %v3070 = vld [vmem:[#allocation2 + $0x130] sm:$0xff]
        %v3071 = vld [vmem:[#allocation2 + $0x138] sm:$0xff]
        %v3072 = vld [vmem:[#allocation2 + $0x140] sm:$0xff]
        %v3073 = vld [vmem:[#allocation2 + $0x148] sm:$0xff]
        %v3074 = vld [vmem:[#allocation2 + $0x150] sm:$0xff]
        %v3075 = vld [vmem:[#allocation2 + $0x158] sm:$0xff]
        %v3076 = vld [vmem:[#allocation2 + $0x160] sm:$0xff]
        %v3077 = vld [vmem:[#allocation2 + $0x168] sm:$0xff]
        %v3078 = vld [vmem:[#allocation2 + $0x170] sm:$0xff]
        %v3079 = vld [vmem:[#allocation2 + $0x178] sm:$0xff]
        %v3080 = vld [vmem:[#allocation2 + $0x180] sm:$0xff]
        %v3081 = vld [vmem:[#allocation2 + $0x188] sm:$0xff]
        %v3082 = vld [vmem:[#allocation2 + $0x190] sm:$0xff]
        %v3083 = vld [vmem:[#allocation2 + $0x198] sm:$0xff]
        %v3084 = vld [vmem:[#allocation2 + $0x1a0] sm:$0xff]
        %v3085 = vld [vmem:[#allocation2 + $0x1a8] sm:$0xff]
        %v3086 = vld [vmem:[#allocation2 + $0x1b0] sm:$0xff]
        %v3087 = vld [vmem:[#allocation2 + $0x1b8] sm:$0xff]
        %v3088 = vld [vmem:[#allocation2 + $0x1c0] sm:$0xff]
        %v3089 = vld [vmem:[#allocation2 + $0x1c8] sm:$0xff]
        %v3090 = vpack.c.bf16 %v3037, %v3036
        %v3091 = vpack.c.bf16 %v3039, %v3038
        %v3092 = vpack.c.bf16 %v3041, %v3040
        %v3093 = vpack.c.bf16 %v3043, %v3042
        %v3094 = vpack.c.bf16 %v3045, %v3044
        %v3095 = vpack.c.bf16 %v3047, %v3046
        %v3096 = vpack.c.bf16 %v3049, %v3048
        %v3097 = vpack.c.bf16 %v3051, %v3050
        %v3098 = vpack.c.bf16 %v3053, %v3052
        %v3099 = vpack.c.bf16 %v3055, %v3054
        %v3100 = vpack.c.bf16 %v3057, %v3056
        %v3101 = vpack.c.bf16 %v3059, %v3058
        %v3102 = vpack.c.bf16 %v3061, %v3060
        %v3103 = vpack.c.bf16 %v3063, %v3062
        %v3104 = vpack.c.bf16 %v3065, %v3064
        %v3105 = vpack.c.bf16 %v3067, %v3066
        %v3106 = vpack.c.bf16 %v3069, %v3068
        %v3107 = vpack.c.bf16 %v3071, %v3070
        %v3108 = vpack.c.bf16 %v3073, %v3072
        %v3109 = vpack.c.bf16 %v3075, %v3074
        %v3110 = vpack.c.bf16 %v3077, %v3076
        %v3111 = vpack.c.bf16 %v3079, %v3078
        %v3112 = vpack.c.bf16 %v3081, %v3080
        %v3113 = vpack.c.bf16 %v3083, %v3082
        %v3114 = vpack.c.bf16 %v3085, %v3084
        %v3115 = vpack.c.bf16 %v3087, %v3086
        %v3116 = vpack.c.bf16 %v3089, %v3088
        %s3117 = scalar_lea.vmem %s5, 128
        %v3118 = vld [vmem:[%s3117] sm:$0xf]
        %v3119 = vld [vmem:[%s3117 + $0x4] sm:$0xf]
        %v3120 = vld [vmem:[%s3117 + $0x8] sm:$0xf]
        %v3121 = vld [vmem:[%s3117 + $0xc] sm:$0xf]
        %v3122 = vld [vmem:[%s3117 + $0x10] sm:$0xf]
        %v3123 = vld [vmem:[%s3117 + $0x14] sm:$0xf]
        %v3124 = vld [vmem:[%s3117 + $0x18] sm:$0xf]
        %v3125 = vld [vmem:[%s3117 + $0x1c] sm:$0xf]
        %v3134 = vunpack.c.l.b16 %v3118
        %v3135 = vunpack.c.l.b16 %v3119
        %v3136 = vunpack.c.l.b16 %v3120
        %v3137 = vunpack.c.l.b16 %v3121
        %v3138 = vunpack.c.l.b16 %v3122
        %v3139 = vunpack.c.l.b16 %v3123
        %v3140 = vunpack.c.l.b16 %v3124
        %v3141 = vunpack.c.l.b16 %v3125
        %v3142 = vpack.c.b16 %v3135, %v3134
        %v3143 = vpack.c.b16 %v3137, %v3136
        %v3144 = vpack.c.b16 %v3139, %v3138
        %v3145 = vpack.c.b16 %v3141, %v3140
        %v3151 = vsel %vm684, %v3090, 0
        %v3154 = vsel %vm684, %v3091, 0
        %v3157 = vsel %vm684, %v3092, 0
        %v3160 = vsel %vm684, %v3093, 0
        %v3163 = vsel %vm684, %v3094, 0
        %v3166 = vsel %vm684, %v3095, 0
        %v3169 = vsel %vm684, %v3096, 0
        %v3172 = vsel %vm684, %v3097, 0
        %v3175 = vsel %vm684, %v3098, 0
        %v3178 = vsel %vm684, %v3099, 0
        %v3181 = vsel %vm684, %v3100, 0
        %v3184 = vsel %vm684, %v3101, 0
        %v3187 = vsel %vm684, %v3102, 0
        %v3190 = vsel %vm684, %v3103, 0
        %v3193 = vsel %vm684, %v3104, 0
        %v3196 = vsel %vm684, %v3105, 0
        %v3199 = vsel %vm684, %v3106, 0
        %v3202 = vsel %vm684, %v3107, 0
        %v3205 = vsel %vm684, %v3108, 0
        %v3208 = vsel %vm684, %v3109, 0
        %v3211 = vsel %vm684, %v3110, 0
        %v3214 = vsel %vm684, %v3111, 0
        %v3217 = vsel %vm684, %v3112, 0
        %v3220 = vsel %vm684, %v3113, 0
        %v3223 = vsel %vm684, %v3114, 0
        %v3226 = vsel %vm684, %v3115, 0
        %v3229 = vsel %vm684, %v3116, 0
        %3231 = vmatprep.subr.bf16.mxu0 0
        %3232 = vmatpush1.bf16.msra.mxu0 0
        %3233 = vmatprep.subr.bf16.mxu0 0
        %3234 = vmatpush1.bf16.msra.mxu0 0
        %3235 = vmatprep.subr.bf16.mxu0 0
        %3236 = vmatpush1.bf16.msra.mxu0 0
        %3237 = vmatprep.subr.bf16.mxu0 0
        %3238 = vmatpush1.bf16.msra.mxu0 0
        %3239 = vmatprep.subr.bf16.mxu0 0
        %3240 = vmatpush1.bf16.msra.mxu0 %v3145
        %3241 = vmatprep.subr.bf16.mxu0 0
        %3242 = vmatpush1.bf16.msra.mxu0 %v3144
        %3243 = vmatprep.subr.bf16.mxu0 0
        %3244 = vmatpush1.bf16.msra.mxu0 %v3143
        %3245 = vmatprep.subr.bf16.mxu0 0
        %3246 = vmatpush1.bf16.msra.mxu0 %v3142
        %3247 = vmatprep.subr.bf16.mxu0 0
        %3248 = vmatpush2.bf16.msra.mxu0 0
        %3249 = vmatprep.subr.bf16.mxu0 0
        %3250 = vmatpush2.bf16.msra.mxu0 0
        %3251 = vmatprep.subr.bf16.mxu0 0
        %3252 = vmatpush2.bf16.msra.mxu0 0
        %3253 = vmatprep.subr.bf16.mxu0 0
        %3254 = vmatpush2.bf16.msra.mxu0 0
        %3255 = vmatprep.subr.bf16.mxu0 0
        %3256 = vmatpush2.bf16.msra.mxu0 0
        %3257 = vmatprep.subr.bf16.mxu0 0
        %3258 = vmatpush2.bf16.msra.mxu0 0
        %3259 = vmatprep.subr.bf16.mxu0 0
        %3260 = vmatpush2.bf16.msra.mxu0 0
        %3261 = vmatprep.subr.bf16.mxu0 0
        %3262 = vmatpush2.bf16.msra.mxu0 0
        %3263 = vmatprep.mubr.bf16.mxu0 0
        %3264 = vmatmul.mubr.bf16.gmra.mxu0 %v3151
        %v3265 = vpop.f32.mrf.mxu0
        %v3266 = vadd.f32 0.0, %v3265
        %v3267 = vpop.f32.mrf.mxu0
        %v3268 = vpop.f32.mrf.mxu0
        %v3269 = vadd.f32 0.0, %v3268
        %v3270 = vpop.f32.mrf.mxu0
        %3271 = vmatprep.mubr.bf16.mxu0 0
        %3272 = vmatmul.mubr.bf16.gmra.mxu0 %v3154
        %v3273 = vpop.f32.mrf.mxu0
        %v3274 = vadd.f32 0.0, %v3273
        %v3275 = vpop.f32.mrf.mxu0
        %v3276 = vpop.f32.mrf.mxu0
        %v3277 = vadd.f32 0.0, %v3276
        %v3278 = vpop.f32.mrf.mxu0
        %3279 = vmatprep.mubr.bf16.mxu0 0
        %3280 = vmatmul.mubr.bf16.gmra.mxu0 %v3157
        %v3281 = vpop.f32.mrf.mxu0
        %v3282 = vadd.f32 0.0, %v3281
        %v3283 = vpop.f32.mrf.mxu0
        %v3284 = vpop.f32.mrf.mxu0
        %v3285 = vadd.f32 0.0, %v3284
        %v3286 = vpop.f32.mrf.mxu0
        %3287 = vmatprep.mubr.bf16.mxu0 0
        %3288 = vmatmul.mubr.bf16.gmra.mxu0 %v3160
        %v3289 = vpop.f32.mrf.mxu0
        %v3290 = vadd.f32 0.0, %v3289
        %v3291 = vpop.f32.mrf.mxu0
        %v3292 = vpop.f32.mrf.mxu0
        %v3293 = vadd.f32 0.0, %v3292
        %v3294 = vpop.f32.mrf.mxu0
        %3295 = vmatprep.mubr.bf16.mxu0 0
        %3296 = vmatmul.mubr.bf16.gmra.mxu0 %v3163
        %v3297 = vpop.f32.mrf.mxu0
        %v3298 = vadd.f32 0.0, %v3297
        %v3299 = vpop.f32.mrf.mxu0
        %v3300 = vpop.f32.mrf.mxu0
        %v3301 = vadd.f32 0.0, %v3300
        %v3302 = vpop.f32.mrf.mxu0
        %3303 = vmatprep.mubr.bf16.mxu0 0
        %3304 = vmatmul.mubr.bf16.gmra.mxu0 %v3166
        %v3305 = vpop.f32.mrf.mxu0
        %v3306 = vadd.f32 0.0, %v3305
        %v3307 = vpop.f32.mrf.mxu0
        %v3308 = vpop.f32.mrf.mxu0
        %v3309 = vadd.f32 0.0, %v3308
        %v3310 = vpop.f32.mrf.mxu0
        %3311 = vmatprep.mubr.bf16.mxu0 0
        %3312 = vmatmul.mubr.bf16.gmra.mxu0 %v3169
        %v3313 = vpop.f32.mrf.mxu0
        %v3314 = vadd.f32 0.0, %v3313
        %v3315 = vpop.f32.mrf.mxu0
        %v3316 = vpop.f32.mrf.mxu0
        %v3317 = vadd.f32 0.0, %v3316
        %v3318 = vpop.f32.mrf.mxu0
        %3319 = vmatprep.mubr.bf16.mxu0 0
        %3320 = vmatmul.mubr.bf16.gmra.mxu0 %v3172
        %v3321 = vpop.f32.mrf.mxu0
        %v3322 = vadd.f32 0.0, %v3321
        %v3323 = vpop.f32.mrf.mxu0
        %v3324 = vpop.f32.mrf.mxu0
        %v3325 = vadd.f32 0.0, %v3324
        %v3326 = vpop.f32.mrf.mxu0
        %3327 = vmatprep.mubr.bf16.mxu0 0
        %3328 = vmatmul.mubr.bf16.gmra.mxu0 %v3175
        %v3329 = vpop.f32.mrf.mxu0
        %v3330 = vadd.f32 0.0, %v3329
        %v3331 = vpop.f32.mrf.mxu0
        %v3332 = vpop.f32.mrf.mxu0
        %v3333 = vadd.f32 0.0, %v3332
        %v3334 = vpop.f32.mrf.mxu0
        %3335 = vmatprep.mubr.bf16.mxu0 0
        %3336 = vmatmul.mubr.bf16.gmra.mxu0 %v3178
        %v3337 = vpop.f32.mrf.mxu0
        %v3338 = vadd.f32 0.0, %v3337
        %v3339 = vpop.f32.mrf.mxu0
        %v3340 = vpop.f32.mrf.mxu0
        %v3341 = vadd.f32 0.0, %v3340
        %v3342 = vpop.f32.mrf.mxu0
        %3343 = vmatprep.mubr.bf16.mxu0 0
        %3344 = vmatmul.mubr.bf16.gmra.mxu0 %v3181
        %v3345 = vpop.f32.mrf.mxu0
        %v3346 = vadd.f32 0.0, %v3345
        %v3347 = vpop.f32.mrf.mxu0
        %v3348 = vpop.f32.mrf.mxu0
        %v3349 = vadd.f32 0.0, %v3348
        %v3350 = vpop.f32.mrf.mxu0
        %3351 = vmatprep.mubr.bf16.mxu0 0
        %3352 = vmatmul.mubr.bf16.gmra.mxu0 %v3184
        %v3353 = vpop.f32.mrf.mxu0
        %v3354 = vadd.f32 0.0, %v3353
        %v3355 = vpop.f32.mrf.mxu0
        %v3356 = vpop.f32.mrf.mxu0
        %v3357 = vadd.f32 0.0, %v3356
        %v3358 = vpop.f32.mrf.mxu0
        %3359 = vmatprep.mubr.bf16.mxu0 0
        %3360 = vmatmul.mubr.bf16.gmra.mxu0 %v3187
        %v3361 = vpop.f32.mrf.mxu0
        %v3362 = vadd.f32 0.0, %v3361
        %v3363 = vpop.f32.mrf.mxu0
        %v3364 = vpop.f32.mrf.mxu0
        %v3365 = vadd.f32 0.0, %v3364
        %v3366 = vpop.f32.mrf.mxu0
        %3367 = vmatprep.mubr.bf16.mxu0 0
        %3368 = vmatmul.mubr.bf16.gmra.mxu0 %v3190
        %v3369 = vpop.f32.mrf.mxu0
        %v3370 = vadd.f32 0.0, %v3369
        %v3371 = vpop.f32.mrf.mxu0
        %v3372 = vpop.f32.mrf.mxu0
        %v3373 = vadd.f32 0.0, %v3372
        %v3374 = vpop.f32.mrf.mxu0
        %3375 = vmatprep.mubr.bf16.mxu0 0
        %3376 = vmatmul.mubr.bf16.gmra.mxu0 %v3193
        %v3377 = vpop.f32.mrf.mxu0
        %v3378 = vadd.f32 0.0, %v3377
        %v3379 = vpop.f32.mrf.mxu0
        %v3380 = vpop.f32.mrf.mxu0
        %v3381 = vadd.f32 0.0, %v3380
        %v3382 = vpop.f32.mrf.mxu0
        %3383 = vmatprep.mubr.bf16.mxu0 0
        %3384 = vmatmul.mubr.bf16.gmra.mxu0 %v3196
        %v3385 = vpop.f32.mrf.mxu0
        %v3386 = vadd.f32 0.0, %v3385
        %v3387 = vpop.f32.mrf.mxu0
        %v3388 = vpop.f32.mrf.mxu0
        %v3389 = vadd.f32 0.0, %v3388
        %v3390 = vpop.f32.mrf.mxu0
        %3391 = vmatprep.mubr.bf16.mxu0 0
        %3392 = vmatmul.mubr.bf16.gmra.mxu0 %v3199
        %v3393 = vpop.f32.mrf.mxu0
        %v3394 = vadd.f32 0.0, %v3393
        %v3395 = vpop.f32.mrf.mxu0
        %v3396 = vpop.f32.mrf.mxu0
        %v3397 = vadd.f32 0.0, %v3396
        %v3398 = vpop.f32.mrf.mxu0
        %3399 = vmatprep.mubr.bf16.mxu0 0
        %3400 = vmatmul.mubr.bf16.gmra.mxu0 %v3202
        %v3401 = vpop.f32.mrf.mxu0
        %v3402 = vadd.f32 0.0, %v3401
        %v3403 = vpop.f32.mrf.mxu0
        %v3404 = vpop.f32.mrf.mxu0
        %v3405 = vadd.f32 0.0, %v3404
        %v3406 = vpop.f32.mrf.mxu0
        %3407 = vmatprep.mubr.bf16.mxu0 0
        %3408 = vmatmul.mubr.bf16.gmra.mxu0 %v3205
        %v3409 = vpop.f32.mrf.mxu0
        %v3410 = vadd.f32 0.0, %v3409
        %v3411 = vpop.f32.mrf.mxu0
        %v3412 = vpop.f32.mrf.mxu0
        %v3413 = vadd.f32 0.0, %v3412
        %v3414 = vpop.f32.mrf.mxu0
        %3415 = vmatprep.mubr.bf16.mxu0 0
        %3416 = vmatmul.mubr.bf16.gmra.mxu0 %v3208
        %v3417 = vpop.f32.mrf.mxu0
        %v3418 = vadd.f32 0.0, %v3417
        %v3419 = vpop.f32.mrf.mxu0
        %v3420 = vpop.f32.mrf.mxu0
        %v3421 = vadd.f32 0.0, %v3420
        %v3422 = vpop.f32.mrf.mxu0
        %3423 = vmatprep.mubr.bf16.mxu0 0
        %3424 = vmatmul.mubr.bf16.gmra.mxu0 %v3211
        %v3425 = vpop.f32.mrf.mxu0
        %v3426 = vadd.f32 0.0, %v3425
        %v3427 = vpop.f32.mrf.mxu0
        %v3428 = vpop.f32.mrf.mxu0
        %v3429 = vadd.f32 0.0, %v3428
        %v3430 = vpop.f32.mrf.mxu0
        %3431 = vmatprep.mubr.bf16.mxu0 0
        %3432 = vmatmul.mubr.bf16.gmra.mxu0 %v3214
        %v3433 = vpop.f32.mrf.mxu0
        %v3434 = vadd.f32 0.0, %v3433
        %v3435 = vpop.f32.mrf.mxu0
        %v3436 = vpop.f32.mrf.mxu0
        %v3437 = vadd.f32 0.0, %v3436
        %v3438 = vpop.f32.mrf.mxu0
        %3439 = vmatprep.mubr.bf16.mxu0 0
        %3440 = vmatmul.mubr.bf16.gmra.mxu0 %v3217
        %v3441 = vpop.f32.mrf.mxu0
        %v3442 = vadd.f32 0.0, %v3441
        %v3443 = vpop.f32.mrf.mxu0
        %v3444 = vpop.f32.mrf.mxu0
        %v3445 = vadd.f32 0.0, %v3444
        %v3446 = vpop.f32.mrf.mxu0
        %3447 = vmatprep.mubr.bf16.mxu0 0
        %3448 = vmatmul.mubr.bf16.gmra.mxu0 %v3220
        %v3449 = vpop.f32.mrf.mxu0
        %v3450 = vadd.f32 0.0, %v3449
        %v3451 = vpop.f32.mrf.mxu0
        %v3452 = vpop.f32.mrf.mxu0
        %v3453 = vadd.f32 0.0, %v3452
        %v3454 = vpop.f32.mrf.mxu0
        %3455 = vmatprep.mubr.bf16.mxu0 0
        %3456 = vmatmul.mubr.bf16.gmra.mxu0 %v3223
        %v3457 = vpop.f32.mrf.mxu0
        %v3458 = vadd.f32 0.0, %v3457
        %v3459 = vpop.f32.mrf.mxu0
        %v3460 = vpop.f32.mrf.mxu0
        %v3461 = vadd.f32 0.0, %v3460
        %v3462 = vpop.f32.mrf.mxu0
        %3463 = vmatprep.mubr.bf16.mxu0 0
        %3464 = vmatmul.mubr.bf16.gmra.mxu0 %v3226
        %v3465 = vpop.f32.mrf.mxu0
        %v3466 = vadd.f32 0.0, %v3465
        %v3467 = vpop.f32.mrf.mxu0
        %v3468 = vpop.f32.mrf.mxu0
        %v3469 = vadd.f32 0.0, %v3468
        %v3470 = vpop.f32.mrf.mxu0
        %3471 = vmatprep.mubr.bf16.mxu0 0
        %3472 = vmatmul.mubr.bf16.gmra.mxu0 %v3229
        %v3473 = vpop.f32.mrf.mxu0
        %v3474 = vadd.f32 0.0, %v3473
        %v3475 = vpop.f32.mrf.mxu0
        %v3476 = vpop.f32.mrf.mxu0
        %v3477 = vadd.f32 0.0, %v3476
        %v3478 = vpop.f32.mrf.mxu0
        %3479 = vdwg.mxu0
        %v3480 = vadd.f32 %v2982, %v3266
        %v3481 = vadd.f32 %v2983, %v3269
        %v3482 = vadd.f32 %v2984, %v3274
        %v3483 = vadd.f32 %v2985, %v3277
        %v3484 = vadd.f32 %v2986, %v3282
        %v3485 = vadd.f32 %v2987, %v3285
        %v3486 = vadd.f32 %v2988, %v3290
        %v3487 = vadd.f32 %v2989, %v3293
        %v3488 = vadd.f32 %v2990, %v3298
        %v3489 = vadd.f32 %v2991, %v3301
        %v3490 = vadd.f32 %v2992, %v3306
        %v3491 = vadd.f32 %v2993, %v3309
        %v3492 = vadd.f32 %v2994, %v3314
        %v3493 = vadd.f32 %v2995, %v3317
        %v3494 = vadd.f32 %v2996, %v3322
        %v3495 = vadd.f32 %v2997, %v3325
        %v3496 = vadd.f32 %v2998, %v3330
        %v3497 = vadd.f32 %v2999, %v3333
        %v3498 = vadd.f32 %v3000, %v3338
        %v3499 = vadd.f32 %v3001, %v3341
        %v3500 = vadd.f32 %v3002, %v3346
        %v3501 = vadd.f32 %v3003, %v3349
        %v3502 = vadd.f32 %v3004, %v3354
        %v3503 = vadd.f32 %v3005, %v3357
        %v3504 = vadd.f32 %v3006, %v3362
        %v3505 = vadd.f32 %v3007, %v3365
        %v3506 = vadd.f32 %v3008, %v3370
        %v3507 = vadd.f32 %v3009, %v3373
        %v3508 = vadd.f32 %v3010, %v3378
        %v3509 = vadd.f32 %v3011, %v3381
        %v3510 = vadd.f32 %v3012, %v3386
        %v3511 = vadd.f32 %v3013, %v3389
        %v3512 = vadd.f32 %v3014, %v3394
        %v3513 = vadd.f32 %v3015, %v3397
        %v3514 = vadd.f32 %v3016, %v3402
        %v3515 = vadd.f32 %v3017, %v3405
        %v3516 = vadd.f32 %v3018, %v3410
        %v3517 = vadd.f32 %v3019, %v3413
        %v3518 = vadd.f32 %v3020, %v3418
        %v3519 = vadd.f32 %v3021, %v3421
        %v3520 = vadd.f32 %v3022, %v3426
        %v3521 = vadd.f32 %v3023, %v3429
        %v3522 = vadd.f32 %v3024, %v3434
        %v3523 = vadd.f32 %v3025, %v3437
        %v3524 = vadd.f32 %v3026, %v3442
        %v3525 = vadd.f32 %v3027, %v3445
        %v3526 = vadd.f32 %v3028, %v3450
        %v3527 = vadd.f32 %v3029, %v3453
        %v3528 = vadd.f32 %v3030, %v3458
        %v3529 = vadd.f32 %v3031, %v3461
        %v3530 = vadd.f32 %v3032, %v3466
        %v3531 = vadd.f32 %v3033, %v3469
        %v3532 = vadd.f32 %v3034, %v3474
        %v3533 = vadd.f32 %v3035, %v3477
        %v3534 = vld [vmem:[#allocation2 + $0x21] sm:$0xff]
        %v3535 = vld [vmem:[#allocation2 + $0x29] sm:$0xff]
        %v3536 = vld [vmem:[#allocation2 + $0x31] sm:$0xff]
        %v3537 = vld [vmem:[#allocation2 + $0x39] sm:$0xff]
        %v3538 = vld [vmem:[#allocation2 + $0x41] sm:$0xff]
        %v3539 = vld [vmem:[#allocation2 + $0x49] sm:$0xff]
        %v3540 = vld [vmem:[#allocation2 + $0x51] sm:$0xff]
        %v3541 = vld [vmem:[#allocation2 + $0x59] sm:$0xff]
        %v3542 = vld [vmem:[#allocation2 + $0x61] sm:$0xff]
        %v3543 = vld [vmem:[#allocation2 + $0x69] sm:$0xff]
        %v3544 = vld [vmem:[#allocation2 + $0x71] sm:$0xff]
        %v3545 = vld [vmem:[#allocation2 + $0x79] sm:$0xff]
        %v3546 = vld [vmem:[#allocation2 + $0x81] sm:$0xff]
        %v3547 = vld [vmem:[#allocation2 + $0x89] sm:$0xff]
        %v3548 = vld [vmem:[#allocation2 + $0x91] sm:$0xff]
        %v3549 = vld [vmem:[#allocation2 + $0x99] sm:$0xff]
        %v3550 = vld [vmem:[#allocation2 + $0xa1] sm:$0xff]
        %v3551 = vld [vmem:[#allocation2 + $0xa9] sm:$0xff]
        %v3552 = vld [vmem:[#allocation2 + $0xb1] sm:$0xff]
        %v3553 = vld [vmem:[#allocation2 + $0xb9] sm:$0xff]
        %v3554 = vld [vmem:[#allocation2 + $0xc1] sm:$0xff]
        %v3555 = vld [vmem:[#allocation2 + $0xc9] sm:$0xff]
        %v3556 = vld [vmem:[#allocation2 + $0xd1] sm:$0xff]
        %v3557 = vld [vmem:[#allocation2 + $0xd9] sm:$0xff]
        %v3558 = vld [vmem:[#allocation2 + $0xe1] sm:$0xff]
        %v3559 = vld [vmem:[#allocation2 + $0xe9] sm:$0xff]
        %v3560 = vld [vmem:[#allocation2 + $0xf1] sm:$0xff]
        %v3561 = vld [vmem:[#allocation2 + $0xf9] sm:$0xff]
        %v3562 = vld [vmem:[#allocation2 + $0x101] sm:$0xff]
        %v3563 = vld [vmem:[#allocation2 + $0x109] sm:$0xff]
        %v3564 = vld [vmem:[#allocation2 + $0x111] sm:$0xff]
        %v3565 = vld [vmem:[#allocation2 + $0x119] sm:$0xff]
        %v3566 = vld [vmem:[#allocation2 + $0x121] sm:$0xff]
        %v3567 = vld [vmem:[#allocation2 + $0x129] sm:$0xff]
        %v3568 = vld [vmem:[#allocation2 + $0x131] sm:$0xff]
        %v3569 = vld [vmem:[#allocation2 + $0x139] sm:$0xff]
        %v3570 = vld [vmem:[#allocation2 + $0x141] sm:$0xff]
        %v3571 = vld [vmem:[#allocation2 + $0x149] sm:$0xff]
        %v3572 = vld [vmem:[#allocation2 + $0x151] sm:$0xff]
        %v3573 = vld [vmem:[#allocation2 + $0x159] sm:$0xff]
        %v3574 = vld [vmem:[#allocation2 + $0x161] sm:$0xff]
        %v3575 = vld [vmem:[#allocation2 + $0x169] sm:$0xff]
        %v3576 = vld [vmem:[#allocation2 + $0x171] sm:$0xff]
        %v3577 = vld [vmem:[#allocation2 + $0x179] sm:$0xff]
        %v3578 = vld [vmem:[#allocation2 + $0x181] sm:$0xff]
        %v3579 = vld [vmem:[#allocation2 + $0x189] sm:$0xff]
        %v3580 = vld [vmem:[#allocation2 + $0x191] sm:$0xff]
        %v3581 = vld [vmem:[#allocation2 + $0x199] sm:$0xff]
        %v3582 = vld [vmem:[#allocation2 + $0x1a1] sm:$0xff]
        %v3583 = vld [vmem:[#allocation2 + $0x1a9] sm:$0xff]
        %v3584 = vld [vmem:[#allocation2 + $0x1b1] sm:$0xff]
        %v3585 = vld [vmem:[#allocation2 + $0x1b9] sm:$0xff]
        %v3586 = vld [vmem:[#allocation2 + $0x1c1] sm:$0xff]
        %v3587 = vld [vmem:[#allocation2 + $0x1c9] sm:$0xff]
        %v3588 = vpack.c.bf16 %v3535, %v3534
        %v3589 = vpack.c.bf16 %v3537, %v3536
        %v3590 = vpack.c.bf16 %v3539, %v3538
        %v3591 = vpack.c.bf16 %v3541, %v3540
        %v3592 = vpack.c.bf16 %v3543, %v3542
        %v3593 = vpack.c.bf16 %v3545, %v3544
        %v3594 = vpack.c.bf16 %v3547, %v3546
        %v3595 = vpack.c.bf16 %v3549, %v3548
        %v3596 = vpack.c.bf16 %v3551, %v3550
        %v3597 = vpack.c.bf16 %v3553, %v3552
        %v3598 = vpack.c.bf16 %v3555, %v3554
        %v3599 = vpack.c.bf16 %v3557, %v3556
        %v3600 = vpack.c.bf16 %v3559, %v3558
        %v3601 = vpack.c.bf16 %v3561, %v3560
        %v3602 = vpack.c.bf16 %v3563, %v3562
        %v3603 = vpack.c.bf16 %v3565, %v3564
        %v3604 = vpack.c.bf16 %v3567, %v3566
        %v3605 = vpack.c.bf16 %v3569, %v3568
        %v3606 = vpack.c.bf16 %v3571, %v3570
        %v3607 = vpack.c.bf16 %v3573, %v3572
        %v3608 = vpack.c.bf16 %v3575, %v3574
        %v3609 = vpack.c.bf16 %v3577, %v3576
        %v3610 = vpack.c.bf16 %v3579, %v3578
        %v3611 = vpack.c.bf16 %v3581, %v3580
        %v3612 = vpack.c.bf16 %v3583, %v3582
        %v3613 = vpack.c.bf16 %v3585, %v3584
        %v3614 = vpack.c.bf16 %v3587, %v3586
        %s3615 = scalar_lea.vmem %s5, 160
        %v3616 = vld [vmem:[%s3615] sm:$0xf]
        %v3617 = vld [vmem:[%s3615 + $0x4] sm:$0xf]
        %v3618 = vld [vmem:[%s3615 + $0x8] sm:$0xf]
        %v3619 = vld [vmem:[%s3615 + $0xc] sm:$0xf]
        %v3620 = vld [vmem:[%s3615 + $0x10] sm:$0xf]
        %v3621 = vld [vmem:[%s3615 + $0x14] sm:$0xf]
        %v3622 = vld [vmem:[%s3615 + $0x18] sm:$0xf]
        %v3623 = vld [vmem:[%s3615 + $0x1c] sm:$0xf]
        %v3632 = vunpack.c.l.b16 %v3616
        %v3633 = vunpack.c.l.b16 %v3617
        %v3634 = vunpack.c.l.b16 %v3618
        %v3635 = vunpack.c.l.b16 %v3619
        %v3636 = vunpack.c.l.b16 %v3620
        %v3637 = vunpack.c.l.b16 %v3621
        %v3638 = vunpack.c.l.b16 %v3622
        %v3639 = vunpack.c.l.b16 %v3623
        %v3640 = vpack.c.b16 %v3633, %v3632
        %v3641 = vpack.c.b16 %v3635, %v3634
        %v3642 = vpack.c.b16 %v3637, %v3636
        %v3643 = vpack.c.b16 %v3639, %v3638
        %v3649 = vsel %vm684, %v3588, 0
        %v3652 = vsel %vm684, %v3589, 0
        %v3655 = vsel %vm684, %v3590, 0
        %v3658 = vsel %vm684, %v3591, 0
        %v3661 = vsel %vm684, %v3592, 0
        %v3664 = vsel %vm684, %v3593, 0
        %v3667 = vsel %vm684, %v3594, 0
        %v3670 = vsel %vm684, %v3595, 0
        %v3673 = vsel %vm684, %v3596, 0
        %v3676 = vsel %vm684, %v3597, 0
        %v3679 = vsel %vm684, %v3598, 0
        %v3682 = vsel %vm684, %v3599, 0
        %v3685 = vsel %vm684, %v3600, 0
        %v3688 = vsel %vm684, %v3601, 0
        %v3691 = vsel %vm684, %v3602, 0
        %v3694 = vsel %vm684, %v3603, 0
        %v3697 = vsel %vm684, %v3604, 0
        %v3700 = vsel %vm684, %v3605, 0
        %v3703 = vsel %vm684, %v3606, 0
        %v3706 = vsel %vm684, %v3607, 0
        %v3709 = vsel %vm684, %v3608, 0
        %v3712 = vsel %vm684, %v3609, 0
        %v3715 = vsel %vm684, %v3610, 0
        %v3718 = vsel %vm684, %v3611, 0
        %v3721 = vsel %vm684, %v3612, 0
        %v3724 = vsel %vm684, %v3613, 0
        %v3727 = vsel %vm684, %v3614, 0
        %3729 = vmatprep.subr.bf16.mxu0 0
        %3730 = vmatpush1.bf16.msra.mxu0 0
        %3731 = vmatprep.subr.bf16.mxu0 0
        %3732 = vmatpush1.bf16.msra.mxu0 0
        %3733 = vmatprep.subr.bf16.mxu0 0
        %3734 = vmatpush1.bf16.msra.mxu0 0
        %3735 = vmatprep.subr.bf16.mxu0 0
        %3736 = vmatpush1.bf16.msra.mxu0 0
        %3737 = vmatprep.subr.bf16.mxu0 0
        %3738 = vmatpush1.bf16.msra.mxu0 %v3643
        %3739 = vmatprep.subr.bf16.mxu0 0
        %3740 = vmatpush1.bf16.msra.mxu0 %v3642
        %3741 = vmatprep.subr.bf16.mxu0 0
        %3742 = vmatpush1.bf16.msra.mxu0 %v3641
        %3743 = vmatprep.subr.bf16.mxu0 0
        %3744 = vmatpush1.bf16.msra.mxu0 %v3640
        %3745 = vmatprep.subr.bf16.mxu0 0
        %3746 = vmatpush2.bf16.msra.mxu0 0
        %3747 = vmatprep.subr.bf16.mxu0 0
        %3748 = vmatpush2.bf16.msra.mxu0 0
        %3749 = vmatprep.subr.bf16.mxu0 0
        %3750 = vmatpush2.bf16.msra.mxu0 0
        %3751 = vmatprep.subr.bf16.mxu0 0
        %3752 = vmatpush2.bf16.msra.mxu0 0
        %3753 = vmatprep.subr.bf16.mxu0 0
        %3754 = vmatpush2.bf16.msra.mxu0 0
        %3755 = vmatprep.subr.bf16.mxu0 0
        %3756 = vmatpush2.bf16.msra.mxu0 0
        %3757 = vmatprep.subr.bf16.mxu0 0
        %3758 = vmatpush2.bf16.msra.mxu0 0
        %3759 = vmatprep.subr.bf16.mxu0 0
        %3760 = vmatpush2.bf16.msra.mxu0 0
        %3761 = vmatprep.mubr.bf16.mxu0 0
        %3762 = vmatmul.mubr.bf16.gmra.mxu0 %v3649
        %v3763 = vpop.f32.mrf.mxu0
        %v3764 = vadd.f32 0.0, %v3763
        %v3765 = vpop.f32.mrf.mxu0
        %v3766 = vpop.f32.mrf.mxu0
        %v3767 = vadd.f32 0.0, %v3766
        %v3768 = vpop.f32.mrf.mxu0
        %3769 = vmatprep.mubr.bf16.mxu0 0
        %3770 = vmatmul.mubr.bf16.gmra.mxu0 %v3652
        %v3771 = vpop.f32.mrf.mxu0
        %v3772 = vadd.f32 0.0, %v3771
        %v3773 = vpop.f32.mrf.mxu0
        %v3774 = vpop.f32.mrf.mxu0
        %v3775 = vadd.f32 0.0, %v3774
        %v3776 = vpop.f32.mrf.mxu0
        %3777 = vmatprep.mubr.bf16.mxu0 0
        %3778 = vmatmul.mubr.bf16.gmra.mxu0 %v3655
        %v3779 = vpop.f32.mrf.mxu0
        %v3780 = vadd.f32 0.0, %v3779
        %v3781 = vpop.f32.mrf.mxu0
        %v3782 = vpop.f32.mrf.mxu0
        %v3783 = vadd.f32 0.0, %v3782
        %v3784 = vpop.f32.mrf.mxu0
        %3785 = vmatprep.mubr.bf16.mxu0 0
        %3786 = vmatmul.mubr.bf16.gmra.mxu0 %v3658
        %v3787 = vpop.f32.mrf.mxu0
        %v3788 = vadd.f32 0.0, %v3787
        %v3789 = vpop.f32.mrf.mxu0
        %v3790 = vpop.f32.mrf.mxu0
        %v3791 = vadd.f32 0.0, %v3790
        %v3792 = vpop.f32.mrf.mxu0
        %3793 = vmatprep.mubr.bf16.mxu0 0
        %3794 = vmatmul.mubr.bf16.gmra.mxu0 %v3661
        %v3795 = vpop.f32.mrf.mxu0
        %v3796 = vadd.f32 0.0, %v3795
        %v3797 = vpop.f32.mrf.mxu0
        %v3798 = vpop.f32.mrf.mxu0
        %v3799 = vadd.f32 0.0, %v3798
        %v3800 = vpop.f32.mrf.mxu0
        %3801 = vmatprep.mubr.bf16.mxu0 0
        %3802 = vmatmul.mubr.bf16.gmra.mxu0 %v3664
        %v3803 = vpop.f32.mrf.mxu0
        %v3804 = vadd.f32 0.0, %v3803
        %v3805 = vpop.f32.mrf.mxu0
        %v3806 = vpop.f32.mrf.mxu0
        %v3807 = vadd.f32 0.0, %v3806
        %v3808 = vpop.f32.mrf.mxu0
        %3809 = vmatprep.mubr.bf16.mxu0 0
        %3810 = vmatmul.mubr.bf16.gmra.mxu0 %v3667
        %v3811 = vpop.f32.mrf.mxu0
        %v3812 = vadd.f32 0.0, %v3811
        %v3813 = vpop.f32.mrf.mxu0
        %v3814 = vpop.f32.mrf.mxu0
        %v3815 = vadd.f32 0.0, %v3814
        %v3816 = vpop.f32.mrf.mxu0
        %3817 = vmatprep.mubr.bf16.mxu0 0
        %3818 = vmatmul.mubr.bf16.gmra.mxu0 %v3670
        %v3819 = vpop.f32.mrf.mxu0
        %v3820 = vadd.f32 0.0, %v3819
        %v3821 = vpop.f32.mrf.mxu0
        %v3822 = vpop.f32.mrf.mxu0
        %v3823 = vadd.f32 0.0, %v3822
        %v3824 = vpop.f32.mrf.mxu0
        %3825 = vmatprep.mubr.bf16.mxu0 0
        %3826 = vmatmul.mubr.bf16.gmra.mxu0 %v3673
        %v3827 = vpop.f32.mrf.mxu0
        %v3828 = vadd.f32 0.0, %v3827
        %v3829 = vpop.f32.mrf.mxu0
        %v3830 = vpop.f32.mrf.mxu0
        %v3831 = vadd.f32 0.0, %v3830
        %v3832 = vpop.f32.mrf.mxu0
        %3833 = vmatprep.mubr.bf16.mxu0 0
        %3834 = vmatmul.mubr.bf16.gmra.mxu0 %v3676
        %v3835 = vpop.f32.mrf.mxu0
        %v3836 = vadd.f32 0.0, %v3835
        %v3837 = vpop.f32.mrf.mxu0
        %v3838 = vpop.f32.mrf.mxu0
        %v3839 = vadd.f32 0.0, %v3838
        %v3840 = vpop.f32.mrf.mxu0
        %3841 = vmatprep.mubr.bf16.mxu0 0
        %3842 = vmatmul.mubr.bf16.gmra.mxu0 %v3679
        %v3843 = vpop.f32.mrf.mxu0
        %v3844 = vadd.f32 0.0, %v3843
        %v3845 = vpop.f32.mrf.mxu0
        %v3846 = vpop.f32.mrf.mxu0
        %v3847 = vadd.f32 0.0, %v3846
        %v3848 = vpop.f32.mrf.mxu0
        %3849 = vmatprep.mubr.bf16.mxu0 0
        %3850 = vmatmul.mubr.bf16.gmra.mxu0 %v3682
        %v3851 = vpop.f32.mrf.mxu0
        %v3852 = vadd.f32 0.0, %v3851
        %v3853 = vpop.f32.mrf.mxu0
        %v3854 = vpop.f32.mrf.mxu0
        %v3855 = vadd.f32 0.0, %v3854
        %v3856 = vpop.f32.mrf.mxu0
        %3857 = vmatprep.mubr.bf16.mxu0 0
        %3858 = vmatmul.mubr.bf16.gmra.mxu0 %v3685
        %v3859 = vpop.f32.mrf.mxu0
        %v3860 = vadd.f32 0.0, %v3859
        %v3861 = vpop.f32.mrf.mxu0
        %v3862 = vpop.f32.mrf.mxu0
        %v3863 = vadd.f32 0.0, %v3862
        %v3864 = vpop.f32.mrf.mxu0
        %3865 = vmatprep.mubr.bf16.mxu0 0
        %3866 = vmatmul.mubr.bf16.gmra.mxu0 %v3688
        %v3867 = vpop.f32.mrf.mxu0
        %v3868 = vadd.f32 0.0, %v3867
        %v3869 = vpop.f32.mrf.mxu0
        %v3870 = vpop.f32.mrf.mxu0
        %v3871 = vadd.f32 0.0, %v3870
        %v3872 = vpop.f32.mrf.mxu0
        %3873 = vmatprep.mubr.bf16.mxu0 0
        %3874 = vmatmul.mubr.bf16.gmra.mxu0 %v3691
        %v3875 = vpop.f32.mrf.mxu0
        %v3876 = vadd.f32 0.0, %v3875
        %v3877 = vpop.f32.mrf.mxu0
        %v3878 = vpop.f32.mrf.mxu0
        %v3879 = vadd.f32 0.0, %v3878
        %v3880 = vpop.f32.mrf.mxu0
        %3881 = vmatprep.mubr.bf16.mxu0 0
        %3882 = vmatmul.mubr.bf16.gmra.mxu0 %v3694
        %v3883 = vpop.f32.mrf.mxu0
        %v3884 = vadd.f32 0.0, %v3883
        %v3885 = vpop.f32.mrf.mxu0
        %v3886 = vpop.f32.mrf.mxu0
        %v3887 = vadd.f32 0.0, %v3886
        %v3888 = vpop.f32.mrf.mxu0
        %3889 = vmatprep.mubr.bf16.mxu0 0
        %3890 = vmatmul.mubr.bf16.gmra.mxu0 %v3697
        %v3891 = vpop.f32.mrf.mxu0
        %v3892 = vadd.f32 0.0, %v3891
        %v3893 = vpop.f32.mrf.mxu0
        %v3894 = vpop.f32.mrf.mxu0
        %v3895 = vadd.f32 0.0, %v3894
        %v3896 = vpop.f32.mrf.mxu0
        %3897 = vmatprep.mubr.bf16.mxu0 0
        %3898 = vmatmul.mubr.bf16.gmra.mxu0 %v3700
        %v3899 = vpop.f32.mrf.mxu0
        %v3900 = vadd.f32 0.0, %v3899
        %v3901 = vpop.f32.mrf.mxu0
        %v3902 = vpop.f32.mrf.mxu0
        %v3903 = vadd.f32 0.0, %v3902
        %v3904 = vpop.f32.mrf.mxu0
        %3905 = vmatprep.mubr.bf16.mxu0 0
        %3906 = vmatmul.mubr.bf16.gmra.mxu0 %v3703
        %v3907 = vpop.f32.mrf.mxu0
        %v3908 = vadd.f32 0.0, %v3907
        %v3909 = vpop.f32.mrf.mxu0
        %v3910 = vpop.f32.mrf.mxu0
        %v3911 = vadd.f32 0.0, %v3910
        %v3912 = vpop.f32.mrf.mxu0
        %3913 = vmatprep.mubr.bf16.mxu0 0
        %3914 = vmatmul.mubr.bf16.gmra.mxu0 %v3706
        %v3915 = vpop.f32.mrf.mxu0
        %v3916 = vadd.f32 0.0, %v3915
        %v3917 = vpop.f32.mrf.mxu0
        %v3918 = vpop.f32.mrf.mxu0
        %v3919 = vadd.f32 0.0, %v3918
        %v3920 = vpop.f32.mrf.mxu0
        %3921 = vmatprep.mubr.bf16.mxu0 0
        %3922 = vmatmul.mubr.bf16.gmra.mxu0 %v3709
        %v3923 = vpop.f32.mrf.mxu0
        %v3924 = vadd.f32 0.0, %v3923
        %v3925 = vpop.f32.mrf.mxu0
        %v3926 = vpop.f32.mrf.mxu0
        %v3927 = vadd.f32 0.0, %v3926
        %v3928 = vpop.f32.mrf.mxu0
        %3929 = vmatprep.mubr.bf16.mxu0 0
        %3930 = vmatmul.mubr.bf16.gmra.mxu0 %v3712
        %v3931 = vpop.f32.mrf.mxu0
        %v3932 = vadd.f32 0.0, %v3931
        %v3933 = vpop.f32.mrf.mxu0
        %v3934 = vpop.f32.mrf.mxu0
        %v3935 = vadd.f32 0.0, %v3934
        %v3936 = vpop.f32.mrf.mxu0
        %3937 = vmatprep.mubr.bf16.mxu0 0
        %3938 = vmatmul.mubr.bf16.gmra.mxu0 %v3715
        %v3939 = vpop.f32.mrf.mxu0
        %v3940 = vadd.f32 0.0, %v3939
        %v3941 = vpop.f32.mrf.mxu0
        %v3942 = vpop.f32.mrf.mxu0
        %v3943 = vadd.f32 0.0, %v3942
        %v3944 = vpop.f32.mrf.mxu0
        %3945 = vmatprep.mubr.bf16.mxu0 0
        %3946 = vmatmul.mubr.bf16.gmra.mxu0 %v3718
        %v3947 = vpop.f32.mrf.mxu0
        %v3948 = vadd.f32 0.0, %v3947
        %v3949 = vpop.f32.mrf.mxu0
        %v3950 = vpop.f32.mrf.mxu0
        %v3951 = vadd.f32 0.0, %v3950
        %v3952 = vpop.f32.mrf.mxu0
        %3953 = vmatprep.mubr.bf16.mxu0 0
        %3954 = vmatmul.mubr.bf16.gmra.mxu0 %v3721
        %v3955 = vpop.f32.mrf.mxu0
        %v3956 = vadd.f32 0.0, %v3955
        %v3957 = vpop.f32.mrf.mxu0
        %v3958 = vpop.f32.mrf.mxu0
        %v3959 = vadd.f32 0.0, %v3958
        %v3960 = vpop.f32.mrf.mxu0
        %3961 = vmatprep.mubr.bf16.mxu0 0
        %3962 = vmatmul.mubr.bf16.gmra.mxu0 %v3724
        %v3963 = vpop.f32.mrf.mxu0
        %v3964 = vadd.f32 0.0, %v3963
        %v3965 = vpop.f32.mrf.mxu0
        %v3966 = vpop.f32.mrf.mxu0
        %v3967 = vadd.f32 0.0, %v3966
        %v3968 = vpop.f32.mrf.mxu0
        %3969 = vmatprep.mubr.bf16.mxu0 0
        %3970 = vmatmul.mubr.bf16.gmra.mxu0 %v3727
        %v3971 = vpop.f32.mrf.mxu0
        %v3972 = vadd.f32 0.0, %v3971
        %v3973 = vpop.f32.mrf.mxu0
        %v3974 = vpop.f32.mrf.mxu0
        %v3975 = vadd.f32 0.0, %v3974
        %v3976 = vpop.f32.mrf.mxu0
        %3977 = vdwg.mxu0
        %v3978 = vadd.f32 %v3480, %v3764
        %v3979 = vadd.f32 %v3481, %v3767
        %v3980 = vadd.f32 %v3482, %v3772
        %v3981 = vadd.f32 %v3483, %v3775
        %v3982 = vadd.f32 %v3484, %v3780
        %v3983 = vadd.f32 %v3485, %v3783
        %v3984 = vadd.f32 %v3486, %v3788
        %v3985 = vadd.f32 %v3487, %v3791
        %v3986 = vadd.f32 %v3488, %v3796
        %v3987 = vadd.f32 %v3489, %v3799
        %v3988 = vadd.f32 %v3490, %v3804
        %v3989 = vadd.f32 %v3491, %v3807
        %v3990 = vadd.f32 %v3492, %v3812
        %v3991 = vadd.f32 %v3493, %v3815
        %v3992 = vadd.f32 %v3494, %v3820
        %v3993 = vadd.f32 %v3495, %v3823
        %v3994 = vadd.f32 %v3496, %v3828
        %v3995 = vadd.f32 %v3497, %v3831
        %v3996 = vadd.f32 %v3498, %v3836
        %v3997 = vadd.f32 %v3499, %v3839
        %v3998 = vadd.f32 %v3500, %v3844
        %v3999 = vadd.f32 %v3501, %v3847
        %v4000 = vadd.f32 %v3502, %v3852
        %v4001 = vadd.f32 %v3503, %v3855
        %v4002 = vadd.f32 %v3504, %v3860
        %v4003 = vadd.f32 %v3505, %v3863
        %v4004 = vadd.f32 %v3506, %v3868
        %v4005 = vadd.f32 %v3507, %v3871
        %v4006 = vadd.f32 %v3508, %v3876
        %v4007 = vadd.f32 %v3509, %v3879
        %v4008 = vadd.f32 %v3510, %v3884
        %v4009 = vadd.f32 %v3511, %v3887
        %v4010 = vadd.f32 %v3512, %v3892
        %v4011 = vadd.f32 %v3513, %v3895
        %v4012 = vadd.f32 %v3514, %v3900
        %v4013 = vadd.f32 %v3515, %v3903
        %v4014 = vadd.f32 %v3516, %v3908
        %v4015 = vadd.f32 %v3517, %v3911
        %v4016 = vadd.f32 %v3518, %v3916
        %v4017 = vadd.f32 %v3519, %v3919
        %v4018 = vadd.f32 %v3520, %v3924
        %v4019 = vadd.f32 %v3521, %v3927
        %v4020 = vadd.f32 %v3522, %v3932
        %v4021 = vadd.f32 %v3523, %v3935
        %v4022 = vadd.f32 %v3524, %v3940
        %v4023 = vadd.f32 %v3525, %v3943
        %v4024 = vadd.f32 %v3526, %v3948
        %v4025 = vadd.f32 %v3527, %v3951
        %v4026 = vadd.f32 %v3528, %v3956
        %v4027 = vadd.f32 %v3529, %v3959
        %v4028 = vadd.f32 %v3530, %v3964
        %v4029 = vadd.f32 %v3531, %v3967
        %v4030 = vadd.f32 %v3532, %v3972
        %v4031 = vadd.f32 %v3533, %v3975
        %v4032 = vld [vmem:[#allocation2 + $0x37] sm:$0xff]
        %v4033 = vld [vmem:[#allocation2 + $0x3f] sm:$0xff]
        %v4034 = vld [vmem:[#allocation2 + $0x47] sm:$0xff]
        %v4035 = vld [vmem:[#allocation2 + $0x4f] sm:$0xff]
        %v4036 = vld [vmem:[#allocation2 + $0x57] sm:$0xff]
        %v4037 = vld [vmem:[#allocation2 + $0x5f] sm:$0xff]
        %v4038 = vld [vmem:[#allocation2 + $0x67] sm:$0xff]
        %v4039 = vld [vmem:[#allocation2 + $0x6f] sm:$0xff]
        %v4040 = vld [vmem:[#allocation2 + $0x77] sm:$0xff]
        %v4041 = vld [vmem:[#allocation2 + $0x7f] sm:$0xff]
        %v4042 = vld [vmem:[#allocation2 + $0x87] sm:$0xff]
        %v4043 = vld [vmem:[#allocation2 + $0x8f] sm:$0xff]
        %v4044 = vld [vmem:[#allocation2 + $0x97] sm:$0xff]
        %v4045 = vld [vmem:[#allocation2 + $0x9f] sm:$0xff]
        %v4046 = vld [vmem:[#allocation2 + $0xa7] sm:$0xff]
        %v4047 = vld [vmem:[#allocation2 + $0xaf] sm:$0xff]
        %v4048 = vld [vmem:[#allocation2 + $0xb7] sm:$0xff]
        %v4049 = vld [vmem:[#allocation2 + $0xbf] sm:$0xff]
        %v4050 = vld [vmem:[#allocation2 + $0xc7] sm:$0xff]
        %v4051 = vld [vmem:[#allocation2 + $0xcf] sm:$0xff]
        %v4052 = vld [vmem:[#allocation2 + $0xd7] sm:$0xff]
        %v4053 = vld [vmem:[#allocation2 + $0xdf] sm:$0xff]
        %v4054 = vld [vmem:[#allocation2 + $0xe7] sm:$0xff]
        %v4055 = vld [vmem:[#allocation2 + $0xef] sm:$0xff]
        %v4056 = vld [vmem:[#allocation2 + $0xf7] sm:$0xff]
        %v4057 = vld [vmem:[#allocation2 + $0xff] sm:$0xff]
        %v4058 = vld [vmem:[#allocation2 + $0x107] sm:$0xff]
        %v4059 = vld [vmem:[#allocation2 + $0x10f] sm:$0xff]
        %v4060 = vld [vmem:[#allocation2 + $0x117] sm:$0xff]
        %v4061 = vld [vmem:[#allocation2 + $0x11f] sm:$0xff]
        %v4062 = vld [vmem:[#allocation2 + $0x127] sm:$0xff]
        %v4063 = vld [vmem:[#allocation2 + $0x12f] sm:$0xff]
        %v4064 = vld [vmem:[#allocation2 + $0x137] sm:$0xff]
        %v4065 = vld [vmem:[#allocation2 + $0x13f] sm:$0xff]
        %v4066 = vld [vmem:[#allocation2 + $0x147] sm:$0xff]
        %v4067 = vld [vmem:[#allocation2 + $0x14f] sm:$0xff]
        %v4068 = vld [vmem:[#allocation2 + $0x157] sm:$0xff]
        %v4069 = vld [vmem:[#allocation2 + $0x15f] sm:$0xff]
        %v4070 = vld [vmem:[#allocation2 + $0x167] sm:$0xff]
        %v4071 = vld [vmem:[#allocation2 + $0x16f] sm:$0xff]
        %v4072 = vld [vmem:[#allocation2 + $0x177] sm:$0xff]
        %v4073 = vld [vmem:[#allocation2 + $0x17f] sm:$0xff]
        %v4074 = vld [vmem:[#allocation2 + $0x187] sm:$0xff]
        %v4075 = vld [vmem:[#allocation2 + $0x18f] sm:$0xff]
        %v4076 = vld [vmem:[#allocation2 + $0x197] sm:$0xff]
        %v4077 = vld [vmem:[#allocation2 + $0x19f] sm:$0xff]
        %v4078 = vld [vmem:[#allocation2 + $0x1a7] sm:$0xff]
        %v4079 = vld [vmem:[#allocation2 + $0x1af] sm:$0xff]
        %v4080 = vld [vmem:[#allocation2 + $0x1b7] sm:$0xff]
        %v4081 = vld [vmem:[#allocation2 + $0x1bf] sm:$0xff]
        %v4082 = vld [vmem:[#allocation2 + $0x1c7] sm:$0xff]
        %v4083 = vld [vmem:[#allocation2 + $0x1cf] sm:$0xff]
        %v4084 = vld [vmem:[#allocation2 + $0x1d7] sm:$0xff]
        %v4085 = vld [vmem:[#allocation2 + $0x1df] sm:$0xff]
        %v4086 = vpack.c.bf16 %v4033, %v4032
        %v4087 = vpack.c.bf16 %v4035, %v4034
        %v4088 = vpack.c.bf16 %v4037, %v4036
        %v4089 = vpack.c.bf16 %v4039, %v4038
        %v4090 = vpack.c.bf16 %v4041, %v4040
        %v4091 = vpack.c.bf16 %v4043, %v4042
        %v4092 = vpack.c.bf16 %v4045, %v4044
        %v4093 = vpack.c.bf16 %v4047, %v4046
        %v4094 = vpack.c.bf16 %v4049, %v4048
        %v4095 = vpack.c.bf16 %v4051, %v4050
        %v4096 = vpack.c.bf16 %v4053, %v4052
        %v4097 = vpack.c.bf16 %v4055, %v4054
        %v4098 = vpack.c.bf16 %v4057, %v4056
        %v4099 = vpack.c.bf16 %v4059, %v4058
        %v4100 = vpack.c.bf16 %v4061, %v4060
        %v4101 = vpack.c.bf16 %v4063, %v4062
        %v4102 = vpack.c.bf16 %v4065, %v4064
        %v4103 = vpack.c.bf16 %v4067, %v4066
        %v4104 = vpack.c.bf16 %v4069, %v4068
        %v4105 = vpack.c.bf16 %v4071, %v4070
        %v4106 = vpack.c.bf16 %v4073, %v4072
        %v4107 = vpack.c.bf16 %v4075, %v4074
        %v4108 = vpack.c.bf16 %v4077, %v4076
        %v4109 = vpack.c.bf16 %v4079, %v4078
        %v4110 = vpack.c.bf16 %v4081, %v4080
        %v4111 = vpack.c.bf16 %v4083, %v4082
        %v4112 = vpack.c.bf16 %v4085, %v4084
        %s4113 = scalar_lea.vmem %s5, 192
        %v4114 = vld [vmem:[%s4113] sm:$0xf]
        %v4115 = vld [vmem:[%s4113 + $0x4] sm:$0xf]
        %v4116 = vld [vmem:[%s4113 + $0x8] sm:$0xf]
        %v4117 = vld [vmem:[%s4113 + $0xc] sm:$0xf]
        %v4118 = vld [vmem:[%s4113 + $0x10] sm:$0xf]
        %v4119 = vld [vmem:[%s4113 + $0x14] sm:$0xf]
        %v4120 = vld [vmem:[%s4113 + $0x18] sm:$0xf]
        %v4121 = vld [vmem:[%s4113 + $0x1c] sm:$0xf]
        %v4130 = vunpack.c.l.b16 %v4114
        %v4131 = vunpack.c.l.b16 %v4115
        %v4132 = vunpack.c.l.b16 %v4116
        %v4133 = vunpack.c.l.b16 %v4117
        %v4134 = vunpack.c.l.b16 %v4118
        %v4135 = vunpack.c.l.b16 %v4119
        %v4136 = vunpack.c.l.b16 %v4120
        %v4137 = vunpack.c.l.b16 %v4121
        %v4138 = vpack.c.b16 %v4131, %v4130
        %v4139 = vpack.c.b16 %v4133, %v4132
        %v4140 = vpack.c.b16 %v4135, %v4134
        %v4141 = vpack.c.b16 %v4137, %v4136
        %v4147 = vsel %vm684, %v4086, 0
        %v4150 = vsel %vm684, %v4087, 0
        %v4153 = vsel %vm684, %v4088, 0
        %v4156 = vsel %vm684, %v4089, 0
        %v4159 = vsel %vm684, %v4090, 0
        %v4162 = vsel %vm684, %v4091, 0
        %v4165 = vsel %vm684, %v4092, 0
        %v4168 = vsel %vm684, %v4093, 0
        %v4171 = vsel %vm684, %v4094, 0
        %v4174 = vsel %vm684, %v4095, 0
        %v4177 = vsel %vm684, %v4096, 0
        %v4180 = vsel %vm684, %v4097, 0
        %v4183 = vsel %vm684, %v4098, 0
        %v4186 = vsel %vm684, %v4099, 0
        %v4189 = vsel %vm684, %v4100, 0
        %v4192 = vsel %vm684, %v4101, 0
        %v4195 = vsel %vm684, %v4102, 0
        %v4198 = vsel %vm684, %v4103, 0
        %v4201 = vsel %vm684, %v4104, 0
        %v4204 = vsel %vm684, %v4105, 0
        %v4207 = vsel %vm684, %v4106, 0
        %v4210 = vsel %vm684, %v4107, 0
        %v4213 = vsel %vm684, %v4108, 0
        %v4216 = vsel %vm684, %v4109, 0
        %v4219 = vsel %vm684, %v4110, 0
        %v4222 = vsel %vm684, %v4111, 0
        %v4225 = vsel %vm684, %v4112, 0
        %4227 = vmatprep.subr.bf16.mxu0 0
        %4228 = vmatpush1.bf16.msra.mxu0 0
        %4229 = vmatprep.subr.bf16.mxu0 0
        %4230 = vmatpush1.bf16.msra.mxu0 0
        %4231 = vmatprep.subr.bf16.mxu0 0
        %4232 = vmatpush1.bf16.msra.mxu0 0
        %4233 = vmatprep.subr.bf16.mxu0 0
        %4234 = vmatpush1.bf16.msra.mxu0 0
        %4235 = vmatprep.subr.bf16.mxu0 0
        %4236 = vmatpush1.bf16.msra.mxu0 %v4141
        %4237 = vmatprep.subr.bf16.mxu0 0
        %4238 = vmatpush1.bf16.msra.mxu0 %v4140
        %4239 = vmatprep.subr.bf16.mxu0 0
        %4240 = vmatpush1.bf16.msra.mxu0 %v4139
        %4241 = vmatprep.subr.bf16.mxu0 0
        %4242 = vmatpush1.bf16.msra.mxu0 %v4138
        %4243 = vmatprep.subr.bf16.mxu0 0
        %4244 = vmatpush2.bf16.msra.mxu0 0
        %4245 = vmatprep.subr.bf16.mxu0 0
        %4246 = vmatpush2.bf16.msra.mxu0 0
        %4247 = vmatprep.subr.bf16.mxu0 0
        %4248 = vmatpush2.bf16.msra.mxu0 0
        %4249 = vmatprep.subr.bf16.mxu0 0
        %4250 = vmatpush2.bf16.msra.mxu0 0
        %4251 = vmatprep.subr.bf16.mxu0 0
        %4252 = vmatpush2.bf16.msra.mxu0 0
        %4253 = vmatprep.subr.bf16.mxu0 0
        %4254 = vmatpush2.bf16.msra.mxu0 0
        %4255 = vmatprep.subr.bf16.mxu0 0
        %4256 = vmatpush2.bf16.msra.mxu0 0
        %4257 = vmatprep.subr.bf16.mxu0 0
        %4258 = vmatpush2.bf16.msra.mxu0 0
        %4259 = vmatprep.mubr.bf16.mxu0 0
        %4260 = vmatmul.mubr.bf16.gmra.mxu0 %v4147
        %v4261 = vpop.f32.mrf.mxu0
        %v4262 = vadd.f32 0.0, %v4261
        %v4263 = vpop.f32.mrf.mxu0
        %v4264 = vpop.f32.mrf.mxu0
        %v4265 = vadd.f32 0.0, %v4264
        %v4266 = vpop.f32.mrf.mxu0
        %4267 = vmatprep.mubr.bf16.mxu0 0
        %4268 = vmatmul.mubr.bf16.gmra.mxu0 %v4150
        %v4269 = vpop.f32.mrf.mxu0
        %v4270 = vadd.f32 0.0, %v4269
        %v4271 = vpop.f32.mrf.mxu0
        %v4272 = vpop.f32.mrf.mxu0
        %v4273 = vadd.f32 0.0, %v4272
        %v4274 = vpop.f32.mrf.mxu0
        %4275 = vmatprep.mubr.bf16.mxu0 0
        %4276 = vmatmul.mubr.bf16.gmra.mxu0 %v4153
        %v4277 = vpop.f32.mrf.mxu0
        %v4278 = vadd.f32 0.0, %v4277
        %v4279 = vpop.f32.mrf.mxu0
        %v4280 = vpop.f32.mrf.mxu0
        %v4281 = vadd.f32 0.0, %v4280
        %v4282 = vpop.f32.mrf.mxu0
        %4283 = vmatprep.mubr.bf16.mxu0 0
        %4284 = vmatmul.mubr.bf16.gmra.mxu0 %v4156
        %v4285 = vpop.f32.mrf.mxu0
        %v4286 = vadd.f32 0.0, %v4285
        %v4287 = vpop.f32.mrf.mxu0
        %v4288 = vpop.f32.mrf.mxu0
        %v4289 = vadd.f32 0.0, %v4288
        %v4290 = vpop.f32.mrf.mxu0
        %4291 = vmatprep.mubr.bf16.mxu0 0
        %4292 = vmatmul.mubr.bf16.gmra.mxu0 %v4159
        %v4293 = vpop.f32.mrf.mxu0
        %v4294 = vadd.f32 0.0, %v4293
        %v4295 = vpop.f32.mrf.mxu0
        %v4296 = vpop.f32.mrf.mxu0
        %v4297 = vadd.f32 0.0, %v4296
        %v4298 = vpop.f32.mrf.mxu0
        %4299 = vmatprep.mubr.bf16.mxu0 0
        %4300 = vmatmul.mubr.bf16.gmra.mxu0 %v4162
        %v4301 = vpop.f32.mrf.mxu0
        %v4302 = vadd.f32 0.0, %v4301
        %v4303 = vpop.f32.mrf.mxu0
        %v4304 = vpop.f32.mrf.mxu0
        %v4305 = vadd.f32 0.0, %v4304
        %v4306 = vpop.f32.mrf.mxu0
        %4307 = vmatprep.mubr.bf16.mxu0 0
        %4308 = vmatmul.mubr.bf16.gmra.mxu0 %v4165
        %v4309 = vpop.f32.mrf.mxu0
        %v4310 = vadd.f32 0.0, %v4309
        %v4311 = vpop.f32.mrf.mxu0
        %v4312 = vpop.f32.mrf.mxu0
        %v4313 = vadd.f32 0.0, %v4312
        %v4314 = vpop.f32.mrf.mxu0
        %4315 = vmatprep.mubr.bf16.mxu0 0
        %4316 = vmatmul.mubr.bf16.gmra.mxu0 %v4168
        %v4317 = vpop.f32.mrf.mxu0
        %v4318 = vadd.f32 0.0, %v4317
        %v4319 = vpop.f32.mrf.mxu0
        %v4320 = vpop.f32.mrf.mxu0
        %v4321 = vadd.f32 0.0, %v4320
        %v4322 = vpop.f32.mrf.mxu0
        %4323 = vmatprep.mubr.bf16.mxu0 0
        %4324 = vmatmul.mubr.bf16.gmra.mxu0 %v4171
        %v4325 = vpop.f32.mrf.mxu0
        %v4326 = vadd.f32 0.0, %v4325
        %v4327 = vpop.f32.mrf.mxu0
        %v4328 = vpop.f32.mrf.mxu0
        %v4329 = vadd.f32 0.0, %v4328
        %v4330 = vpop.f32.mrf.mxu0
        %4331 = vmatprep.mubr.bf16.mxu0 0
        %4332 = vmatmul.mubr.bf16.gmra.mxu0 %v4174
        %v4333 = vpop.f32.mrf.mxu0
        %v4334 = vadd.f32 0.0, %v4333
        %v4335 = vpop.f32.mrf.mxu0
        %v4336 = vpop.f32.mrf.mxu0
        %v4337 = vadd.f32 0.0, %v4336
        %v4338 = vpop.f32.mrf.mxu0
        %4339 = vmatprep.mubr.bf16.mxu0 0
        %4340 = vmatmul.mubr.bf16.gmra.mxu0 %v4177
        %v4341 = vpop.f32.mrf.mxu0
        %v4342 = vadd.f32 0.0, %v4341
        %v4343 = vpop.f32.mrf.mxu0
        %v4344 = vpop.f32.mrf.mxu0
        %v4345 = vadd.f32 0.0, %v4344
        %v4346 = vpop.f32.mrf.mxu0
        %4347 = vmatprep.mubr.bf16.mxu0 0
        %4348 = vmatmul.mubr.bf16.gmra.mxu0 %v4180
        %v4349 = vpop.f32.mrf.mxu0
        %v4350 = vadd.f32 0.0, %v4349
        %v4351 = vpop.f32.mrf.mxu0
        %v4352 = vpop.f32.mrf.mxu0
        %v4353 = vadd.f32 0.0, %v4352
        %v4354 = vpop.f32.mrf.mxu0
        %4355 = vmatprep.mubr.bf16.mxu0 0
        %4356 = vmatmul.mubr.bf16.gmra.mxu0 %v4183
        %v4357 = vpop.f32.mrf.mxu0
        %v4358 = vadd.f32 0.0, %v4357
        %v4359 = vpop.f32.mrf.mxu0
        %v4360 = vpop.f32.mrf.mxu0
        %v4361 = vadd.f32 0.0, %v4360
        %v4362 = vpop.f32.mrf.mxu0
        %4363 = vmatprep.mubr.bf16.mxu0 0
        %4364 = vmatmul.mubr.bf16.gmra.mxu0 %v4186
        %v4365 = vpop.f32.mrf.mxu0
        %v4366 = vadd.f32 0.0, %v4365
        %v4367 = vpop.f32.mrf.mxu0
        %v4368 = vpop.f32.mrf.mxu0
        %v4369 = vadd.f32 0.0, %v4368
        %v4370 = vpop.f32.mrf.mxu0
        %4371 = vmatprep.mubr.bf16.mxu0 0
        %4372 = vmatmul.mubr.bf16.gmra.mxu0 %v4189
        %v4373 = vpop.f32.mrf.mxu0
        %v4374 = vadd.f32 0.0, %v4373
        %v4375 = vpop.f32.mrf.mxu0
        %v4376 = vpop.f32.mrf.mxu0
        %v4377 = vadd.f32 0.0, %v4376
        %v4378 = vpop.f32.mrf.mxu0
        %4379 = vmatprep.mubr.bf16.mxu0 0
        %4380 = vmatmul.mubr.bf16.gmra.mxu0 %v4192
        %v4381 = vpop.f32.mrf.mxu0
        %v4382 = vadd.f32 0.0, %v4381
        %v4383 = vpop.f32.mrf.mxu0
        %v4384 = vpop.f32.mrf.mxu0
        %v4385 = vadd.f32 0.0, %v4384
        %v4386 = vpop.f32.mrf.mxu0
        %4387 = vmatprep.mubr.bf16.mxu0 0
        %4388 = vmatmul.mubr.bf16.gmra.mxu0 %v4195
        %v4389 = vpop.f32.mrf.mxu0
        %v4390 = vadd.f32 0.0, %v4389
        %v4391 = vpop.f32.mrf.mxu0
        %v4392 = vpop.f32.mrf.mxu0
        %v4393 = vadd.f32 0.0, %v4392
        %v4394 = vpop.f32.mrf.mxu0
        %4395 = vmatprep.mubr.bf16.mxu0 0
        %4396 = vmatmul.mubr.bf16.gmra.mxu0 %v4198
        %v4397 = vpop.f32.mrf.mxu0
        %v4398 = vadd.f32 0.0, %v4397
        %v4399 = vpop.f32.mrf.mxu0
        %v4400 = vpop.f32.mrf.mxu0
        %v4401 = vadd.f32 0.0, %v4400
        %v4402 = vpop.f32.mrf.mxu0
        %4403 = vmatprep.mubr.bf16.mxu0 0
        %4404 = vmatmul.mubr.bf16.gmra.mxu0 %v4201
        %v4405 = vpop.f32.mrf.mxu0
        %v4406 = vadd.f32 0.0, %v4405
        %v4407 = vpop.f32.mrf.mxu0
        %v4408 = vpop.f32.mrf.mxu0
        %v4409 = vadd.f32 0.0, %v4408
        %v4410 = vpop.f32.mrf.mxu0
        %4411 = vmatprep.mubr.bf16.mxu0 0
        %4412 = vmatmul.mubr.bf16.gmra.mxu0 %v4204
        %v4413 = vpop.f32.mrf.mxu0
        %v4414 = vadd.f32 0.0, %v4413
        %v4415 = vpop.f32.mrf.mxu0
        %v4416 = vpop.f32.mrf.mxu0
        %v4417 = vadd.f32 0.0, %v4416
        %v4418 = vpop.f32.mrf.mxu0
        %4419 = vmatprep.mubr.bf16.mxu0 0
        %4420 = vmatmul.mubr.bf16.gmra.mxu0 %v4207
        %v4421 = vpop.f32.mrf.mxu0
        %v4422 = vadd.f32 0.0, %v4421
        %v4423 = vpop.f32.mrf.mxu0
        %v4424 = vpop.f32.mrf.mxu0
        %v4425 = vadd.f32 0.0, %v4424
        %v4426 = vpop.f32.mrf.mxu0
        %4427 = vmatprep.mubr.bf16.mxu0 0
        %4428 = vmatmul.mubr.bf16.gmra.mxu0 %v4210
        %v4429 = vpop.f32.mrf.mxu0
        %v4430 = vadd.f32 0.0, %v4429
        %v4431 = vpop.f32.mrf.mxu0
        %v4432 = vpop.f32.mrf.mxu0
        %v4433 = vadd.f32 0.0, %v4432
        %v4434 = vpop.f32.mrf.mxu0
        %4435 = vmatprep.mubr.bf16.mxu0 0
        %4436 = vmatmul.mubr.bf16.gmra.mxu0 %v4213
        %v4437 = vpop.f32.mrf.mxu0
        %v4438 = vadd.f32 0.0, %v4437
        %v4439 = vpop.f32.mrf.mxu0
        %v4440 = vpop.f32.mrf.mxu0
        %v4441 = vadd.f32 0.0, %v4440
        %v4442 = vpop.f32.mrf.mxu0
        %4443 = vmatprep.mubr.bf16.mxu0 0
        %4444 = vmatmul.mubr.bf16.gmra.mxu0 %v4216
        %v4445 = vpop.f32.mrf.mxu0
        %v4446 = vadd.f32 0.0, %v4445
        %v4447 = vpop.f32.mrf.mxu0
        %v4448 = vpop.f32.mrf.mxu0
        %v4449 = vadd.f32 0.0, %v4448
        %v4450 = vpop.f32.mrf.mxu0
        %4451 = vmatprep.mubr.bf16.mxu0 0
        %4452 = vmatmul.mubr.bf16.gmra.mxu0 %v4219
        %v4453 = vpop.f32.mrf.mxu0
        %v4454 = vadd.f32 0.0, %v4453
        %v4455 = vpop.f32.mrf.mxu0
        %v4456 = vpop.f32.mrf.mxu0
        %v4457 = vadd.f32 0.0, %v4456
        %v4458 = vpop.f32.mrf.mxu0
        %4459 = vmatprep.mubr.bf16.mxu0 0
        %4460 = vmatmul.mubr.bf16.gmra.mxu0 %v4222
        %v4461 = vpop.f32.mrf.mxu0
        %v4462 = vadd.f32 0.0, %v4461
        %v4463 = vpop.f32.mrf.mxu0
        %v4464 = vpop.f32.mrf.mxu0
        %v4465 = vadd.f32 0.0, %v4464
        %v4466 = vpop.f32.mrf.mxu0
        %4467 = vmatprep.mubr.bf16.mxu0 0
        %4468 = vmatmul.mubr.bf16.gmra.mxu0 %v4225
        %v4469 = vpop.f32.mrf.mxu0
        %v4470 = vadd.f32 0.0, %v4469
        %v4471 = vpop.f32.mrf.mxu0
        %v4472 = vpop.f32.mrf.mxu0
        %v4473 = vadd.f32 0.0, %v4472
        %v4474 = vpop.f32.mrf.mxu0
        %4475 = vdwg.mxu0
        %v4476 = vadd.f32 %v3978, %v4262
        %v4477 = vadd.f32 %v3979, %v4265
        %v4478 = vadd.f32 %v3980, %v4270
        %v4479 = vadd.f32 %v3981, %v4273
        %v4480 = vadd.f32 %v3982, %v4278
        %v4481 = vadd.f32 %v3983, %v4281
        %v4482 = vadd.f32 %v3984, %v4286
        %v4483 = vadd.f32 %v3985, %v4289
        %v4484 = vadd.f32 %v3986, %v4294
        %v4485 = vadd.f32 %v3987, %v4297
        %v4486 = vadd.f32 %v3988, %v4302
        %v4487 = vadd.f32 %v3989, %v4305
        %v4488 = vadd.f32 %v3990, %v4310
        %v4489 = vadd.f32 %v3991, %v4313
        %v4490 = vadd.f32 %v3992, %v4318
        %v4491 = vadd.f32 %v3993, %v4321
        %v4492 = vadd.f32 %v3994, %v4326
        %v4493 = vadd.f32 %v3995, %v4329
        %v4494 = vadd.f32 %v3996, %v4334
        %v4495 = vadd.f32 %v3997, %v4337
        %v4496 = vadd.f32 %v3998, %v4342
        %v4497 = vadd.f32 %v3999, %v4345
        %v4498 = vadd.f32 %v4000, %v4350
        %v4499 = vadd.f32 %v4001, %v4353
        %v4500 = vadd.f32 %v4002, %v4358
        %v4501 = vadd.f32 %v4003, %v4361
        %v4502 = vadd.f32 %v4004, %v4366
        %v4503 = vadd.f32 %v4005, %v4369
        %v4504 = vadd.f32 %v4006, %v4374
        %v4505 = vadd.f32 %v4007, %v4377
        %v4506 = vadd.f32 %v4008, %v4382
        %v4507 = vadd.f32 %v4009, %v4385
        %v4508 = vadd.f32 %v4010, %v4390
        %v4509 = vadd.f32 %v4011, %v4393
        %v4510 = vadd.f32 %v4012, %v4398
        %v4511 = vadd.f32 %v4013, %v4401
        %v4512 = vadd.f32 %v4014, %v4406
        %v4513 = vadd.f32 %v4015, %v4409
        %v4514 = vadd.f32 %v4016, %v4414
        %v4515 = vadd.f32 %v4017, %v4417
        %v4516 = vadd.f32 %v4018, %v4422
        %v4517 = vadd.f32 %v4019, %v4425
        %v4518 = vadd.f32 %v4020, %v4430
        %v4519 = vadd.f32 %v4021, %v4433
        %v4520 = vadd.f32 %v4022, %v4438
        %v4521 = vadd.f32 %v4023, %v4441
        %v4522 = vadd.f32 %v4024, %v4446
        %v4523 = vadd.f32 %v4025, %v4449
        %v4524 = vadd.f32 %v4026, %v4454
        %v4525 = vadd.f32 %v4027, %v4457
        %v4526 = vadd.f32 %v4028, %v4462
        %v4527 = vadd.f32 %v4029, %v4465
        %v4528 = vadd.f32 %v4030, %v4470
        %v4529 = vadd.f32 %v4031, %v4473
        %v4530 = vld [vmem:[#allocation2 + $0x38] sm:$0xff]
        %v4531 = vld [vmem:[#allocation2 + $0x40] sm:$0xff]
        %v4532 = vld [vmem:[#allocation2 + $0x48] sm:$0xff]
        %v4533 = vld [vmem:[#allocation2 + $0x50] sm:$0xff]
        %v4534 = vld [vmem:[#allocation2 + $0x58] sm:$0xff]
        %v4535 = vld [vmem:[#allocation2 + $0x60] sm:$0xff]
        %v4536 = vld [vmem:[#allocation2 + $0x68] sm:$0xff]
        %v4537 = vld [vmem:[#allocation2 + $0x70] sm:$0xff]
        %v4538 = vld [vmem:[#allocation2 + $0x78] sm:$0xff]
        %v4539 = vld [vmem:[#allocation2 + $0x80] sm:$0xff]
        %v4540 = vld [vmem:[#allocation2 + $0x88] sm:$0xff]
        %v4541 = vld [vmem:[#allocation2 + $0x90] sm:$0xff]
        %v4542 = vld [vmem:[#allocation2 + $0x98] sm:$0xff]
        %v4543 = vld [vmem:[#allocation2 + $0xa0] sm:$0xff]
        %v4544 = vld [vmem:[#allocation2 + $0xa8] sm:$0xff]
        %v4545 = vld [vmem:[#allocation2 + $0xb0] sm:$0xff]
        %v4546 = vld [vmem:[#allocation2 + $0xb8] sm:$0xff]
        %v4547 = vld [vmem:[#allocation2 + $0xc0] sm:$0xff]
        %v4548 = vld [vmem:[#allocation2 + $0xc8] sm:$0xff]
        %v4549 = vld [vmem:[#allocation2 + $0xd0] sm:$0xff]
        %v4550 = vld [vmem:[#allocation2 + $0xd8] sm:$0xff]
        %v4551 = vld [vmem:[#allocation2 + $0xe0] sm:$0xff]
        %v4552 = vld [vmem:[#allocation2 + $0xe8] sm:$0xff]
        %v4553 = vld [vmem:[#allocation2 + $0xf0] sm:$0xff]
        %v4554 = vld [vmem:[#allocation2 + $0xf8] sm:$0xff]
        %v4555 = vld [vmem:[#allocation2 + $0x100] sm:$0xff]
        %v4556 = vld [vmem:[#allocation2 + $0x108] sm:$0xff]
        %v4557 = vld [vmem:[#allocation2 + $0x110] sm:$0xff]
        %v4558 = vld [vmem:[#allocation2 + $0x118] sm:$0xff]
        %v4559 = vld [vmem:[#allocation2 + $0x120] sm:$0xff]
        %v4560 = vld [vmem:[#allocation2 + $0x128] sm:$0xff]
        %v4561 = vld [vmem:[#allocation2 + $0x130] sm:$0xff]
        %v4562 = vld [vmem:[#allocation2 + $0x138] sm:$0xff]
        %v4563 = vld [vmem:[#allocation2 + $0x140] sm:$0xff]
        %v4564 = vld [vmem:[#allocation2 + $0x148] sm:$0xff]
        %v4565 = vld [vmem:[#allocation2 + $0x150] sm:$0xff]
        %v4566 = vld [vmem:[#allocation2 + $0x158] sm:$0xff]
        %v4567 = vld [vmem:[#allocation2 + $0x160] sm:$0xff]
        %v4568 = vld [vmem:[#allocation2 + $0x168] sm:$0xff]
        %v4569 = vld [vmem:[#allocation2 + $0x170] sm:$0xff]
        %v4570 = vld [vmem:[#allocation2 + $0x178] sm:$0xff]
        %v4571 = vld [vmem:[#allocation2 + $0x180] sm:$0xff]
        %v4572 = vld [vmem:[#allocation2 + $0x188] sm:$0xff]
        %v4573 = vld [vmem:[#allocation2 + $0x190] sm:$0xff]
        %v4574 = vld [vmem:[#allocation2 + $0x198] sm:$0xff]
        %v4575 = vld [vmem:[#allocation2 + $0x1a0] sm:$0xff]
        %v4576 = vld [vmem:[#allocation2 + $0x1a8] sm:$0xff]
        %v4577 = vld [vmem:[#allocation2 + $0x1b0] sm:$0xff]
        %v4578 = vld [vmem:[#allocation2 + $0x1b8] sm:$0xff]
        %v4579 = vld [vmem:[#allocation2 + $0x1c0] sm:$0xff]
        %v4580 = vld [vmem:[#allocation2 + $0x1c8] sm:$0xff]
        %v4581 = vld [vmem:[#allocation2 + $0x1d0] sm:$0xff]
        %v4582 = vld [vmem:[#allocation2 + $0x1d8] sm:$0xff]
        %v4583 = vld [vmem:[#allocation2 + $0x1e0] sm:$0xff]
        %v4584 = vpack.c.bf16 %v4531, %v4530
        %v4585 = vpack.c.bf16 %v4533, %v4532
        %v4586 = vpack.c.bf16 %v4535, %v4534
        %v4587 = vpack.c.bf16 %v4537, %v4536
        %v4588 = vpack.c.bf16 %v4539, %v4538
        %v4589 = vpack.c.bf16 %v4541, %v4540
        %v4590 = vpack.c.bf16 %v4543, %v4542
        %v4591 = vpack.c.bf16 %v4545, %v4544
        %v4592 = vpack.c.bf16 %v4547, %v4546
        %v4593 = vpack.c.bf16 %v4549, %v4548
        %v4594 = vpack.c.bf16 %v4551, %v4550
        %v4595 = vpack.c.bf16 %v4553, %v4552
        %v4596 = vpack.c.bf16 %v4555, %v4554
        %v4597 = vpack.c.bf16 %v4557, %v4556
        %v4598 = vpack.c.bf16 %v4559, %v4558
        %v4599 = vpack.c.bf16 %v4561, %v4560
        %v4600 = vpack.c.bf16 %v4563, %v4562
        %v4601 = vpack.c.bf16 %v4565, %v4564
        %v4602 = vpack.c.bf16 %v4567, %v4566
        %v4603 = vpack.c.bf16 %v4569, %v4568
        %v4604 = vpack.c.bf16 %v4571, %v4570
        %v4605 = vpack.c.bf16 %v4573, %v4572
        %v4606 = vpack.c.bf16 %v4575, %v4574
        %v4607 = vpack.c.bf16 %v4577, %v4576
        %v4608 = vpack.c.bf16 %v4579, %v4578
        %v4609 = vpack.c.bf16 %v4581, %v4580
        %v4610 = vpack.c.bf16 %v4583, %v4582
        %s4611 = scalar_lea.vmem %s5, 224
        %v4612 = vld [vmem:[%s4611] sm:$0xf]
        %v4613 = vld [vmem:[%s4611 + $0x4] sm:$0xf]
        %v4614 = vld [vmem:[%s4611 + $0x8] sm:$0xf]
        %v4615 = vld [vmem:[%s4611 + $0xc] sm:$0xf]
        %v4616 = vld [vmem:[%s4611 + $0x10] sm:$0xf]
        %v4617 = vld [vmem:[%s4611 + $0x14] sm:$0xf]
        %v4618 = vld [vmem:[%s4611 + $0x18] sm:$0xf]
        %v4619 = vld [vmem:[%s4611 + $0x1c] sm:$0xf]
        %v4628 = vunpack.c.l.b16 %v4612
        %v4629 = vunpack.c.l.b16 %v4613
        %v4630 = vunpack.c.l.b16 %v4614
        %v4631 = vunpack.c.l.b16 %v4615
        %v4632 = vunpack.c.l.b16 %v4616
        %v4633 = vunpack.c.l.b16 %v4617
        %v4634 = vunpack.c.l.b16 %v4618
        %v4635 = vunpack.c.l.b16 %v4619
        %v4636 = vpack.c.b16 %v4629, %v4628
        %v4637 = vpack.c.b16 %v4631, %v4630
        %v4638 = vpack.c.b16 %v4633, %v4632
        %v4639 = vpack.c.b16 %v4635, %v4634
        %v4645 = vsel %vm684, %v4584, 0
        %v4648 = vsel %vm684, %v4585, 0
        %v4651 = vsel %vm684, %v4586, 0
        %v4654 = vsel %vm684, %v4587, 0
        %v4657 = vsel %vm684, %v4588, 0
        %v4660 = vsel %vm684, %v4589, 0
        %v4663 = vsel %vm684, %v4590, 0
        %v4666 = vsel %vm684, %v4591, 0
        %v4669 = vsel %vm684, %v4592, 0
        %v4672 = vsel %vm684, %v4593, 0
        %v4675 = vsel %vm684, %v4594, 0
        %v4678 = vsel %vm684, %v4595, 0
        %v4681 = vsel %vm684, %v4596, 0
        %v4684 = vsel %vm684, %v4597, 0
        %v4687 = vsel %vm684, %v4598, 0
        %v4690 = vsel %vm684, %v4599, 0
        %v4693 = vsel %vm684, %v4600, 0
        %v4696 = vsel %vm684, %v4601, 0
        %v4699 = vsel %vm684, %v4602, 0
        %v4702 = vsel %vm684, %v4603, 0
        %v4705 = vsel %vm684, %v4604, 0
        %v4708 = vsel %vm684, %v4605, 0
        %v4711 = vsel %vm684, %v4606, 0
        %v4714 = vsel %vm684, %v4607, 0
        %v4717 = vsel %vm684, %v4608, 0
        %v4720 = vsel %vm684, %v4609, 0
        %v4723 = vsel %vm684, %v4610, 0
        %4725 = vmatprep.subr.bf16.mxu0 0
        %4726 = vmatpush1.bf16.msra.mxu0 0
        %4727 = vmatprep.subr.bf16.mxu0 0
        %4728 = vmatpush1.bf16.msra.mxu0 0
        %4729 = vmatprep.subr.bf16.mxu0 0
        %4730 = vmatpush1.bf16.msra.mxu0 0
        %4731 = vmatprep.subr.bf16.mxu0 0
        %4732 = vmatpush1.bf16.msra.mxu0 0
        %4733 = vmatprep.subr.bf16.mxu0 0
        %4734 = vmatpush1.bf16.msra.mxu0 %v4639
        %4735 = vmatprep.subr.bf16.mxu0 0
        %4736 = vmatpush1.bf16.msra.mxu0 %v4638
        %4737 = vmatprep.subr.bf16.mxu0 0
        %4738 = vmatpush1.bf16.msra.mxu0 %v4637
        %4739 = vmatprep.subr.bf16.mxu0 0
        %4740 = vmatpush1.bf16.msra.mxu0 %v4636
        %4741 = vmatprep.subr.bf16.mxu0 0
        %4742 = vmatpush2.bf16.msra.mxu0 0
        %4743 = vmatprep.subr.bf16.mxu0 0
        %4744 = vmatpush2.bf16.msra.mxu0 0
        %4745 = vmatprep.subr.bf16.mxu0 0
        %4746 = vmatpush2.bf16.msra.mxu0 0
        %4747 = vmatprep.subr.bf16.mxu0 0
        %4748 = vmatpush2.bf16.msra.mxu0 0
        %4749 = vmatprep.subr.bf16.mxu0 0
        %4750 = vmatpush2.bf16.msra.mxu0 0
        %4751 = vmatprep.subr.bf16.mxu0 0
        %4752 = vmatpush2.bf16.msra.mxu0 0
        %4753 = vmatprep.subr.bf16.mxu0 0
        %4754 = vmatpush2.bf16.msra.mxu0 0
        %4755 = vmatprep.subr.bf16.mxu0 0
        %4756 = vmatpush2.bf16.msra.mxu0 0
        %4757 = vmatprep.mubr.bf16.mxu0 0
        %4758 = vmatmul.mubr.bf16.gmra.mxu0 %v4645
        %v4759 = vpop.f32.mrf.mxu0
        %v4760 = vadd.f32 0.0, %v4759
        %v4761 = vpop.f32.mrf.mxu0
        %v4762 = vpop.f32.mrf.mxu0
        %v4763 = vadd.f32 0.0, %v4762
        %v4764 = vpop.f32.mrf.mxu0
        %4765 = vmatprep.mubr.bf16.mxu0 0
        %4766 = vmatmul.mubr.bf16.gmra.mxu0 %v4648
        %v4767 = vpop.f32.mrf.mxu0
        %v4768 = vadd.f32 0.0, %v4767
        %v4769 = vpop.f32.mrf.mxu0
        %v4770 = vpop.f32.mrf.mxu0
        %v4771 = vadd.f32 0.0, %v4770
        %v4772 = vpop.f32.mrf.mxu0
        %4773 = vmatprep.mubr.bf16.mxu0 0
        %4774 = vmatmul.mubr.bf16.gmra.mxu0 %v4651
        %v4775 = vpop.f32.mrf.mxu0
        %v4776 = vadd.f32 0.0, %v4775
        %v4777 = vpop.f32.mrf.mxu0
        %v4778 = vpop.f32.mrf.mxu0
        %v4779 = vadd.f32 0.0, %v4778
        %v4780 = vpop.f32.mrf.mxu0
        %4781 = vmatprep.mubr.bf16.mxu0 0
        %4782 = vmatmul.mubr.bf16.gmra.mxu0 %v4654
        %v4783 = vpop.f32.mrf.mxu0
        %v4784 = vadd.f32 0.0, %v4783
        %v4785 = vpop.f32.mrf.mxu0
        %v4786 = vpop.f32.mrf.mxu0
        %v4787 = vadd.f32 0.0, %v4786
        %v4788 = vpop.f32.mrf.mxu0
        %4789 = vmatprep.mubr.bf16.mxu0 0
        %4790 = vmatmul.mubr.bf16.gmra.mxu0 %v4657
        %v4791 = vpop.f32.mrf.mxu0
        %v4792 = vadd.f32 0.0, %v4791
        %v4793 = vpop.f32.mrf.mxu0
        %v4794 = vpop.f32.mrf.mxu0
        %v4795 = vadd.f32 0.0, %v4794
        %v4796 = vpop.f32.mrf.mxu0
        %4797 = vmatprep.mubr.bf16.mxu0 0
        %4798 = vmatmul.mubr.bf16.gmra.mxu0 %v4660
        %v4799 = vpop.f32.mrf.mxu0
        %v4800 = vadd.f32 0.0, %v4799
        %v4801 = vpop.f32.mrf.mxu0
        %v4802 = vpop.f32.mrf.mxu0
        %v4803 = vadd.f32 0.0, %v4802
        %v4804 = vpop.f32.mrf.mxu0
        %4805 = vmatprep.mubr.bf16.mxu0 0
        %4806 = vmatmul.mubr.bf16.gmra.mxu0 %v4663
        %v4807 = vpop.f32.mrf.mxu0
        %v4808 = vadd.f32 0.0, %v4807
        %v4809 = vpop.f32.mrf.mxu0
        %v4810 = vpop.f32.mrf.mxu0
        %v4811 = vadd.f32 0.0, %v4810
        %v4812 = vpop.f32.mrf.mxu0
        %4813 = vmatprep.mubr.bf16.mxu0 0
        %4814 = vmatmul.mubr.bf16.gmra.mxu0 %v4666
        %v4815 = vpop.f32.mrf.mxu0
        %v4816 = vadd.f32 0.0, %v4815
        %v4817 = vpop.f32.mrf.mxu0
        %v4818 = vpop.f32.mrf.mxu0
        %v4819 = vadd.f32 0.0, %v4818
        %v4820 = vpop.f32.mrf.mxu0
        %4821 = vmatprep.mubr.bf16.mxu0 0
        %4822 = vmatmul.mubr.bf16.gmra.mxu0 %v4669
        %v4823 = vpop.f32.mrf.mxu0
        %v4824 = vadd.f32 0.0, %v4823
        %v4825 = vpop.f32.mrf.mxu0
        %v4826 = vpop.f32.mrf.mxu0
        %v4827 = vadd.f32 0.0, %v4826
        %v4828 = vpop.f32.mrf.mxu0
        %4829 = vmatprep.mubr.bf16.mxu0 0
        %4830 = vmatmul.mubr.bf16.gmra.mxu0 %v4672
        %v4831 = vpop.f32.mrf.mxu0
        %v4832 = vadd.f32 0.0, %v4831
        %v4833 = vpop.f32.mrf.mxu0
        %v4834 = vpop.f32.mrf.mxu0
        %v4835 = vadd.f32 0.0, %v4834
        %v4836 = vpop.f32.mrf.mxu0
        %4837 = vmatprep.mubr.bf16.mxu0 0
        %4838 = vmatmul.mubr.bf16.gmra.mxu0 %v4675
        %v4839 = vpop.f32.mrf.mxu0
        %v4840 = vadd.f32 0.0, %v4839
        %v4841 = vpop.f32.mrf.mxu0
        %v4842 = vpop.f32.mrf.mxu0
        %v4843 = vadd.f32 0.0, %v4842
        %v4844 = vpop.f32.mrf.mxu0
        %4845 = vmatprep.mubr.bf16.mxu0 0
        %4846 = vmatmul.mubr.bf16.gmra.mxu0 %v4678
        %v4847 = vpop.f32.mrf.mxu0
        %v4848 = vadd.f32 0.0, %v4847
        %v4849 = vpop.f32.mrf.mxu0
        %v4850 = vpop.f32.mrf.mxu0
        %v4851 = vadd.f32 0.0, %v4850
        %v4852 = vpop.f32.mrf.mxu0
        %4853 = vmatprep.mubr.bf16.mxu0 0
        %4854 = vmatmul.mubr.bf16.gmra.mxu0 %v4681
        %v4855 = vpop.f32.mrf.mxu0
        %v4856 = vadd.f32 0.0, %v4855
        %v4857 = vpop.f32.mrf.mxu0
        %v4858 = vpop.f32.mrf.mxu0
        %v4859 = vadd.f32 0.0, %v4858
        %v4860 = vpop.f32.mrf.mxu0
        %4861 = vmatprep.mubr.bf16.mxu0 0
        %4862 = vmatmul.mubr.bf16.gmra.mxu0 %v4684
        %v4863 = vpop.f32.mrf.mxu0
        %v4864 = vadd.f32 0.0, %v4863
        %v4865 = vpop.f32.mrf.mxu0
        %v4866 = vpop.f32.mrf.mxu0
        %v4867 = vadd.f32 0.0, %v4866
        %v4868 = vpop.f32.mrf.mxu0
        %4869 = vmatprep.mubr.bf16.mxu0 0
        %4870 = vmatmul.mubr.bf16.gmra.mxu0 %v4687
        %v4871 = vpop.f32.mrf.mxu0
        %v4872 = vadd.f32 0.0, %v4871
        %v4873 = vpop.f32.mrf.mxu0
        %v4874 = vpop.f32.mrf.mxu0
        %v4875 = vadd.f32 0.0, %v4874
        %v4876 = vpop.f32.mrf.mxu0
        %4877 = vmatprep.mubr.bf16.mxu0 0
        %4878 = vmatmul.mubr.bf16.gmra.mxu0 %v4690
        %v4879 = vpop.f32.mrf.mxu0
        %v4880 = vadd.f32 0.0, %v4879
        %v4881 = vpop.f32.mrf.mxu0
        %v4882 = vpop.f32.mrf.mxu0
        %v4883 = vadd.f32 0.0, %v4882
        %v4884 = vpop.f32.mrf.mxu0
        %4885 = vmatprep.mubr.bf16.mxu0 0
        %4886 = vmatmul.mubr.bf16.gmra.mxu0 %v4693
        %v4887 = vpop.f32.mrf.mxu0
        %v4888 = vadd.f32 0.0, %v4887
        %v4889 = vpop.f32.mrf.mxu0
        %v4890 = vpop.f32.mrf.mxu0
        %v4891 = vadd.f32 0.0, %v4890
        %v4892 = vpop.f32.mrf.mxu0
        %4893 = vmatprep.mubr.bf16.mxu0 0
        %4894 = vmatmul.mubr.bf16.gmra.mxu0 %v4696
        %v4895 = vpop.f32.mrf.mxu0
        %v4896 = vadd.f32 0.0, %v4895
        %v4897 = vpop.f32.mrf.mxu0
        %v4898 = vpop.f32.mrf.mxu0
        %v4899 = vadd.f32 0.0, %v4898
        %v4900 = vpop.f32.mrf.mxu0
        %4901 = vmatprep.mubr.bf16.mxu0 0
        %4902 = vmatmul.mubr.bf16.gmra.mxu0 %v4699
        %v4903 = vpop.f32.mrf.mxu0
        %v4904 = vadd.f32 0.0, %v4903
        %v4905 = vpop.f32.mrf.mxu0
        %v4906 = vpop.f32.mrf.mxu0
        %v4907 = vadd.f32 0.0, %v4906
        %v4908 = vpop.f32.mrf.mxu0
        %4909 = vmatprep.mubr.bf16.mxu0 0
        %4910 = vmatmul.mubr.bf16.gmra.mxu0 %v4702
        %v4911 = vpop.f32.mrf.mxu0
        %v4912 = vadd.f32 0.0, %v4911
        %v4913 = vpop.f32.mrf.mxu0
        %v4914 = vpop.f32.mrf.mxu0
        %v4915 = vadd.f32 0.0, %v4914
        %v4916 = vpop.f32.mrf.mxu0
        %4917 = vmatprep.mubr.bf16.mxu0 0
        %4918 = vmatmul.mubr.bf16.gmra.mxu0 %v4705
        %v4919 = vpop.f32.mrf.mxu0
        %v4920 = vadd.f32 0.0, %v4919
        %v4921 = vpop.f32.mrf.mxu0
        %v4922 = vpop.f32.mrf.mxu0
        %v4923 = vadd.f32 0.0, %v4922
        %v4924 = vpop.f32.mrf.mxu0
        %4925 = vmatprep.mubr.bf16.mxu0 0
        %4926 = vmatmul.mubr.bf16.gmra.mxu0 %v4708
        %v4927 = vpop.f32.mrf.mxu0
        %v4928 = vadd.f32 0.0, %v4927
        %v4929 = vpop.f32.mrf.mxu0
        %v4930 = vpop.f32.mrf.mxu0
        %v4931 = vadd.f32 0.0, %v4930
        %v4932 = vpop.f32.mrf.mxu0
        %4933 = vmatprep.mubr.bf16.mxu0 0
        %4934 = vmatmul.mubr.bf16.gmra.mxu0 %v4711
        %v4935 = vpop.f32.mrf.mxu0
        %v4936 = vadd.f32 0.0, %v4935
        %v4937 = vpop.f32.mrf.mxu0
        %v4938 = vpop.f32.mrf.mxu0
        %v4939 = vadd.f32 0.0, %v4938
        %v4940 = vpop.f32.mrf.mxu0
        %4941 = vmatprep.mubr.bf16.mxu0 0
        %4942 = vmatmul.mubr.bf16.gmra.mxu0 %v4714
        %v4943 = vpop.f32.mrf.mxu0
        %v4944 = vadd.f32 0.0, %v4943
        %v4945 = vpop.f32.mrf.mxu0
        %v4946 = vpop.f32.mrf.mxu0
        %v4947 = vadd.f32 0.0, %v4946
        %v4948 = vpop.f32.mrf.mxu0
        %4949 = vmatprep.mubr.bf16.mxu0 0
        %4950 = vmatmul.mubr.bf16.gmra.mxu0 %v4717
        %v4951 = vpop.f32.mrf.mxu0
        %v4952 = vadd.f32 0.0, %v4951
        %v4953 = vpop.f32.mrf.mxu0
        %v4954 = vpop.f32.mrf.mxu0
        %v4955 = vadd.f32 0.0, %v4954
        %v4956 = vpop.f32.mrf.mxu0
        %4957 = vmatprep.mubr.bf16.mxu0 0
        %4958 = vmatmul.mubr.bf16.gmra.mxu0 %v4720
        %v4959 = vpop.f32.mrf.mxu0
        %v4960 = vadd.f32 0.0, %v4959
        %v4961 = vpop.f32.mrf.mxu0
        %v4962 = vpop.f32.mrf.mxu0
        %v4963 = vadd.f32 0.0, %v4962
        %v4964 = vpop.f32.mrf.mxu0
        %4965 = vmatprep.mubr.bf16.mxu0 0
        %4966 = vmatmul.mubr.bf16.gmra.mxu0 %v4723
        %v4967 = vpop.f32.mrf.mxu0
        %v4968 = vadd.f32 0.0, %v4967
        %v4969 = vpop.f32.mrf.mxu0
        %v4970 = vpop.f32.mrf.mxu0
        %v4971 = vadd.f32 0.0, %v4970
        %v4972 = vpop.f32.mrf.mxu0
        %4973 = vdwg.mxu0
        %v4974 = vadd.f32 %v4476, %v4760
        %v4975 = vadd.f32 %v4477, %v4763
        %v4976 = vadd.f32 %v4478, %v4768
        %v4977 = vadd.f32 %v4479, %v4771
        %v4978 = vadd.f32 %v4480, %v4776
        %v4979 = vadd.f32 %v4481, %v4779
        %v4980 = vadd.f32 %v4482, %v4784
        %v4981 = vadd.f32 %v4483, %v4787
        %v4982 = vadd.f32 %v4484, %v4792
        %v4983 = vadd.f32 %v4485, %v4795
        %v4984 = vadd.f32 %v4486, %v4800
        %v4985 = vadd.f32 %v4487, %v4803
        %v4986 = vadd.f32 %v4488, %v4808
        %v4987 = vadd.f32 %v4489, %v4811
        %v4988 = vadd.f32 %v4490, %v4816
        %v4989 = vadd.f32 %v4491, %v4819
        %v4990 = vadd.f32 %v4492, %v4824
        %v4991 = vadd.f32 %v4493, %v4827
        %v4992 = vadd.f32 %v4494, %v4832
        %v4993 = vadd.f32 %v4495, %v4835
        %v4994 = vadd.f32 %v4496, %v4840
        %v4995 = vadd.f32 %v4497, %v4843
        %v4996 = vadd.f32 %v4498, %v4848
        %v4997 = vadd.f32 %v4499, %v4851
        %v4998 = vadd.f32 %v4500, %v4856
        %v4999 = vadd.f32 %v4501, %v4859
        %v5000 = vadd.f32 %v4502, %v4864
        %v5001 = vadd.f32 %v4503, %v4867
        %v5002 = vadd.f32 %v4504, %v4872
        %v5003 = vadd.f32 %v4505, %v4875
        %v5004 = vadd.f32 %v4506, %v4880
        %v5005 = vadd.f32 %v4507, %v4883
        %v5006 = vadd.f32 %v4508, %v4888
        %v5007 = vadd.f32 %v4509, %v4891
        %v5008 = vadd.f32 %v4510, %v4896
        %v5009 = vadd.f32 %v4511, %v4899
        %v5010 = vadd.f32 %v4512, %v4904
        %v5011 = vadd.f32 %v4513, %v4907
        %v5012 = vadd.f32 %v4514, %v4912
        %v5013 = vadd.f32 %v4515, %v4915
        %v5014 = vadd.f32 %v4516, %v4920
        %v5015 = vadd.f32 %v4517, %v4923
        %v5016 = vadd.f32 %v4518, %v4928
        %v5017 = vadd.f32 %v4519, %v4931
        %v5018 = vadd.f32 %v4520, %v4936
        %v5019 = vadd.f32 %v4521, %v4939
        %v5020 = vadd.f32 %v4522, %v4944
        %v5021 = vadd.f32 %v4523, %v4947
        %v5022 = vadd.f32 %v4524, %v4952
        %v5023 = vadd.f32 %v4525, %v4955
        %v5024 = vadd.f32 %v4526, %v4960
        %v5025 = vadd.f32 %v4527, %v4963
        %v5026 = vadd.f32 %v4528, %v4968
        %v5027 = vadd.f32 %v4529, %v4971
        %v5028 = vld [vmem:[#allocation2 + $0x39] sm:$0xff]
        %v5029 = vld [vmem:[#allocation2 + $0x41] sm:$0xff]
        %v5030 = vld [vmem:[#allocation2 + $0x49] sm:$0xff]
        %v5031 = vld [vmem:[#allocation2 + $0x51] sm:$0xff]
        %v5032 = vld [vmem:[#allocation2 + $0x59] sm:$0xff]
        %v5033 = vld [vmem:[#allocation2 + $0x61] sm:$0xff]
        %v5034 = vld [vmem:[#allocation2 + $0x69] sm:$0xff]
        %v5035 = vld [vmem:[#allocation2 + $0x71] sm:$0xff]
        %v5036 = vld [vmem:[#allocation2 + $0x79] sm:$0xff]
        %v5037 = vld [vmem:[#allocation2 + $0x81] sm:$0xff]
        %v5038 = vld [vmem:[#allocation2 + $0x89] sm:$0xff]
        %v5039 = vld [vmem:[#allocation2 + $0x91] sm:$0xff]
        %v5040 = vld [vmem:[#allocation2 + $0x99] sm:$0xff]
        %v5041 = vld [vmem:[#allocation2 + $0xa1] sm:$0xff]
        %v5042 = vld [vmem:[#allocation2 + $0xa9] sm:$0xff]
        %v5043 = vld [vmem:[#allocation2 + $0xb1] sm:$0xff]
        %v5044 = vld [vmem:[#allocation2 + $0xb9] sm:$0xff]
        %v5045 = vld [vmem:[#allocation2 + $0xc1] sm:$0xff]
        %v5046 = vld [vmem:[#allocation2 + $0xc9] sm:$0xff]
        %v5047 = vld [vmem:[#allocation2 + $0xd1] sm:$0xff]
        %v5048 = vld [vmem:[#allocation2 + $0xd9] sm:$0xff]
        %v5049 = vld [vmem:[#allocation2 + $0xe1] sm:$0xff]
        %v5050 = vld [vmem:[#allocation2 + $0xe9] sm:$0xff]
        %v5051 = vld [vmem:[#allocation2 + $0xf1] sm:$0xff]
        %v5052 = vld [vmem:[#allocation2 + $0xf9] sm:$0xff]
        %v5053 = vld [vmem:[#allocation2 + $0x101] sm:$0xff]
        %v5054 = vld [vmem:[#allocation2 + $0x109] sm:$0xff]
        %v5055 = vld [vmem:[#allocation2 + $0x111] sm:$0xff]
        %v5056 = vld [vmem:[#allocation2 + $0x119] sm:$0xff]
        %v5057 = vld [vmem:[#allocation2 + $0x121] sm:$0xff]
        %v5058 = vld [vmem:[#allocation2 + $0x129] sm:$0xff]
        %v5059 = vld [vmem:[#allocation2 + $0x131] sm:$0xff]
        %v5060 = vld [vmem:[#allocation2 + $0x139] sm:$0xff]
        %v5061 = vld [vmem:[#allocation2 + $0x141] sm:$0xff]
        %v5062 = vld [vmem:[#allocation2 + $0x149] sm:$0xff]
        %v5063 = vld [vmem:[#allocation2 + $0x151] sm:$0xff]
        %v5064 = vld [vmem:[#allocation2 + $0x159] sm:$0xff]
        %v5065 = vld [vmem:[#allocation2 + $0x161] sm:$0xff]
        %v5066 = vld [vmem:[#allocation2 + $0x169] sm:$0xff]
        %v5067 = vld [vmem:[#allocation2 + $0x171] sm:$0xff]
        %v5068 = vld [vmem:[#allocation2 + $0x179] sm:$0xff]
        %v5069 = vld [vmem:[#allocation2 + $0x181] sm:$0xff]
        %v5070 = vld [vmem:[#allocation2 + $0x189] sm:$0xff]
        %v5071 = vld [vmem:[#allocation2 + $0x191] sm:$0xff]
        %v5072 = vld [vmem:[#allocation2 + $0x199] sm:$0xff]
        %v5073 = vld [vmem:[#allocation2 + $0x1a1] sm:$0xff]
        %v5074 = vld [vmem:[#allocation2 + $0x1a9] sm:$0xff]
        %v5075 = vld [vmem:[#allocation2 + $0x1b1] sm:$0xff]
        %v5076 = vld [vmem:[#allocation2 + $0x1b9] sm:$0xff]
        %v5077 = vld [vmem:[#allocation2 + $0x1c1] sm:$0xff]
        %v5078 = vld [vmem:[#allocation2 + $0x1c9] sm:$0xff]
        %v5079 = vld [vmem:[#allocation2 + $0x1d1] sm:$0xff]
        %v5080 = vld [vmem:[#allocation2 + $0x1d9] sm:$0xff]
        %v5081 = vld [vmem:[#allocation2 + $0x1e1] sm:$0xff]
        %v5082 = vpack.c.bf16 %v5029, %v5028
        %v5083 = vpack.c.bf16 %v5031, %v5030
        %v5084 = vpack.c.bf16 %v5033, %v5032
        %v5085 = vpack.c.bf16 %v5035, %v5034
        %v5086 = vpack.c.bf16 %v5037, %v5036
        %v5087 = vpack.c.bf16 %v5039, %v5038
        %v5088 = vpack.c.bf16 %v5041, %v5040
        %v5089 = vpack.c.bf16 %v5043, %v5042
        %v5090 = vpack.c.bf16 %v5045, %v5044
        %v5091 = vpack.c.bf16 %v5047, %v5046
        %v5092 = vpack.c.bf16 %v5049, %v5048
        %v5093 = vpack.c.bf16 %v5051, %v5050
        %v5094 = vpack.c.bf16 %v5053, %v5052
        %v5095 = vpack.c.bf16 %v5055, %v5054
        %v5096 = vpack.c.bf16 %v5057, %v5056
        %v5097 = vpack.c.bf16 %v5059, %v5058
        %v5098 = vpack.c.bf16 %v5061, %v5060
        %v5099 = vpack.c.bf16 %v5063, %v5062
        %v5100 = vpack.c.bf16 %v5065, %v5064
        %v5101 = vpack.c.bf16 %v5067, %v5066
        %v5102 = vpack.c.bf16 %v5069, %v5068
        %v5103 = vpack.c.bf16 %v5071, %v5070
        %v5104 = vpack.c.bf16 %v5073, %v5072
        %v5105 = vpack.c.bf16 %v5075, %v5074
        %v5106 = vpack.c.bf16 %v5077, %v5076
        %v5107 = vpack.c.bf16 %v5079, %v5078
        %v5108 = vpack.c.bf16 %v5081, %v5080
        %s5109 = scalar_lea.vmem %s5, 256
        %v5110 = vld [vmem:[%s5109] sm:$0xf]
        %v5111 = vld [vmem:[%s5109 + $0x4] sm:$0xf]
        %v5112 = vld [vmem:[%s5109 + $0x8] sm:$0xf]
        %v5113 = vld [vmem:[%s5109 + $0xc] sm:$0xf]
        %v5114 = vld [vmem:[%s5109 + $0x10] sm:$0xf]
        %v5115 = vld [vmem:[%s5109 + $0x14] sm:$0xf]
        %v5116 = vld [vmem:[%s5109 + $0x18] sm:$0xf]
        %v5117 = vld [vmem:[%s5109 + $0x1c] sm:$0xf]
        %v5126 = vunpack.c.l.b16 %v5110
        %v5127 = vunpack.c.l.b16 %v5111
        %v5128 = vunpack.c.l.b16 %v5112
        %v5129 = vunpack.c.l.b16 %v5113
        %v5130 = vunpack.c.l.b16 %v5114
        %v5131 = vunpack.c.l.b16 %v5115
        %v5132 = vunpack.c.l.b16 %v5116
        %v5133 = vunpack.c.l.b16 %v5117
        %v5134 = vpack.c.b16 %v5127, %v5126
        %v5135 = vpack.c.b16 %v5129, %v5128
        %v5136 = vpack.c.b16 %v5131, %v5130
        %v5137 = vpack.c.b16 %v5133, %v5132
        %v5143 = vsel %vm684, %v5082, 0
        %v5146 = vsel %vm684, %v5083, 0
        %v5149 = vsel %vm684, %v5084, 0
        %v5152 = vsel %vm684, %v5085, 0
        %v5155 = vsel %vm684, %v5086, 0
        %v5158 = vsel %vm684, %v5087, 0
        %v5161 = vsel %vm684, %v5088, 0
        %v5164 = vsel %vm684, %v5089, 0
        %v5167 = vsel %vm684, %v5090, 0
        %v5170 = vsel %vm684, %v5091, 0
        %v5173 = vsel %vm684, %v5092, 0
        %v5176 = vsel %vm684, %v5093, 0
        %v5179 = vsel %vm684, %v5094, 0
        %v5182 = vsel %vm684, %v5095, 0
        %v5185 = vsel %vm684, %v5096, 0
        %v5188 = vsel %vm684, %v5097, 0
        %v5191 = vsel %vm684, %v5098, 0
        %v5194 = vsel %vm684, %v5099, 0
        %v5197 = vsel %vm684, %v5100, 0
        %v5200 = vsel %vm684, %v5101, 0
        %v5203 = vsel %vm684, %v5102, 0
        %v5206 = vsel %vm684, %v5103, 0
        %v5209 = vsel %vm684, %v5104, 0
        %v5212 = vsel %vm684, %v5105, 0
        %v5215 = vsel %vm684, %v5106, 0
        %v5218 = vsel %vm684, %v5107, 0
        %v5221 = vsel %vm684, %v5108, 0
        %5223 = vmatprep.subr.bf16.mxu0 0
        %5224 = vmatpush1.bf16.msra.mxu0 0
        %5225 = vmatprep.subr.bf16.mxu0 0
        %5226 = vmatpush1.bf16.msra.mxu0 0
        %5227 = vmatprep.subr.bf16.mxu0 0
        %5228 = vmatpush1.bf16.msra.mxu0 0
        %5229 = vmatprep.subr.bf16.mxu0 0
        %5230 = vmatpush1.bf16.msra.mxu0 0
        %5231 = vmatprep.subr.bf16.mxu0 0
        %5232 = vmatpush1.bf16.msra.mxu0 %v5137
        %5233 = vmatprep.subr.bf16.mxu0 0
        %5234 = vmatpush1.bf16.msra.mxu0 %v5136
        %5235 = vmatprep.subr.bf16.mxu0 0
        %5236 = vmatpush1.bf16.msra.mxu0 %v5135
        %5237 = vmatprep.subr.bf16.mxu0 0
        %5238 = vmatpush1.bf16.msra.mxu0 %v5134
        %5239 = vmatprep.subr.bf16.mxu0 0
        %5240 = vmatpush2.bf16.msra.mxu0 0
        %5241 = vmatprep.subr.bf16.mxu0 0
        %5242 = vmatpush2.bf16.msra.mxu0 0
        %5243 = vmatprep.subr.bf16.mxu0 0
        %5244 = vmatpush2.bf16.msra.mxu0 0
        %5245 = vmatprep.subr.bf16.mxu0 0
        %5246 = vmatpush2.bf16.msra.mxu0 0
        %5247 = vmatprep.subr.bf16.mxu0 0
        %5248 = vmatpush2.bf16.msra.mxu0 0
        %5249 = vmatprep.subr.bf16.mxu0 0
        %5250 = vmatpush2.bf16.msra.mxu0 0
        %5251 = vmatprep.subr.bf16.mxu0 0
        %5252 = vmatpush2.bf16.msra.mxu0 0
        %5253 = vmatprep.subr.bf16.mxu0 0
        %5254 = vmatpush2.bf16.msra.mxu0 0
        %5255 = vmatprep.mubr.bf16.mxu0 0
        %5256 = vmatmul.mubr.bf16.gmra.mxu0 %v5143
        %v5257 = vpop.f32.mrf.mxu0
        %v5258 = vadd.f32 0.0, %v5257
        %v5259 = vpop.f32.mrf.mxu0
        %v5260 = vpop.f32.mrf.mxu0
        %v5261 = vadd.f32 0.0, %v5260
        %v5262 = vpop.f32.mrf.mxu0
        %5263 = vmatprep.mubr.bf16.mxu0 0
        %5264 = vmatmul.mubr.bf16.gmra.mxu0 %v5146
        %v5265 = vpop.f32.mrf.mxu0
        %v5266 = vadd.f32 0.0, %v5265
        %v5267 = vpop.f32.mrf.mxu0
        %v5268 = vpop.f32.mrf.mxu0
        %v5269 = vadd.f32 0.0, %v5268
        %v5270 = vpop.f32.mrf.mxu0
        %5271 = vmatprep.mubr.bf16.mxu0 0
        %5272 = vmatmul.mubr.bf16.gmra.mxu0 %v5149
        %v5273 = vpop.f32.mrf.mxu0
        %v5274 = vadd.f32 0.0, %v5273
        %v5275 = vpop.f32.mrf.mxu0
        %v5276 = vpop.f32.mrf.mxu0
        %v5277 = vadd.f32 0.0, %v5276
        %v5278 = vpop.f32.mrf.mxu0
        %5279 = vmatprep.mubr.bf16.mxu0 0
        %5280 = vmatmul.mubr.bf16.gmra.mxu0 %v5152
        %v5281 = vpop.f32.mrf.mxu0
        %v5282 = vadd.f32 0.0, %v5281
        %v5283 = vpop.f32.mrf.mxu0
        %v5284 = vpop.f32.mrf.mxu0
        %v5285 = vadd.f32 0.0, %v5284
        %v5286 = vpop.f32.mrf.mxu0
        %5287 = vmatprep.mubr.bf16.mxu0 0
        %5288 = vmatmul.mubr.bf16.gmra.mxu0 %v5155
        %v5289 = vpop.f32.mrf.mxu0
        %v5290 = vadd.f32 0.0, %v5289
        %v5291 = vpop.f32.mrf.mxu0
        %v5292 = vpop.f32.mrf.mxu0
        %v5293 = vadd.f32 0.0, %v5292
        %v5294 = vpop.f32.mrf.mxu0
        %5295 = vmatprep.mubr.bf16.mxu0 0
        %5296 = vmatmul.mubr.bf16.gmra.mxu0 %v5158
        %v5297 = vpop.f32.mrf.mxu0
        %v5298 = vadd.f32 0.0, %v5297
        %v5299 = vpop.f32.mrf.mxu0
        %v5300 = vpop.f32.mrf.mxu0
        %v5301 = vadd.f32 0.0, %v5300
        %v5302 = vpop.f32.mrf.mxu0
        %5303 = vmatprep.mubr.bf16.mxu0 0
        %5304 = vmatmul.mubr.bf16.gmra.mxu0 %v5161
        %v5305 = vpop.f32.mrf.mxu0
        %v5306 = vadd.f32 0.0, %v5305
        %v5307 = vpop.f32.mrf.mxu0
        %v5308 = vpop.f32.mrf.mxu0
        %v5309 = vadd.f32 0.0, %v5308
        %v5310 = vpop.f32.mrf.mxu0
        %5311 = vmatprep.mubr.bf16.mxu0 0
        %5312 = vmatmul.mubr.bf16.gmra.mxu0 %v5164
        %v5313 = vpop.f32.mrf.mxu0
        %v5314 = vadd.f32 0.0, %v5313
        %v5315 = vpop.f32.mrf.mxu0
        %v5316 = vpop.f32.mrf.mxu0
        %v5317 = vadd.f32 0.0, %v5316
        %v5318 = vpop.f32.mrf.mxu0
        %5319 = vmatprep.mubr.bf16.mxu0 0
        %5320 = vmatmul.mubr.bf16.gmra.mxu0 %v5167
        %v5321 = vpop.f32.mrf.mxu0
        %v5322 = vadd.f32 0.0, %v5321
        %v5323 = vpop.f32.mrf.mxu0
        %v5324 = vpop.f32.mrf.mxu0
        %v5325 = vadd.f32 0.0, %v5324
        %v5326 = vpop.f32.mrf.mxu0
        %5327 = vmatprep.mubr.bf16.mxu0 0
        %5328 = vmatmul.mubr.bf16.gmra.mxu0 %v5170
        %v5329 = vpop.f32.mrf.mxu0
        %v5330 = vadd.f32 0.0, %v5329
        %v5331 = vpop.f32.mrf.mxu0
        %v5332 = vpop.f32.mrf.mxu0
        %v5333 = vadd.f32 0.0, %v5332
        %v5334 = vpop.f32.mrf.mxu0
        %5335 = vmatprep.mubr.bf16.mxu0 0
        %5336 = vmatmul.mubr.bf16.gmra.mxu0 %v5173
        %v5337 = vpop.f32.mrf.mxu0
        %v5338 = vadd.f32 0.0, %v5337
        %v5339 = vpop.f32.mrf.mxu0
        %v5340 = vpop.f32.mrf.mxu0
        %v5341 = vadd.f32 0.0, %v5340
        %v5342 = vpop.f32.mrf.mxu0
        %5343 = vmatprep.mubr.bf16.mxu0 0
        %5344 = vmatmul.mubr.bf16.gmra.mxu0 %v5176
        %v5345 = vpop.f32.mrf.mxu0
        %v5346 = vadd.f32 0.0, %v5345
        %v5347 = vpop.f32.mrf.mxu0
        %v5348 = vpop.f32.mrf.mxu0
        %v5349 = vadd.f32 0.0, %v5348
        %v5350 = vpop.f32.mrf.mxu0
        %5351 = vmatprep.mubr.bf16.mxu0 0
        %5352 = vmatmul.mubr.bf16.gmra.mxu0 %v5179
        %v5353 = vpop.f32.mrf.mxu0
        %v5354 = vadd.f32 0.0, %v5353
        %v5355 = vpop.f32.mrf.mxu0
        %v5356 = vpop.f32.mrf.mxu0
        %v5357 = vadd.f32 0.0, %v5356
        %v5358 = vpop.f32.mrf.mxu0
        %5359 = vmatprep.mubr.bf16.mxu0 0
        %5360 = vmatmul.mubr.bf16.gmra.mxu0 %v5182
        %v5361 = vpop.f32.mrf.mxu0
        %v5362 = vadd.f32 0.0, %v5361
        %v5363 = vpop.f32.mrf.mxu0
        %v5364 = vpop.f32.mrf.mxu0
        %v5365 = vadd.f32 0.0, %v5364
        %v5366 = vpop.f32.mrf.mxu0
        %5367 = vmatprep.mubr.bf16.mxu0 0
        %5368 = vmatmul.mubr.bf16.gmra.mxu0 %v5185
        %v5369 = vpop.f32.mrf.mxu0
        %v5370 = vadd.f32 0.0, %v5369
        %v5371 = vpop.f32.mrf.mxu0
        %v5372 = vpop.f32.mrf.mxu0
        %v5373 = vadd.f32 0.0, %v5372
        %v5374 = vpop.f32.mrf.mxu0
        %5375 = vmatprep.mubr.bf16.mxu0 0
        %5376 = vmatmul.mubr.bf16.gmra.mxu0 %v5188
        %v5377 = vpop.f32.mrf.mxu0
        %v5378 = vadd.f32 0.0, %v5377
        %v5379 = vpop.f32.mrf.mxu0
        %v5380 = vpop.f32.mrf.mxu0
        %v5381 = vadd.f32 0.0, %v5380
        %v5382 = vpop.f32.mrf.mxu0
        %5383 = vmatprep.mubr.bf16.mxu0 0
        %5384 = vmatmul.mubr.bf16.gmra.mxu0 %v5191
        %v5385 = vpop.f32.mrf.mxu0
        %v5386 = vadd.f32 0.0, %v5385
        %v5387 = vpop.f32.mrf.mxu0
        %v5388 = vpop.f32.mrf.mxu0
        %v5389 = vadd.f32 0.0, %v5388
        %v5390 = vpop.f32.mrf.mxu0
        %5391 = vmatprep.mubr.bf16.mxu0 0
        %5392 = vmatmul.mubr.bf16.gmra.mxu0 %v5194
        %v5393 = vpop.f32.mrf.mxu0
        %v5394 = vadd.f32 0.0, %v5393
        %v5395 = vpop.f32.mrf.mxu0
        %v5396 = vpop.f32.mrf.mxu0
        %v5397 = vadd.f32 0.0, %v5396
        %v5398 = vpop.f32.mrf.mxu0
        %5399 = vmatprep.mubr.bf16.mxu0 0
        %5400 = vmatmul.mubr.bf16.gmra.mxu0 %v5197
        %v5401 = vpop.f32.mrf.mxu0
        %v5402 = vadd.f32 0.0, %v5401
        %v5403 = vpop.f32.mrf.mxu0
        %v5404 = vpop.f32.mrf.mxu0
        %v5405 = vadd.f32 0.0, %v5404
        %v5406 = vpop.f32.mrf.mxu0
        %5407 = vmatprep.mubr.bf16.mxu0 0
        %5408 = vmatmul.mubr.bf16.gmra.mxu0 %v5200
        %v5409 = vpop.f32.mrf.mxu0
        %v5410 = vadd.f32 0.0, %v5409
        %v5411 = vpop.f32.mrf.mxu0
        %v5412 = vpop.f32.mrf.mxu0
        %v5413 = vadd.f32 0.0, %v5412
        %v5414 = vpop.f32.mrf.mxu0
        %5415 = vmatprep.mubr.bf16.mxu0 0
        %5416 = vmatmul.mubr.bf16.gmra.mxu0 %v5203
        %v5417 = vpop.f32.mrf.mxu0
        %v5418 = vadd.f32 0.0, %v5417
        %v5419 = vpop.f32.mrf.mxu0
        %v5420 = vpop.f32.mrf.mxu0
        %v5421 = vadd.f32 0.0, %v5420
        %v5422 = vpop.f32.mrf.mxu0
        %5423 = vmatprep.mubr.bf16.mxu0 0
        %5424 = vmatmul.mubr.bf16.gmra.mxu0 %v5206
        %v5425 = vpop.f32.mrf.mxu0
        %v5426 = vadd.f32 0.0, %v5425
        %v5427 = vpop.f32.mrf.mxu0
        %v5428 = vpop.f32.mrf.mxu0
        %v5429 = vadd.f32 0.0, %v5428
        %v5430 = vpop.f32.mrf.mxu0
        %5431 = vmatprep.mubr.bf16.mxu0 0
        %5432 = vmatmul.mubr.bf16.gmra.mxu0 %v5209
        %v5433 = vpop.f32.mrf.mxu0
        %v5434 = vadd.f32 0.0, %v5433
        %v5435 = vpop.f32.mrf.mxu0
        %v5436 = vpop.f32.mrf.mxu0
        %v5437 = vadd.f32 0.0, %v5436
        %v5438 = vpop.f32.mrf.mxu0
        %5439 = vmatprep.mubr.bf16.mxu0 0
        %5440 = vmatmul.mubr.bf16.gmra.mxu0 %v5212
        %v5441 = vpop.f32.mrf.mxu0
        %v5442 = vadd.f32 0.0, %v5441
        %v5443 = vpop.f32.mrf.mxu0
        %v5444 = vpop.f32.mrf.mxu0
        %v5445 = vadd.f32 0.0, %v5444
        %v5446 = vpop.f32.mrf.mxu0
        %5447 = vmatprep.mubr.bf16.mxu0 0
        %5448 = vmatmul.mubr.bf16.gmra.mxu0 %v5215
        %v5449 = vpop.f32.mrf.mxu0
        %v5450 = vadd.f32 0.0, %v5449
        %v5451 = vpop.f32.mrf.mxu0
        %v5452 = vpop.f32.mrf.mxu0
        %v5453 = vadd.f32 0.0, %v5452
        %v5454 = vpop.f32.mrf.mxu0
        %5455 = vmatprep.mubr.bf16.mxu0 0
        %5456 = vmatmul.mubr.bf16.gmra.mxu0 %v5218
        %v5457 = vpop.f32.mrf.mxu0
        %v5458 = vadd.f32 0.0, %v5457
        %v5459 = vpop.f32.mrf.mxu0
        %v5460 = vpop.f32.mrf.mxu0
        %v5461 = vadd.f32 0.0, %v5460
        %v5462 = vpop.f32.mrf.mxu0
        %5463 = vmatprep.mubr.bf16.mxu0 0
        %5464 = vmatmul.mubr.bf16.gmra.mxu0 %v5221
        %v5465 = vpop.f32.mrf.mxu0
        %v5466 = vadd.f32 0.0, %v5465
        %v5467 = vpop.f32.mrf.mxu0
        %v5468 = vpop.f32.mrf.mxu0
        %v5469 = vadd.f32 0.0, %v5468
        %v5470 = vpop.f32.mrf.mxu0
        %5471 = vdwg.mxu0
        %v5472 = vadd.f32 %v4974, %v5258
        %v5473 = vadd.f32 %v4975, %v5261
        %v5474 = vadd.f32 %v4976, %v5266
        %v5475 = vadd.f32 %v4977, %v5269
        %v5476 = vadd.f32 %v4978, %v5274
        %v5477 = vadd.f32 %v4979, %v5277
        %v5478 = vadd.f32 %v4980, %v5282
        %v5479 = vadd.f32 %v4981, %v5285
        %v5480 = vadd.f32 %v4982, %v5290
        %v5481 = vadd.f32 %v4983, %v5293
        %v5482 = vadd.f32 %v4984, %v5298
        %v5483 = vadd.f32 %v4985, %v5301
        %v5484 = vadd.f32 %v4986, %v5306
        %v5485 = vadd.f32 %v4987, %v5309
        %v5486 = vadd.f32 %v4988, %v5314
        %v5487 = vadd.f32 %v4989, %v5317
        %v5488 = vadd.f32 %v4990, %v5322
        %v5489 = vadd.f32 %v4991, %v5325
        %v5490 = vadd.f32 %v4992, %v5330
        %v5491 = vadd.f32 %v4993, %v5333
        %v5492 = vadd.f32 %v4994, %v5338
        %v5493 = vadd.f32 %v4995, %v5341
        %v5494 = vadd.f32 %v4996, %v5346
        %v5495 = vadd.f32 %v4997, %v5349
        %v5496 = vadd.f32 %v4998, %v5354
        %v5497 = vadd.f32 %v4999, %v5357
        %v5498 = vadd.f32 %v5000, %v5362
        %v5499 = vadd.f32 %v5001, %v5365
        %v5500 = vadd.f32 %v5002, %v5370
        %v5501 = vadd.f32 %v5003, %v5373
        %v5502 = vadd.f32 %v5004, %v5378
        %v5503 = vadd.f32 %v5005, %v5381
        %v5504 = vadd.f32 %v5006, %v5386
        %v5505 = vadd.f32 %v5007, %v5389
        %v5506 = vadd.f32 %v5008, %v5394
        %v5507 = vadd.f32 %v5009, %v5397
        %v5508 = vadd.f32 %v5010, %v5402
        %v5509 = vadd.f32 %v5011, %v5405
        %v5510 = vadd.f32 %v5012, %v5410
        %v5511 = vadd.f32 %v5013, %v5413
        %v5512 = vadd.f32 %v5014, %v5418
        %v5513 = vadd.f32 %v5015, %v5421
        %v5514 = vadd.f32 %v5016, %v5426
        %v5515 = vadd.f32 %v5017, %v5429
        %v5516 = vadd.f32 %v5018, %v5434
        %v5517 = vadd.f32 %v5019, %v5437
        %v5518 = vadd.f32 %v5020, %v5442
        %v5519 = vadd.f32 %v5021, %v5445
        %v5520 = vadd.f32 %v5022, %v5450
        %v5521 = vadd.f32 %v5023, %v5453
        %v5522 = vadd.f32 %v5024, %v5458
        %v5523 = vadd.f32 %v5025, %v5461
        %v5524 = vadd.f32 %v5026, %v5466
        %v5525 = vadd.f32 %v5027, %v5469
        %v5526 = vld [vmem:[%s6] sm:$0x1]
        %v5528 = vlaneseq
        %v5529 = vshrl.u32 %v5528, 7
        %v5530 = vsub.s32 0, %v5529
        %v5531 = vrot.slane %v5526, %v5530
        %v5533 = vadd.f32 %v5472, %v5531
        %v5534 = vadd.f32 %v5473, %v5531
        %v5535 = vadd.f32 %v5474, %v5531
        %v5536 = vadd.f32 %v5475, %v5531
        %v5537 = vadd.f32 %v5476, %v5531
        %v5538 = vadd.f32 %v5477, %v5531
        %v5539 = vadd.f32 %v5478, %v5531
        %v5540 = vadd.f32 %v5479, %v5531
        %v5541 = vadd.f32 %v5480, %v5531
        %v5542 = vadd.f32 %v5481, %v5531
        %v5543 = vadd.f32 %v5482, %v5531
        %v5544 = vadd.f32 %v5483, %v5531
        %v5545 = vadd.f32 %v5484, %v5531
        %v5546 = vadd.f32 %v5485, %v5531
        %v5547 = vadd.f32 %v5486, %v5531
        %v5548 = vadd.f32 %v5487, %v5531
        %v5549 = vadd.f32 %v5488, %v5531
        %v5550 = vadd.f32 %v5489, %v5531
        %v5551 = vadd.f32 %v5490, %v5531
        %v5552 = vadd.f32 %v5491, %v5531
        %v5553 = vadd.f32 %v5492, %v5531
        %v5554 = vadd.f32 %v5493, %v5531
        %v5555 = vadd.f32 %v5494, %v5531
        %v5556 = vadd.f32 %v5495, %v5531
        %v5557 = vadd.f32 %v5496, %v5531
        %v5558 = vadd.f32 %v5497, %v5531
        %v5559 = vadd.f32 %v5498, %v5531
        %v5560 = vadd.f32 %v5499, %v5531
        %v5561 = vadd.f32 %v5500, %v5531
        %v5562 = vadd.f32 %v5501, %v5531
        %v5563 = vadd.f32 %v5502, %v5531
        %v5564 = vadd.f32 %v5503, %v5531
        %v5565 = vadd.f32 %v5504, %v5531
        %v5566 = vadd.f32 %v5505, %v5531
        %v5567 = vadd.f32 %v5506, %v5531
        %v5568 = vadd.f32 %v5507, %v5531
        %v5569 = vadd.f32 %v5508, %v5531
        %v5570 = vadd.f32 %v5509, %v5531
        %v5571 = vadd.f32 %v5510, %v5531
        %v5572 = vadd.f32 %v5511, %v5531
        %v5573 = vadd.f32 %v5512, %v5531
        %v5574 = vadd.f32 %v5513, %v5531
        %v5575 = vadd.f32 %v5514, %v5531
        %v5576 = vadd.f32 %v5515, %v5531
        %v5577 = vadd.f32 %v5516, %v5531
        %v5578 = vadd.f32 %v5517, %v5531
        %v5579 = vadd.f32 %v5518, %v5531
        %v5580 = vadd.f32 %v5519, %v5531
        %v5581 = vadd.f32 %v5520, %v5531
        %v5582 = vadd.f32 %v5521, %v5531
        %v5583 = vadd.f32 %v5522, %v5531
        %v5584 = vadd.f32 %v5523, %v5531
        %v5585 = vadd.f32 %v5524, %v5531
        %v5586 = vadd.f32 %v5525, %v5531
        %v5587 = vmax.f32 %v5533, 0.0
        %v5588 = vmax.f32 %v5534, 0.0
        %v5589 = vmax.f32 %v5535, 0.0
        %v5590 = vmax.f32 %v5536, 0.0
        %v5591 = vmax.f32 %v5537, 0.0
        %v5592 = vmax.f32 %v5538, 0.0
        %v5593 = vmax.f32 %v5539, 0.0
        %v5594 = vmax.f32 %v5540, 0.0
        %v5595 = vmax.f32 %v5541, 0.0
        %v5596 = vmax.f32 %v5542, 0.0
        %v5597 = vmax.f32 %v5543, 0.0
        %v5598 = vmax.f32 %v5544, 0.0
        %v5599 = vmax.f32 %v5545, 0.0
        %v5600 = vmax.f32 %v5546, 0.0
        %v5601 = vmax.f32 %v5547, 0.0
        %v5602 = vmax.f32 %v5548, 0.0
        %v5603 = vmax.f32 %v5549, 0.0
        %v5604 = vmax.f32 %v5550, 0.0
        %v5605 = vmax.f32 %v5551, 0.0
        %v5606 = vmax.f32 %v5552, 0.0
        %v5607 = vmax.f32 %v5553, 0.0
        %v5608 = vmax.f32 %v5554, 0.0
        %v5609 = vmax.f32 %v5555, 0.0
        %v5610 = vmax.f32 %v5556, 0.0
        %v5611 = vmax.f32 %v5557, 0.0
        %v5612 = vmax.f32 %v5558, 0.0
        %v5613 = vmax.f32 %v5559, 0.0
        %v5614 = vmax.f32 %v5560, 0.0
        %v5615 = vmax.f32 %v5561, 0.0
        %v5616 = vmax.f32 %v5562, 0.0
        %v5617 = vmax.f32 %v5563, 0.0
        %v5618 = vmax.f32 %v5564, 0.0
        %v5619 = vmax.f32 %v5565, 0.0
        %v5620 = vmax.f32 %v5566, 0.0
        %v5621 = vmax.f32 %v5567, 0.0
        %v5622 = vmax.f32 %v5568, 0.0
        %v5623 = vmax.f32 %v5569, 0.0
        %v5624 = vmax.f32 %v5570, 0.0
        %v5625 = vmax.f32 %v5571, 0.0
        %v5626 = vmax.f32 %v5572, 0.0
        %v5627 = vmax.f32 %v5573, 0.0
        %v5628 = vmax.f32 %v5574, 0.0
        %v5629 = vmax.f32 %v5575, 0.0
        %v5630 = vmax.f32 %v5576, 0.0
        %v5631 = vmax.f32 %v5577, 0.0
        %v5632 = vmax.f32 %v5578, 0.0
        %v5633 = vmax.f32 %v5579, 0.0
        %v5634 = vmax.f32 %v5580, 0.0
        %v5635 = vmax.f32 %v5581, 0.0
        %v5636 = vmax.f32 %v5582, 0.0
        %v5637 = vmax.f32 %v5583, 0.0
        %v5638 = vmax.f32 %v5584, 0.0
        %v5639 = vmax.f32 %v5585, 0.0
        %v5640 = vmax.f32 %v5586, 0.0
        %v5641 = vpack.c.bf16 %v5588, %v5587
        %v5642 = vpack.c.bf16 %v5590, %v5589
        %v5643 = vpack.c.bf16 %v5592, %v5591
        %v5644 = vpack.c.bf16 %v5594, %v5593
        %v5645 = vpack.c.bf16 %v5596, %v5595
        %v5646 = vpack.c.bf16 %v5598, %v5597
        %v5647 = vpack.c.bf16 %v5600, %v5599
        %v5648 = vpack.c.bf16 %v5602, %v5601
        %v5649 = vpack.c.bf16 %v5604, %v5603
        %v5650 = vpack.c.bf16 %v5606, %v5605
        %v5651 = vpack.c.bf16 %v5608, %v5607
        %v5652 = vpack.c.bf16 %v5610, %v5609
        %v5653 = vpack.c.bf16 %v5612, %v5611
        %v5654 = vpack.c.bf16 %v5614, %v5613
        %v5655 = vpack.c.bf16 %v5616, %v5615
        %v5656 = vpack.c.bf16 %v5618, %v5617
        %v5657 = vpack.c.bf16 %v5620, %v5619
        %v5658 = vpack.c.bf16 %v5622, %v5621
        %v5659 = vpack.c.bf16 %v5624, %v5623
        %v5660 = vpack.c.bf16 %v5626, %v5625
        %v5661 = vpack.c.bf16 %v5628, %v5627
        %v5662 = vpack.c.bf16 %v5630, %v5629
        %v5663 = vpack.c.bf16 %v5632, %v5631
        %v5664 = vpack.c.bf16 %v5634, %v5633
        %v5665 = vpack.c.bf16 %v5636, %v5635
        %v5666 = vpack.c.bf16 %v5638, %v5637
        %v5667 = vpack.c.bf16 %v5640, %v5639
        %v5668 = vld [vmem:[%s7] sm:$0xf]
        %v5669 = vld [vmem:[%s7 + $0x4] sm:$0xf]
        %v5670 = vld [vmem:[%s7 + $0x8] sm:$0xf]
        %v5671 = vld [vmem:[%s7 + $0xc] sm:$0xf]
        %v5672 = vld [vmem:[%s7 + $0x10] sm:$0xf]
        %v5673 = vld [vmem:[%s7 + $0x14] sm:$0xf]
        %v5674 = vld [vmem:[%s7 + $0x18] sm:$0xf]
        %v5675 = vld [vmem:[%s7 + $0x1c] sm:$0xf]
        %v5676 = vld [vmem:[%s8] sm:$0x1]
        %v5678 = vlaneseq
        %v5679 = vshrl.u32 %v5678, 7
        %v5680 = vsub.s32 0, %v5679
        %v5681 = vrot.slane %v5676, %v5680
        %v5691 = vunpack.c.l.b16 %v5668
        %v5692 = vunpack.c.l.b16 %v5669
        %v5693 = vunpack.c.l.b16 %v5670
        %v5694 = vunpack.c.l.b16 %v5671
        %v5695 = vunpack.c.l.b16 %v5672
        %v5696 = vunpack.c.l.b16 %v5673
        %v5697 = vunpack.c.l.b16 %v5674
        %v5698 = vunpack.c.l.b16 %v5675
        %v5699 = vpack.c.b16 %v5692, %v5691
        %v5700 = vpack.c.b16 %v5694, %v5693
        %v5701 = vpack.c.b16 %v5696, %v5695
        %v5702 = vpack.c.b16 %v5698, %v5697
        %v5708 = vsel %vm684, %v5641, 0
        %v5711 = vsel %vm684, %v5642, 0
        %v5714 = vsel %vm684, %v5643, 0
        %v5717 = vsel %vm684, %v5644, 0
        %v5720 = vsel %vm684, %v5645, 0
        %v5723 = vsel %vm684, %v5646, 0
        %v5726 = vsel %vm684, %v5647, 0
        %v5729 = vsel %vm684, %v5648, 0
        %v5732 = vsel %vm684, %v5649, 0
        %v5735 = vsel %vm684, %v5650, 0
        %v5738 = vsel %vm684, %v5651, 0
        %v5741 = vsel %vm684, %v5652, 0
        %v5744 = vsel %vm684, %v5653, 0
        %v5747 = vsel %vm684, %v5654, 0
        %v5750 = vsel %vm684, %v5655, 0
        %v5753 = vsel %vm684, %v5656, 0
        %v5756 = vsel %vm684, %v5657, 0
        %v5759 = vsel %vm684, %v5658, 0
        %v5762 = vsel %vm684, %v5659, 0
        %v5765 = vsel %vm684, %v5660, 0
        %v5768 = vsel %vm684, %v5661, 0
        %v5771 = vsel %vm684, %v5662, 0
        %v5774 = vsel %vm684, %v5663, 0
        %v5777 = vsel %vm684, %v5664, 0
        %v5780 = vsel %vm684, %v5665, 0
        %v5783 = vsel %vm684, %v5666, 0
        %v5786 = vsel %vm684, %v5667, 0
        %5788 = vmatprep.subr.bf16.mxu0 0
        %5789 = vmatpush1.bf16.msra.mxu0 0
        %5790 = vmatprep.subr.bf16.mxu0 0
        %5791 = vmatpush1.bf16.msra.mxu0 0
        %5792 = vmatprep.subr.bf16.mxu0 0
        %5793 = vmatpush1.bf16.msra.mxu0 0
        %5794 = vmatprep.subr.bf16.mxu0 0
        %5795 = vmatpush1.bf16.msra.mxu0 0
        %5796 = vmatprep.subr.bf16.mxu0 0
        %5797 = vmatpush1.bf16.msra.mxu0 %v5702
        %5798 = vmatprep.subr.bf16.mxu0 0
        %5799 = vmatpush1.bf16.msra.mxu0 %v5701
        %5800 = vmatprep.subr.bf16.mxu0 0
        %5801 = vmatpush1.bf16.msra.mxu0 %v5700
        %5802 = vmatprep.subr.bf16.mxu0 0
        %5803 = vmatpush1.bf16.msra.mxu0 %v5699
        %5804 = vmatprep.subr.bf16.mxu0 0
        %5805 = vmatpush2.bf16.msra.mxu0 0
        %5806 = vmatprep.subr.bf16.mxu0 0
        %5807 = vmatpush2.bf16.msra.mxu0 0
        %5808 = vmatprep.subr.bf16.mxu0 0
        %5809 = vmatpush2.bf16.msra.mxu0 0
        %5810 = vmatprep.subr.bf16.mxu0 0
        %5811 = vmatpush2.bf16.msra.mxu0 0
        %5812 = vmatprep.subr.bf16.mxu0 0
        %5813 = vmatpush2.bf16.msra.mxu0 0
        %5814 = vmatprep.subr.bf16.mxu0 0
        %5815 = vmatpush2.bf16.msra.mxu0 0
        %5816 = vmatprep.subr.bf16.mxu0 0
        %5817 = vmatpush2.bf16.msra.mxu0 0
        %5818 = vmatprep.subr.bf16.mxu0 0
        %5819 = vmatpush2.bf16.msra.mxu0 0
        %5820 = vmatprep.mubr.bf16.mxu0 0
        %5821 = vmatmul.mubr.bf16.gmra.mxu0 %v5708
        %v5822 = vpop.f32.mrf.mxu0
        %v5823 = vpop.f32.mrf.mxu0
        %v5824 = vpop.f32.mrf.mxu0
        %v5825 = vpop.f32.mrf.mxu0
        %5826 = vmatprep.mubr.bf16.mxu0 0
        %5827 = vmatmul.mubr.bf16.gmra.mxu0 %v5711
        %v5828 = vpop.f32.mrf.mxu0
        %v5829 = vpop.f32.mrf.mxu0
        %v5830 = vpop.f32.mrf.mxu0
        %v5831 = vpop.f32.mrf.mxu0
        %5832 = vmatprep.mubr.bf16.mxu0 0
        %5833 = vmatmul.mubr.bf16.gmra.mxu0 %v5714
        %v5834 = vpop.f32.mrf.mxu0
        %v5835 = vadd.f32 %v5681, %v5834
        %v5836 = vpop.f32.mrf.mxu0
        %v5837 = vpop.f32.mrf.mxu0
        %v5838 = vadd.f32 %v5681, %v5837
        %v5839 = vpop.f32.mrf.mxu0
        %5840 = vmatprep.mubr.bf16.mxu0 0
        %5841 = vmatmul.mubr.bf16.gmra.mxu0 %v5717
        %v5842 = vpop.f32.mrf.mxu0
        %v5843 = vpop.f32.mrf.mxu0
        %v5844 = vpop.f32.mrf.mxu0
        %v5845 = vadd.f32 %v5681, %v5844
        %v5846 = vpop.f32.mrf.mxu0
        %5847 = vmatprep.mubr.bf16.mxu0 0
        %5848 = vmatmul.mubr.bf16.gmra.mxu0 %v5720
        %v5849 = vpop.f32.mrf.mxu0
        %v5850 = vadd.f32 %v5681, %v5849
        %v5851 = vpop.f32.mrf.mxu0
        %v5852 = vpop.f32.mrf.mxu0
        %v5853 = vpop.f32.mrf.mxu0
        %5854 = vmatprep.mubr.bf16.mxu0 0
        %5855 = vmatmul.mubr.bf16.gmra.mxu0 %v5723
        %v5856 = vpop.f32.mrf.mxu0
        %v5857 = vadd.f32 %v5681, %v5856
        %v5858 = vpop.f32.mrf.mxu0
        %v5859 = vpop.f32.mrf.mxu0
        %v5860 = vadd.f32 %v5681, %v5859
        %v5861 = vpop.f32.mrf.mxu0
        %5862 = vmatprep.mubr.bf16.mxu0 0
        %5863 = vmatmul.mubr.bf16.gmra.mxu0 %v5726
        %v5864 = vpop.f32.mrf.mxu0
        %v5865 = vpop.f32.mrf.mxu0
        %v5866 = vpop.f32.mrf.mxu0
        %v5867 = vadd.f32 %v5681, %v5866
        %v5868 = vpop.f32.mrf.mxu0
        %5869 = vmatprep.mubr.bf16.mxu0 0
        %5870 = vmatmul.mubr.bf16.gmra.mxu0 %v5729
        %v5871 = vpop.f32.mrf.mxu0
        %v5872 = vadd.f32 %v5681, %v5871
        %v5873 = vpop.f32.mrf.mxu0
        %v5874 = vpop.f32.mrf.mxu0
        %v5875 = vpop.f32.mrf.mxu0
        %5876 = vmatprep.mubr.bf16.mxu0 0
        %5877 = vmatmul.mubr.bf16.gmra.mxu0 %v5732
        %v5878 = vpop.f32.mrf.mxu0
        %v5879 = vadd.f32 %v5681, %v5878
        %v5880 = vpop.f32.mrf.mxu0
        %v5881 = vpop.f32.mrf.mxu0
        %v5882 = vadd.f32 %v5681, %v5881
        %v5883 = vpop.f32.mrf.mxu0
        %5884 = vmatprep.mubr.bf16.mxu0 0
        %5885 = vmatmul.mubr.bf16.gmra.mxu0 %v5735
        %v5886 = vpop.f32.mrf.mxu0
        %v5887 = vpop.f32.mrf.mxu0
        %v5888 = vpop.f32.mrf.mxu0
        %v5889 = vadd.f32 %v5681, %v5888
        %v5890 = vpop.f32.mrf.mxu0
        %5891 = vmatprep.mubr.bf16.mxu0 0
        %5892 = vmatmul.mubr.bf16.gmra.mxu0 %v5738
        %v5893 = vpop.f32.mrf.mxu0
        %v5894 = vadd.f32 %v5681, %v5893
        %v5895 = vpop.f32.mrf.mxu0
        %v5896 = vpop.f32.mrf.mxu0
        %v5897 = vpop.f32.mrf.mxu0
        %5898 = vmatprep.mubr.bf16.mxu0 0
        %5899 = vmatmul.mubr.bf16.gmra.mxu0 %v5741
        %v5900 = vpop.f32.mrf.mxu0
        %v5901 = vadd.f32 %v5681, %v5900
        %v5902 = vpop.f32.mrf.mxu0
        %v5903 = vpop.f32.mrf.mxu0
        %v5904 = vadd.f32 %v5681, %v5903
        %v5905 = vpop.f32.mrf.mxu0
        %5906 = vmatprep.mubr.bf16.mxu0 0
        %5907 = vmatmul.mubr.bf16.gmra.mxu0 %v5744
        %v5908 = vpop.f32.mrf.mxu0
        %v5909 = vpop.f32.mrf.mxu0
        %v5910 = vpop.f32.mrf.mxu0
        %v5911 = vadd.f32 %v5681, %v5910
        %v5912 = vpop.f32.mrf.mxu0
        %5913 = vmatprep.mubr.bf16.mxu0 0
        %5914 = vmatmul.mubr.bf16.gmra.mxu0 %v5747
        %v5915 = vpop.f32.mrf.mxu0
        %v5916 = vadd.f32 %v5681, %v5915
        %v5917 = vpop.f32.mrf.mxu0
        %v5918 = vpop.f32.mrf.mxu0
        %v5919 = vpop.f32.mrf.mxu0
        %5920 = vmatprep.mubr.bf16.mxu0 0
        %5921 = vmatmul.mubr.bf16.gmra.mxu0 %v5750
        %v5922 = vpop.f32.mrf.mxu0
        %v5923 = vadd.f32 %v5681, %v5922
        %v5924 = vpop.f32.mrf.mxu0
        %v5925 = vpop.f32.mrf.mxu0
        %v5926 = vadd.f32 %v5681, %v5925
        %v5927 = vpop.f32.mrf.mxu0
        %5928 = vmatprep.mubr.bf16.mxu0 0
        %5929 = vmatmul.mubr.bf16.gmra.mxu0 %v5753
        %v5930 = vpop.f32.mrf.mxu0
        %v5931 = vpop.f32.mrf.mxu0
        %v5932 = vpop.f32.mrf.mxu0
        %v5933 = vadd.f32 %v5681, %v5932
        %v5934 = vpop.f32.mrf.mxu0
        %5935 = vmatprep.mubr.bf16.mxu0 0
        %5936 = vmatmul.mubr.bf16.gmra.mxu0 %v5756
        %v5937 = vpop.f32.mrf.mxu0
        %v5938 = vadd.f32 %v5681, %v5937
        %v5939 = vpop.f32.mrf.mxu0
        %v5940 = vpop.f32.mrf.mxu0
        %v5941 = vpop.f32.mrf.mxu0
        %5942 = vmatprep.mubr.bf16.mxu0 0
        %5943 = vmatmul.mubr.bf16.gmra.mxu0 %v5759
        %v5944 = vpop.f32.mrf.mxu0
        %v5945 = vadd.f32 %v5681, %v5944
        %v5946 = vpop.f32.mrf.mxu0
        %v5947 = vpop.f32.mrf.mxu0
        %v5948 = vadd.f32 %v5681, %v5947
        %v5949 = vpop.f32.mrf.mxu0
        %5950 = vmatprep.mubr.bf16.mxu0 0
        %5951 = vmatmul.mubr.bf16.gmra.mxu0 %v5762
        %v5952 = vpop.f32.mrf.mxu0
        %v5953 = vpop.f32.mrf.mxu0
        %v5954 = vpop.f32.mrf.mxu0
        %v5955 = vadd.f32 %v5681, %v5954
        %v5956 = vpop.f32.mrf.mxu0
        %5957 = vmatprep.mubr.bf16.mxu0 0
        %5958 = vmatmul.mubr.bf16.gmra.mxu0 %v5765
        %v5959 = vpop.f32.mrf.mxu0
        %v5960 = vadd.f32 %v5681, %v5959
        %v5961 = vpop.f32.mrf.mxu0
        %v5962 = vpop.f32.mrf.mxu0
        %v5963 = vpop.f32.mrf.mxu0
        %5964 = vmatprep.mubr.bf16.mxu0 0
        %5965 = vmatmul.mubr.bf16.gmra.mxu0 %v5768
        %v5966 = vpop.f32.mrf.mxu0
        %v5967 = vadd.f32 %v5681, %v5966
        %v5968 = vpop.f32.mrf.mxu0
        %v5969 = vpop.f32.mrf.mxu0
        %v5970 = vadd.f32 %v5681, %v5969
        %v5971 = vpop.f32.mrf.mxu0
        %5972 = vmatprep.mubr.bf16.mxu0 0
        %5973 = vmatmul.mubr.bf16.gmra.mxu0 %v5771
        %v5974 = vpop.f32.mrf.mxu0
        %v5975 = vpop.f32.mrf.mxu0
        %v5976 = vpop.f32.mrf.mxu0
        %v5977 = vadd.f32 %v5681, %v5976
        %v5978 = vpop.f32.mrf.mxu0
        %5979 = vmatprep.mubr.bf16.mxu0 0
        %5980 = vmatmul.mubr.bf16.gmra.mxu0 %v5774
        %v5981 = vpop.f32.mrf.mxu0
        %v5982 = vadd.f32 %v5681, %v5981
        %v5983 = vpop.f32.mrf.mxu0
        %v5984 = vpop.f32.mrf.mxu0
        %v5985 = vpop.f32.mrf.mxu0
        %5986 = vmatprep.mubr.bf16.mxu0 0
        %5987 = vmatmul.mubr.bf16.gmra.mxu0 %v5777
        %v5988 = vpop.f32.mrf.mxu0
        %v5989 = vadd.f32 %v5681, %v5988
        %v5990 = vpop.f32.mrf.mxu0
        %v5991 = vpop.f32.mrf.mxu0
        %v5992 = vadd.f32 %v5681, %v5991
        %v5993 = vpop.f32.mrf.mxu0
        %5994 = vmatprep.mubr.bf16.mxu0 0
        %5995 = vmatmul.mubr.bf16.gmra.mxu0 %v5780
        %v5996 = vpop.f32.mrf.mxu0
        %v5997 = vpop.f32.mrf.mxu0
        %v5998 = vpop.f32.mrf.mxu0
        %v5999 = vadd.f32 %v5681, %v5998
        %v6000 = vpop.f32.mrf.mxu0
        %6001 = vmatprep.mubr.bf16.mxu0 0
        %6002 = vmatmul.mubr.bf16.gmra.mxu0 %v5783
        %v6003 = vpop.f32.mrf.mxu0
        %v6004 = vadd.f32 %v5681, %v6003
        %v6005 = vpop.f32.mrf.mxu0
        %v6006 = vpop.f32.mrf.mxu0
        %v6007 = vpop.f32.mrf.mxu0
        %6008 = vmatprep.mubr.bf16.mxu0 0
        %6009 = vmatmul.mubr.bf16.gmra.mxu0 %v5786
        %v6010 = vpop.f32.mrf.mxu0
        %v6011 = vpop.f32.mrf.mxu0
        %v6012 = vpop.f32.mrf.mxu0
        %v6013 = vpop.f32.mrf.mxu0
        %6014 = vdwg.mxu0
        %v6015 = vpack.c.bf16 %v389, %v388
        %v6016 = vpack.c.bf16 %v391, %v390
        %v6017 = vpack.c.bf16 %v393, %v392
        %v6018 = vpack.c.bf16 %v395, %v394
        %v6019 = vpack.c.bf16 %v397, %v396
        %v6020 = vpack.c.bf16 %v399, %v398
        %v6021 = vpack.c.bf16 %v401, %v400
        %v6022 = vpack.c.bf16 %v403, %v402
        %v6023 = vpack.c.bf16 %v405, %v404
        %v6024 = vpack.c.bf16 %v407, %v406
        %v6025 = vpack.c.bf16 %v409, %v408
        %v6026 = vpack.c.bf16 %v411, %v410
        %v6027 = vpack.c.bf16 %v413, %v412
        %v6028 = vpack.c.bf16 %v415, %v414
        %v6029 = vpack.c.bf16 %v417, %v416
        %v6030 = vpack.c.bf16 %v419, %v418
        %v6031 = vpack.c.bf16 %v421, %v420
        %v6032 = vpack.c.bf16 %v423, %v422
        %v6033 = vpack.c.bf16 %v425, %v424
        %v6034 = vpack.c.bf16 %v427, %v426
        %v6035 = vpack.c.bf16 %v429, %v428
        %v6036 = vpack.c.bf16 %v431, %v430
        %v6037 = vpack.c.bf16 %v433, %v432
        %v6038 = vpack.c.bf16 %v435, %v434
        %v6039 = vpack.c.bf16 %v437, %v436
        %v6040 = vpack.c.bf16 %v439, %v438
        %v6041 = vpack.c.bf16 %v441, %v440
        %v6042 = vld [vmem:[%s9] sm:$0xf]
        %v6043 = vld [vmem:[%s9 + $0x4] sm:$0xf]
        %v6044 = vld [vmem:[%s9 + $0x8] sm:$0xf]
        %v6045 = vld [vmem:[%s9 + $0xc] sm:$0xf]
        %v6046 = vld [vmem:[%s9 + $0x10] sm:$0xf]
        %v6047 = vld [vmem:[%s9 + $0x14] sm:$0xf]
        %v6048 = vld [vmem:[%s9 + $0x18] sm:$0xf]
        %v6049 = vld [vmem:[%s9 + $0x1c] sm:$0xf]
        %v6050 = vld [vmem:[%s10] sm:$0x1]
        %v6052 = vlaneseq
        %v6053 = vshrl.u32 %v6052, 7
        %v6054 = vsub.s32 0, %v6053
        %v6055 = vrot.slane %v6050, %v6054
        %v6065 = vunpack.c.l.b16 %v6042
        %v6066 = vunpack.c.l.b16 %v6043
        %v6067 = vunpack.c.l.b16 %v6044
        %v6068 = vunpack.c.l.b16 %v6045
        %v6069 = vunpack.c.l.b16 %v6046
        %v6070 = vunpack.c.l.b16 %v6047
        %v6071 = vunpack.c.l.b16 %v6048
        %v6072 = vunpack.c.l.b16 %v6049
        %v6073 = vpack.c.b16 %v6066, %v6065
        %v6074 = vpack.c.b16 %v6068, %v6067
        %v6075 = vpack.c.b16 %v6070, %v6069
        %v6076 = vpack.c.b16 %v6072, %v6071
        %v6082 = vsel %vm684, %v6015, 0
        %v6085 = vsel %vm684, %v6016, 0
        %v6088 = vsel %vm684, %v6017, 0
        %v6091 = vsel %vm684, %v6018, 0
        %v6094 = vsel %vm684, %v6019, 0
        %v6097 = vsel %vm684, %v6020, 0
        %v6100 = vsel %vm684, %v6021, 0
        %v6103 = vsel %vm684, %v6022, 0
        %v6106 = vsel %vm684, %v6023, 0
        %v6109 = vsel %vm684, %v6024, 0
        %v6112 = vsel %vm684, %v6025, 0
        %v6115 = vsel %vm684, %v6026, 0
        %v6118 = vsel %vm684, %v6027, 0
        %v6121 = vsel %vm684, %v6028, 0
        %v6124 = vsel %vm684, %v6029, 0
        %v6127 = vsel %vm684, %v6030, 0
        %v6130 = vsel %vm684, %v6031, 0
        %v6133 = vsel %vm684, %v6032, 0
        %v6136 = vsel %vm684, %v6033, 0
        %v6139 = vsel %vm684, %v6034, 0
        %v6142 = vsel %vm684, %v6035, 0
        %v6145 = vsel %vm684, %v6036, 0
        %v6148 = vsel %vm684, %v6037, 0
        %v6151 = vsel %vm684, %v6038, 0
        %v6154 = vsel %vm684, %v6039, 0
        %v6157 = vsel %vm684, %v6040, 0
        %v6160 = vsel %vm684, %v6041, 0
        %6162 = vmatprep.subr.bf16.mxu0 0
        %6163 = vmatpush1.bf16.msra.mxu0 0
        %6164 = vmatprep.subr.bf16.mxu0 0
        %6165 = vmatpush1.bf16.msra.mxu0 0
        %6166 = vmatprep.subr.bf16.mxu0 0
        %6167 = vmatpush1.bf16.msra.mxu0 0
        %6168 = vmatprep.subr.bf16.mxu0 0
        %6169 = vmatpush1.bf16.msra.mxu0 0
        %6170 = vmatprep.subr.bf16.mxu0 0
        %6171 = vmatpush1.bf16.msra.mxu0 %v6076
        %6172 = vmatprep.subr.bf16.mxu0 0
        %6173 = vmatpush1.bf16.msra.mxu0 %v6075
        %6174 = vmatprep.subr.bf16.mxu0 0
        %6175 = vmatpush1.bf16.msra.mxu0 %v6074
        %6176 = vmatprep.subr.bf16.mxu0 0
        %6177 = vmatpush1.bf16.msra.mxu0 %v6073
        %6178 = vmatprep.subr.bf16.mxu0 0
        %6179 = vmatpush2.bf16.msra.mxu0 0
        %6180 = vmatprep.subr.bf16.mxu0 0
        %6181 = vmatpush2.bf16.msra.mxu0 0
        %6182 = vmatprep.subr.bf16.mxu0 0
        %6183 = vmatpush2.bf16.msra.mxu0 0
        %6184 = vmatprep.subr.bf16.mxu0 0
        %6185 = vmatpush2.bf16.msra.mxu0 0
        %6186 = vmatprep.subr.bf16.mxu0 0
        %6187 = vmatpush2.bf16.msra.mxu0 0
        %6188 = vmatprep.subr.bf16.mxu0 0
        %6189 = vmatpush2.bf16.msra.mxu0 0
        %6190 = vmatprep.subr.bf16.mxu0 0
        %6191 = vmatpush2.bf16.msra.mxu0 0
        %6192 = vmatprep.subr.bf16.mxu0 0
        %6193 = vmatpush2.bf16.msra.mxu0 0
        %6194 = vmatprep.mubr.bf16.mxu0 0
        %6195 = vmatmul.mubr.bf16.gmra.mxu0 %v6082
        %v6196 = vpop.f32.mrf.mxu0
        %v6197 = vpop.f32.mrf.mxu0
        %v6198 = vpop.f32.mrf.mxu0
        %v6199 = vpop.f32.mrf.mxu0
        %6200 = vmatprep.mubr.bf16.mxu0 0
        %6201 = vmatmul.mubr.bf16.gmra.mxu0 %v6085
        %v6202 = vpop.f32.mrf.mxu0
        %v6203 = vpop.f32.mrf.mxu0
        %v6204 = vpop.f32.mrf.mxu0
        %v6205 = vpop.f32.mrf.mxu0
        %6206 = vmatprep.mubr.bf16.mxu0 0
        %6207 = vmatmul.mubr.bf16.gmra.mxu0 %v6088
        %v6208 = vpop.f32.mrf.mxu0
        %v6209 = vadd.f32 %v6055, %v6208
        %v6210 = vpop.f32.mrf.mxu0
        %v6211 = vpop.f32.mrf.mxu0
        %v6212 = vadd.f32 %v6055, %v6211
        %v6213 = vpop.f32.mrf.mxu0
        %6214 = vmatprep.mubr.bf16.mxu0 0
        %6215 = vmatmul.mubr.bf16.gmra.mxu0 %v6091
        %v6216 = vpop.f32.mrf.mxu0
        %v6217 = vpop.f32.mrf.mxu0
        %v6218 = vpop.f32.mrf.mxu0
        %v6219 = vadd.f32 %v6055, %v6218
        %v6220 = vpop.f32.mrf.mxu0
        %6221 = vmatprep.mubr.bf16.mxu0 0
        %6222 = vmatmul.mubr.bf16.gmra.mxu0 %v6094
        %v6223 = vpop.f32.mrf.mxu0
        %v6224 = vadd.f32 %v6055, %v6223
        %v6225 = vpop.f32.mrf.mxu0
        %v6226 = vpop.f32.mrf.mxu0
        %v6227 = vpop.f32.mrf.mxu0
        %6228 = vmatprep.mubr.bf16.mxu0 0
        %6229 = vmatmul.mubr.bf16.gmra.mxu0 %v6097
        %v6230 = vpop.f32.mrf.mxu0
        %v6231 = vadd.f32 %v6055, %v6230
        %v6232 = vpop.f32.mrf.mxu0
        %v6233 = vpop.f32.mrf.mxu0
        %v6234 = vadd.f32 %v6055, %v6233
        %v6235 = vpop.f32.mrf.mxu0
        %6236 = vmatprep.mubr.bf16.mxu0 0
        %6237 = vmatmul.mubr.bf16.gmra.mxu0 %v6100
        %v6238 = vpop.f32.mrf.mxu0
        %v6239 = vpop.f32.mrf.mxu0
        %v6240 = vpop.f32.mrf.mxu0
        %v6241 = vadd.f32 %v6055, %v6240
        %v6242 = vpop.f32.mrf.mxu0
        %6243 = vmatprep.mubr.bf16.mxu0 0
        %6244 = vmatmul.mubr.bf16.gmra.mxu0 %v6103
        %v6245 = vpop.f32.mrf.mxu0
        %v6246 = vadd.f32 %v6055, %v6245
        %v6247 = vpop.f32.mrf.mxu0
        %v6248 = vpop.f32.mrf.mxu0
        %v6249 = vpop.f32.mrf.mxu0
        %6250 = vmatprep.mubr.bf16.mxu0 0
        %6251 = vmatmul.mubr.bf16.gmra.mxu0 %v6106
        %v6252 = vpop.f32.mrf.mxu0
        %v6253 = vadd.f32 %v6055, %v6252
        %v6254 = vpop.f32.mrf.mxu0
        %v6255 = vpop.f32.mrf.mxu0
        %v6256 = vadd.f32 %v6055, %v6255
        %v6257 = vpop.f32.mrf.mxu0
        %6258 = vmatprep.mubr.bf16.mxu0 0
        %6259 = vmatmul.mubr.bf16.gmra.mxu0 %v6109
        %v6260 = vpop.f32.mrf.mxu0
        %v6261 = vpop.f32.mrf.mxu0
        %v6262 = vpop.f32.mrf.mxu0
        %v6263 = vadd.f32 %v6055, %v6262
        %v6264 = vpop.f32.mrf.mxu0
        %6265 = vmatprep.mubr.bf16.mxu0 0
        %6266 = vmatmul.mubr.bf16.gmra.mxu0 %v6112
        %v6267 = vpop.f32.mrf.mxu0
        %v6268 = vadd.f32 %v6055, %v6267
        %v6269 = vpop.f32.mrf.mxu0
        %v6270 = vpop.f32.mrf.mxu0
        %v6271 = vpop.f32.mrf.mxu0
        %6272 = vmatprep.mubr.bf16.mxu0 0
        %6273 = vmatmul.mubr.bf16.gmra.mxu0 %v6115
        %v6274 = vpop.f32.mrf.mxu0
        %v6275 = vadd.f32 %v6055, %v6274
        %v6276 = vpop.f32.mrf.mxu0
        %v6277 = vpop.f32.mrf.mxu0
        %v6278 = vadd.f32 %v6055, %v6277
        %v6279 = vpop.f32.mrf.mxu0
        %6280 = vmatprep.mubr.bf16.mxu0 0
        %6281 = vmatmul.mubr.bf16.gmra.mxu0 %v6118
        %v6282 = vpop.f32.mrf.mxu0
        %v6283 = vpop.f32.mrf.mxu0
        %v6284 = vpop.f32.mrf.mxu0
        %v6285 = vadd.f32 %v6055, %v6284
        %v6286 = vpop.f32.mrf.mxu0
        %6287 = vmatprep.mubr.bf16.mxu0 0
        %6288 = vmatmul.mubr.bf16.gmra.mxu0 %v6121
        %v6289 = vpop.f32.mrf.mxu0
        %v6290 = vadd.f32 %v6055, %v6289
        %v6291 = vpop.f32.mrf.mxu0
        %v6292 = vpop.f32.mrf.mxu0
        %v6293 = vpop.f32.mrf.mxu0
        %6294 = vmatprep.mubr.bf16.mxu0 0
        %6295 = vmatmul.mubr.bf16.gmra.mxu0 %v6124
        %v6296 = vpop.f32.mrf.mxu0
        %v6297 = vadd.f32 %v6055, %v6296
        %v6298 = vpop.f32.mrf.mxu0
        %v6299 = vpop.f32.mrf.mxu0
        %v6300 = vadd.f32 %v6055, %v6299
        %v6301 = vpop.f32.mrf.mxu0
        %6302 = vmatprep.mubr.bf16.mxu0 0
        %6303 = vmatmul.mubr.bf16.gmra.mxu0 %v6127
        %v6304 = vpop.f32.mrf.mxu0
        %v6305 = vpop.f32.mrf.mxu0
        %v6306 = vpop.f32.mrf.mxu0
        %v6307 = vadd.f32 %v6055, %v6306
        %v6308 = vpop.f32.mrf.mxu0
        %6309 = vmatprep.mubr.bf16.mxu0 0
        %6310 = vmatmul.mubr.bf16.gmra.mxu0 %v6130
        %v6311 = vpop.f32.mrf.mxu0
        %v6312 = vadd.f32 %v6055, %v6311
        %v6313 = vpop.f32.mrf.mxu0
        %v6314 = vpop.f32.mrf.mxu0
        %v6315 = vpop.f32.mrf.mxu0
        %6316 = vmatprep.mubr.bf16.mxu0 0
        %6317 = vmatmul.mubr.bf16.gmra.mxu0 %v6133
        %v6318 = vpop.f32.mrf.mxu0
        %v6319 = vadd.f32 %v6055, %v6318
        %v6320 = vpop.f32.mrf.mxu0
        %v6321 = vpop.f32.mrf.mxu0
        %v6322 = vadd.f32 %v6055, %v6321
        %v6323 = vpop.f32.mrf.mxu0
        %6324 = vmatprep.mubr.bf16.mxu0 0
        %6325 = vmatmul.mubr.bf16.gmra.mxu0 %v6136
        %v6326 = vpop.f32.mrf.mxu0
        %v6327 = vpop.f32.mrf.mxu0
        %v6328 = vpop.f32.mrf.mxu0
        %v6329 = vadd.f32 %v6055, %v6328
        %v6330 = vpop.f32.mrf.mxu0
        %6331 = vmatprep.mubr.bf16.mxu0 0
        %6332 = vmatmul.mubr.bf16.gmra.mxu0 %v6139
        %v6333 = vpop.f32.mrf.mxu0
        %v6334 = vadd.f32 %v6055, %v6333
        %v6335 = vpop.f32.mrf.mxu0
        %v6336 = vpop.f32.mrf.mxu0
        %v6337 = vpop.f32.mrf.mxu0
        %6338 = vmatprep.mubr.bf16.mxu0 0
        %6339 = vmatmul.mubr.bf16.gmra.mxu0 %v6142
        %v6340 = vpop.f32.mrf.mxu0
        %v6341 = vadd.f32 %v6055, %v6340
        %v6342 = vpop.f32.mrf.mxu0
        %v6343 = vpop.f32.mrf.mxu0
        %v6344 = vadd.f32 %v6055, %v6343
        %v6345 = vpop.f32.mrf.mxu0
        %6346 = vmatprep.mubr.bf16.mxu0 0
        %6347 = vmatmul.mubr.bf16.gmra.mxu0 %v6145
        %v6348 = vpop.f32.mrf.mxu0
        %v6349 = vpop.f32.mrf.mxu0
        %v6350 = vpop.f32.mrf.mxu0
        %v6351 = vadd.f32 %v6055, %v6350
        %v6352 = vpop.f32.mrf.mxu0
        %6353 = vmatprep.mubr.bf16.mxu0 0
        %6354 = vmatmul.mubr.bf16.gmra.mxu0 %v6148
        %v6355 = vpop.f32.mrf.mxu0
        %v6356 = vadd.f32 %v6055, %v6355
        %v6357 = vpop.f32.mrf.mxu0
        %v6358 = vpop.f32.mrf.mxu0
        %v6359 = vpop.f32.mrf.mxu0
        %6360 = vmatprep.mubr.bf16.mxu0 0
        %6361 = vmatmul.mubr.bf16.gmra.mxu0 %v6151
        %v6362 = vpop.f32.mrf.mxu0
        %v6363 = vadd.f32 %v6055, %v6362
        %v6364 = vpop.f32.mrf.mxu0
        %v6365 = vpop.f32.mrf.mxu0
        %v6366 = vadd.f32 %v6055, %v6365
        %v6367 = vpop.f32.mrf.mxu0
        %6368 = vmatprep.mubr.bf16.mxu0 0
        %6369 = vmatmul.mubr.bf16.gmra.mxu0 %v6154
        %v6370 = vpop.f32.mrf.mxu0
        %v6371 = vpop.f32.mrf.mxu0
        %v6372 = vpop.f32.mrf.mxu0
        %v6373 = vadd.f32 %v6055, %v6372
        %v6374 = vpop.f32.mrf.mxu0
        %6375 = vmatprep.mubr.bf16.mxu0 0
        %6376 = vmatmul.mubr.bf16.gmra.mxu0 %v6157
        %v6377 = vpop.f32.mrf.mxu0
        %v6378 = vadd.f32 %v6055, %v6377
        %v6379 = vpop.f32.mrf.mxu0
        %v6380 = vpop.f32.mrf.mxu0
        %v6381 = vpop.f32.mrf.mxu0
        %6382 = vmatprep.mubr.bf16.mxu0 0
        %6383 = vmatmul.mubr.bf16.gmra.mxu0 %v6160
        %v6384 = vpop.f32.mrf.mxu0
        %v6385 = vpop.f32.mrf.mxu0
        %v6386 = vpop.f32.mrf.mxu0
        %v6387 = vpop.f32.mrf.mxu0
        %6388 = vdwg.mxu0
        %v6389 = vadd.f32 %v5835, %v6209
        %v6390 = vadd.f32 %v5838, %v6212
        %v6391 = vadd.f32 %v5845, %v6219
        %v6392 = vadd.f32 %v5850, %v6224
        %v6393 = vadd.f32 %v5857, %v6231
        %v6394 = vadd.f32 %v5860, %v6234
        %v6395 = vadd.f32 %v5867, %v6241
        %v6396 = vadd.f32 %v5872, %v6246
        %v6397 = vadd.f32 %v5879, %v6253
        %v6398 = vadd.f32 %v5882, %v6256
        %v6399 = vadd.f32 %v5889, %v6263
        %v6400 = vadd.f32 %v5894, %v6268
        %v6401 = vadd.f32 %v5901, %v6275
        %v6402 = vadd.f32 %v5904, %v6278
        %v6403 = vadd.f32 %v5911, %v6285
        %v6404 = vadd.f32 %v5916, %v6290
        %v6405 = vadd.f32 %v5923, %v6297
        %v6406 = vadd.f32 %v5926, %v6300
        %v6407 = vadd.f32 %v5933, %v6307
        %v6408 = vadd.f32 %v5938, %v6312
        %v6409 = vadd.f32 %v5945, %v6319
        %v6410 = vadd.f32 %v5948, %v6322
        %v6411 = vadd.f32 %v5955, %v6329
        %v6412 = vadd.f32 %v5960, %v6334
        %v6413 = vadd.f32 %v5967, %v6341
        %v6414 = vadd.f32 %v5970, %v6344
        %v6415 = vadd.f32 %v5977, %v6351
        %v6416 = vadd.f32 %v5982, %v6356
        %v6417 = vadd.f32 %v5989, %v6363
        %v6418 = vadd.f32 %v5992, %v6366
        %v6419 = vadd.f32 %v5999, %v6373
        %v6420 = vadd.f32 %v6004, %v6378
        %6421 = vst [vmem:[%s380] sm:$0xff] %v6389
        %6422 = vst [vmem:[%s380 + $0x8] sm:$0xff] %v6390
        %s6423 = scalar_lea.vmem %s380, 16 [#allocation3]
        %6424 = vst [vmem:[%s6423] sm:$0xff] %v6391
        %6425 = vst [vmem:[%s6423 + $0x8] sm:$0xff] %v6392
        %s6426 = scalar_lea.vmem %s380, 32 [#allocation3]
        %6427 = vst [vmem:[%s6426] sm:$0xff] %v6393
        %6428 = vst [vmem:[%s6426 + $0x8] sm:$0xff] %v6394
        %s6429 = scalar_lea.vmem %s380, 48 [#allocation3]
        %6430 = vst [vmem:[%s6429] sm:$0xff] %v6395
        %6431 = vst [vmem:[%s6429 + $0x8] sm:$0xff] %v6396
        %s6432 = scalar_lea.vmem %s380, 64 [#allocation3]
        %6433 = vst [vmem:[%s6432] sm:$0xff] %v6397
        %6434 = vst [vmem:[%s6432 + $0x8] sm:$0xff] %v6398
        %s6435 = scalar_lea.vmem %s380, 80 [#allocation3]
        %6436 = vst [vmem:[%s6435] sm:$0xff] %v6399
        %6437 = vst [vmem:[%s6435 + $0x8] sm:$0xff] %v6400
        %s6438 = scalar_lea.vmem %s380, 96 [#allocation3]
        %6439 = vst [vmem:[%s6438] sm:$0xff] %v6401
        %6440 = vst [vmem:[%s6438 + $0x8] sm:$0xff] %v6402
        %s6441 = scalar_lea.vmem %s380, 112 [#allocation3]
        %6442 = vst [vmem:[%s6441] sm:$0xff] %v6403
        %6443 = vst [vmem:[%s6441 + $0x8] sm:$0xff] %v6404
        %s6444 = scalar_lea.vmem %s380, 128 [#allocation3]
        %6445 = vst [vmem:[%s6444] sm:$0xff] %v6405
        %6446 = vst [vmem:[%s6444 + $0x8] sm:$0xff] %v6406
        %s6447 = scalar_lea.vmem %s380, 144 [#allocation3]
        %6448 = vst [vmem:[%s6447] sm:$0xff] %v6407
        %6449 = vst [vmem:[%s6447 + $0x8] sm:$0xff] %v6408
        %s6450 = scalar_lea.vmem %s380, 160 [#allocation3]
        %6451 = vst [vmem:[%s6450] sm:$0xff] %v6409
        %6452 = vst [vmem:[%s6450 + $0x8] sm:$0xff] %v6410
        %s6453 = scalar_lea.vmem %s380, 176 [#allocation3]
        %6454 = vst [vmem:[%s6453] sm:$0xff] %v6411
        %6455 = vst [vmem:[%s6453 + $0x8] sm:$0xff] %v6412
        %s6456 = scalar_lea.vmem %s380, 192 [#allocation3]
        %6457 = vst [vmem:[%s6456] sm:$0xff] %v6413
        %6458 = vst [vmem:[%s6456 + $0x8] sm:$0xff] %v6414
        %s6459 = scalar_lea.vmem %s380, 208 [#allocation3]
        %6460 = vst [vmem:[%s6459] sm:$0xff] %v6415
        %6461 = vst [vmem:[%s6459 + $0x8] sm:$0xff] %v6416
        %s6462 = scalar_lea.vmem %s380, 224 [#allocation3]
        %6463 = vst [vmem:[%s6462] sm:$0xff] %v6417
        %6464 = vst [vmem:[%s6462 + $0x8] sm:$0xff] %v6418
        %s6465 = scalar_lea.vmem %s380, 240 [#allocation3]
        %6466 = vst [vmem:[%s6465] sm:$0xff] %v6419
        %6467 = vst [vmem:[%s6465 + $0x8] sm:$0xff] %v6420
        %s6468 = sand.u32 %s269, 1
        %s6469 = scalar_lea.sflag [#allocation4], %s6468
        %s6470 = sand.u32 %s269, 1
        %s6471 = smul.addr %s6470, 256
        %s6472 = scalar_lea.vmem [#allocation3], %s6471
        // Predicated region
        $region65: #{residual_forward.1} parent=63 // pred_check
          %p6473 = pneg %p279
        $region66: #{residual_forward.1} parent=63 // pred_check_branch
          %6475 = sbr.rel (%p6473) target = $region68
        $region67: #{residual_forward.1} parent=63 // pred_region
          %s6477 = ssub.s32 4096, 4096
          %6478 = vsyncadd %s6469, %s6477
          %s6479 = smul.addr %s25, 32
          %s6480 = smul.addr %s6479, 128
          %s6481 = scalar_lea.hbm %s11, %s6480
          %s6482 = sshll.u32 %s6472, 4
          %s6483 = int_to_ptr.vmem [resolvable:$true] %s6482
          %6488 = dma.vmem_to_hbm [thread:$0]  %s6483, 4096, %s6481, %s6469, 128, 128, 8
        $region68: #{residual_forward.1} parent=63 // pred_fallthru
          _
      $region64: #{residual_forward.1} parent=5 // pred_fallthru
        _
      %p6489 = scmp.le.s32.totalorder 2, %s20
      // Predicated region
      $region69: #{residual_forward.1} parent=5 // pred_check
        %p6490 = pneg %p6489
      $region70: #{residual_forward.1} parent=5 // pred_check_branch
        %6492 = sbr.rel (%p6490) target = $region72
      $region71: #{residual_forward.1} parent=5 // pred_region
        %s6493 = ssub.s32 %s20, 2
        // Predicated region
        $region73: #{residual_forward.1} parent=71 // pred_check
          %p6494 = pneg %p285
        $region74: #{residual_forward.1} parent=71 // pred_check_branch
          %6496 = sbr.rel (%p6494) target = $region76
        $region75: #{residual_forward.1} parent=71 // pred_region
          %s6497 = sand.u32 %s270, 1
          %s6498 = scalar_lea.sflag [#allocation4], %s6497
          %s6499 = sand.u32 %s270, 1
          %s6500 = smul.addr %s6499, 256
          %s6501 = scalar_lea.vmem [#allocation3], %s6500
          %6502 = dma.done %s6498, 4096
        $region76: #{residual_forward.1} parent=71 // pred_fallthru
          _
      $region72: #{residual_forward.1} parent=5 // pred_fallthru
        _
    $region6: #{residual_forward.1} parent=1 // loop_footer
      %s24 = sadd.s32 1, %s20
    $region7: #{residual_forward.1} parent=1 // loop_footer_branch
      %19 = sbr.rel target = $region3
    $region8: #{residual_forward.1} parent=1 // loop_exit
      _
    %6503 = vsyncpa [#allocation4], 1
    %s6504 = scalar_lea.sflag [#allocation4], 1
    %6505 = vsyncpa %s6504, 1

</llo_original>
